<compile_context>
chip_gen: v7x
topology: tpu7x:2x2x1
jax: 0.10.0
libtpu: 0.0.40
codegen_flags: <defaults>
</compile_context>

<pallas_src>
import functools
import math

import jax
import jax.numpy as jnp
from jax.experimental import pallas as pl
from jax.experimental.pallas import tpu as pltpu


def _swap01(t):
    """(a, b, e) -> (b, a, e).  Prefer the TPU-native einshape lowering."""
    if hasattr(pltpu, "einshape"):
        return pltpu.einshape("abe->bae", t)
    return jnp.transpose(t, (1, 0, 2))


# ----------------------------------------------------------------------------
# Pallas kernel: the whole decoder stack for one batch block.
# grid = (batch_block, layer); the running target activation lives in acc_ref
# (VMEM scratch) and is carried across the inner ("arbitrary") layer axis.
# ----------------------------------------------------------------------------
def _decoder_stack_kernel(
    # activations (batch-first blocks)
    tgt_ref, memk_ref, memv_ref, qpos_ref,
    # self-attention (Q|K fused, 1/sqrt(hd) pre-folded into Q)
    wqk1_ref, bqk1_ref, wv1_ref, bv1_ref, wo1_ref, bo1_ref, g1_ref, b1_ref,
    # cross-attention
    wq2_ref, bq2_ref, wk2_ref, bk2_ref, wv2_ref, bv2_ref, wo2_ref, bo2_ref,
    g2_ref, b2_ref,
    # feed-forward
    wf1_ref, bf1_ref, wf2_ref, bf2_ref, g3_ref, b3_ref,
    # final norm (shared across layers)
    gf_ref, bfn_ref,
    # output
    out_ref,
    # scratch: running activations, carried across the layer grid axis
    acc_ref,
    *, nhead: int, return_intermediate: bool, apply_final_norm: bool,
):
    layer = pl.program_id(1)
    n_layers = pl.num_programs(1)

    bb, L, D = tgt_ref.shape
    S = memk_ref.shape[1]
    hd = D // nhead
    G = nhead * bb                                   # fused (head, batch) dim

    @pl.when(layer == 0)
    def _():
        acc_ref[...] = tgt_ref[...].reshape(bb * L, D)

    x = acc_ref[...]                                 # (bb*L, D) f32 residual
    qpos = qpos_ref[...].reshape(bb * L, D)          # f32
    memk = memk_ref[...].reshape(bb * S, D)          # bf16 (memory + pos)
    memv = memv_ref[...].reshape(bb * S, D)          # bf16 (memory)

    def mm(a, w_ref, b_ref):
        # bf16 operands on the MXU, f32 accumulation + f32 bias add.
        return (jnp.dot(a.astype(jnp.bfloat16), w_ref[0],
                        preferred_element_type=jnp.float32) + b_ref[0])

    def heads(t, n):
        # (bb*n, D) -> (H*bb, n, hd) bf16 ; group index g = h*bb + b
        t = t.astype(jnp.bfloat16).reshape(bb * n, nhead, hd)
        t = _swap01(t)                               # (H, bb*n, hd)
        return t.reshape(G, n, hd)

    def unheads(o):
        # (H*bb, n, hd) f32 -> (bb*n, D) f32
        n = o.shape[1]
        o = o.reshape(nhead, bb * n, hd)
        o = _swap01(o)                               # (bb*n, H, hd)
        return o.reshape(bb * n, D)

    def attention(qh, kh, vh):
        # qh: (G, lq, hd) bf16 (already scaled), kh/vh: (G, lk, hd) bf16
        s = jnp.einsum("gqe,gke->gqk", qh, kh,
                       preferred_element_type=jnp.float32)        # (G, lq, lk)
        s = s - jnp.max(s, axis=-1, keepdims=True)
        p = jnp.exp(s)
        p = p * pl.reciprocal(jnp.sum(p, axis=-1, keepdims=True), approx=True)
        o = jnp.einsum("gqk,gke->gqe", p.astype(jnp.bfloat16), vh,
                       preferred_element_type=jnp.float32)        # (G, lq, hd)
        return unheads(o)

    def ln(t, g_ref, b_ref):
        mu = jnp.mean(t, axis=-1, keepdims=True)
        var = jnp.mean(jnp.square(t - mu), axis=-1, keepdims=True)
        return (t - mu) * jax.lax.rsqrt(var + 1e-5) * g_ref[0] + b_ref[0]

    # --- self attention: q = k = x + query_pos, v = x -----------------------
    qk = mm(x + qpos, wqk1_ref, bqk1_ref)                          # (bb*L, 2D)
    sa = attention(heads(qk[:, :D], L), heads(qk[:, D:], L),
                   heads(mm(x, wv1_ref, bv1_ref), L))
    x = ln(x + mm(sa, wo1_ref, bo1_ref), g1_ref, b1_ref)

    # --- cross attention: q = x + query_pos, k = memory + pos, v = memory ---
    ca = attention(heads(mm(x + qpos, wq2_ref, bq2_ref), L),
                   heads(mm(memk, wk2_ref, bk2_ref), S),
                   heads(mm(memv, wv2_ref, bv2_ref), S))
    x = ln(x + mm(ca, wo2_ref, bo2_ref), g2_ref, b2_ref)

    # --- feed-forward (ReLU) -------------------------------------------------
    ff = jnp.maximum(mm(x, wf1_ref, bf1_ref), 0.0)
    x = ln(x + mm(ff, wf2_ref, bf2_ref), g3_ref, b3_ref)

    acc_ref[...] = x                                 # carry to the next layer

    def final(t):
        if apply_final_norm:
            mu = jnp.mean(t, axis=-1, keepdims=True)
            var = jnp.mean(jnp.square(t - mu), axis=-1, keepdims=True)
            t = (t - mu) * jax.lax.rsqrt(var + 1e-5) * gf_ref[...] + bfn_ref[...]
        return t

    if return_intermediate:
        out_ref[0] = final(x).reshape(bb, L, D).astype(out_ref.dtype)
    else:
        @pl.when(layer == n_layers - 1)
        def _():
            out_ref[0] = final(x).reshape(bb, L, D).astype(out_ref.dtype)


# ----------------------------------------------------------------------------
# Parameter prep: stack per-layer params on a leading layer axis, fuse Q|K of
# the self-attention, fold the 1/sqrt(head_dim) scale into Q, cast the matmul
# weights to bf16 (biases / LayerNorm params stay f32).
# ----------------------------------------------------------------------------
def _prep_stacked_params(layer_params, nhead):
    d_model = layer_params[0]["wq1"].shape[0]
    scale = 1.0 / math.sqrt(d_model // nhead)
    bf16 = jnp.bfloat16

    def stk(fn, dtype=None):
        a = jnp.stack([fn(p) for p in layer_params])
        return a.astype(dtype) if dtype is not None else a

    return dict(
        wqk1=stk(lambda p: jnp.concatenate([p["wq1"] * scale, p["wk1"]], 1), bf16),
        bqk1=stk(lambda p: jnp.concatenate([p["bq1"] * scale, p["bk1"]], 1)),
        wv1=stk(lambda p: p["wv1"], bf16), bv1=stk(lambda p: p["bv1"]),
        wo1=stk(lambda p: p["wo1"], bf16), bo1=stk(lambda p: p["bo1"]),
        g1=stk(lambda p: p["g1"]), b1=stk(lambda p: p["b1"]),
        wq2=stk(lambda p: p["wq2"] * scale, bf16),
        bq2=stk(lambda p: p["bq2"] * scale),
        wk2=stk(lambda p: p["wk2"], bf16), bk2=stk(lambda p: p["bk2"]),
        wv2=stk(lambda p: p["wv2"], bf16), bv2=stk(lambda p: p["bv2"]),
        wo2=stk(lambda p: p["wo2"], bf16), bo2=stk(lambda p: p["bo2"]),
        g2=stk(lambda p: p["g2"]), b2=stk(lambda p: p["b2"]),
        wf1=stk(lambda p: p["wf1"], bf16), bf1=stk(lambda p: p["bf1"]),
        wf2=stk(lambda p: p["wf2"], bf16), bf2=stk(lambda p: p["bf2"]),
        g3=stk(lambda p: p["g3"]), b3=stk(lambda p: p["b3"]),
    )


def _pick_batch_block(B, L, D):
    # Whole batch per grid step when the f32 activation block is small (< 4 MiB);
    # otherwise the largest divisor of B that keeps the block under that limit.
    limit = 4 << 20
    if B * L * D * 4 <= limit:
        return B
    best = 1
    for d in range(1, B + 1):
        if B % d == 0 and d * L * D * 4 <= limit:
            best = d
    return best


# ----------------------------------------------------------------------------
# TransformerDecoder wrapper (matches the PyTorch module's forward semantics).
# ----------------------------------------------------------------------------
def transformer_decoder(tgt, memory, layer_params, nhead,
                        pos=None, query_pos=None,
                        norm_params=None, return_intermediate=False,
                        tgt_mask=None, memory_mask=None,
                        tgt_key_padding_mask=None, memory_key_padding_mask=None):
    """tgt: (L, B, D), memory: (S, B, D), pos: (S, B, D), query_pos: (L, B, D).
    Returns (num_layers, L, B, D) if return_intermediate else (1, L, B, D)."""
    assert tgt_mask is None and memory_mask is None
    assert tgt_key_padding_mask is None and memory_key_padding_mask is None
    # TODO(synk): attention masks / key-padding masks are not implemented.

    L, B, D = tgt.shape
    S = memory.shape[0]
    NL = len(layer_params)
    F = layer_params[0]["wf1"].shape[1]
    if query_pos is None:
        query_pos = jnp.zeros_like(tgt)
    mem_plus_pos = memory if pos is None else memory + pos   # folded once here
    apply_final_norm = norm_params is not None
    if return_intermediate:
        assert apply_final_norm, "return_intermediate requires a final norm"
    if apply_final_norm:
        gf, bfn = norm_params
    else:
        gf = jnp.ones((1, D), jnp.float32)
        bfn = jnp.zeros((1, D), jnp.float32)

    sp = _prep_stacked_params(layer_params, nhead)

    # Batch-first activations.  memory / memory+pos are MXU-only operands ->
    # store bf16 (halves their HBM stream, removes per-layer casts).  The
    # residual stream (tgt) and query_pos stay f32.
    tgt_b = jnp.transpose(tgt, (1, 0, 2)).astype(jnp.float32)
    qpos_b = jnp.transpose(query_pos, (1, 0, 2)).astype(jnp.float32)
    memk_b = jnp.transpose(mem_plus_pos, (1, 0, 2)).astype(jnp.bfloat16)
    memv_b = jnp.transpose(memory, (1, 0, 2)).astype(jnp.bfloat16)

    b_blk = _pick_batch_block(B, L, D)
    nb = B // b_blk

    def aspec(n):                 # activation block, indexed by batch block
        return pl.BlockSpec((b_blk, n, D), lambda bb, l: (bb, 0, 0))

    def wspec(*shape):            # per-layer stacked tensor, indexed by layer
        zeros = (0,) * len(shape)
        return pl.BlockSpec((1,) + shape, lambda bb, l, z=zeros: (l,) + z)

    def cspec(*shape):            # grid-invariant tensor
        zeros = (0,) * len(shape)
        return pl.BlockSpec(shape, lambda bb, l, z=zeros: z)

    in_specs = [
        aspec(L), aspec(S), aspec(S), aspec(L),
        wspec(D, 2 * D), wspec(1, 2 * D), wspec(D, D), wspec(1, D),
        wspec(D, D), wspec(1, D), wspec(1, D), wspec(1, D),
        wspec(D, D), wspec(1, D), wspec(D, D), wspec(1, D),
        wspec(D, D), wspec(1, D), wspec(D, D), wspec(1, D),
        wspec(1, D), wspec(1, D),
        wspec(D, F), wspec(1, F), wspec(F, D), wspec(1, D),
        wspec(1, D), wspec(1, D),
        cspec(1, D), cspec(1, D),
    ]

    if return_intermediate:
        out_shape = jax.ShapeDtypeStruct((NL, B, L, D), jnp.float32)
        out_spec = pl.BlockSpec((1, b_blk, L, D), lambda bb, l: (l, bb, 0, 0))
    else:
        # Output block stays resident across the inner layer axis; only the
        # last layer's result is ever written back to HBM.
        out_shape = jax.ShapeDtypeStruct((1, B, L, D), jnp.float32)
        out_spec = pl.BlockSpec((1, b_blk, L, D), lambda bb, l: (0, bb, 0, 0))

    # VMEM budget from actual buffer sizes (x2 for double buffering), capped at
    # 64 MiB so the same launch config also fits a v7x TensorCore.
    def nbytes(a):
        return a.size * a.dtype.itemsize
    w_bytes = sum(nbytes(v) // NL for v in sp.values()) + nbytes(gf) + nbytes(bfn)
    a_bytes = 2 * b_blk * L * D * 4 + 2 * b_blk * S * D * 2
    o_bytes = b_blk * L * D * 4
    est = 2 * (w_bytes + a_bytes + o_bytes) + b_blk * L * D * 4 + (16 << 20)
    vmem_limit = int(min(64 << 20, max(est, 32 << 20)))

    kernel = functools.partial(
        _decoder_stack_kernel, nhead=nhead,
        return_intermediate=return_intermediate,
        apply_final_norm=apply_final_norm)

    out = pl.pallas_call(
        kernel,
        out_shape=out_shape,
        grid_spec=pltpu.PrefetchScalarGridSpec(
            num_scalar_prefetch=0,
            grid=(nb, NL),
            in_specs=in_specs,
            out_specs=out_spec,
            scratch_shapes=[pltpu.VMEM((b_blk * L, D), jnp.float32)],
        ),
        compiler_params=pltpu.CompilerParams(
            dimension_semantics=("parallel", "arbitrary"),
            vmem_limit_bytes=vmem_limit,
        ),
    )(
        tgt_b, memk_b, memv_b, qpos_b,
        sp["wqk1"], sp["bqk1"], sp["wv1"], sp["bv1"], sp["wo1"], sp["bo1"],
        sp["g1"], sp["b1"],
        sp["wq2"], sp["bq2"], sp["wk2"], sp["bk2"], sp["wv2"], sp["bv2"],
        sp["wo2"], sp["bo2"], sp["g2"], sp["b2"],
        sp["wf1"], sp["bf1"], sp["wf2"], sp["bf2"], sp["g3"], sp["b3"],
        gf, bfn,
    )

    out = jnp.transpose(out, (0, 2, 1, 3))         # (·, L, B, D) seq-first
    return out


# ----------------------------------------------------------------------------
# Pure-JAX f32 reference (mirrors the PyTorch TransformerDecoder exactly)
# ----------------------------------------------------------------------------
def _reference_decoder(tgt, memory, pos, query_pos, layer_params, nhead,
                       norm_params, return_intermediate):
    x = jnp.transpose(tgt, (1, 0, 2))              # (B, L, D)
    mem = jnp.transpose(memory, (1, 0, 2))
    posb = jnp.transpose(pos, (1, 0, 2))
    qpos = jnp.transpose(query_pos, (1, 0, 2))
    hd = x.shape[-1] // nhead

    def ln(t, g, b):
        mu = jnp.mean(t, -1, keepdims=True)
        var = jnp.mean((t - mu) ** 2, -1, keepdims=True)
        return (t - mu) * jax.lax.rsqrt(var + 1e-5) * g + b

    def attn(q_in, k_in, v_in, wq, bq, wk, bk, wv, bv, wo, bo):
        B, Lq, D = q_in.shape

        def split(t):
            return t.reshape(B, -1, nhead, hd).transpose(0, 2, 1, 3)

        q = split(q_in @ wq + bq)
        k = split(k_in @ wk + bk)
        v = split(v_in @ wv + bv)
        s = jnp.einsum("bhqe,bhke->bhqk", q, k) / math.sqrt(hd)
        a = jax.nn.softmax(s, axis=-1)
        o = jnp.einsum("bhqk,bhke->bhqe", a, v)
        return o.transpose(0, 2, 1, 3).reshape(B, Lq, D) @ wo + bo

    inter = []
    for p in layer_params:
        sa = attn(x + qpos, x + qpos, x,
                  p["wq1"], p["bq1"], p["wk1"], p["bk1"],
                  p["wv1"], p["bv1"], p["wo1"], p["bo1"])
        x = ln(x + sa, p["g1"], p["b1"])
        ca = attn(x + qpos, mem + posb, mem,
                  p["wq2"], p["bq2"], p["wk2"], p["bk2"],
                  p["wv2"], p["bv2"], p["wo2"], p["bo2"])
        x = ln(x + ca, p["g2"], p["b2"])
        ff = jnp.maximum(x @ p["wf1"] + p["bf1"], 0.0) @ p["wf2"] + p["bf2"]
        x = ln(x + ff, p["g3"], p["b3"])
        if return_intermediate:
            g, b = norm_params
            inter.append(jnp.transpose(ln(x, g, b), (1, 0, 2)))
    if return_intermediate:
        return jnp.stack(inter)
    if norm_params is not None:
        g, b = norm_params
        x = ln(x, g, b)
    return jnp.transpose(x, (1, 0, 2))[None]


# ----------------------------------------------------------------------------
# Deterministic parameter construction
# ----------------------------------------------------------------------------
def make_layer_params(key, d_model, dim_ff):
    ks = jax.random.split(key, 20)
    u = lambda k, shape, s: (jax.random.uniform(k, shape, jnp.float32) - 0.5) * 2 * s
    sd = 1.0 / math.sqrt(d_model)
    sf = 1.0 / math.sqrt(dim_ff)
    p = {}
    i = 0
    for n in ["wq1", "wk1", "wv1", "wo1", "wq2", "wk2", "wv2", "wo2"]:
        p[n] = u(ks[i], (d_model, d_model), sd); i += 1
        p["b" + n[1:]] = u(ks[i], (1, d_model), sd); i += 1
    p["wf1"] = u(ks[16], (d_model, dim_ff), sd)
    p["bf1"] = u(ks[17], (1, dim_ff), sd)
    p["wf2"] = u(ks[18], (dim_ff, d_model), sf)
    p["bf2"] = u(ks[19], (1, d_model), sf)
    for n in ["g1", "g2", "g3"]:
        p[n] = jnp.ones((1, d_model), jnp.float32)
    for n in ["b1", "b2", "b3"]:
        p[n] = jnp.zeros((1, d_model), jnp.float32)
    return p


if __name__ == "__main__":
    L, S, B, D = 8, 16, 2, 128       # queries, memory length, batch, d_model
    NHEAD, DIM_FF, NUM_LAYERS = 4, 256, 2

    key = jax.random.PRNGKey(0)
    k_tgt, k_mem, k_pos, k_qpos, k_par = jax.random.split(key, 5)
    tgt = jax.random.normal(k_tgt, (L, B, D), jnp.float32)
    memory = jax.random.normal(k_mem, (S, B, D), jnp.float32)
    pos = jax.random.normal(k_pos, (S, B, D), jnp.float32)
    query_pos = jax.random.normal(k_qpos, (L, B, D), jnp.float32)

    layer_keys = jax.random.split(k_par, NUM_LAYERS)
    layer_params = [make_layer_params(k, D, DIM_FF) for k in layer_keys]
    norm_params = (jnp.ones((1, D), jnp.float32), jnp.zeros((1, D), jnp.float32))

    # return_intermediate=True path (the one the moment model uses)
    out = transformer_decoder(tgt, memory, layer_params, NHEAD,
                              pos=pos, query_pos=query_pos,
                              norm_params=norm_params, return_intermediate=True)
    out = jax.block_until_ready(out)
    ref = jax.block_until_ready(_reference_decoder(
        tgt, memory, pos, query_pos, layer_params, NHEAD, norm_params, True))
    assert out.shape == (NUM_LAYERS, L, B, D), out.shape
    err = float(jnp.max(jnp.abs(out - ref)))
    # bf16 matmul operands + approx reciprocal vs f32 reference
    assert err < 8e-2, f"max abs err {err} vs JAX reference (intermediate)"

    # return_intermediate=False path (last-layer-only HBM writeback)
    out2 = transformer_decoder(tgt, memory, layer_params, NHEAD,
                               pos=pos, query_pos=query_pos,
                               norm_params=norm_params, return_intermediate=False)
    out2 = jax.block_until_ready(out2)
    ref2 = jax.block_until_ready(_reference_decoder(
        tgt, memory, pos, query_pos, layer_params, NHEAD, norm_params, False))
    assert out2.shape == (1, L, B, D), out2.shape
    err2 = float(jnp.max(jnp.abs(out2 - ref2)))
    assert err2 < 8e-2, f"max abs err {err2} vs JAX reference (final)"

    print("KERNEL_OK")
</pallas_src>

<mosaic_0001>
module attributes {stable_mosaic.version = 11 : i64} {
  func.func @_decoder_stack_kernel(%arg0: i32, %arg1: i32, %arg2: memref<2x8x128xf32, #tpu.memory_space<vmem>>, %arg3: memref<2x16x128xbf16, #tpu.memory_space<vmem>>, %arg4: memref<2x16x128xbf16, #tpu.memory_space<vmem>>, %arg5: memref<2x8x128xf32, #tpu.memory_space<vmem>>, %arg6: memref<1x128x256xbf16, #tpu.memory_space<vmem>>, %arg7: memref<1x1x256xf32, #tpu.memory_space<vmem>>, %arg8: memref<1x128x128xbf16, #tpu.memory_space<vmem>>, %arg9: memref<1x1x128xf32, #tpu.memory_space<vmem>>, %arg10: memref<1x128x128xbf16, #tpu.memory_space<vmem>>, %arg11: memref<1x1x128xf32, #tpu.memory_space<vmem>>, %arg12: memref<1x1x128xf32, #tpu.memory_space<vmem>>, %arg13: memref<1x1x128xf32, #tpu.memory_space<vmem>>, %arg14: memref<1x128x128xbf16, #tpu.memory_space<vmem>>, %arg15: memref<1x1x128xf32, #tpu.memory_space<vmem>>, %arg16: memref<1x128x128xbf16, #tpu.memory_space<vmem>>, %arg17: memref<1x1x128xf32, #tpu.memory_space<vmem>>, %arg18: memref<1x128x128xbf16, #tpu.memory_space<vmem>>, %arg19: memref<1x1x128xf32, #tpu.memory_space<vmem>>, %arg20: memref<1x128x128xbf16, #tpu.memory_space<vmem>>, %arg21: memref<1x1x128xf32, #tpu.memory_space<vmem>>, %arg22: memref<1x1x128xf32, #tpu.memory_space<vmem>>, %arg23: memref<1x1x128xf32, #tpu.memory_space<vmem>>, %arg24: memref<1x128x256xbf16, #tpu.memory_space<vmem>>, %arg25: memref<1x1x256xf32, #tpu.memory_space<vmem>>, %arg26: memref<1x256x128xbf16, #tpu.memory_space<vmem>>, %arg27: memref<1x1x128xf32, #tpu.memory_space<vmem>>, %arg28: memref<1x1x128xf32, #tpu.memory_space<vmem>>, %arg29: memref<1x1x128xf32, #tpu.memory_space<vmem>>, %arg30: memref<1x128xf32, #tpu.memory_space<vmem>>, %arg31: memref<1x128xf32, #tpu.memory_space<vmem>>, %arg32: memref<1x2x8x128xf32, #tpu.memory_space<vmem>>, %arg33: memref<16x128xf32, #tpu.memory_space<vmem>>) attributes {dimension_semantics = [#tpu.dimension_semantics<parallel>, #tpu.dimension_semantics<arbitrary>], iteration_bounds = array<i64: 1, 2>, scalar_prefetch = 0 : i64, scratch_operands = 1 : i64, tpu.core_type = #tpu.core_type<tc>, window_params = [{transform_indices = @transform_0, window_bounds = array<i64: 2, 8, 128>}, {transform_indices = @transform_1, window_bounds = array<i64: 2, 16, 128>}, {transform_indices = @transform_2, window_bounds = array<i64: 2, 16, 128>}, {transform_indices = @transform_3, window_bounds = array<i64: 2, 8, 128>}, {transform_indices = @transform_4, window_bounds = array<i64: 1, 128, 256>}, {transform_indices = @transform_5, window_bounds = array<i64: 1, 1, 256>}, {transform_indices = @transform_6, window_bounds = array<i64: 1, 128, 128>}, {transform_indices = @transform_7, window_bounds = array<i64: 1, 1, 128>}, {transform_indices = @transform_8, window_bounds = array<i64: 1, 128, 128>}, {transform_indices = @transform_9, window_bounds = array<i64: 1, 1, 128>}, {transform_indices = @transform_10, window_bounds = array<i64: 1, 1, 128>}, {transform_indices = @transform_11, window_bounds = array<i64: 1, 1, 128>}, {transform_indices = @transform_12, window_bounds = array<i64: 1, 128, 128>}, {transform_indices = @transform_13, window_bounds = array<i64: 1, 1, 128>}, {transform_indices = @transform_14, window_bounds = array<i64: 1, 128, 128>}, {transform_indices = @transform_15, window_bounds = array<i64: 1, 1, 128>}, {transform_indices = @transform_16, window_bounds = array<i64: 1, 128, 128>}, {transform_indices = @transform_17, window_bounds = array<i64: 1, 1, 128>}, {transform_indices = @transform_18, window_bounds = array<i64: 1, 128, 128>}, {transform_indices = @transform_19, window_bounds = array<i64: 1, 1, 128>}, {transform_indices = @transform_20, window_bounds = array<i64: 1, 1, 128>}, {transform_indices = @transform_21, window_bounds = array<i64: 1, 1, 128>}, {transform_indices = @transform_22, window_bounds = array<i64: 1, 128, 256>}, {transform_indices = @transform_23, window_bounds = array<i64: 1, 1, 256>}, {transform_indices = @transform_24, window_bounds = array<i64: 1, 256, 128>}, {transform_indices = @transform_25, window_bounds = array<i64: 1, 1, 128>}, {transform_indices = @transform_26, window_bounds = array<i64: 1, 1, 128>}, {transform_indices = @transform_27, window_bounds = array<i64: 1, 1, 128>}, {pipeline_mode = #tpu.pipeline_mode<synchronous>, transform_indices = @transform_28, window_bounds = array<i64: 1, 128>}, {pipeline_mode = #tpu.pipeline_mode<synchronous>, transform_indices = @transform_29, window_bounds = array<i64: 1, 128>}, {transform_indices = @transform_30, window_bounds = array<i64: 1, 2, 8, 128>}]} {
    %c0_i32 = arith.constant 0 : i32
    %0 = arith.cmpi eq, %arg1, %c0_i32 : i32
    %1 = arith.extui %0 : i1 to i32
    %c0_i32_0 = arith.constant 0 : i32
    %2 = arith.cmpi ne, %1, %c0_i32_0 : i32
    scf.if %2 {
      %c0_130 = arith.constant 0 : index
      %c0_131 = arith.constant 0 : index
      %c0_132 = arith.constant 0 : index
      %252 = vector.load %arg2[%c0_130, %c0_131, %c0_132] : memref<2x8x128xf32, #tpu.memory_space<vmem>>, vector<2x8x128xf32>
      %253 = vector.shape_cast %252 : vector<2x8x128xf32> to vector<16x128xf32>
      %c0_133 = arith.constant 0 : index
      %c0_134 = arith.constant 0 : index
      %254 = vector.load %arg33[%c0_133, %c0_134] : memref<16x128xf32, #tpu.memory_space<vmem>>, vector<16x128xf32>
      tpu.vector_store %arg33[%c0_133, %c0_134], %253 {strides = array<i32>} : memref<16x128xf32, #tpu.memory_space<vmem>>, vector<16x128xf32>,
    } else {
    }
    %c0 = arith.constant 0 : index
    %c0_1 = arith.constant 0 : index
    %3 = vector.load %arg33[%c0, %c0_1] : memref<16x128xf32, #tpu.memory_space<vmem>>, vector<16x128xf32>
    %c0_2 = arith.constant 0 : index
    %c0_3 = arith.constant 0 : index
    %c0_4 = arith.constant 0 : index
    %4 = vector.load %arg5[%c0_2, %c0_3, %c0_4] : memref<2x8x128xf32, #tpu.memory_space<vmem>>, vector<2x8x128xf32>
    %5 = vector.shape_cast %4 : vector<2x8x128xf32> to vector<16x128xf32>
    %c0_5 = arith.constant 0 : index
    %c0_6 = arith.constant 0 : index
    %c0_7 = arith.constant 0 : index
    %6 = vector.load %arg3[%c0_5, %c0_6, %c0_7] : memref<2x16x128xbf16, #tpu.memory_space<vmem>>, vector<2x16x128xbf16>
    %7 = vector.shape_cast %6 : vector<2x16x128xbf16> to vector<32x128xbf16>
    %c0_8 = arith.constant 0 : index
    %c0_9 = arith.constant 0 : index
    %c0_10 = arith.constant 0 : index
    %8 = vector.load %arg4[%c0_8, %c0_9, %c0_10] : memref<2x16x128xbf16, #tpu.memory_space<vmem>>, vector<2x16x128xbf16>
    %9 = vector.shape_cast %8 : vector<2x16x128xbf16> to vector<32x128xbf16>
    %10 = arith.addf %3, %5 : vector<16x128xf32>
    %11 = arith.truncf %10 : vector<16x128xf32> to vector<16x128xbf16>
    %c0_11 = arith.constant 0 : index
    %c0_12 = arith.constant 0 : index
    %c0_13 = arith.constant 0 : index
    %12 = vector.load %arg6[%c0_11, %c0_12, %c0_13] : memref<1x128x256xbf16, #tpu.memory_space<vmem>>, vector<1x128x256xbf16>
    %13 = vector.shape_cast %12 : vector<1x128x256xbf16> to vector<128x256xbf16>
    %cst = arith.constant dense<0.000000e+00> : vector<16x256xf32>
    %14 = tpu.matmul %11, %13, %cst {dimension_numbers = #tpu.dot_dimension_numbers<[1], [0], [0], [1], [0, 0, 1, 1], [], []>} : vector<16x128xbf16>, vector<128x256xbf16>, vector<16x256xf32> -> vector<16x256xf32>
    %c0_14 = arith.constant 0 : index
    %c0_15 = arith.constant 0 : index
    %c0_16 = arith.constant 0 : index
    %15 = vector.load %arg7[%c0_14, %c0_15, %c0_16] : memref<1x1x256xf32, #tpu.memory_space<vmem>>, vector<1x1x256xf32>
    %16 = vector.shape_cast %15 : vector<1x1x256xf32> to vector<1x256xf32>
    %17 = vector.broadcast %16 : vector<1x256xf32> to vector<16x256xf32>
    %18 = arith.addf %14, %17 : vector<16x256xf32>
    %19 = vector.extract_strided_slice %18 {offsets = [0, 0], sizes = [16, 128], strides = [1, 1]} : vector<16x256xf32> to vector<16x128xf32>
    %20 = arith.truncf %19 : vector<16x128xf32> to vector<16x128xbf16>
    %21 = vector.shape_cast %20 : vector<16x128xbf16> to vector<16x4x32xbf16>
    %22 = tpu.transpose %21, [1, 0, 2] : vector<16x4x32xbf16> -> vector<4x16x32xbf16>
    %23 = vector.shape_cast %22 : vector<4x16x32xbf16> to vector<8x8x32xbf16>
    %24 = vector.extract_strided_slice %18 {offsets = [0, 128], sizes = [16, 128], strides = [1, 1]} : vector<16x256xf32> to vector<16x128xf32>
    %25 = arith.truncf %24 : vector<16x128xf32> to vector<16x128xbf16>
    %26 = vector.shape_cast %25 : vector<16x128xbf16> to vector<16x4x32xbf16>
    %27 = tpu.transpose %26, [1, 0, 2] : vector<16x4x32xbf16> -> vector<4x16x32xbf16>
    %28 = vector.shape_cast %27 : vector<4x16x32xbf16> to vector<8x8x32xbf16>
    %29 = arith.truncf %3 : vector<16x128xf32> to vector<16x128xbf16>
    %c0_17 = arith.constant 0 : index
    %c0_18 = arith.constant 0 : index
    %c0_19 = arith.constant 0 : index
    %30 = vector.load %arg8[%c0_17, %c0_18, %c0_19] : memref<1x128x128xbf16, #tpu.memory_space<vmem>>, vector<1x128x128xbf16>
    %31 = vector.shape_cast %30 : vector<1x128x128xbf16> to vector<128x128xbf16>
    %cst_20 = arith.constant dense<0.000000e+00> : vector<16x128xf32>
    %32 = tpu.matmul %29, %31, %cst_20 {dimension_numbers = #tpu.dot_dimension_numbers<[1], [0], [0], [1], [0, 0, 1, 1], [], []>} : vector<16x128xbf16>, vector<128x128xbf16>, vector<16x128xf32> -> vector<16x128xf32>
    %c0_21 = arith.constant 0 : index
    %c0_22 = arith.constant 0 : index
    %c0_23 = arith.constant 0 : index
    %33 = vector.load %arg9[%c0_21, %c0_22, %c0_23] : memref<1x1x128xf32, #tpu.memory_space<vmem>>, vector<1x1x128xf32>
    %34 = vector.shape_cast %33 : vector<1x1x128xf32> to vector<1x128xf32>
    %35 = vector.broadcast %34 : vector<1x128xf32> to vector<16x128xf32>
    %36 = arith.addf %32, %35 : vector<16x128xf32>
    %37 = arith.truncf %36 : vector<16x128xf32> to vector<16x128xbf16>
    %38 = vector.shape_cast %37 : vector<16x128xbf16> to vector<16x4x32xbf16>
    %39 = tpu.transpose %38, [1, 0, 2] : vector<16x4x32xbf16> -> vector<4x16x32xbf16>
    %40 = vector.shape_cast %39 : vector<4x16x32xbf16> to vector<8x8x32xbf16>
    "tpu.trace_start"() <{level = 10 : i32, message = "gqe,gke->gqk"}> : () -> ()
    %cst_24 = arith.constant dense<0.000000e+00> : vector<8x8x8xf32>
    %41 = tpu.matmul %23, %28, %cst_24 {dimension_numbers = #tpu.dot_dimension_numbers<[2], [2], [1], [1], [0, 0, 0, 1, 1, 1], [0], [0]>} : vector<8x8x32xbf16>, vector<8x8x32xbf16>, vector<8x8x8xf32> -> vector<8x8x8xf32>
    "tpu.trace_stop"() : () -> ()
    %cst_25 = arith.constant dense<0xFF800000> : vector<8x8xf32>
    %42 = vector.multi_reduction <maximumf>, %41, %cst_25 [2] : vector<8x8x8xf32> to vector<8x8xf32>
    %43 = vector.shape_cast %42 : vector<8x8xf32> to vector<8x8x1xf32>
    %44 = vector.broadcast %43 : vector<8x8x1xf32> to vector<8x8x8xf32>
    %45 = arith.subf %41, %44 : vector<8x8x8xf32>
    %46 = math.exp %45 : vector<8x8x8xf32>
    %cst_26 = arith.constant dense<0.000000e+00> : vector<8x8xf32>
    %47 = vector.multi_reduction <add>, %46, %cst_26 [2] : vector<8x8x8xf32> to vector<8x8xf32>
    %48 = vector.shape_cast %47 : vector<8x8xf32> to vector<8x8x1xf32>
    %49 = tpu.reciprocal %48 {approx = true} : vector<8x8x1xf32> -> vector<8x8x1xf32>
    %50 = vector.broadcast %49 : vector<8x8x1xf32> to vector<8x8x8xf32>
    %51 = arith.mulf %46, %50 : vector<8x8x8xf32>
    %52 = arith.truncf %51 : vector<8x8x8xf32> to vector<8x8x8xbf16>
    "tpu.trace_start"() <{level = 10 : i32, message = "gqk,gke->gqe"}> : () -> ()
    %cst_27 = arith.constant dense<0.000000e+00> : vector<8x8x32xf32>
    %53 = tpu.matmul %52, %40, %cst_27 {dimension_numbers = #tpu.dot_dimension_numbers<[2], [1], [1], [2], [0, 0, 0, 1, 1, 2], [0], [0]>} : vector<8x8x8xbf16>, vector<8x8x32xbf16>, vector<8x8x32xf32> -> vector<8x8x32xf32>
    "tpu.trace_stop"() : () -> ()
    %54 = vector.shape_cast %53 : vector<8x8x32xf32> to vector<4x16x32xf32>
    %55 = tpu.transpose %54, [1, 0, 2] : vector<4x16x32xf32> -> vector<16x4x32xf32>
    %56 = vector.shape_cast %55 : vector<16x4x32xf32> to vector<16x128xf32>
    %57 = arith.truncf %56 : vector<16x128xf32> to vector<16x128xbf16>
    %c0_28 = arith.constant 0 : index
    %c0_29 = arith.constant 0 : index
    %c0_30 = arith.constant 0 : index
    %58 = vector.load %arg10[%c0_28, %c0_29, %c0_30] : memref<1x128x128xbf16, #tpu.memory_space<vmem>>, vector<1x128x128xbf16>
    %59 = vector.shape_cast %58 : vector<1x128x128xbf16> to vector<128x128xbf16>
    %cst_31 = arith.constant dense<0.000000e+00> : vector<16x128xf32>
    %60 = tpu.matmul %57, %59, %cst_31 {dimension_numbers = #tpu.dot_dimension_numbers<[1], [0], [0], [1], [0, 0, 1, 1], [], []>} : vector<16x128xbf16>, vector<128x128xbf16>, vector<16x128xf32> -> vector<16x128xf32>
    %c0_32 = arith.constant 0 : index
    %c0_33 = arith.constant 0 : index
    %c0_34 = arith.constant 0 : index
    %61 = vector.load %arg11[%c0_32, %c0_33, %c0_34] : memref<1x1x128xf32, #tpu.memory_space<vmem>>, vector<1x1x128xf32>
    %62 = vector.shape_cast %61 : vector<1x1x128xf32> to vector<1x128xf32>
    %63 = vector.broadcast %62 : vector<1x128xf32> to vector<16x128xf32>
    %64 = arith.addf %60, %63 : vector<16x128xf32>
    %65 = arith.addf %3, %64 : vector<16x128xf32>
    %cst_35 = arith.constant dense<0.000000e+00> : vector<16xf32>
    %66 = vector.multi_reduction <add>, %65, %cst_35 [1] : vector<16x128xf32> to vector<16xf32>
    %67 = vector.shape_cast %66 : vector<16xf32> to vector<16x1xf32>
    %cst_36 = arith.constant 1.280000e+02 : f32
    %68 = vector.broadcast %cst_36 : f32 to vector<16x1xf32>
    %69 = arith.divf %67, %68 : vector<16x1xf32>
    %70 = vector.broadcast %69 : vector<16x1xf32> to vector<16x128xf32>
    %71 = arith.subf %65, %70 : vector<16x128xf32>
    %72 = arith.mulf %71, %71 : vector<16x128xf32>
    %cst_37 = arith.constant dense<0.000000e+00> : vector<16xf32>
    %73 = vector.multi_reduction <add>, %72, %cst_37 [1] : vector<16x128xf32> to vector<16xf32>
    %74 = vector.shape_cast %73 : vector<16xf32> to vector<16x1xf32>
    %cst_38 = arith.constant 1.280000e+02 : f32
    %75 = vector.broadcast %cst_38 : f32 to vector<16x1xf32>
    %76 = arith.divf %74, %75 : vector<16x1xf32>
    %77 = vector.broadcast %69 : vector<16x1xf32> to vector<16x128xf32>
    %78 = arith.subf %65, %77 : vector<16x128xf32>
    %cst_39 = arith.constant 9.99999974E-6 : f32
    %79 = vector.broadcast %cst_39 : f32 to vector<16x1xf32>
    %80 = arith.addf %76, %79 : vector<16x1xf32>
    %81 = math.rsqrt %80 : vector<16x1xf32>
    %82 = vector.broadcast %81 : vector<16x1xf32> to vector<16x128xf32>
    %83 = arith.mulf %78, %82 : vector<16x128xf32>
    %c0_40 = arith.constant 0 : index
    %c0_41 = arith.constant 0 : index
    %c0_42 = arith.constant 0 : index
    %84 = vector.load %arg12[%c0_40, %c0_41, %c0_42] : memref<1x1x128xf32, #tpu.memory_space<vmem>>, vector<1x1x128xf32>
    %85 = vector.shape_cast %84 : vector<1x1x128xf32> to vector<1x128xf32>
    %86 = vector.broadcast %85 : vector<1x128xf32> to vector<16x128xf32>
    %87 = arith.mulf %83, %86 : vector<16x128xf32>
    %c0_43 = arith.constant 0 : index
    %c0_44 = arith.constant 0 : index
    %c0_45 = arith.constant 0 : index
    %88 = vector.load %arg13[%c0_43, %c0_44, %c0_45] : memref<1x1x128xf32, #tpu.memory_space<vmem>>, vector<1x1x128xf32>
    %89 = vector.shape_cast %88 : vector<1x1x128xf32> to vector<1x128xf32>
    %90 = vector.broadcast %89 : vector<1x128xf32> to vector<16x128xf32>
    %91 = arith.addf %87, %90 : vector<16x128xf32>
    %92 = arith.addf %91, %5 : vector<16x128xf32>
    %93 = arith.truncf %92 : vector<16x128xf32> to vector<16x128xbf16>
    %c0_46 = arith.constant 0 : index
    %c0_47 = arith.constant 0 : index
    %c0_48 = arith.constant 0 : index
    %94 = vector.load %arg14[%c0_46, %c0_47, %c0_48] : memref<1x128x128xbf16, #tpu.memory_space<vmem>>, vector<1x128x128xbf16>
    %95 = vector.shape_cast %94 : vector<1x128x128xbf16> to vector<128x128xbf16>
    %cst_49 = arith.constant dense<0.000000e+00> : vector<16x128xf32>
    %96 = tpu.matmul %93, %95, %cst_49 {dimension_numbers = #tpu.dot_dimension_numbers<[1], [0], [0], [1], [0, 0, 1, 1], [], []>} : vector<16x128xbf16>, vector<128x128xbf16>, vector<16x128xf32> -> vector<16x128xf32>
    %c0_50 = arith.constant 0 : index
    %c0_51 = arith.constant 0 : index
    %c0_52 = arith.constant 0 : index
    %97 = vector.load %arg15[%c0_50, %c0_51, %c0_52] : memref<1x1x128xf32, #tpu.memory_space<vmem>>, vector<1x1x128xf32>
    %98 = vector.shape_cast %97 : vector<1x1x128xf32> to vector<1x128xf32>
    %99 = vector.broadcast %98 : vector<1x128xf32> to vector<16x128xf32>
    %100 = arith.addf %96, %99 : vector<16x128xf32>
    %101 = arith.truncf %100 : vector<16x128xf32> to vector<16x128xbf16>
    %102 = vector.shape_cast %101 : vector<16x128xbf16> to vector<16x4x32xbf16>
    %103 = tpu.transpose %102, [1, 0, 2] : vector<16x4x32xbf16> -> vector<4x16x32xbf16>
    %104 = vector.shape_cast %103 : vector<4x16x32xbf16> to vector<8x8x32xbf16>
    %c0_53 = arith.constant 0 : index
    %c0_54 = arith.constant 0 : index
    %c0_55 = arith.constant 0 : index
    %105 = vector.load %arg16[%c0_53, %c0_54, %c0_55] : memref<1x128x128xbf16, #tpu.memory_space<vmem>>, vector<1x128x128xbf16>
    %106 = vector.shape_cast %105 : vector<1x128x128xbf16> to vector<128x128xbf16>
    %cst_56 = arith.constant dense<0.000000e+00> : vector<32x128xf32>
    %107 = tpu.matmul %7, %106, %cst_56 {dimension_numbers = #tpu.dot_dimension_numbers<[1], [0], [0], [1], [0, 0, 1, 1], [], []>} : vector<32x128xbf16>, vector<128x128xbf16>, vector<32x128xf32> -> vector<32x128xf32>
    %c0_57 = arith.constant 0 : index
    %c0_58 = arith.constant 0 : index
    %c0_59 = arith.constant 0 : index
    %108 = vector.load %arg17[%c0_57, %c0_58, %c0_59] : memref<1x1x128xf32, #tpu.memory_space<vmem>>, vector<1x1x128xf32>
    %109 = vector.shape_cast %108 : vector<1x1x128xf32> to vector<1x128xf32>
    %110 = vector.broadcast %109 : vector<1x128xf32> to vector<32x128xf32>
    %111 = arith.addf %107, %110 : vector<32x128xf32>
    %112 = arith.truncf %111 : vector<32x128xf32> to vector<32x128xbf16>
    %113 = vector.shape_cast %112 : vector<32x128xbf16> to vector<32x4x32xbf16>
    %114 = tpu.transpose %113, [1, 0, 2] : vector<32x4x32xbf16> -> vector<4x32x32xbf16>
    %115 = vector.shape_cast %114 : vector<4x32x32xbf16> to vector<8x16x32xbf16>
    %c0_60 = arith.constant 0 : index
    %c0_61 = arith.constant 0 : index
    %c0_62 = arith.constant 0 : index
    %116 = vector.load %arg18[%c0_60, %c0_61, %c0_62] : memref<1x128x128xbf16, #tpu.memory_space<vmem>>, vector<1x128x128xbf16>
    %117 = vector.shape_cast %116 : vector<1x128x128xbf16> to vector<128x128xbf16>
    %cst_63 = arith.constant dense<0.000000e+00> : vector<32x128xf32>
    %118 = tpu.matmul %9, %117, %cst_63 {dimension_numbers = #tpu.dot_dimension_numbers<[1], [0], [0], [1], [0, 0, 1, 1], [], []>} : vector<32x128xbf16>, vector<128x128xbf16>, vector<32x128xf32> -> vector<32x128xf32>
    %c0_64 = arith.constant 0 : index
    %c0_65 = arith.constant 0 : index
    %c0_66 = arith.constant 0 : index
    %119 = vector.load %arg19[%c0_64, %c0_65, %c0_66] : memref<1x1x128xf32, #tpu.memory_space<vmem>>, vector<1x1x128xf32>
    %120 = vector.shape_cast %119 : vector<1x1x128xf32> to vector<1x128xf32>
    %121 = vector.broadcast %120 : vector<1x128xf32> to vector<32x128xf32>
    %122 = arith.addf %118, %121 : vector<32x128xf32>
    %123 = arith.truncf %122 : vector<32x128xf32> to vector<32x128xbf16>
    %124 = vector.shape_cast %123 : vector<32x128xbf16> to vector<32x4x32xbf16>
    %125 = tpu.transpose %124, [1, 0, 2] : vector<32x4x32xbf16> -> vector<4x32x32xbf16>
    %126 = vector.shape_cast %125 : vector<4x32x32xbf16> to vector<8x16x32xbf16>
    "tpu.trace_start"() <{level = 10 : i32, message = "gqe,gke->gqk"}> : () -> ()
    %cst_67 = arith.constant dense<0.000000e+00> : vector<8x8x16xf32>
    %127 = tpu.matmul %104, %115, %cst_67 {dimension_numbers = #tpu.dot_dimension_numbers<[2], [2], [1], [1], [0, 0, 0, 1, 1, 1], [0], [0]>} : vector<8x8x32xbf16>, vector<8x16x32xbf16>, vector<8x8x16xf32> -> vector<8x8x16xf32>
    "tpu.trace_stop"() : () -> ()
    %cst_68 = arith.constant dense<0xFF800000> : vector<8x8xf32>
    %128 = vector.multi_reduction <maximumf>, %127, %cst_68 [2] : vector<8x8x16xf32> to vector<8x8xf32>
    %129 = vector.shape_cast %128 : vector<8x8xf32> to vector<8x8x1xf32>
    %130 = vector.broadcast %129 : vector<8x8x1xf32> to vector<8x8x16xf32>
    %131 = arith.subf %127, %130 : vector<8x8x16xf32>
    %132 = math.exp %131 : vector<8x8x16xf32>
    %cst_69 = arith.constant dense<0.000000e+00> : vector<8x8xf32>
    %133 = vector.multi_reduction <add>, %132, %cst_69 [2] : vector<8x8x16xf32> to vector<8x8xf32>
    %134 = vector.shape_cast %133 : vector<8x8xf32> to vector<8x8x1xf32>
    %135 = tpu.reciprocal %134 {approx = true} : vector<8x8x1xf32> -> vector<8x8x1xf32>
    %136 = vector.broadcast %135 : vector<8x8x1xf32> to vector<8x8x16xf32>
    %137 = arith.mulf %132, %136 : vector<8x8x16xf32>
    %138 = arith.truncf %137 : vector<8x8x16xf32> to vector<8x8x16xbf16>
    "tpu.trace_start"() <{level = 10 : i32, message = "gqk,gke->gqe"}> : () -> ()
    %cst_70 = arith.constant dense<0.000000e+00> : vector<8x8x32xf32>
    %139 = tpu.matmul %138, %126, %cst_70 {dimension_numbers = #tpu.dot_dimension_numbers<[2], [1], [1], [2], [0, 0, 0, 1, 1, 2], [0], [0]>} : vector<8x8x16xbf16>, vector<8x16x32xbf16>, vector<8x8x32xf32> -> vector<8x8x32xf32>
    "tpu.trace_stop"() : () -> ()
    %140 = vector.shape_cast %139 : vector<8x8x32xf32> to vector<4x16x32xf32>
    %141 = tpu.transpose %140, [1, 0, 2] : vector<4x16x32xf32> -> vector<16x4x32xf32>
    %142 = vector.shape_cast %141 : vector<16x4x32xf32> to vector<16x128xf32>
    %143 = arith.truncf %142 : vector<16x128xf32> to vector<16x128xbf16>
    %c0_71 = arith.constant 0 : index
    %c0_72 = arith.constant 0 : index
    %c0_73 = arith.constant 0 : index
    %144 = vector.load %arg20[%c0_71, %c0_72, %c0_73] : memref<1x128x128xbf16, #tpu.memory_space<vmem>>, vector<1x128x128xbf16>
    %145 = vector.shape_cast %144 : vector<1x128x128xbf16> to vector<128x128xbf16>
    %cst_74 = arith.constant dense<0.000000e+00> : vector<16x128xf32>
    %146 = tpu.matmul %143, %145, %cst_74 {dimension_numbers = #tpu.dot_dimension_numbers<[1], [0], [0], [1], [0, 0, 1, 1], [], []>} : vector<16x128xbf16>, vector<128x128xbf16>, vector<16x128xf32> -> vector<16x128xf32>
    %c0_75 = arith.constant 0 : index
    %c0_76 = arith.constant 0 : index
    %c0_77 = arith.constant 0 : index
    %147 = vector.load %arg21[%c0_75, %c0_76, %c0_77] : memref<1x1x128xf32, #tpu.memory_space<vmem>>, vector<1x1x128xf32>
    %148 = vector.shape_cast %147 : vector<1x1x128xf32> to vector<1x128xf32>
    %149 = vector.broadcast %148 : vector<1x128xf32> to vector<16x128xf32>
    %150 = arith.addf %146, %149 : vector<16x128xf32>
    %151 = arith.addf %91, %150 : vector<16x128xf32>
    %cst_78 = arith.constant dense<0.000000e+00> : vector<16xf32>
    %152 = vector.multi_reduction <add>, %151, %cst_78 [1] : vector<16x128xf32> to vector<16xf32>
    %153 = vector.shape_cast %152 : vector<16xf32> to vector<16x1xf32>
    %cst_79 = arith.constant 1.280000e+02 : f32
    %154 = vector.broadcast %cst_79 : f32 to vector<16x1xf32>
    %155 = arith.divf %153, %154 : vector<16x1xf32>
    %156 = vector.broadcast %155 : vector<16x1xf32> to vector<16x128xf32>
    %157 = arith.subf %151, %156 : vector<16x128xf32>
    %158 = arith.mulf %157, %157 : vector<16x128xf32>
    %cst_80 = arith.constant dense<0.000000e+00> : vector<16xf32>
    %159 = vector.multi_reduction <add>, %158, %cst_80 [1] : vector<16x128xf32> to vector<16xf32>
    %160 = vector.shape_cast %159 : vector<16xf32> to vector<16x1xf32>
    %cst_81 = arith.constant 1.280000e+02 : f32
    %161 = vector.broadcast %cst_81 : f32 to vector<16x1xf32>
    %162 = arith.divf %160, %161 : vector<16x1xf32>
    %163 = vector.broadcast %155 : vector<16x1xf32> to vector<16x128xf32>
    %164 = arith.subf %151, %163 : vector<16x128xf32>
    %cst_82 = arith.constant 9.99999974E-6 : f32
    %165 = vector.broadcast %cst_82 : f32 to vector<16x1xf32>
    %166 = arith.addf %162, %165 : vector<16x1xf32>
    %167 = math.rsqrt %166 : vector<16x1xf32>
    %168 = vector.broadcast %167 : vector<16x1xf32> to vector<16x128xf32>
    %169 = arith.mulf %164, %168 : vector<16x128xf32>
    %c0_83 = arith.constant 0 : index
    %c0_84 = arith.constant 0 : index
    %c0_85 = arith.constant 0 : index
    %170 = vector.load %arg22[%c0_83, %c0_84, %c0_85] : memref<1x1x128xf32, #tpu.memory_space<vmem>>, vector<1x1x128xf32>
    %171 = vector.shape_cast %170 : vector<1x1x128xf32> to vector<1x128xf32>
    %172 = vector.broadcast %171 : vector<1x128xf32> to vector<16x128xf32>
    %173 = arith.mulf %169, %172 : vector<16x128xf32>
    %c0_86 = arith.constant 0 : index
    %c0_87 = arith.constant 0 : index
    %c0_88 = arith.constant 0 : index
    %174 = vector.load %arg23[%c0_86, %c0_87, %c0_88] : memref<1x1x128xf32, #tpu.memory_space<vmem>>, vector<1x1x128xf32>
    %175 = vector.shape_cast %174 : vector<1x1x128xf32> to vector<1x128xf32>
    %176 = vector.broadcast %175 : vector<1x128xf32> to vector<16x128xf32>
    %177 = arith.addf %173, %176 : vector<16x128xf32>
    %178 = arith.truncf %177 : vector<16x128xf32> to vector<16x128xbf16>
    %c0_89 = arith.constant 0 : index
    %c0_90 = arith.constant 0 : index
    %c0_91 = arith.constant 0 : index
    %179 = vector.load %arg24[%c0_89, %c0_90, %c0_91] : memref<1x128x256xbf16, #tpu.memory_space<vmem>>, vector<1x128x256xbf16>
    %180 = vector.shape_cast %179 : vector<1x128x256xbf16> to vector<128x256xbf16>
    %cst_92 = arith.constant dense<0.000000e+00> : vector<16x256xf32>
    %181 = tpu.matmul %178, %180, %cst_92 {dimension_numbers = #tpu.dot_dimension_numbers<[1], [0], [0], [1], [0, 0, 1, 1], [], []>} : vector<16x128xbf16>, vector<128x256xbf16>, vector<16x256xf32> -> vector<16x256xf32>
    %c0_93 = arith.constant 0 : index
    %c0_94 = arith.constant 0 : index
    %c0_95 = arith.constant 0 : index
    %182 = vector.load %arg25[%c0_93, %c0_94, %c0_95] : memref<1x1x256xf32, #tpu.memory_space<vmem>>, vector<1x1x256xf32>
    %183 = vector.shape_cast %182 : vector<1x1x256xf32> to vector<1x256xf32>
    %184 = vector.broadcast %183 : vector<1x256xf32> to vector<16x256xf32>
    %185 = arith.addf %181, %184 : vector<16x256xf32>
    %cst_96 = arith.constant 0.000000e+00 : f32
    %186 = vector.broadcast %cst_96 : f32 to vector<16x256xf32>
    %187 = arith.maximumf %185, %186 : vector<16x256xf32>
    %188 = arith.truncf %187 : vector<16x256xf32> to vector<16x256xbf16>
    %c0_97 = arith.constant 0 : index
    %c0_98 = arith.constant 0 : index
    %c0_99 = arith.constant 0 : index
    %189 = vector.load %arg26[%c0_97, %c0_98, %c0_99] : memref<1x256x128xbf16, #tpu.memory_space<vmem>>, vector<1x256x128xbf16>
    %190 = vector.shape_cast %189 : vector<1x256x128xbf16> to vector<256x128xbf16>
    %cst_100 = arith.constant dense<0.000000e+00> : vector<16x128xf32>
    %191 = tpu.matmul %188, %190, %cst_100 {dimension_numbers = #tpu.dot_dimension_numbers<[1], [0], [0], [1], [0, 0, 1, 1], [], []>} : vector<16x256xbf16>, vector<256x128xbf16>, vector<16x128xf32> -> vector<16x128xf32>
    %c0_101 = arith.constant 0 : index
    %c0_102 = arith.constant 0 : index
    %c0_103 = arith.constant 0 : index
    %192 = vector.load %arg27[%c0_101, %c0_102, %c0_103] : memref<1x1x128xf32, #tpu.memory_space<vmem>>, vector<1x1x128xf32>
    %193 = vector.shape_cast %192 : vector<1x1x128xf32> to vector<1x128xf32>
    %194 = vector.broadcast %193 : vector<1x128xf32> to vector<16x128xf32>
    %195 = arith.addf %191, %194 : vector<16x128xf32>
    %196 = arith.addf %177, %195 : vector<16x128xf32>
    %cst_104 = arith.constant dense<0.000000e+00> : vector<16xf32>
    %197 = vector.multi_reduction <add>, %196, %cst_104 [1] : vector<16x128xf32> to vector<16xf32>
    %198 = vector.shape_cast %197 : vector<16xf32> to vector<16x1xf32>
    %cst_105 = arith.constant 1.280000e+02 : f32
    %199 = vector.broadcast %cst_105 : f32 to vector<16x1xf32>
    %200 = arith.divf %198, %199 : vector<16x1xf32>
    %201 = vector.broadcast %200 : vector<16x1xf32> to vector<16x128xf32>
    %202 = arith.subf %196, %201 : vector<16x128xf32>
    %203 = arith.mulf %202, %202 : vector<16x128xf32>
    %cst_106 = arith.constant dense<0.000000e+00> : vector<16xf32>
    %204 = vector.multi_reduction <add>, %203, %cst_106 [1] : vector<16x128xf32> to vector<16xf32>
    %205 = vector.shape_cast %204 : vector<16xf32> to vector<16x1xf32>
    %cst_107 = arith.constant 1.280000e+02 : f32
    %206 = vector.broadcast %cst_107 : f32 to vector<16x1xf32>
    %207 = arith.divf %205, %206 : vector<16x1xf32>
    %208 = vector.broadcast %200 : vector<16x1xf32> to vector<16x128xf32>
    %209 = arith.subf %196, %208 : vector<16x128xf32>
    %cst_108 = arith.constant 9.99999974E-6 : f32
    %210 = vector.broadcast %cst_108 : f32 to vector<16x1xf32>
    %211 = arith.addf %207, %210 : vector<16x1xf32>
    %212 = math.rsqrt %211 : vector<16x1xf32>
    %213 = vector.broadcast %212 : vector<16x1xf32> to vector<16x128xf32>
    %214 = arith.mulf %209, %213 : vector<16x128xf32>
    %c0_109 = arith.constant 0 : index
    %c0_110 = arith.constant 0 : index
    %c0_111 = arith.constant 0 : index
    %215 = vector.load %arg28[%c0_109, %c0_110, %c0_111] : memref<1x1x128xf32, #tpu.memory_space<vmem>>, vector<1x1x128xf32>
    %216 = vector.shape_cast %215 : vector<1x1x128xf32> to vector<1x128xf32>
    %217 = vector.broadcast %216 : vector<1x128xf32> to vector<16x128xf32>
    %218 = arith.mulf %214, %217 : vector<16x128xf32>
    %c0_112 = arith.constant 0 : index
    %c0_113 = arith.constant 0 : index
    %c0_114 = arith.constant 0 : index
    %219 = vector.load %arg29[%c0_112, %c0_113, %c0_114] : memref<1x1x128xf32, #tpu.memory_space<vmem>>, vector<1x1x128xf32>
    %220 = vector.shape_cast %219 : vector<1x1x128xf32> to vector<1x128xf32>
    %221 = vector.broadcast %220 : vector<1x128xf32> to vector<16x128xf32>
    %222 = arith.addf %218, %221 : vector<16x128xf32>
    %c0_115 = arith.constant 0 : index
    %c0_116 = arith.constant 0 : index
    %223 = vector.load %arg33[%c0_115, %c0_116] : memref<16x128xf32, #tpu.memory_space<vmem>>, vector<16x128xf32>
    tpu.vector_store %arg33[%c0_115, %c0_116], %222 {strides = array<i32>} : memref<16x128xf32, #tpu.memory_space<vmem>>, vector<16x128xf32>,
    %cst_117 = arith.constant dense<0.000000e+00> : vector<16xf32>
    %224 = vector.multi_reduction <add>, %222, %cst_117 [1] : vector<16x128xf32> to vector<16xf32>
    %225 = vector.shape_cast %224 : vector<16xf32> to vector<16x1xf32>
    %cst_118 = arith.constant 1.280000e+02 : f32
    %226 = vector.broadcast %cst_118 : f32 to vector<16x1xf32>
    %227 = arith.divf %225, %226 : vector<16x1xf32>
    %228 = vector.broadcast %227 : vector<16x1xf32> to vector<16x128xf32>
    %229 = arith.subf %222, %228 : vector<16x128xf32>
    %230 = arith.mulf %229, %229 : vector<16x128xf32>
    %cst_119 = arith.constant dense<0.000000e+00> : vector<16xf32>
    %231 = vector.multi_reduction <add>, %230, %cst_119 [1] : vector<16x128xf32> to vector<16xf32>
    %232 = vector.shape_cast %231 : vector<16xf32> to vector<16x1xf32>
    %cst_120 = arith.constant 1.280000e+02 : f32
    %233 = vector.broadcast %cst_120 : f32 to vector<16x1xf32>
    %234 = arith.divf %232, %233 : vector<16x1xf32>
    %235 = vector.broadcast %227 : vector<16x1xf32> to vector<16x128xf32>
    %236 = arith.subf %222, %235 : vector<16x128xf32>
    %cst_121 = arith.constant 9.99999974E-6 : f32
    %237 = vector.broadcast %cst_121 : f32 to vector<16x1xf32>
    %238 = arith.addf %234, %237 : vector<16x1xf32>
    %239 = math.rsqrt %238 : vector<16x1xf32>
    %240 = vector.broadcast %239 : vector<16x1xf32> to vector<16x128xf32>
    %241 = arith.mulf %236, %240 : vector<16x128xf32>
    %c0_122 = arith.constant 0 : index
    %c0_123 = arith.constant 0 : index
    %242 = vector.load %arg30[%c0_122, %c0_123] : memref<1x128xf32, #tpu.memory_space<vmem>>, vector<1x128xf32>
    %243 = vector.broadcast %242 : vector<1x128xf32> to vector<16x128xf32>
    %244 = arith.mulf %241, %243 : vector<16x128xf32>
    %c0_124 = arith.constant 0 : index
    %c0_125 = arith.constant 0 : index
    %245 = vector.load %arg31[%c0_124, %c0_125] : memref<1x128xf32, #tpu.memory_space<vmem>>, vector<1x128xf32>
    %246 = vector.broadcast %245 : vector<1x128xf32> to vector<16x128xf32>
    %247 = arith.addf %244, %246 : vector<16x128xf32>
    %248 = vector.shape_cast %247 : vector<16x128xf32> to vector<2x8x128xf32>
    %c0_126 = arith.constant 0 : index
    %c0_127 = arith.constant 0 : index
    %c0_128 = arith.constant 0 : index
    %c0_129 = arith.constant 0 : index
    %249 = vector.load %arg32[%c0_126, %c0_127, %c0_128, %c0_129] : memref<1x2x8x128xf32, #tpu.memory_space<vmem>>, vector<1x2x8x128xf32>
    %250 = vector.shape_cast %249 : vector<1x2x8x128xf32> to vector<2x8x128xf32>
    %251 = vector.shape_cast %248 : vector<2x8x128xf32> to vector<1x2x8x128xf32>
    tpu.vector_store %arg32[%c0_126, %c0_127, %c0_128, %c0_129], %251 {strides = array<i32>} : memref<1x2x8x128xf32, #tpu.memory_space<vmem>>, vector<1x2x8x128xf32>,
    return
  }
  func.func @transform_0(%arg0: i32, %arg1: i32) -> (i32, i32, i32) {
    %c0_i32 = arith.constant 0 : i32
    %c0_i32_0 = arith.constant 0 : i32
    %c0_i32_1 = arith.constant 0 : i32
    return %arg0, %c0_i32, %c0_i32_0 : i32, i32, i32
  }
  func.func @transform_1(%arg0: i32, %arg1: i32) -> (i32, i32, i32) {
    %c0_i32 = arith.constant 0 : i32
    %c0_i32_0 = arith.constant 0 : i32
    %c0_i32_1 = arith.constant 0 : i32
    return %arg0, %c0_i32, %c0_i32_0 : i32, i32, i32
  }
  func.func @transform_2(%arg0: i32, %arg1: i32) -> (i32, i32, i32) {
    %c0_i32 = arith.constant 0 : i32
    %c0_i32_0 = arith.constant 0 : i32
    %c0_i32_1 = arith.constant 0 : i32
    return %arg0, %c0_i32, %c0_i32_0 : i32, i32, i32
  }
  func.func @transform_3(%arg0: i32, %arg1: i32) -> (i32, i32, i32) {
    %c0_i32 = arith.constant 0 : i32
    %c0_i32_0 = arith.constant 0 : i32
    %c0_i32_1 = arith.constant 0 : i32
    return %arg0, %c0_i32, %c0_i32_0 : i32, i32, i32
  }
  func.func @transform_4(%arg0: i32, %arg1: i32) -> (i32, i32, i32) {
    %c0_i32 = arith.constant 0 : i32
    %c0_i32_0 = arith.constant 0 : i32
    %c0_i32_1 = arith.constant 0 : i32
    return %arg1, %c0_i32, %c0_i32_0 : i32, i32, i32
  }
  func.func @transform_5(%arg0: i32, %arg1: i32) -> (i32, i32, i32) {
    %c0_i32 = arith.constant 0 : i32
    %c0_i32_0 = arith.constant 0 : i32
    %c0_i32_1 = arith.constant 0 : i32
    return %arg1, %c0_i32, %c0_i32_0 : i32, i32, i32
  }
  func.func @transform_6(%arg0: i32, %arg1: i32) -> (i32, i32, i32) {
    %c0_i32 = arith.constant 0 : i32
    %c0_i32_0 = arith.constant 0 : i32
    %c0_i32_1 = arith.constant 0 : i32
    return %arg1, %c0_i32, %c0_i32_0 : i32, i32, i32
  }
  func.func @transform_7(%arg0: i32, %arg1: i32) -> (i32, i32, i32) {
    %c0_i32 = arith.constant 0 : i32
    %c0_i32_0 = arith.constant 0 : i32
    %c0_i32_1 = arith.constant 0 : i32
    return %arg1, %c0_i32, %c0_i32_0 : i32, i32, i32
  }
  func.func @transform_8(%arg0: i32, %arg1: i32) -> (i32, i32, i32) {
    %c0_i32 = arith.constant 0 : i32
    %c0_i32_0 = arith.constant 0 : i32
    %c0_i32_1 = arith.constant 0 : i32
    return %arg1, %c0_i32, %c0_i32_0 : i32, i32, i32
  }
  func.func @transform_9(%arg0: i32, %arg1: i32) -> (i32, i32, i32) {
    %c0_i32 = arith.constant 0 : i32
    %c0_i32_0 = arith.constant 0 : i32
    %c0_i32_1 = arith.constant 0 : i32
    return %arg1, %c0_i32, %c0_i32_0 : i32, i32, i32
  }
  func.func @transform_10(%arg0: i32, %arg1: i32) -> (i32, i32, i32) {
    %c0_i32 = arith.constant 0 : i32
    %c0_i32_0 = arith.constant 0 : i32
    %c0_i32_1 = arith.constant 0 : i32
    return %arg1, %c0_i32, %c0_i32_0 : i32, i32, i32
  }
  func.func @transform_11(%arg0: i32, %arg1: i32) -> (i32, i32, i32) {
    %c0_i32 = arith.constant 0 : i32
    %c0_i32_0 = arith.constant 0 : i32
    %c0_i32_1 = arith.constant 0 : i32
    return %arg1, %c0_i32, %c0_i32_0 : i32, i32, i32
  }
  func.func @transform_12(%arg0: i32, %arg1: i32) -> (i32, i32, i32) {
    %c0_i32 = arith.constant 0 : i32
    %c0_i32_0 = arith.constant 0 : i32
    %c0_i32_1 = arith.constant 0 : i32
    return %arg1, %c0_i32, %c0_i32_0 : i32, i32, i32
  }
  func.func @transform_13(%arg0: i32, %arg1: i32) -> (i32, i32, i32) {
    %c0_i32 = arith.constant 0 : i32
    %c0_i32_0 = arith.constant 0 : i32
    %c0_i32_1 = arith.constant 0 : i32
    return %arg1, %c0_i32, %c0_i32_0 : i32, i32, i32
  }
  func.func @transform_14(%arg0: i32, %arg1: i32) -> (i32, i32, i32) {
    %c0_i32 = arith.constant 0 : i32
    %c0_i32_0 = arith.constant 0 : i32
    %c0_i32_1 = arith.constant 0 : i32
    return %arg1, %c0_i32, %c0_i32_0 : i32, i32, i32
  }
  func.func @transform_15(%arg0: i32, %arg1: i32) -> (i32, i32, i32) {
    %c0_i32 = arith.constant 0 : i32
    %c0_i32_0 = arith.constant 0 : i32
    %c0_i32_1 = arith.constant 0 : i32
    return %arg1, %c0_i32, %c0_i32_0 : i32, i32, i32
  }
  func.func @transform_16(%arg0: i32, %arg1: i32) -> (i32, i32, i32) {
    %c0_i32 = arith.constant 0 : i32
    %c0_i32_0 = arith.constant 0 : i32
    %c0_i32_1 = arith.constant 0 : i32
    return %arg1, %c0_i32, %c0_i32_0 : i32, i32, i32
  }
  func.func @transform_17(%arg0: i32, %arg1: i32) -> (i32, i32, i32) {
    %c0_i32 = arith.constant 0 : i32
    %c0_i32_0 = arith.constant 0 : i32
    %c0_i32_1 = arith.constant 0 : i32
    return %arg1, %c0_i32, %c0_i32_0 : i32, i32, i32
  }
  func.func @transform_18(%arg0: i32, %arg1: i32) -> (i32, i32, i32) {
    %c0_i32 = arith.constant 0 : i32
    %c0_i32_0 = arith.constant 0 : i32
    %c0_i32_1 = arith.constant 0 : i32
    return %arg1, %c0_i32, %c0_i32_0 : i32, i32, i32
  }
  func.func @transform_19(%arg0: i32, %arg1: i32) -> (i32, i32, i32) {
    %c0_i32 = arith.constant 0 : i32
    %c0_i32_0 = arith.constant 0 : i32
    %c0_i32_1 = arith.constant 0 : i32
    return %arg1, %c0_i32, %c0_i32_0 : i32, i32, i32
  }
  func.func @transform_20(%arg0: i32, %arg1: i32) -> (i32, i32, i32) {
    %c0_i32 = arith.constant 0 : i32
    %c0_i32_0 = arith.constant 0 : i32
    %c0_i32_1 = arith.constant 0 : i32
    return %arg1, %c0_i32, %c0_i32_0 : i32, i32, i32
  }
  func.func @transform_21(%arg0: i32, %arg1: i32) -> (i32, i32, i32) {
    %c0_i32 = arith.constant 0 : i32
    %c0_i32_0 = arith.constant 0 : i32
    %c0_i32_1 = arith.constant 0 : i32
    return %arg1, %c0_i32, %c0_i32_0 : i32, i32, i32
  }
  func.func @transform_22(%arg0: i32, %arg1: i32) -> (i32, i32, i32) {
    %c0_i32 = arith.constant 0 : i32
    %c0_i32_0 = arith.constant 0 : i32
    %c0_i32_1 = arith.constant 0 : i32
    return %arg1, %c0_i32, %c0_i32_0 : i32, i32, i32
  }
  func.func @transform_23(%arg0: i32, %arg1: i32) -> (i32, i32, i32) {
    %c0_i32 = arith.constant 0 : i32
    %c0_i32_0 = arith.constant 0 : i32
    %c0_i32_1 = arith.constant 0 : i32
    return %arg1, %c0_i32, %c0_i32_0 : i32, i32, i32
  }
  func.func @transform_24(%arg0: i32, %arg1: i32) -> (i32, i32, i32) {
    %c0_i32 = arith.constant 0 : i32
    %c0_i32_0 = arith.constant 0 : i32
    %c0_i32_1 = arith.constant 0 : i32
    return %arg1, %c0_i32, %c0_i32_0 : i32, i32, i32
  }
  func.func @transform_25(%arg0: i32, %arg1: i32) -> (i32, i32, i32) {
    %c0_i32 = arith.constant 0 : i32
    %c0_i32_0 = arith.constant 0 : i32
    %c0_i32_1 = arith.constant 0 : i32
    return %arg1, %c0_i32, %c0_i32_0 : i32, i32, i32
  }
  func.func @transform_26(%arg0: i32, %arg1: i32) -> (i32, i32, i32) {
    %c0_i32 = arith.constant 0 : i32
    %c0_i32_0 = arith.constant 0 : i32
    %c0_i32_1 = arith.constant 0 : i32
    return %arg1, %c0_i32, %c0_i32_0 : i32, i32, i32
  }
  func.func @transform_27(%arg0: i32, %arg1: i32) -> (i32, i32, i32) {
    %c0_i32 = arith.constant 0 : i32
    %c0_i32_0 = arith.constant 0 : i32
    %c0_i32_1 = arith.constant 0 : i32
    return %arg1, %c0_i32, %c0_i32_0 : i32, i32, i32
  }
  func.func @transform_28(%arg0: i32, %arg1: i32) -> (i32, i32) {
    %c0_i32 = arith.constant 0 : i32
    %c0_i32_0 = arith.constant 0 : i32
    %c0_i32_1 = arith.constant 0 : i32
    return %c0_i32, %c0_i32_0 : i32, i32
  }
  func.func @transform_29(%arg0: i32, %arg1: i32) -> (i32, i32) {
    %c0_i32 = arith.constant 0 : i32
    %c0_i32_0 = arith.constant 0 : i32
    %c0_i32_1 = arith.constant 0 : i32
    return %c0_i32, %c0_i32_0 : i32, i32
  }
  func.func @transform_30(%arg0: i32, %arg1: i32) -> (i32, i32, i32, i32) {
    %c0_i32 = arith.constant 0 : i32
    %c0_i32_0 = arith.constant 0 : i32
    %c0_i32_1 = arith.constant 0 : i32
    return %arg1, %arg0, %c0_i32, %c0_i32_0 : i32, i32, i32, i32
  }
}

</mosaic_0001>

<llo_original>
// kernel: tpu_custom_call.1
$region0: #{tpu_custom_call.1}
  #allocation0 [shape = 'u32[]', space=smem, size = 0x4, offset = 0x4, fixed_abs, tag = 'smem constant byte address 0x4 - core index']
  #allocation1 [shape = 'u32[144,128]{1,0:T(1,128)}', space=vmem, size = 0x12000, scoped, tag = 'internal scratch']
  #allocation2 [shape = 'f32[16,128]{1,0:T(8,128)}', space=vmem, size = 0x2000, scoped, tag = 'scratch operand']
  %s0 = inlined_call_operand.smem [shape: u32[31], index: -1, kind: input, shape index: {}]
  %s1 = sld [smem:[%s0]]
  %s2 = scalar_lea.smem %s0, 1
  %s3 = sld [smem:[%s2]]
  %s4 = scalar_lea.smem %s0, 2
  %s5 = sld [smem:[%s4]]
  %s6 = scalar_lea.smem %s0, 3
  %s7 = sld [smem:[%s6]]
  %s8 = scalar_lea.smem %s0, 4
  %s9 = sld [smem:[%s8]]
  %s10 = scalar_lea.smem %s0, 5
  %s11 = sld [smem:[%s10]]
  %s12 = scalar_lea.smem %s0, 6
  %s13 = sld [smem:[%s12]]
  %s14 = scalar_lea.smem %s0, 7
  %s15 = sld [smem:[%s14]]
  %s16 = scalar_lea.smem %s0, 8
  %s17 = sld [smem:[%s16]]
  %s18 = scalar_lea.smem %s0, 9
  %s19 = sld [smem:[%s18]]
  %s20 = scalar_lea.smem %s0, 10
  %s21 = sld [smem:[%s20]]
  %s22 = scalar_lea.smem %s0, 11
  %s23 = sld [smem:[%s22]]
  %s24 = scalar_lea.smem %s0, 12
  %s25 = sld [smem:[%s24]]
  %s26 = scalar_lea.smem %s0, 13
  %s27 = sld [smem:[%s26]]
  %s28 = scalar_lea.smem %s0, 14
  %s29 = sld [smem:[%s28]]
  %s30 = scalar_lea.smem %s0, 15
  %s31 = sld [smem:[%s30]]
  %s32 = scalar_lea.smem %s0, 16
  %s33 = sld [smem:[%s32]]
  %s34 = scalar_lea.smem %s0, 17
  %s35 = sld [smem:[%s34]]
  %s36 = scalar_lea.smem %s0, 18
  %s37 = sld [smem:[%s36]]
  %s38 = scalar_lea.smem %s0, 19
  %s39 = sld [smem:[%s38]]
  %s40 = scalar_lea.smem %s0, 20
  %s41 = sld [smem:[%s40]]
  %s42 = scalar_lea.smem %s0, 21
  %s43 = sld [smem:[%s42]]
  %s44 = scalar_lea.smem %s0, 22
  %s45 = sld [smem:[%s44]]
  %s46 = scalar_lea.smem %s0, 23
  %s47 = sld [smem:[%s46]]
  %s48 = scalar_lea.smem %s0, 24
  %s49 = sld [smem:[%s48]]
  %s50 = scalar_lea.smem %s0, 25
  %s51 = sld [smem:[%s50]]
  %s52 = scalar_lea.smem %s0, 26
  %s53 = sld [smem:[%s52]]
  %s54 = scalar_lea.smem %s0, 27
  %s55 = sld [smem:[%s54]]
  %s56 = scalar_lea.smem %s0, 28
  %s57 = sld [smem:[%s56]]
  %s58 = scalar_lea.smem %s0, 29
  %s59 = sld [smem:[%s58]]
  %s60 = scalar_lea.smem %s0, 30
  %s61 = sld [smem:[%s60]]
  %s62 = sld [smem:[#allocation0]]
  $region209: #{tpu_custom_call.1} parent=0
    _
  %s64 = ssub.s32 1, %s62
  %s65 = scalar_select 0, %s64, %s62
  $region1: #{tpu_custom_call.1} parent=0
    #allocation3 [shape = 'u8[8192]{0}', space=vmem, size = 0x2000, scoped, tag = 'input window, operand 0, single buffered']
    #allocation4 [shape = 's32[2]{0}', space=sflag, size = 0x8, scoped, tag = 'scoped memory for tpu_custom_call.1']
    #allocation5 [shape = 's32[2]{0}', space=sflag, size = 0x8, scoped, tag = 'scoped memory for tpu_custom_call.1']
    #allocation6 [shape = 'u8[8192]{0}', space=vmem, size = 0x2000, scoped, tag = 'input window, operand 1, single buffered']
    #allocation7 [shape = 's32[1]{0}', space=sflag, size = 0x4, scoped, tag = 'scoped memory for tpu_custom_call.1']
    #allocation8 [shape = 'u8[8192]{0}', space=vmem, size = 0x2000, scoped, tag = 'input window, operand 2, single buffered']
    #allocation9 [shape = 'u8[8192]{0}', space=vmem, size = 0x2000, scoped, tag = 'input window, operand 3, single buffered']
    #allocation10 [shape = 's32[1]{0}', space=sflag, size = 0x4, scoped, tag = 'scoped memory for tpu_custom_call.1']
    #allocation11 [shape = 'u8[131072]{0}', space=vmem, size = 0x20000, scoped, tag = 'input window, operand 4']
    #allocation12 [shape = 'u8[65536]{0}', space=vmem, size = 0x10000, scoped, tag = 'input window, operand 6']
    #allocation13 [shape = 'u8[65536]{0}', space=vmem, size = 0x10000, scoped, tag = 'input window, operand 8']
    #allocation14 [shape = 'u8[65536]{0}', space=vmem, size = 0x10000, scoped, tag = 'input window, operand 12']
    #allocation15 [shape = 'u8[65536]{0}', space=vmem, size = 0x10000, scoped, tag = 'input window, operand 14']
    #allocation16 [shape = 'u8[65536]{0}', space=vmem, size = 0x10000, scoped, tag = 'input window, operand 16']
    #allocation17 [shape = 'u8[65536]{0}', space=vmem, size = 0x10000, scoped, tag = 'input window, operand 18']
    #allocation18 [shape = 'u8[131072]{0}', space=vmem, size = 0x20000, scoped, tag = 'input window, operand 22']
    #allocation19 [shape = 'u8[131072]{0}', space=vmem, size = 0x20000, scoped, tag = 'input window, operand 24']
    #allocation20 [shape = 'u8[16384]{0}', space=vmem, size = 0x4000, scoped, tag = 'output window, operand 0']
    %66 = vsyncpa [#allocation4], 0
    %67 = vsyncpa [#allocation7], 0
    %68 = vsyncpa [#allocation10], 0
    %69 = vsyncpa [#allocation5], 0
    %s70 = scalar_lea.sflag [#allocation5], 1
    %71 = vsyncpa %s70, 0
    loop: start=0, step=1, limit=4
    $region2: #{tpu_custom_call.1} parent=1 // loop_pre_header
      _
    $region3: #{tpu_custom_call.1} parent=1 // loop_header
      %s73 = sphi 0, %s77
      %p74 = scmp.ge.s32.totalorder %s73, 4
      %s80 = sphi 0, %s92
      %s81 = sphi 0, %s88
      %s82 = sphi 0, %s80
      %s83 = sphi 0, %s81
      %s84 = sphi 0, %s82
      %s85 = sphi 0, %s83
      %s95 = sphi 0, %s97
      %s98 = sphi 0, %s95
      %s99 = sphi 0, %s98
      %s115 = sphi 0, %s99
      %s121 = sphi 0, %s123
      %s124 = sphi 0, %s121
      %s125 = sphi 0, %s124
      %s141 = sphi 0, %s125
      %s147 = sphi 0, %s149
      %s150 = sphi 0, %s147
      %s151 = sphi 0, %s150
      %s167 = sphi 0, %s151
      %s173 = sphi 0, %s175
      %s176 = sphi 0, %s173
      %s177 = sphi 0, %s176
      %s193 = sphi 0, %s177
      %s199 = sphi 0, %s201
      %s202 = sphi 0, %s199
      %s203 = sphi 0, %s202
      %s219 = sphi 0, %s203
      %s225 = sphi 0, %s227
      %s228 = sphi 0, %s225
      %s229 = sphi 0, %s228
      %s245 = sphi 0, %s229
      %s251 = sphi 0, %s253
      %s254 = sphi 0, %s251
      %s255 = sphi 0, %s254
      %s271 = sphi 0, %s255
      %s277 = sphi 0, %s279
      %s280 = sphi 0, %s277
      %s281 = sphi 0, %s280
      %s297 = sphi 0, %s281
      %s303 = sphi 0, %s305
      %s306 = sphi 0, %s303
      %s307 = sphi 0, %s306
      %s323 = sphi 0, %s307
      %s329 = sphi 0, %s331
      %s332 = sphi 0, %s329
      %s333 = sphi 0, %s332
      %s349 = sphi 0, %s333
      %s355 = sphi 0, %s357
      %s358 = sphi 0, %s355
      %s359 = sphi 0, %s358
      %s375 = sphi 0, %s359
      %s381 = sphi 0, %s383
      %s384 = sphi 0, %s381
      %s385 = sphi 0, %s384
      %s401 = sphi 0, %s385
      %s407 = sphi 0, %s409
      %s410 = sphi 0, %s407
      %s411 = sphi 0, %s410
      %s427 = sphi 0, %s411
      %s433 = sphi 0, %s435
      %s436 = sphi 0, %s433
      %s437 = sphi 0, %s436
      %s453 = sphi 0, %s437
      %s459 = sphi 0, %s461
      %s462 = sphi 0, %s459
      %s463 = sphi 0, %s462
      %s479 = sphi 0, %s463
      %s485 = sphi 0, %s487
      %s488 = sphi 0, %s485
      %s489 = sphi 0, %s488
      %s505 = sphi 0, %s489
      %s511 = sphi 0, %s513
      %s514 = sphi 0, %s511
      %s515 = sphi 0, %s514
      %s531 = sphi 0, %s515
      %s537 = sphi 0, %s539
      %s540 = sphi 0, %s537
      %s541 = sphi 0, %s540
      %s557 = sphi 0, %s541
      %s563 = sphi 0, %s565
      %s566 = sphi 0, %s563
      %s567 = sphi 0, %s566
      %s583 = sphi 0, %s567
      %s589 = sphi 0, %s591
      %s592 = sphi 0, %s589
      %s593 = sphi 0, %s592
      %s609 = sphi 0, %s593
      %s615 = sphi 0, %s617
      %s618 = sphi 0, %s615
      %s619 = sphi 0, %s618
      %s635 = sphi 0, %s619
      %s641 = sphi 0, %s643
      %s644 = sphi 0, %s641
      %s645 = sphi 0, %s644
      %s661 = sphi 0, %s645
      %s667 = sphi 0, %s669
      %s670 = sphi 0, %s667
      %s671 = sphi 0, %s670
      %s687 = sphi 0, %s671
      %s693 = sphi 0, %s695
      %s696 = sphi 0, %s693
      %s697 = sphi 0, %s696
      %s713 = sphi 0, %s697
      %s719 = sphi 0, %s721
      %s722 = sphi 0, %s719
      %s723 = sphi 0, %s722
      %s739 = sphi 0, %s723
      %s745 = sphi 0, %s747
      %s748 = sphi 0, %s745
      %s749 = sphi 0, %s748
      %s765 = sphi 0, %s749
      %s771 = sphi 0, %s773
      %s774 = sphi 0, %s771
      %s775 = sphi 0, %s774
      %s791 = sphi 0, %s775
      %s797 = sphi 0, %s799
      %s800 = sphi 0, %s797
      %s801 = sphi 0, %s800
      %s817 = sphi 0, %s801
      %s821 = sphi 0, %s821
      %s823 = sphi 0, %s821
      %s824 = sphi 0, %s823
      %s838 = sphi 0, %s824
      %s842 = sphi 0, %s842
      %s844 = sphi 0, %s842
      %s845 = sphi 0, %s844
      %s859 = sphi 0, %s845
      %s867 = sphi 0, %s869
      %s870 = sphi 0, %s867
      %s871 = sphi 0, %s870
      %s887 = sphi 0, %s871
    $region4: #{tpu_custom_call.1} parent=1 // loop_header_branch
      %76 = sbr.rel (%p74) target = $region8
    $region5: #{tpu_custom_call.1} parent=1 // loop_body
      %s78 = ssub.s32 %s73, 1
      %s79 = ssub.s32 %s73, 2
      %s86 = sadd.s32 1, %s81
      %p87 = scmp.ge.s32.totalorder %s86, 2
      %s88 = scalar_select %p87, 0, %s86
      %s89 = sadd.s32 1, %s80
      %s90 = scalar_select %p87, %s89, %s80
      %p91 = scmp.ge.s32.totalorder %s90, 1
      %s92 = scalar_select %p91, 0, %s90
      %s93 = ssub.s32 %s80, %s92
      %p94 = scmp.eq.s32.totalorder %s93, 0
      %s96 = sadd.s32 %s95, 1
      %s97 = scalar_select %p94, %s95, %s96
      %p100 = pneg %p94
      %p101 = scmp.eq.s32.totalorder %s73, 1
      %p102 = por %p100, %p101
      %p103 = scmp.ne.s32.totalorder %s95, %s98
      %p104 = scmp.eq.s32.totalorder %s73, 0
      %p105 = por %p103, %p104
      %p106 = scmp.ne.s32.totalorder %s95, %s98
      %p107 = scmp.eq.s32.totalorder %s78, 1
      %p108 = por %p106, %p107
      %p109 = scmp.ne.s32.totalorder %s98, %s99
      %p110 = scmp.eq.s32.totalorder %s78, 0
      %p111 = por %p109, %p110
      %p112 = scmp.ne.s32.totalorder %s98, %s99
      %p113 = scmp.eq.s32.totalorder %s79, 1
      %p114 = por %p112, %p113
      %p116 = scmp.ne.s32.totalorder %s99, %s115
      %p117 = scmp.eq.s32.totalorder %s79, 0
      %p118 = por %p116, %p117
      %s119 = ssub.s32 %s80, %s92
      %p120 = scmp.eq.s32.totalorder %s119, 0
      %s122 = sadd.s32 %s121, 1
      %s123 = scalar_select %p120, %s121, %s122
      %p126 = pneg %p120
      %p127 = scmp.eq.s32.totalorder %s73, 1
      %p128 = por %p126, %p127
      %p129 = scmp.ne.s32.totalorder %s121, %s124
      %p130 = scmp.eq.s32.totalorder %s73, 0
      %p131 = por %p129, %p130
      %p132 = scmp.ne.s32.totalorder %s121, %s124
      %p133 = scmp.eq.s32.totalorder %s78, 1
      %p134 = por %p132, %p133
      %p135 = scmp.ne.s32.totalorder %s124, %s125
      %p136 = scmp.eq.s32.totalorder %s78, 0
      %p137 = por %p135, %p136
      %p138 = scmp.ne.s32.totalorder %s124, %s125
      %p139 = scmp.eq.s32.totalorder %s79, 1
      %p140 = por %p138, %p139
      %p142 = scmp.ne.s32.totalorder %s125, %s141
      %p143 = scmp.eq.s32.totalorder %s79, 0
      %p144 = por %p142, %p143
      %s145 = ssub.s32 %s80, %s92
      %p146 = scmp.eq.s32.totalorder %s145, 0
      %s148 = sadd.s32 %s147, 1
      %s149 = scalar_select %p146, %s147, %s148
      %p152 = pneg %p146
      %p153 = scmp.eq.s32.totalorder %s73, 1
      %p154 = por %p152, %p153
      %p155 = scmp.ne.s32.totalorder %s147, %s150
      %p156 = scmp.eq.s32.totalorder %s73, 0
      %p157 = por %p155, %p156
      %p158 = scmp.ne.s32.totalorder %s147, %s150
      %p159 = scmp.eq.s32.totalorder %s78, 1
      %p160 = por %p158, %p159
      %p161 = scmp.ne.s32.totalorder %s150, %s151
      %p162 = scmp.eq.s32.totalorder %s78, 0
      %p163 = por %p161, %p162
      %p164 = scmp.ne.s32.totalorder %s150, %s151
      %p165 = scmp.eq.s32.totalorder %s79, 1
      %p166 = por %p164, %p165
      %p168 = scmp.ne.s32.totalorder %s151, %s167
      %p169 = scmp.eq.s32.totalorder %s79, 0
      %p170 = por %p168, %p169
      %s171 = ssub.s32 %s80, %s92
      %p172 = scmp.eq.s32.totalorder %s171, 0
      %s174 = sadd.s32 %s173, 1
      %s175 = scalar_select %p172, %s173, %s174
      %p178 = pneg %p172
      %p179 = scmp.eq.s32.totalorder %s73, 1
      %p180 = por %p178, %p179
      %p181 = scmp.ne.s32.totalorder %s173, %s176
      %p182 = scmp.eq.s32.totalorder %s73, 0
      %p183 = por %p181, %p182
      %p184 = scmp.ne.s32.totalorder %s173, %s176
      %p185 = scmp.eq.s32.totalorder %s78, 1
      %p186 = por %p184, %p185
      %p187 = scmp.ne.s32.totalorder %s176, %s177
      %p188 = scmp.eq.s32.totalorder %s78, 0
      %p189 = por %p187, %p188
      %p190 = scmp.ne.s32.totalorder %s176, %s177
      %p191 = scmp.eq.s32.totalorder %s79, 1
      %p192 = por %p190, %p191
      %p194 = scmp.ne.s32.totalorder %s177, %s193
      %p195 = scmp.eq.s32.totalorder %s79, 0
      %p196 = por %p194, %p195
      %s197 = ssub.s32 %s81, %s88
      %p198 = scmp.eq.s32.totalorder %s197, 0
      %s200 = sadd.s32 %s199, 1
      %s201 = scalar_select %p198, %s199, %s200
      %p204 = pneg %p198
      %p205 = scmp.eq.s32.totalorder %s73, 1
      %p206 = por %p204, %p205
      %p207 = scmp.ne.s32.totalorder %s199, %s202
      %p208 = scmp.eq.s32.totalorder %s73, 0
      %p209 = por %p207, %p208
      %p210 = scmp.ne.s32.totalorder %s199, %s202
      %p211 = scmp.eq.s32.totalorder %s78, 1
      %p212 = por %p210, %p211
      %p213 = scmp.ne.s32.totalorder %s202, %s203
      %p214 = scmp.eq.s32.totalorder %s78, 0
      %p215 = por %p213, %p214
      %p216 = scmp.ne.s32.totalorder %s202, %s203
      %p217 = scmp.eq.s32.totalorder %s79, 1
      %p218 = por %p216, %p217
      %p220 = scmp.ne.s32.totalorder %s203, %s219
      %p221 = scmp.eq.s32.totalorder %s79, 0
      %p222 = por %p220, %p221
      %s223 = ssub.s32 %s81, %s88
      %p224 = scmp.eq.s32.totalorder %s223, 0
      %s226 = sadd.s32 %s225, 1
      %s227 = scalar_select %p224, %s225, %s226
      %p230 = pneg %p224
      %p231 = scmp.eq.s32.totalorder %s73, 1
      %p232 = por %p230, %p231
      %p233 = scmp.ne.s32.totalorder %s225, %s228
      %p234 = scmp.eq.s32.totalorder %s73, 0
      %p235 = por %p233, %p234
      %p236 = scmp.ne.s32.totalorder %s225, %s228
      %p237 = scmp.eq.s32.totalorder %s78, 1
      %p238 = por %p236, %p237
      %p239 = scmp.ne.s32.totalorder %s228, %s229
      %p240 = scmp.eq.s32.totalorder %s78, 0
      %p241 = por %p239, %p240
      %p242 = scmp.ne.s32.totalorder %s228, %s229
      %p243 = scmp.eq.s32.totalorder %s79, 1
      %p244 = por %p242, %p243
      %p246 = scmp.ne.s32.totalorder %s229, %s245
      %p247 = scmp.eq.s32.totalorder %s79, 0
      %p248 = por %p246, %p247
      %s249 = ssub.s32 %s81, %s88
      %p250 = scmp.eq.s32.totalorder %s249, 0
      %s252 = sadd.s32 %s251, 1
      %s253 = scalar_select %p250, %s251, %s252
      %p256 = pneg %p250
      %p257 = scmp.eq.s32.totalorder %s73, 1
      %p258 = por %p256, %p257
      %p259 = scmp.ne.s32.totalorder %s251, %s254
      %p260 = scmp.eq.s32.totalorder %s73, 0
      %p261 = por %p259, %p260
      %p262 = scmp.ne.s32.totalorder %s251, %s254
      %p263 = scmp.eq.s32.totalorder %s78, 1
      %p264 = por %p262, %p263
      %p265 = scmp.ne.s32.totalorder %s254, %s255
      %p266 = scmp.eq.s32.totalorder %s78, 0
      %p267 = por %p265, %p266
      %p268 = scmp.ne.s32.totalorder %s254, %s255
      %p269 = scmp.eq.s32.totalorder %s79, 1
      %p270 = por %p268, %p269
      %p272 = scmp.ne.s32.totalorder %s255, %s271
      %p273 = scmp.eq.s32.totalorder %s79, 0
      %p274 = por %p272, %p273
      %s275 = ssub.s32 %s81, %s88
      %p276 = scmp.eq.s32.totalorder %s275, 0
      %s278 = sadd.s32 %s277, 1
      %s279 = scalar_select %p276, %s277, %s278
      %p282 = pneg %p276
      %p283 = scmp.eq.s32.totalorder %s73, 1
      %p284 = por %p282, %p283
      %p285 = scmp.ne.s32.totalorder %s277, %s280
      %p286 = scmp.eq.s32.totalorder %s73, 0
      %p287 = por %p285, %p286
      %p288 = scmp.ne.s32.totalorder %s277, %s280
      %p289 = scmp.eq.s32.totalorder %s78, 1
      %p290 = por %p288, %p289
      %p291 = scmp.ne.s32.totalorder %s280, %s281
      %p292 = scmp.eq.s32.totalorder %s78, 0
      %p293 = por %p291, %p292
      %p294 = scmp.ne.s32.totalorder %s280, %s281
      %p295 = scmp.eq.s32.totalorder %s79, 1
      %p296 = por %p294, %p295
      %p298 = scmp.ne.s32.totalorder %s281, %s297
      %p299 = scmp.eq.s32.totalorder %s79, 0
      %p300 = por %p298, %p299
      %s301 = ssub.s32 %s81, %s88
      %p302 = scmp.eq.s32.totalorder %s301, 0
      %s304 = sadd.s32 %s303, 1
      %s305 = scalar_select %p302, %s303, %s304
      %p308 = pneg %p302
      %p309 = scmp.eq.s32.totalorder %s73, 1
      %p310 = por %p308, %p309
      %p311 = scmp.ne.s32.totalorder %s303, %s306
      %p312 = scmp.eq.s32.totalorder %s73, 0
      %p313 = por %p311, %p312
      %p314 = scmp.ne.s32.totalorder %s303, %s306
      %p315 = scmp.eq.s32.totalorder %s78, 1
      %p316 = por %p314, %p315
      %p317 = scmp.ne.s32.totalorder %s306, %s307
      %p318 = scmp.eq.s32.totalorder %s78, 0
      %p319 = por %p317, %p318
      %p320 = scmp.ne.s32.totalorder %s306, %s307
      %p321 = scmp.eq.s32.totalorder %s79, 1
      %p322 = por %p320, %p321
      %p324 = scmp.ne.s32.totalorder %s307, %s323
      %p325 = scmp.eq.s32.totalorder %s79, 0
      %p326 = por %p324, %p325
      %s327 = ssub.s32 %s81, %s88
      %p328 = scmp.eq.s32.totalorder %s327, 0
      %s330 = sadd.s32 %s329, 1
      %s331 = scalar_select %p328, %s329, %s330
      %p334 = pneg %p328
      %p335 = scmp.eq.s32.totalorder %s73, 1
      %p336 = por %p334, %p335
      %p337 = scmp.ne.s32.totalorder %s329, %s332
      %p338 = scmp.eq.s32.totalorder %s73, 0
      %p339 = por %p337, %p338
      %p340 = scmp.ne.s32.totalorder %s329, %s332
      %p341 = scmp.eq.s32.totalorder %s78, 1
      %p342 = por %p340, %p341
      %p343 = scmp.ne.s32.totalorder %s332, %s333
      %p344 = scmp.eq.s32.totalorder %s78, 0
      %p345 = por %p343, %p344
      %p346 = scmp.ne.s32.totalorder %s332, %s333
      %p347 = scmp.eq.s32.totalorder %s79, 1
      %p348 = por %p346, %p347
      %p350 = scmp.ne.s32.totalorder %s333, %s349
      %p351 = scmp.eq.s32.totalorder %s79, 0
      %p352 = por %p350, %p351
      %s353 = ssub.s32 %s81, %s88
      %p354 = scmp.eq.s32.totalorder %s353, 0
      %s356 = sadd.s32 %s355, 1
      %s357 = scalar_select %p354, %s355, %s356
      %p360 = pneg %p354
      %p361 = scmp.eq.s32.totalorder %s73, 1
      %p362 = por %p360, %p361
      %p363 = scmp.ne.s32.totalorder %s355, %s358
      %p364 = scmp.eq.s32.totalorder %s73, 0
      %p365 = por %p363, %p364
      %p366 = scmp.ne.s32.totalorder %s355, %s358
      %p367 = scmp.eq.s32.totalorder %s78, 1
      %p368 = por %p366, %p367
      %p369 = scmp.ne.s32.totalorder %s358, %s359
      %p370 = scmp.eq.s32.totalorder %s78, 0
      %p371 = por %p369, %p370
      %p372 = scmp.ne.s32.totalorder %s358, %s359
      %p373 = scmp.eq.s32.totalorder %s79, 1
      %p374 = por %p372, %p373
      %p376 = scmp.ne.s32.totalorder %s359, %s375
      %p377 = scmp.eq.s32.totalorder %s79, 0
      %p378 = por %p376, %p377
      %s379 = ssub.s32 %s81, %s88
      %p380 = scmp.eq.s32.totalorder %s379, 0
      %s382 = sadd.s32 %s381, 1
      %s383 = scalar_select %p380, %s381, %s382
      %p386 = pneg %p380
      %p387 = scmp.eq.s32.totalorder %s73, 1
      %p388 = por %p386, %p387
      %p389 = scmp.ne.s32.totalorder %s381, %s384
      %p390 = scmp.eq.s32.totalorder %s73, 0
      %p391 = por %p389, %p390
      %p392 = scmp.ne.s32.totalorder %s381, %s384
      %p393 = scmp.eq.s32.totalorder %s78, 1
      %p394 = por %p392, %p393
      %p395 = scmp.ne.s32.totalorder %s384, %s385
      %p396 = scmp.eq.s32.totalorder %s78, 0
      %p397 = por %p395, %p396
      %p398 = scmp.ne.s32.totalorder %s384, %s385
      %p399 = scmp.eq.s32.totalorder %s79, 1
      %p400 = por %p398, %p399
      %p402 = scmp.ne.s32.totalorder %s385, %s401
      %p403 = scmp.eq.s32.totalorder %s79, 0
      %p404 = por %p402, %p403
      %s405 = ssub.s32 %s81, %s88
      %p406 = scmp.eq.s32.totalorder %s405, 0
      %s408 = sadd.s32 %s407, 1
      %s409 = scalar_select %p406, %s407, %s408
      %p412 = pneg %p406
      %p413 = scmp.eq.s32.totalorder %s73, 1
      %p414 = por %p412, %p413
      %p415 = scmp.ne.s32.totalorder %s407, %s410
      %p416 = scmp.eq.s32.totalorder %s73, 0
      %p417 = por %p415, %p416
      %p418 = scmp.ne.s32.totalorder %s407, %s410
      %p419 = scmp.eq.s32.totalorder %s78, 1
      %p420 = por %p418, %p419
      %p421 = scmp.ne.s32.totalorder %s410, %s411
      %p422 = scmp.eq.s32.totalorder %s78, 0
      %p423 = por %p421, %p422
      %p424 = scmp.ne.s32.totalorder %s410, %s411
      %p425 = scmp.eq.s32.totalorder %s79, 1
      %p426 = por %p424, %p425
      %p428 = scmp.ne.s32.totalorder %s411, %s427
      %p429 = scmp.eq.s32.totalorder %s79, 0
      %p430 = por %p428, %p429
      %s431 = ssub.s32 %s81, %s88
      %p432 = scmp.eq.s32.totalorder %s431, 0
      %s434 = sadd.s32 %s433, 1
      %s435 = scalar_select %p432, %s433, %s434
      %p438 = pneg %p432
      %p439 = scmp.eq.s32.totalorder %s73, 1
      %p440 = por %p438, %p439
      %p441 = scmp.ne.s32.totalorder %s433, %s436
      %p442 = scmp.eq.s32.totalorder %s73, 0
      %p443 = por %p441, %p442
      %p444 = scmp.ne.s32.totalorder %s433, %s436
      %p445 = scmp.eq.s32.totalorder %s78, 1
      %p446 = por %p444, %p445
      %p447 = scmp.ne.s32.totalorder %s436, %s437
      %p448 = scmp.eq.s32.totalorder %s78, 0
      %p449 = por %p447, %p448
      %p450 = scmp.ne.s32.totalorder %s436, %s437
      %p451 = scmp.eq.s32.totalorder %s79, 1
      %p452 = por %p450, %p451
      %p454 = scmp.ne.s32.totalorder %s437, %s453
      %p455 = scmp.eq.s32.totalorder %s79, 0
      %p456 = por %p454, %p455
      %s457 = ssub.s32 %s81, %s88
      %p458 = scmp.eq.s32.totalorder %s457, 0
      %s460 = sadd.s32 %s459, 1
      %s461 = scalar_select %p458, %s459, %s460
      %p464 = pneg %p458
      %p465 = scmp.eq.s32.totalorder %s73, 1
      %p466 = por %p464, %p465
      %p467 = scmp.ne.s32.totalorder %s459, %s462
      %p468 = scmp.eq.s32.totalorder %s73, 0
      %p469 = por %p467, %p468
      %p470 = scmp.ne.s32.totalorder %s459, %s462
      %p471 = scmp.eq.s32.totalorder %s78, 1
      %p472 = por %p470, %p471
      %p473 = scmp.ne.s32.totalorder %s462, %s463
      %p474 = scmp.eq.s32.totalorder %s78, 0
      %p475 = por %p473, %p474
      %p476 = scmp.ne.s32.totalorder %s462, %s463
      %p477 = scmp.eq.s32.totalorder %s79, 1
      %p478 = por %p476, %p477
      %p480 = scmp.ne.s32.totalorder %s463, %s479
      %p481 = scmp.eq.s32.totalorder %s79, 0
      %p482 = por %p480, %p481
      %s483 = ssub.s32 %s81, %s88
      %p484 = scmp.eq.s32.totalorder %s483, 0
      %s486 = sadd.s32 %s485, 1
      %s487 = scalar_select %p484, %s485, %s486
      %p490 = pneg %p484
      %p491 = scmp.eq.s32.totalorder %s73, 1
      %p492 = por %p490, %p491
      %p493 = scmp.ne.s32.totalorder %s485, %s488
      %p494 = scmp.eq.s32.totalorder %s73, 0
      %p495 = por %p493, %p494
      %p496 = scmp.ne.s32.totalorder %s485, %s488
      %p497 = scmp.eq.s32.totalorder %s78, 1
      %p498 = por %p496, %p497
      %p499 = scmp.ne.s32.totalorder %s488, %s489
      %p500 = scmp.eq.s32.totalorder %s78, 0
      %p501 = por %p499, %p500
      %p502 = scmp.ne.s32.totalorder %s488, %s489
      %p503 = scmp.eq.s32.totalorder %s79, 1
      %p504 = por %p502, %p503
      %p506 = scmp.ne.s32.totalorder %s489, %s505
      %p507 = scmp.eq.s32.totalorder %s79, 0
      %p508 = por %p506, %p507
      %s509 = ssub.s32 %s81, %s88
      %p510 = scmp.eq.s32.totalorder %s509, 0
      %s512 = sadd.s32 %s511, 1
      %s513 = scalar_select %p510, %s511, %s512
      %p516 = pneg %p510
      %p517 = scmp.eq.s32.totalorder %s73, 1
      %p518 = por %p516, %p517
      %p519 = scmp.ne.s32.totalorder %s511, %s514
      %p520 = scmp.eq.s32.totalorder %s73, 0
      %p521 = por %p519, %p520
      %p522 = scmp.ne.s32.totalorder %s511, %s514
      %p523 = scmp.eq.s32.totalorder %s78, 1
      %p524 = por %p522, %p523
      %p525 = scmp.ne.s32.totalorder %s514, %s515
      %p526 = scmp.eq.s32.totalorder %s78, 0
      %p527 = por %p525, %p526
      %p528 = scmp.ne.s32.totalorder %s514, %s515
      %p529 = scmp.eq.s32.totalorder %s79, 1
      %p530 = por %p528, %p529
      %p532 = scmp.ne.s32.totalorder %s515, %s531
      %p533 = scmp.eq.s32.totalorder %s79, 0
      %p534 = por %p532, %p533
      %s535 = ssub.s32 %s81, %s88
      %p536 = scmp.eq.s32.totalorder %s535, 0
      %s538 = sadd.s32 %s537, 1
      %s539 = scalar_select %p536, %s537, %s538
      %p542 = pneg %p536
      %p543 = scmp.eq.s32.totalorder %s73, 1
      %p544 = por %p542, %p543
      %p545 = scmp.ne.s32.totalorder %s537, %s540
      %p546 = scmp.eq.s32.totalorder %s73, 0
      %p547 = por %p545, %p546
      %p548 = scmp.ne.s32.totalorder %s537, %s540
      %p549 = scmp.eq.s32.totalorder %s78, 1
      %p550 = por %p548, %p549
      %p551 = scmp.ne.s32.totalorder %s540, %s541
      %p552 = scmp.eq.s32.totalorder %s78, 0
      %p553 = por %p551, %p552
      %p554 = scmp.ne.s32.totalorder %s540, %s541
      %p555 = scmp.eq.s32.totalorder %s79, 1
      %p556 = por %p554, %p555
      %p558 = scmp.ne.s32.totalorder %s541, %s557
      %p559 = scmp.eq.s32.totalorder %s79, 0
      %p560 = por %p558, %p559
      %s561 = ssub.s32 %s81, %s88
      %p562 = scmp.eq.s32.totalorder %s561, 0
      %s564 = sadd.s32 %s563, 1
      %s565 = scalar_select %p562, %s563, %s564
      %p568 = pneg %p562
      %p569 = scmp.eq.s32.totalorder %s73, 1
      %p570 = por %p568, %p569
      %p571 = scmp.ne.s32.totalorder %s563, %s566
      %p572 = scmp.eq.s32.totalorder %s73, 0
      %p573 = por %p571, %p572
      %p574 = scmp.ne.s32.totalorder %s563, %s566
      %p575 = scmp.eq.s32.totalorder %s78, 1
      %p576 = por %p574, %p575
      %p577 = scmp.ne.s32.totalorder %s566, %s567
      %p578 = scmp.eq.s32.totalorder %s78, 0
      %p579 = por %p577, %p578
      %p580 = scmp.ne.s32.totalorder %s566, %s567
      %p581 = scmp.eq.s32.totalorder %s79, 1
      %p582 = por %p580, %p581
      %p584 = scmp.ne.s32.totalorder %s567, %s583
      %p585 = scmp.eq.s32.totalorder %s79, 0
      %p586 = por %p584, %p585
      %s587 = ssub.s32 %s81, %s88
      %p588 = scmp.eq.s32.totalorder %s587, 0
      %s590 = sadd.s32 %s589, 1
      %s591 = scalar_select %p588, %s589, %s590
      %p594 = pneg %p588
      %p595 = scmp.eq.s32.totalorder %s73, 1
      %p596 = por %p594, %p595
      %p597 = scmp.ne.s32.totalorder %s589, %s592
      %p598 = scmp.eq.s32.totalorder %s73, 0
      %p599 = por %p597, %p598
      %p600 = scmp.ne.s32.totalorder %s589, %s592
      %p601 = scmp.eq.s32.totalorder %s78, 1
      %p602 = por %p600, %p601
      %p603 = scmp.ne.s32.totalorder %s592, %s593
      %p604 = scmp.eq.s32.totalorder %s78, 0
      %p605 = por %p603, %p604
      %p606 = scmp.ne.s32.totalorder %s592, %s593
      %p607 = scmp.eq.s32.totalorder %s79, 1
      %p608 = por %p606, %p607
      %p610 = scmp.ne.s32.totalorder %s593, %s609
      %p611 = scmp.eq.s32.totalorder %s79, 0
      %p612 = por %p610, %p611
      %s613 = ssub.s32 %s81, %s88
      %p614 = scmp.eq.s32.totalorder %s613, 0
      %s616 = sadd.s32 %s615, 1
      %s617 = scalar_select %p614, %s615, %s616
      %p620 = pneg %p614
      %p621 = scmp.eq.s32.totalorder %s73, 1
      %p622 = por %p620, %p621
      %p623 = scmp.ne.s32.totalorder %s615, %s618
      %p624 = scmp.eq.s32.totalorder %s73, 0
      %p625 = por %p623, %p624
      %p626 = scmp.ne.s32.totalorder %s615, %s618
      %p627 = scmp.eq.s32.totalorder %s78, 1
      %p628 = por %p626, %p627
      %p629 = scmp.ne.s32.totalorder %s618, %s619
      %p630 = scmp.eq.s32.totalorder %s78, 0
      %p631 = por %p629, %p630
      %p632 = scmp.ne.s32.totalorder %s618, %s619
      %p633 = scmp.eq.s32.totalorder %s79, 1
      %p634 = por %p632, %p633
      %p636 = scmp.ne.s32.totalorder %s619, %s635
      %p637 = scmp.eq.s32.totalorder %s79, 0
      %p638 = por %p636, %p637
      %s639 = ssub.s32 %s81, %s88
      %p640 = scmp.eq.s32.totalorder %s639, 0
      %s642 = sadd.s32 %s641, 1
      %s643 = scalar_select %p640, %s641, %s642
      %p646 = pneg %p640
      %p647 = scmp.eq.s32.totalorder %s73, 1
      %p648 = por %p646, %p647
      %p649 = scmp.ne.s32.totalorder %s641, %s644
      %p650 = scmp.eq.s32.totalorder %s73, 0
      %p651 = por %p649, %p650
      %p652 = scmp.ne.s32.totalorder %s641, %s644
      %p653 = scmp.eq.s32.totalorder %s78, 1
      %p654 = por %p652, %p653
      %p655 = scmp.ne.s32.totalorder %s644, %s645
      %p656 = scmp.eq.s32.totalorder %s78, 0
      %p657 = por %p655, %p656
      %p658 = scmp.ne.s32.totalorder %s644, %s645
      %p659 = scmp.eq.s32.totalorder %s79, 1
      %p660 = por %p658, %p659
      %p662 = scmp.ne.s32.totalorder %s645, %s661
      %p663 = scmp.eq.s32.totalorder %s79, 0
      %p664 = por %p662, %p663
      %s665 = ssub.s32 %s81, %s88
      %p666 = scmp.eq.s32.totalorder %s665, 0
      %s668 = sadd.s32 %s667, 1
      %s669 = scalar_select %p666, %s667, %s668
      %p672 = pneg %p666
      %p673 = scmp.eq.s32.totalorder %s73, 1
      %p674 = por %p672, %p673
      %p675 = scmp.ne.s32.totalorder %s667, %s670
      %p676 = scmp.eq.s32.totalorder %s73, 0
      %p677 = por %p675, %p676
      %p678 = scmp.ne.s32.totalorder %s667, %s670
      %p679 = scmp.eq.s32.totalorder %s78, 1
      %p680 = por %p678, %p679
      %p681 = scmp.ne.s32.totalorder %s670, %s671
      %p682 = scmp.eq.s32.totalorder %s78, 0
      %p683 = por %p681, %p682
      %p684 = scmp.ne.s32.totalorder %s670, %s671
      %p685 = scmp.eq.s32.totalorder %s79, 1
      %p686 = por %p684, %p685
      %p688 = scmp.ne.s32.totalorder %s671, %s687
      %p689 = scmp.eq.s32.totalorder %s79, 0
      %p690 = por %p688, %p689
      %s691 = ssub.s32 %s81, %s88
      %p692 = scmp.eq.s32.totalorder %s691, 0
      %s694 = sadd.s32 %s693, 1
      %s695 = scalar_select %p692, %s693, %s694
      %p698 = pneg %p692
      %p699 = scmp.eq.s32.totalorder %s73, 1
      %p700 = por %p698, %p699
      %p701 = scmp.ne.s32.totalorder %s693, %s696
      %p702 = scmp.eq.s32.totalorder %s73, 0
      %p703 = por %p701, %p702
      %p704 = scmp.ne.s32.totalorder %s693, %s696
      %p705 = scmp.eq.s32.totalorder %s78, 1
      %p706 = por %p704, %p705
      %p707 = scmp.ne.s32.totalorder %s696, %s697
      %p708 = scmp.eq.s32.totalorder %s78, 0
      %p709 = por %p707, %p708
      %p710 = scmp.ne.s32.totalorder %s696, %s697
      %p711 = scmp.eq.s32.totalorder %s79, 1
      %p712 = por %p710, %p711
      %p714 = scmp.ne.s32.totalorder %s697, %s713
      %p715 = scmp.eq.s32.totalorder %s79, 0
      %p716 = por %p714, %p715
      %s717 = ssub.s32 %s81, %s88
      %p718 = scmp.eq.s32.totalorder %s717, 0
      %s720 = sadd.s32 %s719, 1
      %s721 = scalar_select %p718, %s719, %s720
      %p724 = pneg %p718
      %p725 = scmp.eq.s32.totalorder %s73, 1
      %p726 = por %p724, %p725
      %p727 = scmp.ne.s32.totalorder %s719, %s722
      %p728 = scmp.eq.s32.totalorder %s73, 0
      %p729 = por %p727, %p728
      %p730 = scmp.ne.s32.totalorder %s719, %s722
      %p731 = scmp.eq.s32.totalorder %s78, 1
      %p732 = por %p730, %p731
      %p733 = scmp.ne.s32.totalorder %s722, %s723
      %p734 = scmp.eq.s32.totalorder %s78, 0
      %p735 = por %p733, %p734
      %p736 = scmp.ne.s32.totalorder %s722, %s723
      %p737 = scmp.eq.s32.totalorder %s79, 1
      %p738 = por %p736, %p737
      %p740 = scmp.ne.s32.totalorder %s723, %s739
      %p741 = scmp.eq.s32.totalorder %s79, 0
      %p742 = por %p740, %p741
      %s743 = ssub.s32 %s81, %s88
      %p744 = scmp.eq.s32.totalorder %s743, 0
      %s746 = sadd.s32 %s745, 1
      %s747 = scalar_select %p744, %s745, %s746
      %p750 = pneg %p744
      %p751 = scmp.eq.s32.totalorder %s73, 1
      %p752 = por %p750, %p751
      %p753 = scmp.ne.s32.totalorder %s745, %s748
      %p754 = scmp.eq.s32.totalorder %s73, 0
      %p755 = por %p753, %p754
      %p756 = scmp.ne.s32.totalorder %s745, %s748
      %p757 = scmp.eq.s32.totalorder %s78, 1
      %p758 = por %p756, %p757
      %p759 = scmp.ne.s32.totalorder %s748, %s749
      %p760 = scmp.eq.s32.totalorder %s78, 0
      %p761 = por %p759, %p760
      %p762 = scmp.ne.s32.totalorder %s748, %s749
      %p763 = scmp.eq.s32.totalorder %s79, 1
      %p764 = por %p762, %p763
      %p766 = scmp.ne.s32.totalorder %s749, %s765
      %p767 = scmp.eq.s32.totalorder %s79, 0
      %p768 = por %p766, %p767
      %s769 = ssub.s32 %s81, %s88
      %p770 = scmp.eq.s32.totalorder %s769, 0
      %s772 = sadd.s32 %s771, 1
      %s773 = scalar_select %p770, %s771, %s772
      %p776 = pneg %p770
      %p777 = scmp.eq.s32.totalorder %s73, 1
      %p778 = por %p776, %p777
      %p779 = scmp.ne.s32.totalorder %s771, %s774
      %p780 = scmp.eq.s32.totalorder %s73, 0
      %p781 = por %p779, %p780
      %p782 = scmp.ne.s32.totalorder %s771, %s774
      %p783 = scmp.eq.s32.totalorder %s78, 1
      %p784 = por %p782, %p783
      %p785 = scmp.ne.s32.totalorder %s774, %s775
      %p786 = scmp.eq.s32.totalorder %s78, 0
      %p787 = por %p785, %p786
      %p788 = scmp.ne.s32.totalorder %s774, %s775
      %p789 = scmp.eq.s32.totalorder %s79, 1
      %p790 = por %p788, %p789
      %p792 = scmp.ne.s32.totalorder %s775, %s791
      %p793 = scmp.eq.s32.totalorder %s79, 0
      %p794 = por %p792, %p793
      %s795 = ssub.s32 %s81, %s88
      %p796 = scmp.eq.s32.totalorder %s795, 0
      %s798 = sadd.s32 %s797, 1
      %s799 = scalar_select %p796, %s797, %s798
      %p802 = pneg %p796
      %p803 = scmp.eq.s32.totalorder %s73, 1
      %p804 = por %p802, %p803
      %p805 = scmp.ne.s32.totalorder %s797, %s800
      %p806 = scmp.eq.s32.totalorder %s73, 0
      %p807 = por %p805, %p806
      %p808 = scmp.ne.s32.totalorder %s797, %s800
      %p809 = scmp.eq.s32.totalorder %s78, 1
      %p810 = por %p808, %p809
      %p811 = scmp.ne.s32.totalorder %s800, %s801
      %p812 = scmp.eq.s32.totalorder %s78, 0
      %p813 = por %p811, %p812
      %p814 = scmp.ne.s32.totalorder %s800, %s801
      %p815 = scmp.eq.s32.totalorder %s79, 1
      %p816 = por %p814, %p815
      %p818 = scmp.ne.s32.totalorder %s801, %s817
      %p819 = scmp.eq.s32.totalorder %s79, 0
      %p820 = por %p818, %p819
      %s822 = sadd.s32 %s821, 1
      %p825 = scmp.eq.s32.totalorder %s73, 1
      %p826 = scmp.ne.s32.totalorder %s821, %s823
      %p827 = scmp.eq.s32.totalorder %s73, 0
      %p828 = por %p826, %p827
      %p829 = scmp.ne.s32.totalorder %s821, %s823
      %p830 = scmp.eq.s32.totalorder %s78, 1
      %p831 = por %p829, %p830
      %p832 = scmp.ne.s32.totalorder %s823, %s824
      %p833 = scmp.eq.s32.totalorder %s78, 0
      %p834 = por %p832, %p833
      %p835 = scmp.ne.s32.totalorder %s823, %s824
      %p836 = scmp.eq.s32.totalorder %s79, 1
      %p837 = por %p835, %p836
      %p839 = scmp.ne.s32.totalorder %s824, %s838
      %p840 = scmp.eq.s32.totalorder %s79, 0
      %p841 = por %p839, %p840
      %s843 = sadd.s32 %s842, 1
      %p846 = scmp.eq.s32.totalorder %s73, 1
      %p847 = scmp.ne.s32.totalorder %s842, %s844
      %p848 = scmp.eq.s32.totalorder %s73, 0
      %p849 = por %p847, %p848
      %p850 = scmp.ne.s32.totalorder %s842, %s844
      %p851 = scmp.eq.s32.totalorder %s78, 1
      %p852 = por %p850, %p851
      %p853 = scmp.ne.s32.totalorder %s844, %s845
      %p854 = scmp.eq.s32.totalorder %s78, 0
      %p855 = por %p853, %p854
      %p856 = scmp.ne.s32.totalorder %s844, %s845
      %p857 = scmp.eq.s32.totalorder %s79, 1
      %p858 = por %p856, %p857
      %p860 = scmp.ne.s32.totalorder %s845, %s859
      %p861 = scmp.eq.s32.totalorder %s79, 0
      %p862 = por %p860, %p861
      %s863 = ssub.s32 %s81, %s88
      %s864 = ssub.s32 %s80, %s92
      %s865 = sor.u32 %s863, %s864
      %p866 = scmp.eq.s32.totalorder %s865, 0
      %s868 = sadd.s32 %s867, 1
      %s869 = scalar_select %p866, %s867, %s868
      %p872 = pneg %p866
      %p873 = scmp.eq.s32.totalorder %s73, 1
      %p874 = por %p872, %p873
      %p875 = scmp.ne.s32.totalorder %s867, %s870
      %p876 = scmp.eq.s32.totalorder %s73, 0
      %p877 = por %p875, %p876
      %p878 = scmp.ne.s32.totalorder %s867, %s870
      %p879 = scmp.eq.s32.totalorder %s78, 1
      %p880 = por %p878, %p879
      %p881 = scmp.ne.s32.totalorder %s870, %s871
      %p882 = scmp.eq.s32.totalorder %s78, 0
      %p883 = por %p881, %p882
      %p884 = scmp.ne.s32.totalorder %s870, %s871
      %p885 = scmp.eq.s32.totalorder %s79, 1
      %p886 = por %p884, %p885
      %p888 = scmp.ne.s32.totalorder %s871, %s887
      %p889 = scmp.eq.s32.totalorder %s79, 0
      %p890 = por %p888, %p889
      %p891 = scmp.le.s32.totalorder 1, %s73
      %p892 = scmp.lt.s32.totalorder %s73, 3
      %p893 = pnand %p891, %p892
      %p894 = pneg %p893
      // Predicated region
      $region9: #{tpu_custom_call.1} parent=5 // pred_check
        _
      $region10: #{tpu_custom_call.1} parent=5 // pred_check_branch
        %896 = sbr.rel (%p893) target = $region12
      $region11: #{tpu_custom_call.1} parent=5 // pred_region
        %s897 = ssub.s32 %s73, 1
        // Predicated region
        $region13: #{tpu_custom_call.1} parent=11 // pred_check
          %p898 = pneg %p111
        $region14: #{tpu_custom_call.1} parent=11 // pred_check_branch
          %900 = sbr.rel (%p898) target = $region16
        $region15: #{tpu_custom_call.1} parent=11 // pred_region
          %s901 = smul.u32 2, %s82
          %s903 = ssub.s32 256, 256
          %904 = vsyncadd [#allocation4], %s903
          %s905 = smul.addr %s901, 128
          %s906 = scalar_lea.hbm %s1, %s905
          %s907 = sshll.u32 [#allocation3], 4
          %s908 = int_to_ptr.vmem [resolvable:$true] %s907
          %913 = dma.hbm_to_vmem [thread:$0]  %s906, 256, %s908, [#allocation4], 128, 128, 8
        $region16: #{tpu_custom_call.1} parent=11 // pred_fallthru
          _
        // Predicated region
        $region17: #{tpu_custom_call.1} parent=11 // pred_check
          %p914 = pneg %p137
        $region18: #{tpu_custom_call.1} parent=11 // pred_check_branch
          %916 = sbr.rel (%p914) target = $region20
        $region19: #{tpu_custom_call.1} parent=11 // pred_region
          %s917 = smul.u32 2, %s82
          %s919 = ssub.s32 256, 256
          %920 = vsyncadd [#allocation7], %s919
          %s921 = smul.addr %s917, 2
          %s922 = smul.addr %s921, 64
          %s923 = scalar_lea.hbm %s3, %s922
          %s924 = sshll.u32 [#allocation6], 4
          %s925 = int_to_ptr.vmem [resolvable:$true] %s924
          %930 = dma.hbm_to_vmem [thread:$0]  %s923, 256, %s925, [#allocation7], 64, 64, 4
        $region20: #{tpu_custom_call.1} parent=11 // pred_fallthru
          _
        // Predicated region
        $region21: #{tpu_custom_call.1} parent=11 // pred_check
          %p931 = pneg %p163
        $region22: #{tpu_custom_call.1} parent=11 // pred_check_branch
          %933 = sbr.rel (%p931) target = $region24
        $region23: #{tpu_custom_call.1} parent=11 // pred_region
          %s934 = smul.u32 2, %s82
          %s936 = ssub.s32 256, 256
          %937 = vsyncadd [#allocation7], %s936
          %s938 = smul.addr %s934, 2
          %s939 = smul.addr %s938, 64
          %s940 = scalar_lea.hbm %s5, %s939
          %s941 = sshll.u32 [#allocation8], 4
          %s942 = int_to_ptr.vmem [resolvable:$true] %s941
          %947 = dma.hbm_to_vmem [thread:$0]  %s940, 256, %s942, [#allocation7], 64, 64, 4
        $region24: #{tpu_custom_call.1} parent=11 // pred_fallthru
          _
        // Predicated region
        $region25: #{tpu_custom_call.1} parent=11 // pred_check
          %p948 = pneg %p189
        $region26: #{tpu_custom_call.1} parent=11 // pred_check_branch
          %950 = sbr.rel (%p948) target = $region28
        $region27: #{tpu_custom_call.1} parent=11 // pred_region
          %s951 = smul.u32 2, %s82
          %s953 = ssub.s32 256, 256
          %954 = vsyncadd [#allocation10], %s953
          %s955 = smul.addr %s951, 128
          %s956 = scalar_lea.hbm %s7, %s955
          %s957 = sshll.u32 [#allocation9], 4
          %s958 = int_to_ptr.vmem [resolvable:$true] %s957
          %963 = dma.hbm_to_vmem [thread:$0]  %s956, 256, %s958, [#allocation10], 128, 128, 8
        $region28: #{tpu_custom_call.1} parent=11 // pred_fallthru
          _
        // Predicated region
        $region29: #{tpu_custom_call.1} parent=11 // pred_check
          %p964 = pneg %p834
        $region30: #{tpu_custom_call.1} parent=11 // pred_check_branch
          %966 = sbr.rel (%p964) target = $region32
        $region31: #{tpu_custom_call.1} parent=11 // pred_region
          _
        $region32: #{tpu_custom_call.1} parent=11 // pred_fallthru
          _
        // Predicated region
        $region33: #{tpu_custom_call.1} parent=11 // pred_check
          %p967 = pneg %p855
        $region34: #{tpu_custom_call.1} parent=11 // pred_check_branch
          %969 = sbr.rel (%p967) target = $region36
        $region35: #{tpu_custom_call.1} parent=11 // pred_region
          _
        $region36: #{tpu_custom_call.1} parent=11 // pred_fallthru
          _
      $region12: #{tpu_custom_call.1} parent=5 // pred_fallthru
        _
      %p970 = scmp.lt.s32.totalorder %s73, 2
      // Predicated region
      $region37: #{tpu_custom_call.1} parent=5 // pred_check
        %p971 = pneg %p970
      $region38: #{tpu_custom_call.1} parent=5 // pred_check_branch
        %973 = sbr.rel (%p971) target = $region40
      $region39: #{tpu_custom_call.1} parent=5 // pred_region
        // Predicated region
        $region41: #{tpu_custom_call.1} parent=39 // pred_check
          %p974 = pneg %p209
        $region42: #{tpu_custom_call.1} parent=39 // pred_check_branch
          %976 = sbr.rel (%p974) target = $region44
        $region43: #{tpu_custom_call.1} parent=39 // pred_region
          %s977 = sand.u32 %s73, 1
          %s978 = scalar_lea.sflag [#allocation4], %s977
          %s979 = sand.u32 %s199, 1
          %s980 = smul.addr %s979, 128
          %s981 = scalar_lea.vmem [#allocation11], %s980
          %s983 = ssub.s32 2048, 2048
          %984 = vsyncadd %s978, %s983
          %s985 = smul.addr %s81, 32
          %s986 = smul.addr %s985, 64
          %s987 = scalar_lea.hbm %s9, %s986
          %s988 = sshll.u32 %s981, 4
          %s989 = int_to_ptr.vmem [resolvable:$true] %s988
          %994 = dma.hbm_to_vmem [thread:$0]  %s987, 2048, %s989, %s978, 128, 128, 8
        $region44: #{tpu_custom_call.1} parent=39 // pred_fallthru
          _
        // Predicated region
        $region45: #{tpu_custom_call.1} parent=39 // pred_check
          %p995 = pneg %p235
        $region46: #{tpu_custom_call.1} parent=39 // pred_check_branch
          %997 = sbr.rel (%p995) target = $region48
        $region47: #{tpu_custom_call.1} parent=39 // pred_region
          %p998 = scmp.lt.s32.totalorder %s81, 1
          %s999 = scalar_select %p998, %s81, 1
          %s1000 = smul.addr %s999, 2
          %s1001 = scalar_lea.vmem %s11, %s1000
        $region48: #{tpu_custom_call.1} parent=39 // pred_fallthru
          _
        // Predicated region
        $region49: #{tpu_custom_call.1} parent=39 // pred_check
          %p1002 = pneg %p261
        $region50: #{tpu_custom_call.1} parent=39 // pred_check_branch
          %1004 = sbr.rel (%p1002) target = $region52
        $region51: #{tpu_custom_call.1} parent=39 // pred_region
          %s1005 = sand.u32 %s73, 1
          %s1006 = scalar_lea.sflag [#allocation4], %s1005
          %s1007 = sand.u32 %s251, 1
          %s1008 = smul.addr %s1007, 64
          %s1009 = scalar_lea.vmem [#allocation12], %s1008
          %s1011 = ssub.s32 1024, 1024
          %1012 = vsyncadd %s1006, %s1011
          %s1013 = smul.addr %s81, 16
          %s1014 = smul.addr %s1013, 64
          %s1015 = scalar_lea.hbm %s13, %s1014
          %s1016 = sshll.u32 %s1009, 4
          %s1017 = int_to_ptr.vmem [resolvable:$true] %s1016
          %1022 = dma.hbm_to_vmem [thread:$0]  %s1015, 1024, %s1017, %s1006, 64, 64, 4
        $region52: #{tpu_custom_call.1} parent=39 // pred_fallthru
          _
        // Predicated region
        $region53: #{tpu_custom_call.1} parent=39 // pred_check
          %p1023 = pneg %p287
        $region54: #{tpu_custom_call.1} parent=39 // pred_check_branch
          %1025 = sbr.rel (%p1023) target = $region56
        $region55: #{tpu_custom_call.1} parent=39 // pred_region
          %p1026 = scmp.lt.s32.totalorder %s81, 1
          %s1027 = scalar_select %p1026, %s81, 1
          %s1028 = scalar_lea.vmem %s15, %s1027
        $region56: #{tpu_custom_call.1} parent=39 // pred_fallthru
          _
        // Predicated region
        $region57: #{tpu_custom_call.1} parent=39 // pred_check
          %p1029 = pneg %p313
        $region58: #{tpu_custom_call.1} parent=39 // pred_check_branch
          %1031 = sbr.rel (%p1029) target = $region60
        $region59: #{tpu_custom_call.1} parent=39 // pred_region
          %s1032 = sand.u32 %s73, 1
          %s1033 = scalar_lea.sflag [#allocation4], %s1032
          %s1034 = sand.u32 %s303, 1
          %s1035 = smul.addr %s1034, 64
          %s1036 = scalar_lea.vmem [#allocation13], %s1035
          %s1038 = ssub.s32 1024, 1024
          %1039 = vsyncadd %s1033, %s1038
          %s1040 = smul.addr %s81, 16
          %s1041 = smul.addr %s1040, 64
          %s1042 = scalar_lea.hbm %s17, %s1041
          %s1043 = sshll.u32 %s1036, 4
          %s1044 = int_to_ptr.vmem [resolvable:$true] %s1043
          %1049 = dma.hbm_to_vmem [thread:$0]  %s1042, 1024, %s1044, %s1033, 64, 64, 4
        $region60: #{tpu_custom_call.1} parent=39 // pred_fallthru
          _
        // Predicated region
        $region61: #{tpu_custom_call.1} parent=39 // pred_check
          %p1050 = pneg %p339
        $region62: #{tpu_custom_call.1} parent=39 // pred_check_branch
          %1052 = sbr.rel (%p1050) target = $region64
        $region63: #{tpu_custom_call.1} parent=39 // pred_region
          %p1053 = scmp.lt.s32.totalorder %s81, 1
          %s1054 = scalar_select %p1053, %s81, 1
          %s1055 = scalar_lea.vmem %s19, %s1054
        $region64: #{tpu_custom_call.1} parent=39 // pred_fallthru
          _
        // Predicated region
        $region65: #{tpu_custom_call.1} parent=39 // pred_check
          %p1056 = pneg %p365
        $region66: #{tpu_custom_call.1} parent=39 // pred_check_branch
          %1058 = sbr.rel (%p1056) target = $region68
        $region67: #{tpu_custom_call.1} parent=39 // pred_region
          %p1059 = scmp.lt.s32.totalorder %s81, 1
          %s1060 = scalar_select %p1059, %s81, 1
          %s1061 = scalar_lea.vmem %s21, %s1060
        $region68: #{tpu_custom_call.1} parent=39 // pred_fallthru
          _
        // Predicated region
        $region69: #{tpu_custom_call.1} parent=39 // pred_check
          %p1062 = pneg %p391
        $region70: #{tpu_custom_call.1} parent=39 // pred_check_branch
          %1064 = sbr.rel (%p1062) target = $region72
        $region71: #{tpu_custom_call.1} parent=39 // pred_region
          %p1065 = scmp.lt.s32.totalorder %s81, 1
          %s1066 = scalar_select %p1065, %s81, 1
          %s1067 = scalar_lea.vmem %s23, %s1066
        $region72: #{tpu_custom_call.1} parent=39 // pred_fallthru
          _
        // Predicated region
        $region73: #{tpu_custom_call.1} parent=39 // pred_check
          %p1068 = pneg %p417
        $region74: #{tpu_custom_call.1} parent=39 // pred_check_branch
          %1070 = sbr.rel (%p1068) target = $region76
        $region75: #{tpu_custom_call.1} parent=39 // pred_region
          %s1071 = sand.u32 %s73, 1
          %s1072 = scalar_lea.sflag [#allocation4], %s1071
          %s1073 = sand.u32 %s407, 1
          %s1074 = smul.addr %s1073, 64
          %s1075 = scalar_lea.vmem [#allocation14], %s1074
          %s1077 = ssub.s32 1024, 1024
          %1078 = vsyncadd %s1072, %s1077
          %s1079 = smul.addr %s81, 16
          %s1080 = smul.addr %s1079, 64
          %s1081 = scalar_lea.hbm %s25, %s1080
          %s1082 = sshll.u32 %s1075, 4
          %s1083 = int_to_ptr.vmem [resolvable:$true] %s1082
          %1088 = dma.hbm_to_vmem [thread:$0]  %s1081, 1024, %s1083, %s1072, 64, 64, 4
        $region76: #{tpu_custom_call.1} parent=39 // pred_fallthru
          _
        // Predicated region
        $region77: #{tpu_custom_call.1} parent=39 // pred_check
          %p1089 = pneg %p443
        $region78: #{tpu_custom_call.1} parent=39 // pred_check_branch
          %1091 = sbr.rel (%p1089) target = $region80
        $region79: #{tpu_custom_call.1} parent=39 // pred_region
          %p1092 = scmp.lt.s32.totalorder %s81, 1
          %s1093 = scalar_select %p1092, %s81, 1
          %s1094 = scalar_lea.vmem %s27, %s1093
        $region80: #{tpu_custom_call.1} parent=39 // pred_fallthru
          _
        // Predicated region
        $region81: #{tpu_custom_call.1} parent=39 // pred_check
          %p1095 = pneg %p469
        $region82: #{tpu_custom_call.1} parent=39 // pred_check_branch
          %1097 = sbr.rel (%p1095) target = $region84
        $region83: #{tpu_custom_call.1} parent=39 // pred_region
          %s1098 = sand.u32 %s73, 1
          %s1099 = scalar_lea.sflag [#allocation4], %s1098
          %s1100 = sand.u32 %s459, 1
          %s1101 = smul.addr %s1100, 64
          %s1102 = scalar_lea.vmem [#allocation15], %s1101
          %s1104 = ssub.s32 1024, 1024
          %1105 = vsyncadd %s1099, %s1104
          %s1106 = smul.addr %s81, 16
          %s1107 = smul.addr %s1106, 64
          %s1108 = scalar_lea.hbm %s29, %s1107
          %s1109 = sshll.u32 %s1102, 4
          %s1110 = int_to_ptr.vmem [resolvable:$true] %s1109
          %1115 = dma.hbm_to_vmem [thread:$0]  %s1108, 1024, %s1110, %s1099, 64, 64, 4
        $region84: #{tpu_custom_call.1} parent=39 // pred_fallthru
          _
        // Predicated region
        $region85: #{tpu_custom_call.1} parent=39 // pred_check
          %p1116 = pneg %p495
        $region86: #{tpu_custom_call.1} parent=39 // pred_check_branch
          %1118 = sbr.rel (%p1116) target = $region88
        $region87: #{tpu_custom_call.1} parent=39 // pred_region
          %p1119 = scmp.lt.s32.totalorder %s81, 1
          %s1120 = scalar_select %p1119, %s81, 1
          %s1121 = scalar_lea.vmem %s31, %s1120
        $region88: #{tpu_custom_call.1} parent=39 // pred_fallthru
          _
        // Predicated region
        $region89: #{tpu_custom_call.1} parent=39 // pred_check
          %p1122 = pneg %p521
        $region90: #{tpu_custom_call.1} parent=39 // pred_check_branch
          %1124 = sbr.rel (%p1122) target = $region92
        $region91: #{tpu_custom_call.1} parent=39 // pred_region
          %s1125 = sand.u32 %s73, 1
          %s1126 = scalar_lea.sflag [#allocation4], %s1125
          %s1127 = sand.u32 %s511, 1
          %s1128 = smul.addr %s1127, 64
          %s1129 = scalar_lea.vmem [#allocation16], %s1128
          %s1131 = ssub.s32 1024, 1024
          %1132 = vsyncadd %s1126, %s1131
          %s1133 = smul.addr %s81, 16
          %s1134 = smul.addr %s1133, 64
          %s1135 = scalar_lea.hbm %s33, %s1134
          %s1136 = sshll.u32 %s1129, 4
          %s1137 = int_to_ptr.vmem [resolvable:$true] %s1136
          %1142 = dma.hbm_to_vmem [thread:$0]  %s1135, 1024, %s1137, %s1126, 64, 64, 4
        $region92: #{tpu_custom_call.1} parent=39 // pred_fallthru
          _
        // Predicated region
        $region93: #{tpu_custom_call.1} parent=39 // pred_check
          %p1143 = pneg %p547
        $region94: #{tpu_custom_call.1} parent=39 // pred_check_branch
          %1145 = sbr.rel (%p1143) target = $region96
        $region95: #{tpu_custom_call.1} parent=39 // pred_region
          %p1146 = scmp.lt.s32.totalorder %s81, 1
          %s1147 = scalar_select %p1146, %s81, 1
          %s1148 = scalar_lea.vmem %s35, %s1147
        $region96: #{tpu_custom_call.1} parent=39 // pred_fallthru
          _
        // Predicated region
        $region97: #{tpu_custom_call.1} parent=39 // pred_check
          %p1149 = pneg %p573
        $region98: #{tpu_custom_call.1} parent=39 // pred_check_branch
          %1151 = sbr.rel (%p1149) target = $region100
        $region99: #{tpu_custom_call.1} parent=39 // pred_region
          %s1152 = sand.u32 %s73, 1
          %s1153 = scalar_lea.sflag [#allocation4], %s1152
          %s1154 = sand.u32 %s563, 1
          %s1155 = smul.addr %s1154, 64
          %s1156 = scalar_lea.vmem [#allocation17], %s1155
          %s1158 = ssub.s32 1024, 1024
          %1159 = vsyncadd %s1153, %s1158
          %s1160 = smul.addr %s81, 16
          %s1161 = smul.addr %s1160, 64
          %s1162 = scalar_lea.hbm %s37, %s1161
          %s1163 = sshll.u32 %s1156, 4
          %s1164 = int_to_ptr.vmem [resolvable:$true] %s1163
          %1169 = dma.hbm_to_vmem [thread:$0]  %s1162, 1024, %s1164, %s1153, 64, 64, 4
        $region100: #{tpu_custom_call.1} parent=39 // pred_fallthru
          _
        // Predicated region
        $region101: #{tpu_custom_call.1} parent=39 // pred_check
          %p1170 = pneg %p599
        $region102: #{tpu_custom_call.1} parent=39 // pred_check_branch
          %1172 = sbr.rel (%p1170) target = $region104
        $region103: #{tpu_custom_call.1} parent=39 // pred_region
          %p1173 = scmp.lt.s32.totalorder %s81, 1
          %s1174 = scalar_select %p1173, %s81, 1
          %s1175 = scalar_lea.vmem %s39, %s1174
        $region104: #{tpu_custom_call.1} parent=39 // pred_fallthru
          _
        // Predicated region
        $region105: #{tpu_custom_call.1} parent=39 // pred_check
          %p1176 = pneg %p625
        $region106: #{tpu_custom_call.1} parent=39 // pred_check_branch
          %1178 = sbr.rel (%p1176) target = $region108
        $region107: #{tpu_custom_call.1} parent=39 // pred_region
          %p1179 = scmp.lt.s32.totalorder %s81, 1
          %s1180 = scalar_select %p1179, %s81, 1
          %s1181 = scalar_lea.vmem %s41, %s1180
        $region108: #{tpu_custom_call.1} parent=39 // pred_fallthru
          _
        // Predicated region
        $region109: #{tpu_custom_call.1} parent=39 // pred_check
          %p1182 = pneg %p651
        $region110: #{tpu_custom_call.1} parent=39 // pred_check_branch
          %1184 = sbr.rel (%p1182) target = $region112
        $region111: #{tpu_custom_call.1} parent=39 // pred_region
          %p1185 = scmp.lt.s32.totalorder %s81, 1
          %s1186 = scalar_select %p1185, %s81, 1
          %s1187 = scalar_lea.vmem %s43, %s1186
        $region112: #{tpu_custom_call.1} parent=39 // pred_fallthru
          _
        // Predicated region
        $region113: #{tpu_custom_call.1} parent=39 // pred_check
          %p1188 = pneg %p677
        $region114: #{tpu_custom_call.1} parent=39 // pred_check_branch
          %1190 = sbr.rel (%p1188) target = $region116
        $region115: #{tpu_custom_call.1} parent=39 // pred_region
          %s1191 = sand.u32 %s73, 1
          %s1192 = scalar_lea.sflag [#allocation4], %s1191
          %s1193 = sand.u32 %s667, 1
          %s1194 = smul.addr %s1193, 128
          %s1195 = scalar_lea.vmem [#allocation18], %s1194
          %s1197 = ssub.s32 2048, 2048
          %1198 = vsyncadd %s1192, %s1197
          %s1199 = smul.addr %s81, 32
          %s1200 = smul.addr %s1199, 64
          %s1201 = scalar_lea.hbm %s45, %s1200
          %s1202 = sshll.u32 %s1195, 4
          %s1203 = int_to_ptr.vmem [resolvable:$true] %s1202
          %1208 = dma.hbm_to_vmem [thread:$0]  %s1201, 2048, %s1203, %s1192, 128, 128, 8
        $region116: #{tpu_custom_call.1} parent=39 // pred_fallthru
          _
        // Predicated region
        $region117: #{tpu_custom_call.1} parent=39 // pred_check
          %p1209 = pneg %p703
        $region118: #{tpu_custom_call.1} parent=39 // pred_check_branch
          %1211 = sbr.rel (%p1209) target = $region120
        $region119: #{tpu_custom_call.1} parent=39 // pred_region
          %p1212 = scmp.lt.s32.totalorder %s81, 1
          %s1213 = scalar_select %p1212, %s81, 1
          %s1214 = smul.addr %s1213, 2
          %s1215 = scalar_lea.vmem %s47, %s1214
        $region120: #{tpu_custom_call.1} parent=39 // pred_fallthru
          _
        // Predicated region
        $region121: #{tpu_custom_call.1} parent=39 // pred_check
          %p1216 = pneg %p729
        $region122: #{tpu_custom_call.1} parent=39 // pred_check_branch
          %1218 = sbr.rel (%p1216) target = $region124
        $region123: #{tpu_custom_call.1} parent=39 // pred_region
          %s1219 = sand.u32 %s73, 1
          %s1220 = scalar_lea.sflag [#allocation4], %s1219
          %s1221 = sand.u32 %s719, 1
          %s1222 = smul.addr %s1221, 128
          %s1223 = scalar_lea.vmem [#allocation19], %s1222
          %s1225 = ssub.s32 2048, 2048
          %1226 = vsyncadd %s1220, %s1225
          %s1227 = smul.addr %s81, 32
          %s1228 = smul.addr %s1227, 64
          %s1229 = scalar_lea.hbm %s49, %s1228
          %s1230 = sshll.u32 %s1223, 4
          %s1231 = int_to_ptr.vmem [resolvable:$true] %s1230
          %1236 = dma.hbm_to_vmem [thread:$0]  %s1229, 2048, %s1231, %s1220, 64, 64, 4
        $region124: #{tpu_custom_call.1} parent=39 // pred_fallthru
          _
        // Predicated region
        $region125: #{tpu_custom_call.1} parent=39 // pred_check
          %p1237 = pneg %p755
        $region126: #{tpu_custom_call.1} parent=39 // pred_check_branch
          %1239 = sbr.rel (%p1237) target = $region128
        $region127: #{tpu_custom_call.1} parent=39 // pred_region
          %p1240 = scmp.lt.s32.totalorder %s81, 1
          %s1241 = scalar_select %p1240, %s81, 1
          %s1242 = scalar_lea.vmem %s51, %s1241
        $region128: #{tpu_custom_call.1} parent=39 // pred_fallthru
          _
        // Predicated region
        $region129: #{tpu_custom_call.1} parent=39 // pred_check
          %p1243 = pneg %p781
        $region130: #{tpu_custom_call.1} parent=39 // pred_check_branch
          %1245 = sbr.rel (%p1243) target = $region132
        $region131: #{tpu_custom_call.1} parent=39 // pred_region
          %p1246 = scmp.lt.s32.totalorder %s81, 1
          %s1247 = scalar_select %p1246, %s81, 1
          %s1248 = scalar_lea.vmem %s53, %s1247
        $region132: #{tpu_custom_call.1} parent=39 // pred_fallthru
          _
        // Predicated region
        $region133: #{tpu_custom_call.1} parent=39 // pred_check
          %p1249 = pneg %p807
        $region134: #{tpu_custom_call.1} parent=39 // pred_check_branch
          %1251 = sbr.rel (%p1249) target = $region136
        $region135: #{tpu_custom_call.1} parent=39 // pred_region
          %p1252 = scmp.lt.s32.totalorder %s81, 1
          %s1253 = scalar_select %p1252, %s81, 1
          %s1254 = scalar_lea.vmem %s55, %s1253
        $region136: #{tpu_custom_call.1} parent=39 // pred_fallthru
          _
      $region40: #{tpu_custom_call.1} parent=5 // pred_fallthru
        _
      %p1255 = scmp.le.s32.totalorder 1, %s73
      %p1256 = scmp.lt.s32.totalorder %s73, 3
      %p1257 = pnand %p1255, %p1256
      %p1258 = pneg %p1257
      // Predicated region
      $region137: #{tpu_custom_call.1} parent=5 // pred_check
        _
      $region138: #{tpu_custom_call.1} parent=5 // pred_check_branch
        %1260 = sbr.rel (%p1257) target = $region140
      $region139: #{tpu_custom_call.1} parent=5 // pred_region
        %s1261 = ssub.s32 %s73, 1
        // Predicated region
        $region141: #{tpu_custom_call.1} parent=139 // pred_check
          %p1262 = pneg %p111
        $region142: #{tpu_custom_call.1} parent=139 // pred_check_branch
          %1264 = sbr.rel (%p1262) target = $region144
        $region143: #{tpu_custom_call.1} parent=139 // pred_region
          %1265 = dma.done [#allocation4], 256
        $region144: #{tpu_custom_call.1} parent=139 // pred_fallthru
          _
        // Predicated region
        $region145: #{tpu_custom_call.1} parent=139 // pred_check
          %p1266 = pneg %p137
        $region146: #{tpu_custom_call.1} parent=139 // pred_check_branch
          %1268 = sbr.rel (%p1266) target = $region148
        $region147: #{tpu_custom_call.1} parent=139 // pred_region
          %1269 = dma.done [#allocation7], 256
        $region148: #{tpu_custom_call.1} parent=139 // pred_fallthru
          _
        // Predicated region
        $region149: #{tpu_custom_call.1} parent=139 // pred_check
          %p1270 = pneg %p163
        $region150: #{tpu_custom_call.1} parent=139 // pred_check_branch
          %1272 = sbr.rel (%p1270) target = $region152
        $region151: #{tpu_custom_call.1} parent=139 // pred_region
          %1273 = dma.done [#allocation7], 256
        $region152: #{tpu_custom_call.1} parent=139 // pred_fallthru
          _
        // Predicated region
        $region153: #{tpu_custom_call.1} parent=139 // pred_check
          %p1274 = pneg %p189
        $region154: #{tpu_custom_call.1} parent=139 // pred_check_branch
          %1276 = sbr.rel (%p1274) target = $region156
        $region155: #{tpu_custom_call.1} parent=139 // pred_region
          %1277 = dma.done [#allocation10], 256
        $region156: #{tpu_custom_call.1} parent=139 // pred_fallthru
          _
        %s1278 = sand.u32 %s78, 1
        %s1279 = scalar_lea.sflag [#allocation4], %s1278
        %s1280 = sand.u32 %s202, 1
        %s1281 = smul.addr %s1280, 128
        %s1282 = scalar_lea.vmem [#allocation11], %s1281
        // Predicated region
        $region157: #{tpu_custom_call.1} parent=139 // pred_check
          %p1283 = pneg %p215
        $region158: #{tpu_custom_call.1} parent=139 // pred_check_branch
          %1285 = sbr.rel (%p1283) target = $region160
        $region159: #{tpu_custom_call.1} parent=139 // pred_region
          %1286 = dma.done %s1279, 2048
        $region160: #{tpu_custom_call.1} parent=139 // pred_fallthru
          _
        %s1287 = sand.u32 %s78, 1
        %s1288 = scalar_lea.sflag [#allocation4], %s1287
        %s1289 = sand.u32 %s254, 1
        %s1290 = smul.addr %s1289, 64
        %s1291 = scalar_lea.vmem [#allocation12], %s1290
        // Predicated region
        $region161: #{tpu_custom_call.1} parent=139 // pred_check
          %p1292 = pneg %p267
        $region162: #{tpu_custom_call.1} parent=139 // pred_check_branch
          %1294 = sbr.rel (%p1292) target = $region164
        $region163: #{tpu_custom_call.1} parent=139 // pred_region
          %1295 = dma.done %s1288, 1024
        $region164: #{tpu_custom_call.1} parent=139 // pred_fallthru
          _
        %s1296 = sand.u32 %s78, 1
        %s1297 = scalar_lea.sflag [#allocation4], %s1296
        %s1298 = sand.u32 %s306, 1
        %s1299 = smul.addr %s1298, 64
        %s1300 = scalar_lea.vmem [#allocation13], %s1299
        // Predicated region
        $region165: #{tpu_custom_call.1} parent=139 // pred_check
          %p1301 = pneg %p319
        $region166: #{tpu_custom_call.1} parent=139 // pred_check_branch
          %1303 = sbr.rel (%p1301) target = $region168
        $region167: #{tpu_custom_call.1} parent=139 // pred_region
          %1304 = dma.done %s1297, 1024
        $region168: #{tpu_custom_call.1} parent=139 // pred_fallthru
          _
        %s1305 = sand.u32 %s78, 1
        %s1306 = scalar_lea.sflag [#allocation4], %s1305
        %s1307 = sand.u32 %s410, 1
        %s1308 = smul.addr %s1307, 64
        %s1309 = scalar_lea.vmem [#allocation14], %s1308
        // Predicated region
        $region169: #{tpu_custom_call.1} parent=139 // pred_check
          %p1310 = pneg %p423
        $region170: #{tpu_custom_call.1} parent=139 // pred_check_branch
          %1312 = sbr.rel (%p1310) target = $region172
        $region171: #{tpu_custom_call.1} parent=139 // pred_region
          %1313 = dma.done %s1306, 1024
        $region172: #{tpu_custom_call.1} parent=139 // pred_fallthru
          _
        %s1314 = sand.u32 %s78, 1
        %s1315 = scalar_lea.sflag [#allocation4], %s1314
        %s1316 = sand.u32 %s462, 1
        %s1317 = smul.addr %s1316, 64
        %s1318 = scalar_lea.vmem [#allocation15], %s1317
        // Predicated region
        $region173: #{tpu_custom_call.1} parent=139 // pred_check
          %p1319 = pneg %p475
        $region174: #{tpu_custom_call.1} parent=139 // pred_check_branch
          %1321 = sbr.rel (%p1319) target = $region176
        $region175: #{tpu_custom_call.1} parent=139 // pred_region
          %1322 = dma.done %s1315, 1024
        $region176: #{tpu_custom_call.1} parent=139 // pred_fallthru
          _
        %s1323 = sand.u32 %s78, 1
        %s1324 = scalar_lea.sflag [#allocation4], %s1323
        %s1325 = sand.u32 %s514, 1
        %s1326 = smul.addr %s1325, 64
        %s1327 = scalar_lea.vmem [#allocation16], %s1326
        // Predicated region
        $region177: #{tpu_custom_call.1} parent=139 // pred_check
          %p1328 = pneg %p527
        $region178: #{tpu_custom_call.1} parent=139 // pred_check_branch
          %1330 = sbr.rel (%p1328) target = $region180
        $region179: #{tpu_custom_call.1} parent=139 // pred_region
          %1331 = dma.done %s1324, 1024
        $region180: #{tpu_custom_call.1} parent=139 // pred_fallthru
          _
        %s1332 = sand.u32 %s78, 1
        %s1333 = scalar_lea.sflag [#allocation4], %s1332
        %s1334 = sand.u32 %s566, 1
        %s1335 = smul.addr %s1334, 64
        %s1336 = scalar_lea.vmem [#allocation17], %s1335
        // Predicated region
        $region181: #{tpu_custom_call.1} parent=139 // pred_check
          %p1337 = pneg %p579
        $region182: #{tpu_custom_call.1} parent=139 // pred_check_branch
          %1339 = sbr.rel (%p1337) target = $region184
        $region183: #{tpu_custom_call.1} parent=139 // pred_region
          %1340 = dma.done %s1333, 1024
        $region184: #{tpu_custom_call.1} parent=139 // pred_fallthru
          _
        %s1341 = sand.u32 %s78, 1
        %s1342 = scalar_lea.sflag [#allocation4], %s1341
        %s1343 = sand.u32 %s670, 1
        %s1344 = smul.addr %s1343, 128
        %s1345 = scalar_lea.vmem [#allocation18], %s1344
        // Predicated region
        $region185: #{tpu_custom_call.1} parent=139 // pred_check
          %p1346 = pneg %p683
        $region186: #{tpu_custom_call.1} parent=139 // pred_check_branch
          %1348 = sbr.rel (%p1346) target = $region188
        $region187: #{tpu_custom_call.1} parent=139 // pred_region
          %1349 = dma.done %s1342, 2048
        $region188: #{tpu_custom_call.1} parent=139 // pred_fallthru
          _
        %s1350 = sand.u32 %s78, 1
        %s1351 = scalar_lea.sflag [#allocation4], %s1350
        %s1352 = sand.u32 %s722, 1
        %s1353 = smul.addr %s1352, 128
        %s1354 = scalar_lea.vmem [#allocation19], %s1353
        // Predicated region
        $region189: #{tpu_custom_call.1} parent=139 // pred_check
          %p1355 = pneg %p735
        $region190: #{tpu_custom_call.1} parent=139 // pred_check_branch
          %1357 = sbr.rel (%p1355) target = $region192
        $region191: #{tpu_custom_call.1} parent=139 // pred_region
          %1358 = dma.done %s1351, 2048
        $region192: #{tpu_custom_call.1} parent=139 // pred_fallthru
          _
        %p1359 = pneg %p111
        %p1360 = pneg %p108
        %p1361 = pneg %p137
        %p1362 = pneg %p134
        %p1363 = pneg %p163
        %p1364 = pneg %p160
        %p1365 = pneg %p189
        %p1366 = pneg %p186
        %s1367 = sand.u32 %s78, 1
        %s1368 = scalar_lea.sflag [#allocation4], %s1367
        %s1369 = sand.u32 %s202, 1
        %s1370 = smul.addr %s1369, 128
        %s1371 = scalar_lea.vmem [#allocation11], %s1370
        %p1372 = pneg %p215
        %p1373 = pneg %p212
        %p1374 = scmp.lt.s32.totalorder %s83, 1
        %s1375 = scalar_select %p1374, %s83, 1
        %s1376 = smul.addr %s1375, 2
        %s1377 = scalar_lea.vmem %s11, %s1376
        %p1378 = pneg %p241
        %p1379 = pneg %p238
        %s1380 = sand.u32 %s78, 1
        %s1381 = scalar_lea.sflag [#allocation4], %s1380
        %s1382 = sand.u32 %s254, 1
        %s1383 = smul.addr %s1382, 64
        %s1384 = scalar_lea.vmem [#allocation12], %s1383
        %p1385 = pneg %p267
        %p1386 = pneg %p264
        %p1387 = scmp.lt.s32.totalorder %s83, 1
        %s1388 = scalar_select %p1387, %s83, 1
        %s1389 = scalar_lea.vmem %s15, %s1388
        %p1390 = pneg %p293
        %p1391 = pneg %p290
        %s1392 = sand.u32 %s78, 1
        %s1393 = scalar_lea.sflag [#allocation4], %s1392
        %s1394 = sand.u32 %s306, 1
        %s1395 = smul.addr %s1394, 64
        %s1396 = scalar_lea.vmem [#allocation13], %s1395
        %p1397 = pneg %p319
        %p1398 = pneg %p316
        %p1399 = scmp.lt.s32.totalorder %s83, 1
        %s1400 = scalar_select %p1399, %s83, 1
        %s1401 = scalar_lea.vmem %s19, %s1400
        %p1402 = pneg %p345
        %p1403 = pneg %p342
        %p1404 = scmp.lt.s32.totalorder %s83, 1
        %s1405 = scalar_select %p1404, %s83, 1
        %s1406 = scalar_lea.vmem %s21, %s1405
        %p1407 = pneg %p371
        %p1408 = pneg %p368
        %p1409 = scmp.lt.s32.totalorder %s83, 1
        %s1410 = scalar_select %p1409, %s83, 1
        %s1411 = scalar_lea.vmem %s23, %s1410
        %p1412 = pneg %p397
        %p1413 = pneg %p394
        %s1414 = sand.u32 %s78, 1
        %s1415 = scalar_lea.sflag [#allocation4], %s1414
        %s1416 = sand.u32 %s410, 1
        %s1417 = smul.addr %s1416, 64
        %s1418 = scalar_lea.vmem [#allocation14], %s1417
        %p1419 = pneg %p423
        %p1420 = pneg %p420
        %p1421 = scmp.lt.s32.totalorder %s83, 1
        %s1422 = scalar_select %p1421, %s83, 1
        %s1423 = scalar_lea.vmem %s27, %s1422
        %p1424 = pneg %p449
        %p1425 = pneg %p446
        %s1426 = sand.u32 %s78, 1
        %s1427 = scalar_lea.sflag [#allocation4], %s1426
        %s1428 = sand.u32 %s462, 1
        %s1429 = smul.addr %s1428, 64
        %s1430 = scalar_lea.vmem [#allocation15], %s1429
        %p1431 = pneg %p475
        %p1432 = pneg %p472
        %p1433 = scmp.lt.s32.totalorder %s83, 1
        %s1434 = scalar_select %p1433, %s83, 1
        %s1435 = scalar_lea.vmem %s31, %s1434
        %p1436 = pneg %p501
        %p1437 = pneg %p498
        %s1438 = sand.u32 %s78, 1
        %s1439 = scalar_lea.sflag [#allocation4], %s1438
        %s1440 = sand.u32 %s514, 1
        %s1441 = smul.addr %s1440, 64
        %s1442 = scalar_lea.vmem [#allocation16], %s1441
        %p1443 = pneg %p527
        %p1444 = pneg %p524
        %p1445 = scmp.lt.s32.totalorder %s83, 1
        %s1446 = scalar_select %p1445, %s83, 1
        %s1447 = scalar_lea.vmem %s35, %s1446
        %p1448 = pneg %p553
        %p1449 = pneg %p550
        %s1450 = sand.u32 %s78, 1
        %s1451 = scalar_lea.sflag [#allocation4], %s1450
        %s1452 = sand.u32 %s566, 1
        %s1453 = smul.addr %s1452, 64
        %s1454 = scalar_lea.vmem [#allocation17], %s1453
        %p1455 = pneg %p579
        %p1456 = pneg %p576
        %p1457 = scmp.lt.s32.totalorder %s83, 1
        %s1458 = scalar_select %p1457, %s83, 1
        %s1459 = scalar_lea.vmem %s39, %s1458
        %p1460 = pneg %p605
        %p1461 = pneg %p602
        %p1462 = scmp.lt.s32.totalorder %s83, 1
        %s1463 = scalar_select %p1462, %s83, 1
        %s1464 = scalar_lea.vmem %s41, %s1463
        %p1465 = pneg %p631
        %p1466 = pneg %p628
        %p1467 = scmp.lt.s32.totalorder %s83, 1
        %s1468 = scalar_select %p1467, %s83, 1
        %s1469 = scalar_lea.vmem %s43, %s1468
        %p1470 = pneg %p657
        %p1471 = pneg %p654
        %s1472 = sand.u32 %s78, 1
        %s1473 = scalar_lea.sflag [#allocation4], %s1472
        %s1474 = sand.u32 %s670, 1
        %s1475 = smul.addr %s1474, 128
        %s1476 = scalar_lea.vmem [#allocation18], %s1475
        %p1477 = pneg %p683
        %p1478 = pneg %p680
        %p1479 = scmp.lt.s32.totalorder %s83, 1
        %s1480 = scalar_select %p1479, %s83, 1
        %s1481 = smul.addr %s1480, 2
        %s1482 = scalar_lea.vmem %s47, %s1481
        %p1483 = pneg %p709
        %p1484 = pneg %p706
        %s1485 = sand.u32 %s78, 1
        %s1486 = scalar_lea.sflag [#allocation4], %s1485
        %s1487 = sand.u32 %s722, 1
        %s1488 = smul.addr %s1487, 128
        %s1489 = scalar_lea.vmem [#allocation19], %s1488
        %p1490 = pneg %p735
        %p1491 = pneg %p732
        %p1492 = scmp.lt.s32.totalorder %s83, 1
        %s1493 = scalar_select %p1492, %s83, 1
        %s1494 = scalar_lea.vmem %s51, %s1493
        %p1495 = pneg %p761
        %p1496 = pneg %p758
        %p1497 = scmp.lt.s32.totalorder %s83, 1
        %s1498 = scalar_select %p1497, %s83, 1
        %s1499 = scalar_lea.vmem %s53, %s1498
        %p1500 = pneg %p787
        %p1501 = pneg %p784
        %p1502 = scmp.lt.s32.totalorder %s83, 1
        %s1503 = scalar_select %p1502, %s83, 1
        %s1504 = scalar_lea.vmem %s55, %s1503
        %p1505 = pneg %p813
        %p1506 = pneg %p810
        %p1507 = pneg %p834
        %p1508 = pneg %p831
        %p1509 = pneg %p855
        %p1510 = pneg %p852
        %p1511 = pneg %p883
        %p1512 = pneg %p880
        %s1513 = sand.u32 %s870, 1
        %s1514 = scalar_lea.sflag [#allocation5], %s1513
        %s1515 = sand.u32 %s870, 1
        %s1516 = smul.addr %s1515, 16
        %s1517 = scalar_lea.vmem [#allocation20], %s1516
        %s1518 = smul.u32 2, %s82
        %s1519 = smul.u32 2, %s82
        %s1520 = smul.u32 2, %s82
        %s1521 = smul.u32 2, %s82
        %p1522 = scmp.lt.s32.totalorder %s83, 1
        %s1523 = scalar_select %p1522, %s83, 1
        %s1524 = smul.addr %s1523, 2
        %s1525 = scalar_lea.vmem %s11, %s1524
        %p1526 = scmp.lt.s32.totalorder %s83, 1
        %s1527 = scalar_select %p1526, %s83, 1
        %s1528 = scalar_lea.vmem %s15, %s1527
        %p1529 = scmp.lt.s32.totalorder %s83, 1
        %s1530 = scalar_select %p1529, %s83, 1
        %s1531 = scalar_lea.vmem %s19, %s1530
        %p1532 = scmp.lt.s32.totalorder %s83, 1
        %s1533 = scalar_select %p1532, %s83, 1
        %s1534 = scalar_lea.vmem %s21, %s1533
        %p1535 = scmp.lt.s32.totalorder %s83, 1
        %s1536 = scalar_select %p1535, %s83, 1
        %s1537 = scalar_lea.vmem %s23, %s1536
        %p1538 = scmp.lt.s32.totalorder %s83, 1
        %s1539 = scalar_select %p1538, %s83, 1
        %s1540 = scalar_lea.vmem %s27, %s1539
        %p1541 = scmp.lt.s32.totalorder %s83, 1
        %s1542 = scalar_select %p1541, %s83, 1
        %s1543 = scalar_lea.vmem %s31, %s1542
        %p1544 = scmp.lt.s32.totalorder %s83, 1
        %s1545 = scalar_select %p1544, %s83, 1
        %s1546 = scalar_lea.vmem %s35, %s1545
        %p1547 = scmp.lt.s32.totalorder %s83, 1
        %s1548 = scalar_select %p1547, %s83, 1
        %s1549 = scalar_lea.vmem %s39, %s1548
        %p1550 = scmp.lt.s32.totalorder %s83, 1
        %s1551 = scalar_select %p1550, %s83, 1
        %s1552 = scalar_lea.vmem %s41, %s1551
        %p1553 = scmp.lt.s32.totalorder %s83, 1
        %s1554 = scalar_select %p1553, %s83, 1
        %s1555 = scalar_lea.vmem %s43, %s1554
        %p1556 = scmp.lt.s32.totalorder %s83, 1
        %s1557 = scalar_select %p1556, %s83, 1
        %s1558 = smul.addr %s1557, 2
        %s1559 = scalar_lea.vmem %s47, %s1558
        %p1560 = scmp.lt.s32.totalorder %s83, 1
        %s1561 = scalar_select %p1560, %s83, 1
        %s1562 = scalar_lea.vmem %s51, %s1561
        %p1563 = scmp.lt.s32.totalorder %s83, 1
        %s1564 = scalar_select %p1563, %s83, 1
        %s1565 = scalar_lea.vmem %s53, %s1564
        %p1566 = scmp.lt.s32.totalorder %s83, 1
        %s1567 = scalar_select %p1566, %s83, 1
        %s1568 = scalar_lea.vmem %s55, %s1567
        %s1569 = smul.u32 2, %s82
        %p1571 = scmp.eq.s32.totalorder %s83, 0
        // Predicated region
        $region193: #{tpu_custom_call.1} parent=139 // pred_check
          %p1572 = pneg %p1571
        $region194: #{tpu_custom_call.1} parent=139 // pred_check_branch
          %1574 = sbr.rel (%p1572) target = $region196
        $region195: #{tpu_custom_call.1} parent=139 // pred_region
          %v1575 = vld [vmem:[#allocation3] sm:$0xff]
          %v1576 = vld [vmem:[#allocation3 + $0x8] sm:$0xff]
          %1577 = vst [vmem:[#allocation2] sm:$0xff] %v1575
          %1578 = vst [vmem:[#allocation2 + $0x8] sm:$0xff] %v1576
        $region196: #{tpu_custom_call.1} parent=139 // pred_fallthru
          _
        %v1579 = vld [vmem:[#allocation2] sm:$0xff]
        %v1580 = vld [vmem:[#allocation2 + $0x8] sm:$0xff]
        %v1581 = vld [vmem:[#allocation9] sm:$0xff]
        %v1582 = vld [vmem:[#allocation9 + $0x8] sm:$0xff]
        %v1583 = vld [vmem:[#allocation6] sm:$0xf]
        %v1584 = vld [vmem:[#allocation6 + $0x4] sm:$0xf]
        %v1585 = vld [vmem:[#allocation6 + $0x8] sm:$0xf]
        %v1586 = vld [vmem:[#allocation6 + $0xc] sm:$0xf]
        %v1587 = vld [vmem:[#allocation8] sm:$0xf]
        %v1588 = vld [vmem:[#allocation8 + $0x4] sm:$0xf]
        %v1589 = vld [vmem:[#allocation8 + $0x8] sm:$0xf]
        %v1590 = vld [vmem:[#allocation8 + $0xc] sm:$0xf]
        %v1591 = vadd.f32 %v1579, %v1581
        %v1592 = vadd.f32 %v1580, %v1582
        %v1593 = vpack.c.bf16 %v1592, %v1591
        %v1594 = vld [vmem:[%s1282] sm:$0xff]
        %v1595 = vld [vmem:[%s1282 + $0x8] sm:$0xff]
        %v1596 = vld [vmem:[%s1282 + $0x10] sm:$0xff]
        %v1597 = vld [vmem:[%s1282 + $0x18] sm:$0xff]
        %v1598 = vld [vmem:[%s1282 + $0x20] sm:$0xff]
        %v1599 = vld [vmem:[%s1282 + $0x28] sm:$0xff]
        %v1600 = vld [vmem:[%s1282 + $0x30] sm:$0xff]
        %v1601 = vld [vmem:[%s1282 + $0x38] sm:$0xff]
        %v1602 = vld [vmem:[%s1282 + $0x40] sm:$0xff]
        %v1603 = vld [vmem:[%s1282 + $0x48] sm:$0xff]
        %v1604 = vld [vmem:[%s1282 + $0x50] sm:$0xff]
        %v1605 = vld [vmem:[%s1282 + $0x58] sm:$0xff]
        %v1606 = vld [vmem:[%s1282 + $0x60] sm:$0xff]
        %v1607 = vld [vmem:[%s1282 + $0x68] sm:$0xff]
        %v1608 = vld [vmem:[%s1282 + $0x70] sm:$0xff]
        %v1609 = vld [vmem:[%s1282 + $0x78] sm:$0xff]
        %v1610 = vld [vmem:[%s1525] sm:$0x3]
        %v1612 = vlaneseq
        %v1613 = vshrl.u32 %v1612, 7
        %v1614 = vsub.s32 0, %v1613
        %v1615 = vrot.slane %v1610, %v1614
        %v1616 = vlaneseq
        %v1617 = vshrl.u32 %v1616, 7
        %v1618 = vsub.s32 1, %v1617
        %v1619 = vrot.slane %v1610, %v1618
        %v1638 = vunpack.c.l.b16 %v1594
        %v1639 = vunpack.c.h.b16 %v1594
        %v1640 = vunpack.c.l.b16 %v1595
        %v1641 = vunpack.c.h.b16 %v1595
        %v1642 = vunpack.c.l.b16 %v1596
        %v1643 = vunpack.c.h.b16 %v1596
        %v1644 = vunpack.c.l.b16 %v1597
        %v1645 = vunpack.c.h.b16 %v1597
        %v1646 = vunpack.c.l.b16 %v1598
        %v1647 = vunpack.c.h.b16 %v1598
        %v1648 = vunpack.c.l.b16 %v1599
        %v1649 = vunpack.c.h.b16 %v1599
        %v1650 = vunpack.c.l.b16 %v1600
        %v1651 = vunpack.c.h.b16 %v1600
        %v1652 = vunpack.c.l.b16 %v1601
        %v1653 = vunpack.c.h.b16 %v1601
        %v1654 = vunpack.c.l.b16 %v1602
        %v1655 = vunpack.c.h.b16 %v1602
        %v1656 = vunpack.c.l.b16 %v1603
        %v1657 = vunpack.c.h.b16 %v1603
        %v1658 = vunpack.c.l.b16 %v1604
        %v1659 = vunpack.c.h.b16 %v1604
        %v1660 = vunpack.c.l.b16 %v1605
        %v1661 = vunpack.c.h.b16 %v1605
        %v1662 = vunpack.c.l.b16 %v1606
        %v1663 = vunpack.c.h.b16 %v1606
        %v1664 = vunpack.c.l.b16 %v1607
        %v1665 = vunpack.c.h.b16 %v1607
        %v1666 = vunpack.c.l.b16 %v1608
        %v1667 = vunpack.c.h.b16 %v1608
        %v1668 = vunpack.c.l.b16 %v1609
        %v1669 = vunpack.c.h.b16 %v1609
        %v1670 = vpack.c.b16 %v1640, %v1638
        %v1671 = vpack.c.b16 %v1641, %v1639
        %v1672 = vpack.c.b16 %v1644, %v1642
        %v1673 = vpack.c.b16 %v1645, %v1643
        %v1674 = vpack.c.b16 %v1648, %v1646
        %v1675 = vpack.c.b16 %v1649, %v1647
        %v1676 = vpack.c.b16 %v1652, %v1650
        %v1677 = vpack.c.b16 %v1653, %v1651
        %v1678 = vpack.c.b16 %v1656, %v1654
        %v1679 = vpack.c.b16 %v1657, %v1655
        %v1680 = vpack.c.b16 %v1660, %v1658
        %v1681 = vpack.c.b16 %v1661, %v1659
        %v1682 = vpack.c.b16 %v1664, %v1662
        %v1683 = vpack.c.b16 %v1665, %v1663
        %v1684 = vpack.c.b16 %v1668, %v1666
        %v1685 = vpack.c.b16 %v1669, %v1667
        %1702 = vmatprep.subr.bf16.mxu0 %v1671
        %1703 = vmatpush1.bf16.msra.mxu0 %v1670
        %1704 = vmatprep.subr.bf16.mxu0 %v1673
        %1705 = vmatpush1.bf16.msra.mxu0 %v1672
        %1706 = vmatprep.subr.bf16.mxu0 %v1675
        %1707 = vmatpush1.bf16.msra.mxu0 %v1674
        %1708 = vmatprep.subr.bf16.mxu0 %v1677
        %1709 = vmatpush1.bf16.msra.mxu0 %v1676
        %1710 = vmatprep.subr.bf16.mxu0 %v1679
        %1711 = vmatpush1.bf16.msra.mxu0 %v1678
        %1712 = vmatprep.subr.bf16.mxu0 %v1681
        %1713 = vmatpush1.bf16.msra.mxu0 %v1680
        %1714 = vmatprep.subr.bf16.mxu0 %v1683
        %1715 = vmatpush1.bf16.msra.mxu0 %v1682
        %1716 = vmatprep.subr.bf16.mxu0 %v1685
        %1717 = vmatpush1.bf16.msra.mxu0 %v1684
        %1718 = vmatprep.subr.bf16.mxu0 0
        %1719 = vmatpush1.bf16.msra.mxu0 0
        %1720 = vmatprep.subr.bf16.mxu0 0
        %1721 = vmatpush1.bf16.msra.mxu0 0
        %1722 = vmatprep.subr.bf16.mxu0 0
        %1723 = vmatpush1.bf16.msra.mxu0 0
        %1724 = vmatprep.subr.bf16.mxu0 0
        %1725 = vmatpush1.bf16.msra.mxu0 0
        %1726 = vmatprep.subr.bf16.mxu0 0
        %1727 = vmatpush1.bf16.msra.mxu0 0
        %1728 = vmatprep.subr.bf16.mxu0 0
        %1729 = vmatpush1.bf16.msra.mxu0 0
        %1730 = vmatprep.subr.bf16.mxu0 0
        %1731 = vmatpush1.bf16.msra.mxu0 0
        %1732 = vmatprep.subr.bf16.mxu0 0
        %1733 = vmatpush1.bf16.msra.mxu0 0
        %1734 = vmatprep.mubr.bf16.mxu0 0
        %1735 = vmatmul.mubr.bf16.gmra.mrb[0].mxu0 %v1593
        %v1736 = vpop.f32.mrb[0].mxu0
        %v1737 = vadd.f32 %v1615, %v1736
        %v1738 = vpop.f32.mrb[0].mxu0
        %v1739 = vadd.f32 %v1619, %v1738
        %v1740 = vpop.f32.mrb[0].mxu0
        %v1741 = vadd.f32 %v1615, %v1740
        %v1742 = vpop.f32.mrb[0].mxu0
        %v1743 = vadd.f32 %v1619, %v1742
        %1744 = vdwg.mxu0
        %v1745 = vpack.c.bf16 %v1741, %v1737
        %1747 = vrot.lane.b32.xlu0 %v1745, 96
        %v1748 = vpop.permute.xlu0 %1747
        %1749 = vrot.lane.b32.xlu0 %v1745, 64
        %v1750 = vpop.permute.xlu0 %1749
        %1751 = vrot.lane.b32.xlu0 %v1745, 32
        %v1752 = vpop.permute.xlu0 %1751
        %v1755 = vpack.i.b16 %v1748, %v1745
        %v1757 = vshrl.u32 %v1745, 16
        %v1758 = vshrl.u32 %v1748, 16
        %v1759 = vpack.i.b16 %v1758, %v1757
        %v1763 = vpack.i.b16 %v1752, %v1750
        %v1765 = vshrl.u32 %v1750, 16
        %v1766 = vshrl.u32 %v1752, 16
        %v1767 = vpack.i.b16 %v1766, %v1765
        %v1770 = vpack.i.b16 0, 0
        %v1772 = vshrl.u32 0, 16
        %v1773 = vpack.i.b16 %v1772, %v1772
        %v1775 = vcombine.high %v1755, %v1770
        %v1777 = vunpack.c.l.s4 1983009808
        %v1778 = vunpack.c.0.s8 %v1777
        %v1779 = vlaneseq
        %v1780 = vshrl.u32 %v1779, 7
        %v1781 = vsub.s32 %v1778, %v1780
        %v1782 = vrot.slane %v1755, %v1781
        %v1784 = vunpack.c.l.s4 1983009808
        %v1785 = vunpack.c.0.s8 %v1784
        %v1786 = vlaneseq
        %v1787 = vshrl.u32 %v1786, 7
        %v1788 = vsub.s32 %v1785, %v1787
        %v1789 = vrot.slane %v1775, %v1788
        %v1790 = vcombine.high %v1763, %v1770
        %v1792 = vunpack.c.l.s4 1983009808
        %v1793 = vunpack.c.0.s8 %v1792
        %v1794 = vlaneseq
        %v1795 = vshrl.u32 %v1794, 7
        %v1796 = vsub.s32 %v1793, %v1795
        %v1797 = vrot.slane %v1763, %v1796
        %v1799 = vunpack.c.l.s4 1983009808
        %v1800 = vunpack.c.0.s8 %v1799
        %v1801 = vlaneseq
        %v1802 = vshrl.u32 %v1801, 7
        %v1803 = vsub.s32 %v1800, %v1802
        %v1804 = vrot.slane %v1790, %v1803
        %v1805 = vcombine.low %v1782, %v1797
        %v1806 = vcombine.high %v1782, %v1797
        %v1808 = vunpack.c.l.s4 1934713408
        %v1809 = vunpack.c.0.s8 %v1808
        %v1810 = vlaneseq
        %v1811 = vshrl.u32 %v1810, 7
        %v1812 = vsub.s32 %v1809, %v1811
        %v1813 = vrot.slane %v1805, %v1812
        %v1815 = vunpack.c.l.s4 1934713408
        %v1816 = vunpack.c.0.s8 %v1815
        %v1817 = vlaneseq
        %v1818 = vshrl.u32 %v1817, 7
        %v1819 = vsub.s32 %v1816, %v1818
        %v1820 = vrot.slane %v1806, %v1819
        %v1821 = vcombine.low %v1789, %v1804
        %v1822 = vcombine.high %v1789, %v1804
        %v1824 = vunpack.c.l.s4 1934713408
        %v1825 = vunpack.c.0.s8 %v1824
        %v1826 = vlaneseq
        %v1827 = vshrl.u32 %v1826, 7
        %v1828 = vsub.s32 %v1825, %v1827
        %v1829 = vrot.slane %v1821, %v1828
        %v1831 = vunpack.c.l.s4 1934713408
        %v1832 = vunpack.c.0.s8 %v1831
        %v1833 = vlaneseq
        %v1834 = vshrl.u32 %v1833, 7
        %v1835 = vsub.s32 %v1832, %v1834
        %v1836 = vrot.slane %v1822, %v1835
        %v1837 = vcombine.high %v1813, 0
        %v1838 = vcombine.high %v1820, 0
        %v1839 = vcombine.high %v1829, 0
        %v1840 = vcombine.high %v1836, 0
        %v1841 = vcombine.high %v1759, %v1773
        %v1843 = vunpack.c.l.s4 1983009808
        %v1844 = vunpack.c.0.s8 %v1843
        %v1845 = vlaneseq
        %v1846 = vshrl.u32 %v1845, 7
        %v1847 = vsub.s32 %v1844, %v1846
        %v1848 = vrot.slane %v1759, %v1847
        %v1850 = vunpack.c.l.s4 1983009808
        %v1851 = vunpack.c.0.s8 %v1850
        %v1852 = vlaneseq
        %v1853 = vshrl.u32 %v1852, 7
        %v1854 = vsub.s32 %v1851, %v1853
        %v1855 = vrot.slane %v1841, %v1854
        %v1856 = vcombine.high %v1767, %v1773
        %v1858 = vunpack.c.l.s4 1983009808
        %v1859 = vunpack.c.0.s8 %v1858
        %v1860 = vlaneseq
        %v1861 = vshrl.u32 %v1860, 7
        %v1862 = vsub.s32 %v1859, %v1861
        %v1863 = vrot.slane %v1767, %v1862
        %v1865 = vunpack.c.l.s4 1983009808
        %v1866 = vunpack.c.0.s8 %v1865
        %v1867 = vlaneseq
        %v1868 = vshrl.u32 %v1867, 7
        %v1869 = vsub.s32 %v1866, %v1868
        %v1870 = vrot.slane %v1856, %v1869
        %v1871 = vcombine.low %v1848, %v1863
        %v1872 = vcombine.high %v1848, %v1863
        %v1874 = vunpack.c.l.s4 1934713408
        %v1875 = vunpack.c.0.s8 %v1874
        %v1876 = vlaneseq
        %v1877 = vshrl.u32 %v1876, 7
        %v1878 = vsub.s32 %v1875, %v1877
        %v1879 = vrot.slane %v1871, %v1878
        %v1881 = vunpack.c.l.s4 1934713408
        %v1882 = vunpack.c.0.s8 %v1881
        %v1883 = vlaneseq
        %v1884 = vshrl.u32 %v1883, 7
        %v1885 = vsub.s32 %v1882, %v1884
        %v1886 = vrot.slane %v1872, %v1885
        %v1887 = vcombine.low %v1855, %v1870
        %v1888 = vcombine.high %v1855, %v1870
        %v1890 = vunpack.c.l.s4 1934713408
        %v1891 = vunpack.c.0.s8 %v1890
        %v1892 = vlaneseq
        %v1893 = vshrl.u32 %v1892, 7
        %v1894 = vsub.s32 %v1891, %v1893
        %v1895 = vrot.slane %v1887, %v1894
        %v1897 = vunpack.c.l.s4 1934713408
        %v1898 = vunpack.c.0.s8 %v1897
        %v1899 = vlaneseq
        %v1900 = vshrl.u32 %v1899, 7
        %v1901 = vsub.s32 %v1898, %v1900
        %v1902 = vrot.slane %v1888, %v1901
        %v1903 = vcombine.high %v1879, 0
        %v1904 = vcombine.high %v1886, 0
        %v1905 = vcombine.high %v1895, 0
        %v1906 = vcombine.high %v1902, 0
        %v1907 = vcombine.low %v1813, %v1820
        %v1909 = vunpack.c.l.s4 1983009808
        %v1910 = vunpack.c.0.s8 %v1909
        %v1911 = vlaneseq
        %v1912 = vshrl.u32 %v1911, 7
        %v1913 = vsub.s32 %v1910, %v1912
        %v1914 = vrot.slane %v1907, %v1913
        %v1915 = vcombine.low %v1837, %v1838
        %v1917 = vunpack.c.l.s4 1983009808
        %v1918 = vunpack.c.0.s8 %v1917
        %v1919 = vlaneseq
        %v1920 = vshrl.u32 %v1919, 7
        %v1921 = vsub.s32 %v1918, %v1920
        %v1922 = vrot.slane %v1915, %v1921
        %v1923 = vcombine.low %v1829, %v1836
        %v1925 = vunpack.c.l.s4 1983009808
        %v1926 = vunpack.c.0.s8 %v1925
        %v1927 = vlaneseq
        %v1928 = vshrl.u32 %v1927, 7
        %v1929 = vsub.s32 %v1926, %v1928
        %v1930 = vrot.slane %v1923, %v1929
        %v1931 = vcombine.low %v1839, %v1840
        %v1933 = vunpack.c.l.s4 1983009808
        %v1934 = vunpack.c.0.s8 %v1933
        %v1935 = vlaneseq
        %v1936 = vshrl.u32 %v1935, 7
        %v1937 = vsub.s32 %v1934, %v1936
        %v1938 = vrot.slane %v1931, %v1937
        %v1939 = vcombine.low %v1914, %v1922
        %v1941 = vunpack.c.l.s4 1934713408
        %v1942 = vunpack.c.0.s8 %v1941
        %v1943 = vlaneseq
        %v1944 = vshrl.u32 %v1943, 7
        %v1945 = vsub.s32 %v1942, %v1944
        %v1946 = vrot.slane %v1939, %v1945
        %v1947 = vcombine.low %v1930, %v1938
        %v1949 = vunpack.c.l.s4 1934713408
        %v1950 = vunpack.c.0.s8 %v1949
        %v1951 = vlaneseq
        %v1952 = vshrl.u32 %v1951, 7
        %v1953 = vsub.s32 %v1950, %v1952
        %v1954 = vrot.slane %v1947, %v1953
        %v1955 = vcombine.low %v1946, %v1954
        %v1956 = vcombine.high %v1946, %v1954
        %v1957 = vcombine.low %v1879, %v1886
        %v1959 = vunpack.c.l.s4 1983009808
        %v1960 = vunpack.c.0.s8 %v1959
        %v1961 = vlaneseq
        %v1962 = vshrl.u32 %v1961, 7
        %v1963 = vsub.s32 %v1960, %v1962
        %v1964 = vrot.slane %v1957, %v1963
        %v1965 = vcombine.low %v1903, %v1904
        %v1967 = vunpack.c.l.s4 1983009808
        %v1968 = vunpack.c.0.s8 %v1967
        %v1969 = vlaneseq
        %v1970 = vshrl.u32 %v1969, 7
        %v1971 = vsub.s32 %v1968, %v1970
        %v1972 = vrot.slane %v1965, %v1971
        %v1973 = vcombine.low %v1895, %v1902
        %v1975 = vunpack.c.l.s4 1983009808
        %v1976 = vunpack.c.0.s8 %v1975
        %v1977 = vlaneseq
        %v1978 = vshrl.u32 %v1977, 7
        %v1979 = vsub.s32 %v1976, %v1978
        %v1980 = vrot.slane %v1973, %v1979
        %v1981 = vcombine.low %v1905, %v1906
        %v1983 = vunpack.c.l.s4 1983009808
        %v1984 = vunpack.c.0.s8 %v1983
        %v1985 = vlaneseq
        %v1986 = vshrl.u32 %v1985, 7
        %v1987 = vsub.s32 %v1984, %v1986
        %v1988 = vrot.slane %v1981, %v1987
        %v1989 = vcombine.low %v1964, %v1972
        %v1991 = vunpack.c.l.s4 1934713408
        %v1992 = vunpack.c.0.s8 %v1991
        %v1993 = vlaneseq
        %v1994 = vshrl.u32 %v1993, 7
        %v1995 = vsub.s32 %v1992, %v1994
        %v1996 = vrot.slane %v1989, %v1995
        %v1997 = vcombine.low %v1980, %v1988
        %v1999 = vunpack.c.l.s4 1934713408
        %v2000 = vunpack.c.0.s8 %v1999
        %v2001 = vlaneseq
        %v2002 = vshrl.u32 %v2001, 7
        %v2003 = vsub.s32 %v2000, %v2002
        %v2004 = vrot.slane %v1997, %v2003
        %v2005 = vcombine.low %v1996, %v2004
        %v2006 = vcombine.high %v1996, %v2004
        %v2009 = vpack.i.b16 %v2005, %v1955
        %v2010 = vshrl.u32 %v1955, 16
        %v2011 = vshrl.u32 %v2005, 16
        %v2012 = vpack.i.b16 %v2011, %v2010
        %v2015 = vpack.i.b16 %v2006, %v1956
        %v2016 = vshrl.u32 %v1956, 16
        %v2017 = vshrl.u32 %v2006, 16
        %v2018 = vpack.i.b16 %v2017, %v2016
        %v2019 = vunpack.c.l.b16 %v2009
        %v2020 = vunpack.c.h.b16 %v2009
        %v2021 = vunpack.c.l.b16 %v2012
        %v2022 = vunpack.c.h.b16 %v2012
        %v2023 = vunpack.c.l.b16 %v2015
        %v2024 = vunpack.c.h.b16 %v2015
        %v2025 = vunpack.c.l.b16 %v2018
        %v2026 = vunpack.c.h.b16 %v2018
        %v2027 = vpack.c.b16 %v2019, %v2019
        %v2028 = vpack.c.b16 %v2020, %v2020
        %v2029 = vpack.c.b16 %v2021, %v2021
        %v2030 = vpack.c.b16 %v2022, %v2022
        %v2031 = vpack.c.b16 %v2023, %v2023
        %v2032 = vpack.c.b16 %v2024, %v2024
        %v2033 = vpack.c.b16 %v2025, %v2025
        %v2034 = vpack.c.b16 %v2026, %v2026
        %v2035 = vpack.c.bf16 %v1743, %v1739
        %2037 = vrot.lane.b32.xlu0 %v2035, 96
        %v2038 = vpop.permute.xlu0 %2037
        %2039 = vrot.lane.b32.xlu0 %v2035, 64
        %v2040 = vpop.permute.xlu0 %2039
        %2041 = vrot.lane.b32.xlu0 %v2035, 32
        %v2042 = vpop.permute.xlu0 %2041
        %v2045 = vpack.i.b16 %v2038, %v2035
        %v2047 = vshrl.u32 %v2035, 16
        %v2048 = vshrl.u32 %v2038, 16
        %v2049 = vpack.i.b16 %v2048, %v2047
        %v2053 = vpack.i.b16 %v2042, %v2040
        %v2055 = vshrl.u32 %v2040, 16
        %v2056 = vshrl.u32 %v2042, 16
        %v2057 = vpack.i.b16 %v2056, %v2055
        %v2059 = vcombine.high %v2045, %v1770
        %v2061 = vunpack.c.l.s4 1983009808
        %v2062 = vunpack.c.0.s8 %v2061
        %v2063 = vlaneseq
        %v2064 = vshrl.u32 %v2063, 7
        %v2065 = vsub.s32 %v2062, %v2064
        %v2066 = vrot.slane %v2045, %v2065
        %v2068 = vunpack.c.l.s4 1983009808
        %v2069 = vunpack.c.0.s8 %v2068
        %v2070 = vlaneseq
        %v2071 = vshrl.u32 %v2070, 7
        %v2072 = vsub.s32 %v2069, %v2071
        %v2073 = vrot.slane %v2059, %v2072
        %v2074 = vcombine.high %v2053, %v1770
        %v2076 = vunpack.c.l.s4 1983009808
        %v2077 = vunpack.c.0.s8 %v2076
        %v2078 = vlaneseq
        %v2079 = vshrl.u32 %v2078, 7
        %v2080 = vsub.s32 %v2077, %v2079
        %v2081 = vrot.slane %v2053, %v2080
        %v2083 = vunpack.c.l.s4 1983009808
        %v2084 = vunpack.c.0.s8 %v2083
        %v2085 = vlaneseq
        %v2086 = vshrl.u32 %v2085, 7
        %v2087 = vsub.s32 %v2084, %v2086
        %v2088 = vrot.slane %v2074, %v2087
        %v2089 = vcombine.low %v2066, %v2081
        %v2090 = vcombine.high %v2066, %v2081
        %v2092 = vunpack.c.l.s4 1934713408
        %v2093 = vunpack.c.0.s8 %v2092
        %v2094 = vlaneseq
        %v2095 = vshrl.u32 %v2094, 7
        %v2096 = vsub.s32 %v2093, %v2095
        %v2097 = vrot.slane %v2089, %v2096
        %v2099 = vunpack.c.l.s4 1934713408
        %v2100 = vunpack.c.0.s8 %v2099
        %v2101 = vlaneseq
        %v2102 = vshrl.u32 %v2101, 7
        %v2103 = vsub.s32 %v2100, %v2102
        %v2104 = vrot.slane %v2090, %v2103
        %v2105 = vcombine.low %v2073, %v2088
        %v2106 = vcombine.high %v2073, %v2088
        %v2108 = vunpack.c.l.s4 1934713408
        %v2109 = vunpack.c.0.s8 %v2108
        %v2110 = vlaneseq
        %v2111 = vshrl.u32 %v2110, 7
        %v2112 = vsub.s32 %v2109, %v2111
        %v2113 = vrot.slane %v2105, %v2112
        %v2115 = vunpack.c.l.s4 1934713408
        %v2116 = vunpack.c.0.s8 %v2115
        %v2117 = vlaneseq
        %v2118 = vshrl.u32 %v2117, 7
        %v2119 = vsub.s32 %v2116, %v2118
        %v2120 = vrot.slane %v2106, %v2119
        %v2121 = vcombine.high %v2097, 0
        %v2122 = vcombine.high %v2104, 0
        %v2123 = vcombine.high %v2113, 0
        %v2124 = vcombine.high %v2120, 0
        %v2125 = vcombine.high %v2049, %v1773
        %v2127 = vunpack.c.l.s4 1983009808
        %v2128 = vunpack.c.0.s8 %v2127
        %v2129 = vlaneseq
        %v2130 = vshrl.u32 %v2129, 7
        %v2131 = vsub.s32 %v2128, %v2130
        %v2132 = vrot.slane %v2049, %v2131
        %v2134 = vunpack.c.l.s4 1983009808
        %v2135 = vunpack.c.0.s8 %v2134
        %v2136 = vlaneseq
        %v2137 = vshrl.u32 %v2136, 7
        %v2138 = vsub.s32 %v2135, %v2137
        %v2139 = vrot.slane %v2125, %v2138
        %v2140 = vcombine.high %v2057, %v1773
        %v2142 = vunpack.c.l.s4 1983009808
        %v2143 = vunpack.c.0.s8 %v2142
        %v2144 = vlaneseq
        %v2145 = vshrl.u32 %v2144, 7
        %v2146 = vsub.s32 %v2143, %v2145
        %v2147 = vrot.slane %v2057, %v2146
        %v2149 = vunpack.c.l.s4 1983009808
        %v2150 = vunpack.c.0.s8 %v2149
        %v2151 = vlaneseq
        %v2152 = vshrl.u32 %v2151, 7
        %v2153 = vsub.s32 %v2150, %v2152
        %v2154 = vrot.slane %v2140, %v2153
        %v2155 = vcombine.low %v2132, %v2147
        %v2156 = vcombine.high %v2132, %v2147
        %v2158 = vunpack.c.l.s4 1934713408
        %v2159 = vunpack.c.0.s8 %v2158
        %v2160 = vlaneseq
        %v2161 = vshrl.u32 %v2160, 7
        %v2162 = vsub.s32 %v2159, %v2161
        %v2163 = vrot.slane %v2155, %v2162
        %v2165 = vunpack.c.l.s4 1934713408
        %v2166 = vunpack.c.0.s8 %v2165
        %v2167 = vlaneseq
        %v2168 = vshrl.u32 %v2167, 7
        %v2169 = vsub.s32 %v2166, %v2168
        %v2170 = vrot.slane %v2156, %v2169
        %v2171 = vcombine.low %v2139, %v2154
        %v2172 = vcombine.high %v2139, %v2154
        %v2174 = vunpack.c.l.s4 1934713408
        %v2175 = vunpack.c.0.s8 %v2174
        %v2176 = vlaneseq
        %v2177 = vshrl.u32 %v2176, 7
        %v2178 = vsub.s32 %v2175, %v2177
        %v2179 = vrot.slane %v2171, %v2178
        %v2181 = vunpack.c.l.s4 1934713408
        %v2182 = vunpack.c.0.s8 %v2181
        %v2183 = vlaneseq
        %v2184 = vshrl.u32 %v2183, 7
        %v2185 = vsub.s32 %v2182, %v2184
        %v2186 = vrot.slane %v2172, %v2185
        %v2187 = vcombine.high %v2163, 0
        %v2188 = vcombine.high %v2170, 0
        %v2189 = vcombine.high %v2179, 0
        %v2190 = vcombine.high %v2186, 0
        %v2191 = vcombine.low %v2097, %v2104
        %v2193 = vunpack.c.l.s4 1983009808
        %v2194 = vunpack.c.0.s8 %v2193
        %v2195 = vlaneseq
        %v2196 = vshrl.u32 %v2195, 7
        %v2197 = vsub.s32 %v2194, %v2196
        %v2198 = vrot.slane %v2191, %v2197
        %v2199 = vcombine.low %v2121, %v2122
        %v2201 = vunpack.c.l.s4 1983009808
        %v2202 = vunpack.c.0.s8 %v2201
        %v2203 = vlaneseq
        %v2204 = vshrl.u32 %v2203, 7
        %v2205 = vsub.s32 %v2202, %v2204
        %v2206 = vrot.slane %v2199, %v2205
        %v2207 = vcombine.low %v2113, %v2120
        %v2209 = vunpack.c.l.s4 1983009808
        %v2210 = vunpack.c.0.s8 %v2209
        %v2211 = vlaneseq
        %v2212 = vshrl.u32 %v2211, 7
        %v2213 = vsub.s32 %v2210, %v2212
        %v2214 = vrot.slane %v2207, %v2213
        %v2215 = vcombine.low %v2123, %v2124
        %v2217 = vunpack.c.l.s4 1983009808
        %v2218 = vunpack.c.0.s8 %v2217
        %v2219 = vlaneseq
        %v2220 = vshrl.u32 %v2219, 7
        %v2221 = vsub.s32 %v2218, %v2220
        %v2222 = vrot.slane %v2215, %v2221
        %v2223 = vcombine.low %v2198, %v2206
        %v2225 = vunpack.c.l.s4 1934713408
        %v2226 = vunpack.c.0.s8 %v2225
        %v2227 = vlaneseq
        %v2228 = vshrl.u32 %v2227, 7
        %v2229 = vsub.s32 %v2226, %v2228
        %v2230 = vrot.slane %v2223, %v2229
        %v2231 = vcombine.low %v2214, %v2222
        %v2233 = vunpack.c.l.s4 1934713408
        %v2234 = vunpack.c.0.s8 %v2233
        %v2235 = vlaneseq
        %v2236 = vshrl.u32 %v2235, 7
        %v2237 = vsub.s32 %v2234, %v2236
        %v2238 = vrot.slane %v2231, %v2237
        %v2239 = vcombine.low %v2230, %v2238
        %v2240 = vcombine.high %v2230, %v2238
        %v2241 = vcombine.low %v2163, %v2170
        %v2243 = vunpack.c.l.s4 1983009808
        %v2244 = vunpack.c.0.s8 %v2243
        %v2245 = vlaneseq
        %v2246 = vshrl.u32 %v2245, 7
        %v2247 = vsub.s32 %v2244, %v2246
        %v2248 = vrot.slane %v2241, %v2247
        %v2249 = vcombine.low %v2187, %v2188
        %v2251 = vunpack.c.l.s4 1983009808
        %v2252 = vunpack.c.0.s8 %v2251
        %v2253 = vlaneseq
        %v2254 = vshrl.u32 %v2253, 7
        %v2255 = vsub.s32 %v2252, %v2254
        %v2256 = vrot.slane %v2249, %v2255
        %v2257 = vcombine.low %v2179, %v2186
        %v2259 = vunpack.c.l.s4 1983009808
        %v2260 = vunpack.c.0.s8 %v2259
        %v2261 = vlaneseq
        %v2262 = vshrl.u32 %v2261, 7
        %v2263 = vsub.s32 %v2260, %v2262
        %v2264 = vrot.slane %v2257, %v2263
        %v2265 = vcombine.low %v2189, %v2190
        %v2267 = vunpack.c.l.s4 1983009808
        %v2268 = vunpack.c.0.s8 %v2267
        %v2269 = vlaneseq
        %v2270 = vshrl.u32 %v2269, 7
        %v2271 = vsub.s32 %v2268, %v2270
        %v2272 = vrot.slane %v2265, %v2271
        %v2273 = vcombine.low %v2248, %v2256
        %v2275 = vunpack.c.l.s4 1934713408
        %v2276 = vunpack.c.0.s8 %v2275
        %v2277 = vlaneseq
        %v2278 = vshrl.u32 %v2277, 7
        %v2279 = vsub.s32 %v2276, %v2278
        %v2280 = vrot.slane %v2273, %v2279
        %v2281 = vcombine.low %v2264, %v2272
        %v2283 = vunpack.c.l.s4 1934713408
        %v2284 = vunpack.c.0.s8 %v2283
        %v2285 = vlaneseq
        %v2286 = vshrl.u32 %v2285, 7
        %v2287 = vsub.s32 %v2284, %v2286
        %v2288 = vrot.slane %v2281, %v2287
        %v2289 = vcombine.low %v2280, %v2288
        %v2290 = vcombine.high %v2280, %v2288
        %v2293 = vpack.i.b16 %v2289, %v2239
        %v2294 = vshrl.u32 %v2239, 16
        %v2295 = vshrl.u32 %v2289, 16
        %v2296 = vpack.i.b16 %v2295, %v2294
        %v2299 = vpack.i.b16 %v2290, %v2240
        %v2300 = vshrl.u32 %v2240, 16
        %v2301 = vshrl.u32 %v2290, 16
        %v2302 = vpack.i.b16 %v2301, %v2300
        %v2303 = vunpack.c.l.b16 %v2293
        %v2304 = vunpack.c.h.b16 %v2293
        %v2305 = vunpack.c.l.b16 %v2296
        %v2306 = vunpack.c.h.b16 %v2296
        %v2307 = vunpack.c.l.b16 %v2299
        %v2308 = vunpack.c.h.b16 %v2299
        %v2309 = vunpack.c.l.b16 %v2302
        %v2310 = vunpack.c.h.b16 %v2302
        %v2311 = vpack.c.b16 %v2303, %v2303
        %v2312 = vpack.c.b16 %v2304, %v2304
        %v2313 = vpack.c.b16 %v2305, %v2305
        %v2314 = vpack.c.b16 %v2306, %v2306
        %v2315 = vpack.c.b16 %v2307, %v2307
        %v2316 = vpack.c.b16 %v2308, %v2308
        %v2317 = vpack.c.b16 %v2309, %v2309
        %v2318 = vpack.c.b16 %v2310, %v2310
        %v2319 = vpack.c.bf16 %v1580, %v1579
        %v2320 = vld [vmem:[%s1291] sm:$0xf]
        %v2321 = vld [vmem:[%s1291 + $0x4] sm:$0xf]
        %v2322 = vld [vmem:[%s1291 + $0x8] sm:$0xf]
        %v2323 = vld [vmem:[%s1291 + $0xc] sm:$0xf]
        %v2324 = vld [vmem:[%s1291 + $0x10] sm:$0xf]
        %v2325 = vld [vmem:[%s1291 + $0x14] sm:$0xf]
        %v2326 = vld [vmem:[%s1291 + $0x18] sm:$0xf]
        %v2327 = vld [vmem:[%s1291 + $0x1c] sm:$0xf]
        %v2328 = vld [vmem:[%s1291 + $0x20] sm:$0xf]
        %v2329 = vld [vmem:[%s1291 + $0x24] sm:$0xf]
        %v2330 = vld [vmem:[%s1291 + $0x28] sm:$0xf]
        %v2331 = vld [vmem:[%s1291 + $0x2c] sm:$0xf]
        %v2332 = vld [vmem:[%s1291 + $0x30] sm:$0xf]
        %v2333 = vld [vmem:[%s1291 + $0x34] sm:$0xf]
        %v2334 = vld [vmem:[%s1291 + $0x38] sm:$0xf]
        %v2335 = vld [vmem:[%s1291 + $0x3c] sm:$0xf]
        %v2336 = vld [vmem:[%s1528] sm:$0x1]
        %v2338 = vlaneseq
        %v2339 = vshrl.u32 %v2338, 7
        %v2340 = vsub.s32 0, %v2339
        %v2341 = vrot.slane %v2336, %v2340
        %v2359 = vunpack.c.l.b16 %v2320
        %v2360 = vunpack.c.l.b16 %v2321
        %v2361 = vunpack.c.l.b16 %v2322
        %v2362 = vunpack.c.l.b16 %v2323
        %v2363 = vunpack.c.l.b16 %v2324
        %v2364 = vunpack.c.l.b16 %v2325
        %v2365 = vunpack.c.l.b16 %v2326
        %v2366 = vunpack.c.l.b16 %v2327
        %v2367 = vunpack.c.l.b16 %v2328
        %v2368 = vunpack.c.l.b16 %v2329
        %v2369 = vunpack.c.l.b16 %v2330
        %v2370 = vunpack.c.l.b16 %v2331
        %v2371 = vunpack.c.l.b16 %v2332
        %v2372 = vunpack.c.l.b16 %v2333
        %v2373 = vunpack.c.l.b16 %v2334
        %v2374 = vunpack.c.l.b16 %v2335
        %v2375 = vpack.c.b16 %v2360, %v2359
        %v2376 = vpack.c.b16 %v2362, %v2361
        %v2377 = vpack.c.b16 %v2364, %v2363
        %v2378 = vpack.c.b16 %v2366, %v2365
        %v2379 = vpack.c.b16 %v2368, %v2367
        %v2380 = vpack.c.b16 %v2370, %v2369
        %v2381 = vpack.c.b16 %v2372, %v2371
        %v2382 = vpack.c.b16 %v2374, %v2373
        %2391 = vmatprep.subr.bf16.mxu0 0
        %2392 = vmatpush1.bf16.msra.mxu0 %v2375
        %2393 = vmatprep.subr.bf16.mxu0 0
        %2394 = vmatpush1.bf16.msra.mxu0 %v2376
        %2395 = vmatprep.subr.bf16.mxu0 0
        %2396 = vmatpush1.bf16.msra.mxu0 %v2377
        %2397 = vmatprep.subr.bf16.mxu0 0
        %2398 = vmatpush1.bf16.msra.mxu0 %v2378
        %2399 = vmatprep.subr.bf16.mxu0 0
        %2400 = vmatpush1.bf16.msra.mxu0 %v2379
        %2401 = vmatprep.subr.bf16.mxu0 0
        %2402 = vmatpush1.bf16.msra.mxu0 %v2380
        %2403 = vmatprep.subr.bf16.mxu0 0
        %2404 = vmatpush1.bf16.msra.mxu0 %v2381
        %2405 = vmatprep.subr.bf16.mxu0 0
        %2406 = vmatpush1.bf16.msra.mxu0 %v2382
        %2407 = vmatprep.subr.bf16.mxu0 0
        %2408 = vmatpush1.bf16.msra.mxu0 0
        %2409 = vmatprep.subr.bf16.mxu0 0
        %2410 = vmatpush1.bf16.msra.mxu0 0
        %2411 = vmatprep.subr.bf16.mxu0 0
        %2412 = vmatpush1.bf16.msra.mxu0 0
        %2413 = vmatprep.subr.bf16.mxu0 0
        %2414 = vmatpush1.bf16.msra.mxu0 0
        %2415 = vmatprep.subr.bf16.mxu0 0
        %2416 = vmatpush1.bf16.msra.mxu0 0
        %2417 = vmatprep.subr.bf16.mxu0 0
        %2418 = vmatpush1.bf16.msra.mxu0 0
        %2419 = vmatprep.subr.bf16.mxu0 0
        %2420 = vmatpush1.bf16.msra.mxu0 0
        %2421 = vmatprep.subr.bf16.mxu0 0
        %2422 = vmatpush1.bf16.msra.mxu0 0
        %2423 = vmatprep.mubr.bf16.mxu0 0
        %2424 = vmatmul.mubr.bf16.gmra.mrb[0].mxu0 %v2319
        %v2425 = vpop.f32.mrb[0].mxu0
        %v2426 = vadd.f32 %v2341, %v2425
        %v2427 = vpop.f32.mrb[0].mxu0
        %v2428 = vpop.f32.mrb[0].mxu0
        %v2429 = vadd.f32 %v2341, %v2428
        %v2430 = vpop.f32.mrb[0].mxu0
        %2431 = vdwg.mxu0
        %v2432 = vpack.c.bf16 %v2429, %v2426
        %2434 = vrot.lane.b32.xlu0 %v2432, 96
        %v2435 = vpop.permute.xlu0 %2434
        %2436 = vrot.lane.b32.xlu0 %v2432, 64
        %v2437 = vpop.permute.xlu0 %2436
        %2438 = vrot.lane.b32.xlu0 %v2432, 32
        %v2439 = vpop.permute.xlu0 %2438
        %v2442 = vpack.i.b16 %v2435, %v2432
        %v2444 = vshrl.u32 %v2432, 16
        %v2445 = vshrl.u32 %v2435, 16
        %v2446 = vpack.i.b16 %v2445, %v2444
        %v2450 = vpack.i.b16 %v2439, %v2437
        %v2452 = vshrl.u32 %v2437, 16
        %v2453 = vshrl.u32 %v2439, 16
        %v2454 = vpack.i.b16 %v2453, %v2452
        %v2456 = vcombine.high %v2442, %v1770
        %v2458 = vunpack.c.l.s4 1983009808
        %v2459 = vunpack.c.0.s8 %v2458
        %v2460 = vlaneseq
        %v2461 = vshrl.u32 %v2460, 7
        %v2462 = vsub.s32 %v2459, %v2461
        %v2463 = vrot.slane %v2442, %v2462
        %v2465 = vunpack.c.l.s4 1983009808
        %v2466 = vunpack.c.0.s8 %v2465
        %v2467 = vlaneseq
        %v2468 = vshrl.u32 %v2467, 7
        %v2469 = vsub.s32 %v2466, %v2468
        %v2470 = vrot.slane %v2456, %v2469
        %v2471 = vcombine.high %v2450, %v1770
        %v2473 = vunpack.c.l.s4 1983009808
        %v2474 = vunpack.c.0.s8 %v2473
        %v2475 = vlaneseq
        %v2476 = vshrl.u32 %v2475, 7
        %v2477 = vsub.s32 %v2474, %v2476
        %v2478 = vrot.slane %v2450, %v2477
        %v2480 = vunpack.c.l.s4 1983009808
        %v2481 = vunpack.c.0.s8 %v2480
        %v2482 = vlaneseq
        %v2483 = vshrl.u32 %v2482, 7
        %v2484 = vsub.s32 %v2481, %v2483
        %v2485 = vrot.slane %v2471, %v2484
        %v2486 = vcombine.low %v2463, %v2478
        %v2487 = vcombine.high %v2463, %v2478
        %v2489 = vunpack.c.l.s4 1934713408
        %v2490 = vunpack.c.0.s8 %v2489
        %v2491 = vlaneseq
        %v2492 = vshrl.u32 %v2491, 7
        %v2493 = vsub.s32 %v2490, %v2492
        %v2494 = vrot.slane %v2486, %v2493
        %v2496 = vunpack.c.l.s4 1934713408
        %v2497 = vunpack.c.0.s8 %v2496
        %v2498 = vlaneseq
        %v2499 = vshrl.u32 %v2498, 7
        %v2500 = vsub.s32 %v2497, %v2499
        %v2501 = vrot.slane %v2487, %v2500
        %v2502 = vcombine.low %v2470, %v2485
        %v2503 = vcombine.high %v2470, %v2485
        %v2505 = vunpack.c.l.s4 1934713408
        %v2506 = vunpack.c.0.s8 %v2505
        %v2507 = vlaneseq
        %v2508 = vshrl.u32 %v2507, 7
        %v2509 = vsub.s32 %v2506, %v2508
        %v2510 = vrot.slane %v2502, %v2509
        %v2512 = vunpack.c.l.s4 1934713408
        %v2513 = vunpack.c.0.s8 %v2512
        %v2514 = vlaneseq
        %v2515 = vshrl.u32 %v2514, 7
        %v2516 = vsub.s32 %v2513, %v2515
        %v2517 = vrot.slane %v2503, %v2516
        %v2518 = vcombine.high %v2494, 0
        %v2519 = vcombine.high %v2501, 0
        %v2520 = vcombine.high %v2510, 0
        %v2521 = vcombine.high %v2517, 0
        %v2522 = vcombine.high %v2446, %v1773
        %v2524 = vunpack.c.l.s4 1983009808
        %v2525 = vunpack.c.0.s8 %v2524
        %v2526 = vlaneseq
        %v2527 = vshrl.u32 %v2526, 7
        %v2528 = vsub.s32 %v2525, %v2527
        %v2529 = vrot.slane %v2446, %v2528
        %v2531 = vunpack.c.l.s4 1983009808
        %v2532 = vunpack.c.0.s8 %v2531
        %v2533 = vlaneseq
        %v2534 = vshrl.u32 %v2533, 7
        %v2535 = vsub.s32 %v2532, %v2534
        %v2536 = vrot.slane %v2522, %v2535
        %v2537 = vcombine.high %v2454, %v1773
        %v2539 = vunpack.c.l.s4 1983009808
        %v2540 = vunpack.c.0.s8 %v2539
        %v2541 = vlaneseq
        %v2542 = vshrl.u32 %v2541, 7
        %v2543 = vsub.s32 %v2540, %v2542
        %v2544 = vrot.slane %v2454, %v2543
        %v2546 = vunpack.c.l.s4 1983009808
        %v2547 = vunpack.c.0.s8 %v2546
        %v2548 = vlaneseq
        %v2549 = vshrl.u32 %v2548, 7
        %v2550 = vsub.s32 %v2547, %v2549
        %v2551 = vrot.slane %v2537, %v2550
        %v2552 = vcombine.low %v2529, %v2544
        %v2553 = vcombine.high %v2529, %v2544
        %v2555 = vunpack.c.l.s4 1934713408
        %v2556 = vunpack.c.0.s8 %v2555
        %v2557 = vlaneseq
        %v2558 = vshrl.u32 %v2557, 7
        %v2559 = vsub.s32 %v2556, %v2558
        %v2560 = vrot.slane %v2552, %v2559
        %v2562 = vunpack.c.l.s4 1934713408
        %v2563 = vunpack.c.0.s8 %v2562
        %v2564 = vlaneseq
        %v2565 = vshrl.u32 %v2564, 7
        %v2566 = vsub.s32 %v2563, %v2565
        %v2567 = vrot.slane %v2553, %v2566
        %v2568 = vcombine.low %v2536, %v2551
        %v2569 = vcombine.high %v2536, %v2551
        %v2571 = vunpack.c.l.s4 1934713408
        %v2572 = vunpack.c.0.s8 %v2571
        %v2573 = vlaneseq
        %v2574 = vshrl.u32 %v2573, 7
        %v2575 = vsub.s32 %v2572, %v2574
        %v2576 = vrot.slane %v2568, %v2575
        %v2578 = vunpack.c.l.s4 1934713408
        %v2579 = vunpack.c.0.s8 %v2578
        %v2580 = vlaneseq
        %v2581 = vshrl.u32 %v2580, 7
        %v2582 = vsub.s32 %v2579, %v2581
        %v2583 = vrot.slane %v2569, %v2582
        %v2584 = vcombine.high %v2560, 0
        %v2585 = vcombine.high %v2567, 0
        %v2586 = vcombine.high %v2576, 0
        %v2587 = vcombine.high %v2583, 0
        %v2588 = vcombine.low %v2494, %v2501
        %v2590 = vunpack.c.l.s4 1983009808
        %v2591 = vunpack.c.0.s8 %v2590
        %v2592 = vlaneseq
        %v2593 = vshrl.u32 %v2592, 7
        %v2594 = vsub.s32 %v2591, %v2593
        %v2595 = vrot.slane %v2588, %v2594
        %v2596 = vcombine.low %v2518, %v2519
        %v2598 = vunpack.c.l.s4 1983009808
        %v2599 = vunpack.c.0.s8 %v2598
        %v2600 = vlaneseq
        %v2601 = vshrl.u32 %v2600, 7
        %v2602 = vsub.s32 %v2599, %v2601
        %v2603 = vrot.slane %v2596, %v2602
        %v2604 = vcombine.low %v2510, %v2517
        %v2606 = vunpack.c.l.s4 1983009808
        %v2607 = vunpack.c.0.s8 %v2606
        %v2608 = vlaneseq
        %v2609 = vshrl.u32 %v2608, 7
        %v2610 = vsub.s32 %v2607, %v2609
        %v2611 = vrot.slane %v2604, %v2610
        %v2612 = vcombine.low %v2520, %v2521
        %v2614 = vunpack.c.l.s4 1983009808
        %v2615 = vunpack.c.0.s8 %v2614
        %v2616 = vlaneseq
        %v2617 = vshrl.u32 %v2616, 7
        %v2618 = vsub.s32 %v2615, %v2617
        %v2619 = vrot.slane %v2612, %v2618
        %v2620 = vcombine.low %v2595, %v2603
        %v2622 = vunpack.c.l.s4 1934713408
        %v2623 = vunpack.c.0.s8 %v2622
        %v2624 = vlaneseq
        %v2625 = vshrl.u32 %v2624, 7
        %v2626 = vsub.s32 %v2623, %v2625
        %v2627 = vrot.slane %v2620, %v2626
        %v2628 = vcombine.low %v2611, %v2619
        %v2630 = vunpack.c.l.s4 1934713408
        %v2631 = vunpack.c.0.s8 %v2630
        %v2632 = vlaneseq
        %v2633 = vshrl.u32 %v2632, 7
        %v2634 = vsub.s32 %v2631, %v2633
        %v2635 = vrot.slane %v2628, %v2634
        %v2636 = vcombine.low %v2627, %v2635
        %v2637 = vcombine.high %v2627, %v2635
        %v2638 = vcombine.low %v2560, %v2567
        %v2640 = vunpack.c.l.s4 1983009808
        %v2641 = vunpack.c.0.s8 %v2640
        %v2642 = vlaneseq
        %v2643 = vshrl.u32 %v2642, 7
        %v2644 = vsub.s32 %v2641, %v2643
        %v2645 = vrot.slane %v2638, %v2644
        %v2646 = vcombine.low %v2584, %v2585
        %v2648 = vunpack.c.l.s4 1983009808
        %v2649 = vunpack.c.0.s8 %v2648
        %v2650 = vlaneseq
        %v2651 = vshrl.u32 %v2650, 7
        %v2652 = vsub.s32 %v2649, %v2651
        %v2653 = vrot.slane %v2646, %v2652
        %v2654 = vcombine.low %v2576, %v2583
        %v2656 = vunpack.c.l.s4 1983009808
        %v2657 = vunpack.c.0.s8 %v2656
        %v2658 = vlaneseq
        %v2659 = vshrl.u32 %v2658, 7
        %v2660 = vsub.s32 %v2657, %v2659
        %v2661 = vrot.slane %v2654, %v2660
        %v2662 = vcombine.low %v2586, %v2587
        %v2664 = vunpack.c.l.s4 1983009808
        %v2665 = vunpack.c.0.s8 %v2664
        %v2666 = vlaneseq
        %v2667 = vshrl.u32 %v2666, 7
        %v2668 = vsub.s32 %v2665, %v2667
        %v2669 = vrot.slane %v2662, %v2668
        %v2670 = vcombine.low %v2645, %v2653
        %v2672 = vunpack.c.l.s4 1934713408
        %v2673 = vunpack.c.0.s8 %v2672
        %v2674 = vlaneseq
        %v2675 = vshrl.u32 %v2674, 7
        %v2676 = vsub.s32 %v2673, %v2675
        %v2677 = vrot.slane %v2670, %v2676
        %v2678 = vcombine.low %v2661, %v2669
        %v2680 = vunpack.c.l.s4 1934713408
        %v2681 = vunpack.c.0.s8 %v2680
        %v2682 = vlaneseq
        %v2683 = vshrl.u32 %v2682, 7
        %v2684 = vsub.s32 %v2681, %v2683
        %v2685 = vrot.slane %v2678, %v2684
        %v2686 = vcombine.low %v2677, %v2685
        %v2687 = vcombine.high %v2677, %v2685
        %v2690 = vpack.i.b16 %v2686, %v2636
        %v2691 = vshrl.u32 %v2636, 16
        %v2692 = vshrl.u32 %v2686, 16
        %v2693 = vpack.i.b16 %v2692, %v2691
        %v2696 = vpack.i.b16 %v2687, %v2637
        %v2697 = vshrl.u32 %v2637, 16
        %v2698 = vshrl.u32 %v2687, 16
        %v2699 = vpack.i.b16 %v2698, %v2697
        %v2700 = vunpack.c.l.b16 %v2690
        %v2701 = vunpack.c.h.b16 %v2690
        %v2702 = vunpack.c.l.b16 %v2693
        %v2703 = vunpack.c.h.b16 %v2693
        %v2704 = vunpack.c.l.b16 %v2696
        %v2705 = vunpack.c.h.b16 %v2696
        %v2706 = vunpack.c.l.b16 %v2699
        %v2707 = vunpack.c.h.b16 %v2699
        %v2708 = vpack.c.b16 %v2700, %v2700
        %v2709 = vpack.c.b16 %v2701, %v2701
        %v2710 = vpack.c.b16 %v2702, %v2702
        %v2711 = vpack.c.b16 %v2703, %v2703
        %v2712 = vpack.c.b16 %v2704, %v2704
        %v2713 = vpack.c.b16 %v2705, %v2705
        %v2714 = vpack.c.b16 %v2706, %v2706
        %v2715 = vpack.c.b16 %v2707, %v2707
        %vm2716 = vcmask 261120
        %v2718 = vsel %vm2716, %v2027, 0
        %v2721 = vsel %vm2716, %v2311, 0
        %2723 = vmatprep.subr.bf16.mxu0 0
        %2724 = vmatpush1.bf16.xpose.msra.mxu0 %v2721
        %2725 = vmatprep.subr.bf16.mxu0 0
        %2726 = vmatpush1.bf16.xpose.msra.mxu0 0
        %2727 = vmatprep.subr.bf16.mxu0 0
        %2728 = vmatpush1.bf16.xpose.msra.mxu0 0
        %2729 = vmatprep.subr.bf16.mxu0 0
        %2730 = vmatpush1.bf16.xpose.msra.mxu0 0
        %2731 = vmatprep.subr.bf16.mxu0 0
        %2732 = vmatpush1.bf16.xpose.msra.mxu0 0
        %2733 = vmatprep.subr.bf16.mxu0 0
        %2734 = vmatpush1.bf16.xpose.msra.mxu0 0
        %2735 = vmatprep.subr.bf16.mxu0 0
        %2736 = vmatpush1.bf16.xpose.msra.mxu0 0
        %2737 = vmatprep.subr.bf16.mxu0 0
        %2738 = vmatpush1.bf16.xpose.msra.mxu0 0
        %2739 = vmatprep.subr.bf16.mxu0 0
        %2740 = vmatpush1.bf16.xpose.msra.mxu0 0
        %2741 = vmatprep.subr.bf16.mxu0 0
        %2742 = vmatpush1.bf16.xpose.msra.mxu0 0
        %2743 = vmatprep.subr.bf16.mxu0 0
        %2744 = vmatpush1.bf16.xpose.msra.mxu0 0
        %2745 = vmatprep.subr.bf16.mxu0 0
        %2746 = vmatpush1.bf16.xpose.msra.mxu0 0
        %2747 = vmatprep.subr.bf16.mxu0 0
        %2748 = vmatpush1.bf16.xpose.msra.mxu0 0
        %2749 = vmatprep.subr.bf16.mxu0 0
        %2750 = vmatpush1.bf16.xpose.msra.mxu0 0
        %2751 = vmatprep.subr.bf16.mxu0 0
        %2752 = vmatpush1.bf16.xpose.msra.mxu0 0
        %2753 = vmatprep.subr.bf16.mxu0 0
        %2754 = vmatpush1.bf16.xpose.msra.mxu0 0
        %2755 = vmatprep.mubr.bf16.mxu0 0
        %2756 = vmatmul.mubr.bf16.gmra.mrb[0].mxu0 %v2718
        %v2757 = vpop.f32.mrb[0].mxu0
        %v2758 = vadd.f32 0.0, %v2757
        %v2759 = vpop.f32.mrb[0].mxu0
        %v2760 = vpop.f32.mrb[0].mxu0
        %v2761 = vpop.f32.mrb[0].mxu0
        %2762 = vdwg.mxu0
        %v2764 = vsel %vm2716, %v2028, 0
        %v2767 = vsel %vm2716, %v2312, 0
        %2769 = vmatprep.subr.bf16.mxu0 0
        %2770 = vmatpush1.bf16.xpose.msra.mxu0 %v2767
        %2771 = vmatprep.subr.bf16.mxu0 0
        %2772 = vmatpush1.bf16.xpose.msra.mxu0 0
        %2773 = vmatprep.subr.bf16.mxu0 0
        %2774 = vmatpush1.bf16.xpose.msra.mxu0 0
        %2775 = vmatprep.subr.bf16.mxu0 0
        %2776 = vmatpush1.bf16.xpose.msra.mxu0 0
        %2777 = vmatprep.subr.bf16.mxu0 0
        %2778 = vmatpush1.bf16.xpose.msra.mxu0 0
        %2779 = vmatprep.subr.bf16.mxu0 0
        %2780 = vmatpush1.bf16.xpose.msra.mxu0 0
        %2781 = vmatprep.subr.bf16.mxu0 0
        %2782 = vmatpush1.bf16.xpose.msra.mxu0 0
        %2783 = vmatprep.subr.bf16.mxu0 0
        %2784 = vmatpush1.bf16.xpose.msra.mxu0 0
        %2785 = vmatprep.subr.bf16.mxu0 0
        %2786 = vmatpush1.bf16.xpose.msra.mxu0 0
        %2787 = vmatprep.subr.bf16.mxu0 0
        %2788 = vmatpush1.bf16.xpose.msra.mxu0 0
        %2789 = vmatprep.subr.bf16.mxu0 0
        %2790 = vmatpush1.bf16.xpose.msra.mxu0 0
        %2791 = vmatprep.subr.bf16.mxu0 0
        %2792 = vmatpush1.bf16.xpose.msra.mxu0 0
        %2793 = vmatprep.subr.bf16.mxu0 0
        %2794 = vmatpush1.bf16.xpose.msra.mxu0 0
        %2795 = vmatprep.subr.bf16.mxu0 0
        %2796 = vmatpush1.bf16.xpose.msra.mxu0 0
        %2797 = vmatprep.subr.bf16.mxu0 0
        %2798 = vmatpush1.bf16.xpose.msra.mxu0 0
        %2799 = vmatprep.subr.bf16.mxu0 0
        %2800 = vmatpush1.bf16.xpose.msra.mxu0 0
        %2801 = vmatprep.mubr.bf16.mxu0 0
        %2802 = vmatmul.mubr.bf16.gmra.mrb[0].mxu0 %v2764
        %v2803 = vpop.f32.mrb[0].mxu0
        %v2804 = vadd.f32 0.0, %v2803
        %v2805 = vpop.f32.mrb[0].mxu0
        %v2806 = vpop.f32.mrb[0].mxu0
        %v2807 = vpop.f32.mrb[0].mxu0
        %2808 = vdwg.mxu0
        %v2810 = vsel %vm2716, %v2029, 0
        %v2813 = vsel %vm2716, %v2313, 0
        %2815 = vmatprep.subr.bf16.mxu0 0
        %2816 = vmatpush1.bf16.xpose.msra.mxu0 %v2813
        %2817 = vmatprep.subr.bf16.mxu0 0
        %2818 = vmatpush1.bf16.xpose.msra.mxu0 0
        %2819 = vmatprep.subr.bf16.mxu0 0
        %2820 = vmatpush1.bf16.xpose.msra.mxu0 0
        %2821 = vmatprep.subr.bf16.mxu0 0
        %2822 = vmatpush1.bf16.xpose.msra.mxu0 0
        %2823 = vmatprep.subr.bf16.mxu0 0
        %2824 = vmatpush1.bf16.xpose.msra.mxu0 0
        %2825 = vmatprep.subr.bf16.mxu0 0
        %2826 = vmatpush1.bf16.xpose.msra.mxu0 0
        %2827 = vmatprep.subr.bf16.mxu0 0
        %2828 = vmatpush1.bf16.xpose.msra.mxu0 0
        %2829 = vmatprep.subr.bf16.mxu0 0
        %2830 = vmatpush1.bf16.xpose.msra.mxu0 0
        %2831 = vmatprep.subr.bf16.mxu0 0
        %2832 = vmatpush1.bf16.xpose.msra.mxu0 0
        %2833 = vmatprep.subr.bf16.mxu0 0
        %2834 = vmatpush1.bf16.xpose.msra.mxu0 0
        %2835 = vmatprep.subr.bf16.mxu0 0
        %2836 = vmatpush1.bf16.xpose.msra.mxu0 0
        %2837 = vmatprep.subr.bf16.mxu0 0
        %2838 = vmatpush1.bf16.xpose.msra.mxu0 0
        %2839 = vmatprep.subr.bf16.mxu0 0
        %2840 = vmatpush1.bf16.xpose.msra.mxu0 0
        %2841 = vmatprep.subr.bf16.mxu0 0
        %2842 = vmatpush1.bf16.xpose.msra.mxu0 0
        %2843 = vmatprep.subr.bf16.mxu0 0
        %2844 = vmatpush1.bf16.xpose.msra.mxu0 0
        %2845 = vmatprep.subr.bf16.mxu0 0
        %2846 = vmatpush1.bf16.xpose.msra.mxu0 0
        %2847 = vmatprep.mubr.bf16.mxu0 0
        %2848 = vmatmul.mubr.bf16.gmra.mrb[0].mxu0 %v2810
        %v2849 = vpop.f32.mrb[0].mxu0
        %v2850 = vadd.f32 0.0, %v2849
        %v2851 = vpop.f32.mrb[0].mxu0
        %v2852 = vpop.f32.mrb[0].mxu0
        %v2853 = vpop.f32.mrb[0].mxu0
        %2854 = vdwg.mxu0
        %v2856 = vsel %vm2716, %v2030, 0
        %v2859 = vsel %vm2716, %v2314, 0
        %2861 = vmatprep.subr.bf16.mxu0 0
        %2862 = vmatpush1.bf16.xpose.msra.mxu0 %v2859
        %2863 = vmatprep.subr.bf16.mxu0 0
        %2864 = vmatpush1.bf16.xpose.msra.mxu0 0
        %2865 = vmatprep.subr.bf16.mxu0 0
        %2866 = vmatpush1.bf16.xpose.msra.mxu0 0
        %2867 = vmatprep.subr.bf16.mxu0 0
        %2868 = vmatpush1.bf16.xpose.msra.mxu0 0
        %2869 = vmatprep.subr.bf16.mxu0 0
        %2870 = vmatpush1.bf16.xpose.msra.mxu0 0
        %2871 = vmatprep.subr.bf16.mxu0 0
        %2872 = vmatpush1.bf16.xpose.msra.mxu0 0
        %2873 = vmatprep.subr.bf16.mxu0 0
        %2874 = vmatpush1.bf16.xpose.msra.mxu0 0
        %2875 = vmatprep.subr.bf16.mxu0 0
        %2876 = vmatpush1.bf16.xpose.msra.mxu0 0
        %2877 = vmatprep.subr.bf16.mxu0 0
        %2878 = vmatpush1.bf16.xpose.msra.mxu0 0
        %2879 = vmatprep.subr.bf16.mxu0 0
        %2880 = vmatpush1.bf16.xpose.msra.mxu0 0
        %2881 = vmatprep.subr.bf16.mxu0 0
        %2882 = vmatpush1.bf16.xpose.msra.mxu0 0
        %2883 = vmatprep.subr.bf16.mxu0 0
        %2884 = vmatpush1.bf16.xpose.msra.mxu0 0
        %2885 = vmatprep.subr.bf16.mxu0 0
        %2886 = vmatpush1.bf16.xpose.msra.mxu0 0
        %2887 = vmatprep.subr.bf16.mxu0 0
        %2888 = vmatpush1.bf16.xpose.msra.mxu0 0
        %2889 = vmatprep.subr.bf16.mxu0 0
        %2890 = vmatpush1.bf16.xpose.msra.mxu0 0
        %2891 = vmatprep.subr.bf16.mxu0 0
        %2892 = vmatpush1.bf16.xpose.msra.mxu0 0
        %2893 = vmatprep.mubr.bf16.mxu0 0
        %2894 = vmatmul.mubr.bf16.gmra.mrb[0].mxu0 %v2856
        %v2895 = vpop.f32.mrb[0].mxu0
        %v2896 = vadd.f32 0.0, %v2895
        %v2897 = vpop.f32.mrb[0].mxu0
        %v2898 = vpop.f32.mrb[0].mxu0
        %v2899 = vpop.f32.mrb[0].mxu0
        %2900 = vdwg.mxu0
        %v2902 = vsel %vm2716, %v2031, 0
        %v2905 = vsel %vm2716, %v2315, 0
        %2907 = vmatprep.subr.bf16.mxu0 0
        %2908 = vmatpush1.bf16.xpose.msra.mxu0 %v2905
        %2909 = vmatprep.subr.bf16.mxu0 0
        %2910 = vmatpush1.bf16.xpose.msra.mxu0 0
        %2911 = vmatprep.subr.bf16.mxu0 0
        %2912 = vmatpush1.bf16.xpose.msra.mxu0 0
        %2913 = vmatprep.subr.bf16.mxu0 0
        %2914 = vmatpush1.bf16.xpose.msra.mxu0 0
        %2915 = vmatprep.subr.bf16.mxu0 0
        %2916 = vmatpush1.bf16.xpose.msra.mxu0 0
        %2917 = vmatprep.subr.bf16.mxu0 0
        %2918 = vmatpush1.bf16.xpose.msra.mxu0 0
        %2919 = vmatprep.subr.bf16.mxu0 0
        %2920 = vmatpush1.bf16.xpose.msra.mxu0 0
        %2921 = vmatprep.subr.bf16.mxu0 0
        %2922 = vmatpush1.bf16.xpose.msra.mxu0 0
        %2923 = vmatprep.subr.bf16.mxu0 0
        %2924 = vmatpush1.bf16.xpose.msra.mxu0 0
        %2925 = vmatprep.subr.bf16.mxu0 0
        %2926 = vmatpush1.bf16.xpose.msra.mxu0 0
        %2927 = vmatprep.subr.bf16.mxu0 0
        %2928 = vmatpush1.bf16.xpose.msra.mxu0 0
        %2929 = vmatprep.subr.bf16.mxu0 0
        %2930 = vmatpush1.bf16.xpose.msra.mxu0 0
        %2931 = vmatprep.subr.bf16.mxu0 0
        %2932 = vmatpush1.bf16.xpose.msra.mxu0 0
        %2933 = vmatprep.subr.bf16.mxu0 0
        %2934 = vmatpush1.bf16.xpose.msra.mxu0 0
        %2935 = vmatprep.subr.bf16.mxu0 0
        %2936 = vmatpush1.bf16.xpose.msra.mxu0 0
        %2937 = vmatprep.subr.bf16.mxu0 0
        %2938 = vmatpush1.bf16.xpose.msra.mxu0 0
        %2939 = vmatprep.mubr.bf16.mxu0 0
        %2940 = vmatmul.mubr.bf16.gmra.mrb[0].mxu0 %v2902
        %v2941 = vpop.f32.mrb[0].mxu0
        %v2942 = vadd.f32 0.0, %v2941
        %v2943 = vpop.f32.mrb[0].mxu0
        %v2944 = vpop.f32.mrb[0].mxu0
        %v2945 = vpop.f32.mrb[0].mxu0
        %2946 = vdwg.mxu0
        %v2948 = vsel %vm2716, %v2032, 0
        %v2951 = vsel %vm2716, %v2316, 0
        %2953 = vmatprep.subr.bf16.mxu0 0
        %2954 = vmatpush1.bf16.xpose.msra.mxu0 %v2951
        %2955 = vmatprep.subr.bf16.mxu0 0
        %2956 = vmatpush1.bf16.xpose.msra.mxu0 0
        %2957 = vmatprep.subr.bf16.mxu0 0
        %2958 = vmatpush1.bf16.xpose.msra.mxu0 0
        %2959 = vmatprep.subr.bf16.mxu0 0
        %2960 = vmatpush1.bf16.xpose.msra.mxu0 0
        %2961 = vmatprep.subr.bf16.mxu0 0
        %2962 = vmatpush1.bf16.xpose.msra.mxu0 0
        %2963 = vmatprep.subr.bf16.mxu0 0
        %2964 = vmatpush1.bf16.xpose.msra.mxu0 0
        %2965 = vmatprep.subr.bf16.mxu0 0
        %2966 = vmatpush1.bf16.xpose.msra.mxu0 0
        %2967 = vmatprep.subr.bf16.mxu0 0
        %2968 = vmatpush1.bf16.xpose.msra.mxu0 0
        %2969 = vmatprep.subr.bf16.mxu0 0
        %2970 = vmatpush1.bf16.xpose.msra.mxu0 0
        %2971 = vmatprep.subr.bf16.mxu0 0
        %2972 = vmatpush1.bf16.xpose.msra.mxu0 0
        %2973 = vmatprep.subr.bf16.mxu0 0
        %2974 = vmatpush1.bf16.xpose.msra.mxu0 0
        %2975 = vmatprep.subr.bf16.mxu0 0
        %2976 = vmatpush1.bf16.xpose.msra.mxu0 0
        %2977 = vmatprep.subr.bf16.mxu0 0
        %2978 = vmatpush1.bf16.xpose.msra.mxu0 0
        %2979 = vmatprep.subr.bf16.mxu0 0
        %2980 = vmatpush1.bf16.xpose.msra.mxu0 0
        %2981 = vmatprep.subr.bf16.mxu0 0
        %2982 = vmatpush1.bf16.xpose.msra.mxu0 0
        %2983 = vmatprep.subr.bf16.mxu0 0
        %2984 = vmatpush1.bf16.xpose.msra.mxu0 0
        %2985 = vmatprep.mubr.bf16.mxu0 0
        %2986 = vmatmul.mubr.bf16.gmra.mrb[0].mxu0 %v2948
        %v2987 = vpop.f32.mrb[0].mxu0
        %v2988 = vadd.f32 0.0, %v2987
        %v2989 = vpop.f32.mrb[0].mxu0
        %v2990 = vpop.f32.mrb[0].mxu0
        %v2991 = vpop.f32.mrb[0].mxu0
        %2992 = vdwg.mxu0
        %v2994 = vsel %vm2716, %v2033, 0
        %v2997 = vsel %vm2716, %v2317, 0
        %2999 = vmatprep.subr.bf16.mxu0 0
        %3000 = vmatpush1.bf16.xpose.msra.mxu0 %v2997
        %3001 = vmatprep.subr.bf16.mxu0 0
        %3002 = vmatpush1.bf16.xpose.msra.mxu0 0
        %3003 = vmatprep.subr.bf16.mxu0 0
        %3004 = vmatpush1.bf16.xpose.msra.mxu0 0
        %3005 = vmatprep.subr.bf16.mxu0 0
        %3006 = vmatpush1.bf16.xpose.msra.mxu0 0
        %3007 = vmatprep.subr.bf16.mxu0 0
        %3008 = vmatpush1.bf16.xpose.msra.mxu0 0
        %3009 = vmatprep.subr.bf16.mxu0 0
        %3010 = vmatpush1.bf16.xpose.msra.mxu0 0
        %3011 = vmatprep.subr.bf16.mxu0 0
        %3012 = vmatpush1.bf16.xpose.msra.mxu0 0
        %3013 = vmatprep.subr.bf16.mxu0 0
        %3014 = vmatpush1.bf16.xpose.msra.mxu0 0
        %3015 = vmatprep.subr.bf16.mxu0 0
        %3016 = vmatpush1.bf16.xpose.msra.mxu0 0
        %3017 = vmatprep.subr.bf16.mxu0 0
        %3018 = vmatpush1.bf16.xpose.msra.mxu0 0
        %3019 = vmatprep.subr.bf16.mxu0 0
        %3020 = vmatpush1.bf16.xpose.msra.mxu0 0
        %3021 = vmatprep.subr.bf16.mxu0 0
        %3022 = vmatpush1.bf16.xpose.msra.mxu0 0
        %3023 = vmatprep.subr.bf16.mxu0 0
        %3024 = vmatpush1.bf16.xpose.msra.mxu0 0
        %3025 = vmatprep.subr.bf16.mxu0 0
        %3026 = vmatpush1.bf16.xpose.msra.mxu0 0
        %3027 = vmatprep.subr.bf16.mxu0 0
        %3028 = vmatpush1.bf16.xpose.msra.mxu0 0
        %3029 = vmatprep.subr.bf16.mxu0 0
        %3030 = vmatpush1.bf16.xpose.msra.mxu0 0
        %3031 = vmatprep.mubr.bf16.mxu0 0
        %3032 = vmatmul.mubr.bf16.gmra.mrb[0].mxu0 %v2994
        %v3033 = vpop.f32.mrb[0].mxu0
        %v3034 = vadd.f32 0.0, %v3033
        %v3035 = vpop.f32.mrb[0].mxu0
        %v3036 = vpop.f32.mrb[0].mxu0
        %v3037 = vpop.f32.mrb[0].mxu0
        %3038 = vdwg.mxu0
        %v3040 = vsel %vm2716, %v2034, 0
        %v3043 = vsel %vm2716, %v2318, 0
        %3045 = vmatprep.subr.bf16.mxu0 0
        %3046 = vmatpush1.bf16.xpose.msra.mxu0 %v3043
        %3047 = vmatprep.subr.bf16.mxu0 0
        %3048 = vmatpush1.bf16.xpose.msra.mxu0 0
        %3049 = vmatprep.subr.bf16.mxu0 0
        %3050 = vmatpush1.bf16.xpose.msra.mxu0 0
        %3051 = vmatprep.subr.bf16.mxu0 0
        %3052 = vmatpush1.bf16.xpose.msra.mxu0 0
        %3053 = vmatprep.subr.bf16.mxu0 0
        %3054 = vmatpush1.bf16.xpose.msra.mxu0 0
        %3055 = vmatprep.subr.bf16.mxu0 0
        %3056 = vmatpush1.bf16.xpose.msra.mxu0 0
        %3057 = vmatprep.subr.bf16.mxu0 0
        %3058 = vmatpush1.bf16.xpose.msra.mxu0 0
        %3059 = vmatprep.subr.bf16.mxu0 0
        %3060 = vmatpush1.bf16.xpose.msra.mxu0 0
        %3061 = vmatprep.subr.bf16.mxu0 0
        %3062 = vmatpush1.bf16.xpose.msra.mxu0 0
        %3063 = vmatprep.subr.bf16.mxu0 0
        %3064 = vmatpush1.bf16.xpose.msra.mxu0 0
        %3065 = vmatprep.subr.bf16.mxu0 0
        %3066 = vmatpush1.bf16.xpose.msra.mxu0 0
        %3067 = vmatprep.subr.bf16.mxu0 0
        %3068 = vmatpush1.bf16.xpose.msra.mxu0 0
        %3069 = vmatprep.subr.bf16.mxu0 0
        %3070 = vmatpush1.bf16.xpose.msra.mxu0 0
        %3071 = vmatprep.subr.bf16.mxu0 0
        %3072 = vmatpush1.bf16.xpose.msra.mxu0 0
        %3073 = vmatprep.subr.bf16.mxu0 0
        %3074 = vmatpush1.bf16.xpose.msra.mxu0 0
        %3075 = vmatprep.subr.bf16.mxu0 0
        %3076 = vmatpush1.bf16.xpose.msra.mxu0 0
        %3077 = vmatprep.mubr.bf16.mxu0 0
        %3078 = vmatmul.mubr.bf16.gmra.mrb[0].mxu0 %v3040
        %v3079 = vpop.f32.mrb[0].mxu0
        %v3080 = vadd.f32 0.0, %v3079
        %v3081 = vpop.f32.mrb[0].mxu0
        %v3082 = vpop.f32.mrb[0].mxu0
        %v3083 = vpop.f32.mrb[0].mxu0
        %3084 = vdwg.mxu0
        %vm3085 = vcmask 64512
        %v3086 = vsel %vm3085, %v2758, -inf
        %3087 = vmax.xlane.f32.xlu0 %v3086
        %v3088 = vpop.xlane.xlu0 %3087
        %v3089 = vsel %vm3085, %v2804, -inf
        %3090 = vmax.xlane.f32.xlu0 %v3089
        %v3091 = vpop.xlane.xlu0 %3090
        %v3092 = vsel %vm3085, %v2850, -inf
        %3093 = vmax.xlane.f32.xlu0 %v3092
        %v3094 = vpop.xlane.xlu0 %3093
        %v3095 = vsel %vm3085, %v2896, -inf
        %3096 = vmax.xlane.f32.xlu0 %v3095
        %v3097 = vpop.xlane.xlu0 %3096
        %v3098 = vsel %vm3085, %v2942, -inf
        %3099 = vmax.xlane.f32.xlu0 %v3098
        %v3100 = vpop.xlane.xlu0 %3099
        %v3101 = vsel %vm3085, %v2988, -inf
        %3102 = vmax.xlane.f32.xlu0 %v3101
        %v3103 = vpop.xlane.xlu0 %3102
        %v3104 = vsel %vm3085, %v3034, -inf
        %3105 = vmax.xlane.f32.xlu0 %v3104
        %v3106 = vpop.xlane.xlu0 %3105
        %v3107 = vsel %vm3085, %v3080, -inf
        %3108 = vmax.xlane.f32.xlu0 %v3107
        %v3109 = vpop.xlane.xlu0 %3108
        %v3110 = vsub.f32 %v2758, %v3088
        %v3111 = vsub.f32 %v2804, %v3091
        %v3112 = vsub.f32 %v2850, %v3094
        %v3113 = vsub.f32 %v2896, %v3097
        %v3114 = vsub.f32 %v2942, %v3100
        %v3115 = vsub.f32 %v2988, %v3103
        %v3116 = vsub.f32 %v3034, %v3106
        %v3117 = vsub.f32 %v3080, %v3109
        %v3118 = vmul.f32 %v3110, 1.442695
        %v3119 = vpow.pop %v3118
        %v3120 = vmul.f32 %v3111, 1.442695
        %v3121 = vpow.pop %v3120
        %v3122 = vmul.f32 %v3112, 1.442695
        %v3123 = vpow.pop %v3122
        %v3124 = vmul.f32 %v3113, 1.442695
        %v3125 = vpow.pop %v3124
        %v3126 = vmul.f32 %v3114, 1.442695
        %v3127 = vpow.pop %v3126
        %v3128 = vmul.f32 %v3115, 1.442695
        %v3129 = vpow.pop %v3128
        %v3130 = vmul.f32 %v3116, 1.442695
        %v3131 = vpow.pop %v3130
        %v3132 = vmul.f32 %v3117, 1.442695
        %v3133 = vpow.pop %v3132
        %v3134 = vsel %vm3085, %v3119, 0.0
        %3135 = vadd.xlane.f32.xlu0 %v3134
        %v3136 = vpop.xlane.xlu0 %3135
        %v3137 = vsel %vm3085, %v3121, 0.0
        %3138 = vadd.xlane.f32.xlu0 %v3137
        %v3139 = vpop.xlane.xlu0 %3138
        %v3140 = vsel %vm3085, %v3123, 0.0
        %3141 = vadd.xlane.f32.xlu0 %v3140
        %v3142 = vpop.xlane.xlu0 %3141
        %v3143 = vsel %vm3085, %v3125, 0.0
        %3144 = vadd.xlane.f32.xlu0 %v3143
        %v3145 = vpop.xlane.xlu0 %3144
        %v3146 = vsel %vm3085, %v3127, 0.0
        %3147 = vadd.xlane.f32.xlu0 %v3146
        %v3148 = vpop.xlane.xlu0 %3147
        %v3149 = vsel %vm3085, %v3129, 0.0
        %3150 = vadd.xlane.f32.xlu0 %v3149
        %v3151 = vpop.xlane.xlu0 %3150
        %v3152 = vsel %vm3085, %v3131, 0.0
        %3153 = vadd.xlane.f32.xlu0 %v3152
        %v3154 = vpop.xlane.xlu0 %3153
        %v3155 = vsel %vm3085, %v3133, 0.0
        %3156 = vadd.xlane.f32.xlu0 %v3155
        %v3157 = vpop.xlane.xlu0 %3156
        %v3158 = vrcp.pop %v3136
        %v3159 = vrcp.pop %v3139
        %v3160 = vrcp.pop %v3142
        %v3161 = vrcp.pop %v3145
        %v3162 = vrcp.pop %v3148
        %v3163 = vrcp.pop %v3151
        %v3164 = vrcp.pop %v3154
        %v3165 = vrcp.pop %v3157
        %v3166 = vmul.f32 %v3119, %v3158
        %v3167 = vmul.f32 %v3121, %v3159
        %v3168 = vmul.f32 %v3123, %v3160
        %v3169 = vmul.f32 %v3125, %v3161
        %v3170 = vmul.f32 %v3127, %v3162
        %v3171 = vmul.f32 %v3129, %v3163
        %v3172 = vmul.f32 %v3131, %v3164
        %v3173 = vmul.f32 %v3133, %v3165
        %v3174 = vpack.c.bf16 %v3166, %v3166
        %v3175 = vpack.c.bf16 %v3167, %v3167
        %v3176 = vpack.c.bf16 %v3168, %v3168
        %v3177 = vpack.c.bf16 %v3169, %v3169
        %v3178 = vpack.c.bf16 %v3170, %v3170
        %v3179 = vpack.c.bf16 %v3171, %v3171
        %v3180 = vpack.c.bf16 %v3172, %v3172
        %v3181 = vpack.c.bf16 %v3173, %v3173
        %v3183 = vsel %vm3085, %v3174, 0
        %vm3185 = vcmask 1043456
        %v3187 = vsel %vm3185, %v2708, 0
        %3189 = vmatprep.subr.bf16.mxu0 0
        %3190 = vmatpush1.bf16.msra.mxu0 %v3187
        %3191 = vmatprep.subr.bf16.mxu0 0
        %3192 = vmatpush1.bf16.msra.mxu0 0
        %3193 = vmatprep.subr.bf16.mxu0 0
        %3194 = vmatpush1.bf16.msra.mxu0 0
        %3195 = vmatprep.subr.bf16.mxu0 0
        %3196 = vmatpush1.bf16.msra.mxu0 0
        %3197 = vmatprep.subr.bf16.mxu0 0
        %3198 = vmatpush1.bf16.msra.mxu0 0
        %3199 = vmatprep.subr.bf16.mxu0 0
        %3200 = vmatpush1.bf16.msra.mxu0 0
        %3201 = vmatprep.subr.bf16.mxu0 0
        %3202 = vmatpush1.bf16.msra.mxu0 0
        %3203 = vmatprep.subr.bf16.mxu0 0
        %3204 = vmatpush1.bf16.msra.mxu0 0
        %3205 = vmatprep.subr.bf16.mxu0 0
        %3206 = vmatpush1.bf16.msra.mxu0 0
        %3207 = vmatprep.subr.bf16.mxu0 0
        %3208 = vmatpush1.bf16.msra.mxu0 0
        %3209 = vmatprep.subr.bf16.mxu0 0
        %3210 = vmatpush1.bf16.msra.mxu0 0
        %3211 = vmatprep.subr.bf16.mxu0 0
        %3212 = vmatpush1.bf16.msra.mxu0 0
        %3213 = vmatprep.subr.bf16.mxu0 0
        %3214 = vmatpush1.bf16.msra.mxu0 0
        %3215 = vmatprep.subr.bf16.mxu0 0
        %3216 = vmatpush1.bf16.msra.mxu0 0
        %3217 = vmatprep.subr.bf16.mxu0 0
        %3218 = vmatpush1.bf16.msra.mxu0 0
        %3219 = vmatprep.subr.bf16.mxu0 0
        %3220 = vmatpush1.bf16.msra.mxu0 0
        %3221 = vmatprep.mubr.bf16.mxu0 0
        %3222 = vmatmul.mubr.bf16.gmra.mrb[0].mxu0 %v3183
        %v3223 = vpop.f32.mrb[0].mxu0
        %v3224 = vadd.f32 0.0, %v3223
        %v3225 = vpop.f32.mrb[0].mxu0
        %v3226 = vpop.f32.mrb[0].mxu0
        %v3227 = vpop.f32.mrb[0].mxu0
        %3228 = vdwg.mxu0
        %v3230 = vsel %vm3085, %v3175, 0
        %v3233 = vsel %vm3185, %v2709, 0
        %3235 = vmatprep.subr.bf16.mxu0 0
        %3236 = vmatpush1.bf16.msra.mxu0 %v3233
        %3237 = vmatprep.subr.bf16.mxu0 0
        %3238 = vmatpush1.bf16.msra.mxu0 0
        %3239 = vmatprep.subr.bf16.mxu0 0
        %3240 = vmatpush1.bf16.msra.mxu0 0
        %3241 = vmatprep.subr.bf16.mxu0 0
        %3242 = vmatpush1.bf16.msra.mxu0 0
        %3243 = vmatprep.subr.bf16.mxu0 0
        %3244 = vmatpush1.bf16.msra.mxu0 0
        %3245 = vmatprep.subr.bf16.mxu0 0
        %3246 = vmatpush1.bf16.msra.mxu0 0
        %3247 = vmatprep.subr.bf16.mxu0 0
        %3248 = vmatpush1.bf16.msra.mxu0 0
        %3249 = vmatprep.subr.bf16.mxu0 0
        %3250 = vmatpush1.bf16.msra.mxu0 0
        %3251 = vmatprep.subr.bf16.mxu0 0
        %3252 = vmatpush1.bf16.msra.mxu0 0
        %3253 = vmatprep.subr.bf16.mxu0 0
        %3254 = vmatpush1.bf16.msra.mxu0 0
        %3255 = vmatprep.subr.bf16.mxu0 0
        %3256 = vmatpush1.bf16.msra.mxu0 0
        %3257 = vmatprep.subr.bf16.mxu0 0
        %3258 = vmatpush1.bf16.msra.mxu0 0
        %3259 = vmatprep.subr.bf16.mxu0 0
        %3260 = vmatpush1.bf16.msra.mxu0 0
        %3261 = vmatprep.subr.bf16.mxu0 0
        %3262 = vmatpush1.bf16.msra.mxu0 0
        %3263 = vmatprep.subr.bf16.mxu0 0
        %3264 = vmatpush1.bf16.msra.mxu0 0
        %3265 = vmatprep.subr.bf16.mxu0 0
        %3266 = vmatpush1.bf16.msra.mxu0 0
        %3267 = vmatprep.mubr.bf16.mxu0 0
        %3268 = vmatmul.mubr.bf16.gmra.mrb[0].mxu0 %v3230
        %v3269 = vpop.f32.mrb[0].mxu0
        %v3270 = vadd.f32 0.0, %v3269
        %v3271 = vpop.f32.mrb[0].mxu0
        %v3272 = vpop.f32.mrb[0].mxu0
        %v3273 = vpop.f32.mrb[0].mxu0
        %3274 = vdwg.mxu0
        %v3276 = vsel %vm3085, %v3176, 0
        %v3279 = vsel %vm3185, %v2710, 0
        %3281 = vmatprep.subr.bf16.mxu0 0
        %3282 = vmatpush1.bf16.msra.mxu0 %v3279
        %3283 = vmatprep.subr.bf16.mxu0 0
        %3284 = vmatpush1.bf16.msra.mxu0 0
        %3285 = vmatprep.subr.bf16.mxu0 0
        %3286 = vmatpush1.bf16.msra.mxu0 0
        %3287 = vmatprep.subr.bf16.mxu0 0
        %3288 = vmatpush1.bf16.msra.mxu0 0
        %3289 = vmatprep.subr.bf16.mxu0 0
        %3290 = vmatpush1.bf16.msra.mxu0 0
        %3291 = vmatprep.subr.bf16.mxu0 0
        %3292 = vmatpush1.bf16.msra.mxu0 0
        %3293 = vmatprep.subr.bf16.mxu0 0
        %3294 = vmatpush1.bf16.msra.mxu0 0
        %3295 = vmatprep.subr.bf16.mxu0 0
        %3296 = vmatpush1.bf16.msra.mxu0 0
        %3297 = vmatprep.subr.bf16.mxu0 0
        %3298 = vmatpush1.bf16.msra.mxu0 0
        %3299 = vmatprep.subr.bf16.mxu0 0
        %3300 = vmatpush1.bf16.msra.mxu0 0
        %3301 = vmatprep.subr.bf16.mxu0 0
        %3302 = vmatpush1.bf16.msra.mxu0 0
        %3303 = vmatprep.subr.bf16.mxu0 0
        %3304 = vmatpush1.bf16.msra.mxu0 0
        %3305 = vmatprep.subr.bf16.mxu0 0
        %3306 = vmatpush1.bf16.msra.mxu0 0
        %3307 = vmatprep.subr.bf16.mxu0 0
        %3308 = vmatpush1.bf16.msra.mxu0 0
        %3309 = vmatprep.subr.bf16.mxu0 0
        %3310 = vmatpush1.bf16.msra.mxu0 0
        %3311 = vmatprep.subr.bf16.mxu0 0
        %3312 = vmatpush1.bf16.msra.mxu0 0
        %3313 = vmatprep.mubr.bf16.mxu0 0
        %3314 = vmatmul.mubr.bf16.gmra.mrb[0].mxu0 %v3276
        %v3315 = vpop.f32.mrb[0].mxu0
        %v3316 = vadd.f32 0.0, %v3315
        %v3317 = vpop.f32.mrb[0].mxu0
        %v3318 = vpop.f32.mrb[0].mxu0
        %v3319 = vpop.f32.mrb[0].mxu0
        %3320 = vdwg.mxu0
        %v3322 = vsel %vm3085, %v3177, 0
        %v3325 = vsel %vm3185, %v2711, 0
        %3327 = vmatprep.subr.bf16.mxu0 0
        %3328 = vmatpush1.bf16.msra.mxu0 %v3325
        %3329 = vmatprep.subr.bf16.mxu0 0
        %3330 = vmatpush1.bf16.msra.mxu0 0
        %3331 = vmatprep.subr.bf16.mxu0 0
        %3332 = vmatpush1.bf16.msra.mxu0 0
        %3333 = vmatprep.subr.bf16.mxu0 0
        %3334 = vmatpush1.bf16.msra.mxu0 0
        %3335 = vmatprep.subr.bf16.mxu0 0
        %3336 = vmatpush1.bf16.msra.mxu0 0
        %3337 = vmatprep.subr.bf16.mxu0 0
        %3338 = vmatpush1.bf16.msra.mxu0 0
        %3339 = vmatprep.subr.bf16.mxu0 0
        %3340 = vmatpush1.bf16.msra.mxu0 0
        %3341 = vmatprep.subr.bf16.mxu0 0
        %3342 = vmatpush1.bf16.msra.mxu0 0
        %3343 = vmatprep.subr.bf16.mxu0 0
        %3344 = vmatpush1.bf16.msra.mxu0 0
        %3345 = vmatprep.subr.bf16.mxu0 0
        %3346 = vmatpush1.bf16.msra.mxu0 0
        %3347 = vmatprep.subr.bf16.mxu0 0
        %3348 = vmatpush1.bf16.msra.mxu0 0
        %3349 = vmatprep.subr.bf16.mxu0 0
        %3350 = vmatpush1.bf16.msra.mxu0 0
        %3351 = vmatprep.subr.bf16.mxu0 0
        %3352 = vmatpush1.bf16.msra.mxu0 0
        %3353 = vmatprep.subr.bf16.mxu0 0
        %3354 = vmatpush1.bf16.msra.mxu0 0
        %3355 = vmatprep.subr.bf16.mxu0 0
        %3356 = vmatpush1.bf16.msra.mxu0 0
        %3357 = vmatprep.subr.bf16.mxu0 0
        %3358 = vmatpush1.bf16.msra.mxu0 0
        %3359 = vmatprep.mubr.bf16.mxu0 0
        %3360 = vmatmul.mubr.bf16.gmra.mrb[0].mxu0 %v3322
        %v3361 = vpop.f32.mrb[0].mxu0
        %v3362 = vadd.f32 0.0, %v3361
        %v3363 = vpop.f32.mrb[0].mxu0
        %v3364 = vpop.f32.mrb[0].mxu0
        %v3365 = vpop.f32.mrb[0].mxu0
        %3366 = vdwg.mxu0
        %v3368 = vsel %vm3085, %v3178, 0
        %v3371 = vsel %vm3185, %v2712, 0
        %3373 = vmatprep.subr.bf16.mxu0 0
        %3374 = vmatpush1.bf16.msra.mxu0 %v3371
        %3375 = vmatprep.subr.bf16.mxu0 0
        %3376 = vmatpush1.bf16.msra.mxu0 0
        %3377 = vmatprep.subr.bf16.mxu0 0
        %3378 = vmatpush1.bf16.msra.mxu0 0
        %3379 = vmatprep.subr.bf16.mxu0 0
        %3380 = vmatpush1.bf16.msra.mxu0 0
        %3381 = vmatprep.subr.bf16.mxu0 0
        %3382 = vmatpush1.bf16.msra.mxu0 0
        %3383 = vmatprep.subr.bf16.mxu0 0
        %3384 = vmatpush1.bf16.msra.mxu0 0
        %3385 = vmatprep.subr.bf16.mxu0 0
        %3386 = vmatpush1.bf16.msra.mxu0 0
        %3387 = vmatprep.subr.bf16.mxu0 0
        %3388 = vmatpush1.bf16.msra.mxu0 0
        %3389 = vmatprep.subr.bf16.mxu0 0
        %3390 = vmatpush1.bf16.msra.mxu0 0
        %3391 = vmatprep.subr.bf16.mxu0 0
        %3392 = vmatpush1.bf16.msra.mxu0 0
        %3393 = vmatprep.subr.bf16.mxu0 0
        %3394 = vmatpush1.bf16.msra.mxu0 0
        %3395 = vmatprep.subr.bf16.mxu0 0
        %3396 = vmatpush1.bf16.msra.mxu0 0
        %3397 = vmatprep.subr.bf16.mxu0 0
        %3398 = vmatpush1.bf16.msra.mxu0 0
        %3399 = vmatprep.subr.bf16.mxu0 0
        %3400 = vmatpush1.bf16.msra.mxu0 0
        %3401 = vmatprep.subr.bf16.mxu0 0
        %3402 = vmatpush1.bf16.msra.mxu0 0
        %3403 = vmatprep.subr.bf16.mxu0 0
        %3404 = vmatpush1.bf16.msra.mxu0 0
        %3405 = vmatprep.mubr.bf16.mxu0 0
        %3406 = vmatmul.mubr.bf16.gmra.mrb[0].mxu0 %v3368
        %v3407 = vpop.f32.mrb[0].mxu0
        %v3408 = vadd.f32 0.0, %v3407
        %v3409 = vpop.f32.mrb[0].mxu0
        %v3410 = vpop.f32.mrb[0].mxu0
        %v3411 = vpop.f32.mrb[0].mxu0
        %3412 = vdwg.mxu0
        %v3414 = vsel %vm3085, %v3179, 0
        %v3417 = vsel %vm3185, %v2713, 0
        %3419 = vmatprep.subr.bf16.mxu0 0
        %3420 = vmatpush1.bf16.msra.mxu0 %v3417
        %3421 = vmatprep.subr.bf16.mxu0 0
        %3422 = vmatpush1.bf16.msra.mxu0 0
        %3423 = vmatprep.subr.bf16.mxu0 0
        %3424 = vmatpush1.bf16.msra.mxu0 0
        %3425 = vmatprep.subr.bf16.mxu0 0
        %3426 = vmatpush1.bf16.msra.mxu0 0
        %3427 = vmatprep.subr.bf16.mxu0 0
        %3428 = vmatpush1.bf16.msra.mxu0 0
        %3429 = vmatprep.subr.bf16.mxu0 0
        %3430 = vmatpush1.bf16.msra.mxu0 0
        %3431 = vmatprep.subr.bf16.mxu0 0
        %3432 = vmatpush1.bf16.msra.mxu0 0
        %3433 = vmatprep.subr.bf16.mxu0 0
        %3434 = vmatpush1.bf16.msra.mxu0 0
        %3435 = vmatprep.subr.bf16.mxu0 0
        %3436 = vmatpush1.bf16.msra.mxu0 0
        %3437 = vmatprep.subr.bf16.mxu0 0
        %3438 = vmatpush1.bf16.msra.mxu0 0
        %3439 = vmatprep.subr.bf16.mxu0 0
        %3440 = vmatpush1.bf16.msra.mxu0 0
        %3441 = vmatprep.subr.bf16.mxu0 0
        %3442 = vmatpush1.bf16.msra.mxu0 0
        %3443 = vmatprep.subr.bf16.mxu0 0
        %3444 = vmatpush1.bf16.msra.mxu0 0
        %3445 = vmatprep.subr.bf16.mxu0 0
        %3446 = vmatpush1.bf16.msra.mxu0 0
        %3447 = vmatprep.subr.bf16.mxu0 0
        %3448 = vmatpush1.bf16.msra.mxu0 0
        %3449 = vmatprep.subr.bf16.mxu0 0
        %3450 = vmatpush1.bf16.msra.mxu0 0
        %3451 = vmatprep.mubr.bf16.mxu0 0
        %3452 = vmatmul.mubr.bf16.gmra.mrb[0].mxu0 %v3414
        %v3453 = vpop.f32.mrb[0].mxu0
        %v3454 = vadd.f32 0.0, %v3453
        %v3455 = vpop.f32.mrb[0].mxu0
        %v3456 = vpop.f32.mrb[0].mxu0
        %v3457 = vpop.f32.mrb[0].mxu0
        %3458 = vdwg.mxu0
        %v3460 = vsel %vm3085, %v3180, 0
        %v3463 = vsel %vm3185, %v2714, 0
        %3465 = vmatprep.subr.bf16.mxu0 0
        %3466 = vmatpush1.bf16.msra.mxu0 %v3463
        %3467 = vmatprep.subr.bf16.mxu0 0
        %3468 = vmatpush1.bf16.msra.mxu0 0
        %3469 = vmatprep.subr.bf16.mxu0 0
        %3470 = vmatpush1.bf16.msra.mxu0 0
        %3471 = vmatprep.subr.bf16.mxu0 0
        %3472 = vmatpush1.bf16.msra.mxu0 0
        %3473 = vmatprep.subr.bf16.mxu0 0
        %3474 = vmatpush1.bf16.msra.mxu0 0
        %3475 = vmatprep.subr.bf16.mxu0 0
        %3476 = vmatpush1.bf16.msra.mxu0 0
        %3477 = vmatprep.subr.bf16.mxu0 0
        %3478 = vmatpush1.bf16.msra.mxu0 0
        %3479 = vmatprep.subr.bf16.mxu0 0
        %3480 = vmatpush1.bf16.msra.mxu0 0
        %3481 = vmatprep.subr.bf16.mxu0 0
        %3482 = vmatpush1.bf16.msra.mxu0 0
        %3483 = vmatprep.subr.bf16.mxu0 0
        %3484 = vmatpush1.bf16.msra.mxu0 0
        %3485 = vmatprep.subr.bf16.mxu0 0
        %3486 = vmatpush1.bf16.msra.mxu0 0
        %3487 = vmatprep.subr.bf16.mxu0 0
        %3488 = vmatpush1.bf16.msra.mxu0 0
        %3489 = vmatprep.subr.bf16.mxu0 0
        %3490 = vmatpush1.bf16.msra.mxu0 0
        %3491 = vmatprep.subr.bf16.mxu0 0
        %3492 = vmatpush1.bf16.msra.mxu0 0
        %3493 = vmatprep.subr.bf16.mxu0 0
        %3494 = vmatpush1.bf16.msra.mxu0 0
        %3495 = vmatprep.subr.bf16.mxu0 0
        %3496 = vmatpush1.bf16.msra.mxu0 0
        %3497 = vmatprep.mubr.bf16.mxu0 0
        %3498 = vmatmul.mubr.bf16.gmra.mrb[0].mxu0 %v3460
        %v3499 = vpop.f32.mrb[0].mxu0
        %v3500 = vadd.f32 0.0, %v3499
        %v3501 = vpop.f32.mrb[0].mxu0
        %v3502 = vpop.f32.mrb[0].mxu0
        %v3503 = vpop.f32.mrb[0].mxu0
        %3504 = vdwg.mxu0
        %v3506 = vsel %vm3085, %v3181, 0
        %v3509 = vsel %vm3185, %v2715, 0
        %3511 = vmatprep.subr.bf16.mxu0 0
        %3512 = vmatpush1.bf16.msra.mxu0 %v3509
        %3513 = vmatprep.subr.bf16.mxu0 0
        %3514 = vmatpush1.bf16.msra.mxu0 0
        %3515 = vmatprep.subr.bf16.mxu0 0
        %3516 = vmatpush1.bf16.msra.mxu0 0
        %3517 = vmatprep.subr.bf16.mxu0 0
        %3518 = vmatpush1.bf16.msra.mxu0 0
        %3519 = vmatprep.subr.bf16.mxu0 0
        %3520 = vmatpush1.bf16.msra.mxu0 0
        %3521 = vmatprep.subr.bf16.mxu0 0
        %3522 = vmatpush1.bf16.msra.mxu0 0
        %3523 = vmatprep.subr.bf16.mxu0 0
        %3524 = vmatpush1.bf16.msra.mxu0 0
        %3525 = vmatprep.subr.bf16.mxu0 0
        %3526 = vmatpush1.bf16.msra.mxu0 0
        %3527 = vmatprep.subr.bf16.mxu0 0
        %3528 = vmatpush1.bf16.msra.mxu0 0
        %3529 = vmatprep.subr.bf16.mxu0 0
        %3530 = vmatpush1.bf16.msra.mxu0 0
        %3531 = vmatprep.subr.bf16.mxu0 0
        %3532 = vmatpush1.bf16.msra.mxu0 0
        %3533 = vmatprep.subr.bf16.mxu0 0
        %3534 = vmatpush1.bf16.msra.mxu0 0
        %3535 = vmatprep.subr.bf16.mxu0 0
        %3536 = vmatpush1.bf16.msra.mxu0 0
        %3537 = vmatprep.subr.bf16.mxu0 0
        %3538 = vmatpush1.bf16.msra.mxu0 0
        %3539 = vmatprep.subr.bf16.mxu0 0
        %3540 = vmatpush1.bf16.msra.mxu0 0
        %3541 = vmatprep.subr.bf16.mxu0 0
        %3542 = vmatpush1.bf16.msra.mxu0 0
        %3543 = vmatprep.mubr.bf16.mxu0 0
        %3544 = vmatmul.mubr.bf16.gmra.mrb[0].mxu0 %v3506
        %v3545 = vpop.f32.mrb[0].mxu0
        %v3546 = vadd.f32 0.0, %v3545
        %v3547 = vpop.f32.mrb[0].mxu0
        %v3548 = vpop.f32.mrb[0].mxu0
        %v3549 = vpop.f32.mrb[0].mxu0
        %3550 = vdwg.mxu0
        %v3551 = vcombine.low %v3224, %v3408
        %v3552 = vcombine.high %v3224, %v3408
        %v3554 = vunpack.c.l.s4 1983009808
        %v3555 = vunpack.c.0.s8 %v3554
        %v3556 = vlaneseq
        %v3557 = vshrl.u32 %v3556, 7
        %v3558 = vsub.s32 %v3555, %v3557
        %v3559 = vrot.slane %v3551, %v3558
        %v3561 = vunpack.c.l.s4 1983009808
        %v3562 = vunpack.c.0.s8 %v3561
        %v3563 = vlaneseq
        %v3564 = vshrl.u32 %v3563, 7
        %v3565 = vsub.s32 %v3562, %v3564
        %v3566 = vrot.slane %v3552, %v3565
        %v3567 = vcombine.low %v3316, %v3500
        %v3568 = vcombine.high %v3316, %v3500
        %v3570 = vunpack.c.l.s4 1983009808
        %v3571 = vunpack.c.0.s8 %v3570
        %v3572 = vlaneseq
        %v3573 = vshrl.u32 %v3572, 7
        %v3574 = vsub.s32 %v3571, %v3573
        %v3575 = vrot.slane %v3567, %v3574
        %v3577 = vunpack.c.l.s4 1983009808
        %v3578 = vunpack.c.0.s8 %v3577
        %v3579 = vlaneseq
        %v3580 = vshrl.u32 %v3579, 7
        %v3581 = vsub.s32 %v3578, %v3580
        %v3582 = vrot.slane %v3568, %v3581
        %v3583 = vcombine.low %v3559, %v3575
        %v3584 = vcombine.high %v3559, %v3575
        %v3586 = vunpack.c.l.s4 1934713408
        %v3587 = vunpack.c.0.s8 %v3586
        %v3588 = vlaneseq
        %v3589 = vshrl.u32 %v3588, 7
        %v3590 = vsub.s32 %v3587, %v3589
        %v3591 = vrot.slane %v3583, %v3590
        %v3593 = vunpack.c.l.s4 1934713408
        %v3594 = vunpack.c.0.s8 %v3593
        %v3595 = vlaneseq
        %v3596 = vshrl.u32 %v3595, 7
        %v3597 = vsub.s32 %v3594, %v3596
        %v3598 = vrot.slane %v3584, %v3597
        %v3599 = vcombine.low %v3566, %v3582
        %v3600 = vcombine.high %v3566, %v3582
        %v3602 = vunpack.c.l.s4 1934713408
        %v3603 = vunpack.c.0.s8 %v3602
        %v3604 = vlaneseq
        %v3605 = vshrl.u32 %v3604, 7
        %v3606 = vsub.s32 %v3603, %v3605
        %v3607 = vrot.slane %v3599, %v3606
        %v3609 = vunpack.c.l.s4 1934713408
        %v3610 = vunpack.c.0.s8 %v3609
        %v3611 = vlaneseq
        %v3612 = vshrl.u32 %v3611, 7
        %v3613 = vsub.s32 %v3610, %v3612
        %v3614 = vrot.slane %v3600, %v3613
        %v3615 = vcombine.high %v3591, 0.0
        %v3616 = vcombine.high %v3598, 0.0
        %v3617 = vcombine.high %v3607, 0.0
        %v3618 = vcombine.high %v3614, 0.0
        %v3619 = vcombine.low %v3270, %v3454
        %v3620 = vcombine.high %v3270, %v3454
        %v3622 = vunpack.c.l.s4 1983009808
        %v3623 = vunpack.c.0.s8 %v3622
        %v3624 = vlaneseq
        %v3625 = vshrl.u32 %v3624, 7
        %v3626 = vsub.s32 %v3623, %v3625
        %v3627 = vrot.slane %v3619, %v3626
        %v3629 = vunpack.c.l.s4 1983009808
        %v3630 = vunpack.c.0.s8 %v3629
        %v3631 = vlaneseq
        %v3632 = vshrl.u32 %v3631, 7
        %v3633 = vsub.s32 %v3630, %v3632
        %v3634 = vrot.slane %v3620, %v3633
        %v3635 = vcombine.low %v3362, %v3546
        %v3636 = vcombine.high %v3362, %v3546
        %v3638 = vunpack.c.l.s4 1983009808
        %v3639 = vunpack.c.0.s8 %v3638
        %v3640 = vlaneseq
        %v3641 = vshrl.u32 %v3640, 7
        %v3642 = vsub.s32 %v3639, %v3641
        %v3643 = vrot.slane %v3635, %v3642
        %v3645 = vunpack.c.l.s4 1983009808
        %v3646 = vunpack.c.0.s8 %v3645
        %v3647 = vlaneseq
        %v3648 = vshrl.u32 %v3647, 7
        %v3649 = vsub.s32 %v3646, %v3648
        %v3650 = vrot.slane %v3636, %v3649
        %v3651 = vcombine.low %v3627, %v3643
        %v3652 = vcombine.high %v3627, %v3643
        %v3654 = vunpack.c.l.s4 1934713408
        %v3655 = vunpack.c.0.s8 %v3654
        %v3656 = vlaneseq
        %v3657 = vshrl.u32 %v3656, 7
        %v3658 = vsub.s32 %v3655, %v3657
        %v3659 = vrot.slane %v3651, %v3658
        %v3661 = vunpack.c.l.s4 1934713408
        %v3662 = vunpack.c.0.s8 %v3661
        %v3663 = vlaneseq
        %v3664 = vshrl.u32 %v3663, 7
        %v3665 = vsub.s32 %v3662, %v3664
        %v3666 = vrot.slane %v3652, %v3665
        %v3667 = vcombine.low %v3634, %v3650
        %v3668 = vcombine.high %v3634, %v3650
        %v3670 = vunpack.c.l.s4 1934713408
        %v3671 = vunpack.c.0.s8 %v3670
        %v3672 = vlaneseq
        %v3673 = vshrl.u32 %v3672, 7
        %v3674 = vsub.s32 %v3671, %v3673
        %v3675 = vrot.slane %v3667, %v3674
        %v3677 = vunpack.c.l.s4 1934713408
        %v3678 = vunpack.c.0.s8 %v3677
        %v3679 = vlaneseq
        %v3680 = vshrl.u32 %v3679, 7
        %v3681 = vsub.s32 %v3678, %v3680
        %v3682 = vrot.slane %v3668, %v3681
        %v3683 = vcombine.high %v3659, 0.0
        %v3684 = vcombine.high %v3666, 0.0
        %v3685 = vcombine.high %v3675, 0.0
        %v3686 = vcombine.high %v3682, 0.0
        %v3687 = vcombine.low %v3591, %v3598
        %v3689 = vunpack.c.l.s4 1983009808
        %v3690 = vunpack.c.0.s8 %v3689
        %v3691 = vlaneseq
        %v3692 = vshrl.u32 %v3691, 7
        %v3693 = vsub.s32 %v3690, %v3692
        %v3694 = vrot.slane %v3687, %v3693
        %v3695 = vcombine.low %v3615, %v3616
        %v3697 = vunpack.c.l.s4 1983009808
        %v3698 = vunpack.c.0.s8 %v3697
        %v3699 = vlaneseq
        %v3700 = vshrl.u32 %v3699, 7
        %v3701 = vsub.s32 %v3698, %v3700
        %v3702 = vrot.slane %v3695, %v3701
        %v3703 = vcombine.low %v3607, %v3614
        %v3705 = vunpack.c.l.s4 1983009808
        %v3706 = vunpack.c.0.s8 %v3705
        %v3707 = vlaneseq
        %v3708 = vshrl.u32 %v3707, 7
        %v3709 = vsub.s32 %v3706, %v3708
        %v3710 = vrot.slane %v3703, %v3709
        %v3711 = vcombine.low %v3617, %v3618
        %v3713 = vunpack.c.l.s4 1983009808
        %v3714 = vunpack.c.0.s8 %v3713
        %v3715 = vlaneseq
        %v3716 = vshrl.u32 %v3715, 7
        %v3717 = vsub.s32 %v3714, %v3716
        %v3718 = vrot.slane %v3711, %v3717
        %v3719 = vcombine.low %v3694, %v3702
        %v3720 = vcombine.high %v3694, %v3702
        %v3722 = vunpack.c.l.s4 1934713408
        %v3723 = vunpack.c.0.s8 %v3722
        %v3724 = vlaneseq
        %v3725 = vshrl.u32 %v3724, 7
        %v3726 = vsub.s32 %v3723, %v3725
        %v3727 = vrot.slane %v3719, %v3726
        %v3729 = vunpack.c.l.s4 1934713408
        %v3730 = vunpack.c.0.s8 %v3729
        %v3731 = vlaneseq
        %v3732 = vshrl.u32 %v3731, 7
        %v3733 = vsub.s32 %v3730, %v3732
        %v3734 = vrot.slane %v3720, %v3733
        %v3735 = vcombine.low %v3710, %v3718
        %v3736 = vcombine.high %v3710, %v3718
        %v3738 = vunpack.c.l.s4 1934713408
        %v3739 = vunpack.c.0.s8 %v3738
        %v3740 = vlaneseq
        %v3741 = vshrl.u32 %v3740, 7
        %v3742 = vsub.s32 %v3739, %v3741
        %v3743 = vrot.slane %v3735, %v3742
        %v3745 = vunpack.c.l.s4 1934713408
        %v3746 = vunpack.c.0.s8 %v3745
        %v3747 = vlaneseq
        %v3748 = vshrl.u32 %v3747, 7
        %v3749 = vsub.s32 %v3746, %v3748
        %v3750 = vrot.slane %v3736, %v3749
        %v3751 = vcombine.low %v3727, %v3743
        %v3752 = vcombine.high %v3727, %v3743
        %v3753 = vcombine.low %v3734, %v3750
        %v3754 = vcombine.high %v3734, %v3750
        %v3755 = vcombine.low %v3659, %v3666
        %v3757 = vunpack.c.l.s4 1983009808
        %v3758 = vunpack.c.0.s8 %v3757
        %v3759 = vlaneseq
        %v3760 = vshrl.u32 %v3759, 7
        %v3761 = vsub.s32 %v3758, %v3760
        %v3762 = vrot.slane %v3755, %v3761
        %v3763 = vcombine.low %v3683, %v3684
        %v3765 = vunpack.c.l.s4 1983009808
        %v3766 = vunpack.c.0.s8 %v3765
        %v3767 = vlaneseq
        %v3768 = vshrl.u32 %v3767, 7
        %v3769 = vsub.s32 %v3766, %v3768
        %v3770 = vrot.slane %v3763, %v3769
        %v3771 = vcombine.low %v3675, %v3682
        %v3773 = vunpack.c.l.s4 1983009808
        %v3774 = vunpack.c.0.s8 %v3773
        %v3775 = vlaneseq
        %v3776 = vshrl.u32 %v3775, 7
        %v3777 = vsub.s32 %v3774, %v3776
        %v3778 = vrot.slane %v3771, %v3777
        %v3779 = vcombine.low %v3685, %v3686
        %v3781 = vunpack.c.l.s4 1983009808
        %v3782 = vunpack.c.0.s8 %v3781
        %v3783 = vlaneseq
        %v3784 = vshrl.u32 %v3783, 7
        %v3785 = vsub.s32 %v3782, %v3784
        %v3786 = vrot.slane %v3779, %v3785
        %v3787 = vcombine.low %v3762, %v3770
        %v3788 = vcombine.high %v3762, %v3770
        %v3790 = vunpack.c.l.s4 1934713408
        %v3791 = vunpack.c.0.s8 %v3790
        %v3792 = vlaneseq
        %v3793 = vshrl.u32 %v3792, 7
        %v3794 = vsub.s32 %v3791, %v3793
        %v3795 = vrot.slane %v3787, %v3794
        %v3797 = vunpack.c.l.s4 1934713408
        %v3798 = vunpack.c.0.s8 %v3797
        %v3799 = vlaneseq
        %v3800 = vshrl.u32 %v3799, 7
        %v3801 = vsub.s32 %v3798, %v3800
        %v3802 = vrot.slane %v3788, %v3801
        %v3803 = vcombine.low %v3778, %v3786
        %v3804 = vcombine.high %v3778, %v3786
        %v3806 = vunpack.c.l.s4 1934713408
        %v3807 = vunpack.c.0.s8 %v3806
        %v3808 = vlaneseq
        %v3809 = vshrl.u32 %v3808, 7
        %v3810 = vsub.s32 %v3807, %v3809
        %v3811 = vrot.slane %v3803, %v3810
        %v3813 = vunpack.c.l.s4 1934713408
        %v3814 = vunpack.c.0.s8 %v3813
        %v3815 = vlaneseq
        %v3816 = vshrl.u32 %v3815, 7
        %v3817 = vsub.s32 %v3814, %v3816
        %v3818 = vrot.slane %v3804, %v3817
        %v3819 = vcombine.low %v3795, %v3811
        %v3820 = vcombine.high %v3795, %v3811
        %v3821 = vcombine.low %v3802, %v3818
        %v3822 = vcombine.high %v3802, %v3818
        %3825 = vrot.lane.b32.xlu0 %v3752, 32
        %v3826 = vpop.permute.xlu0 %3825
        %3827 = vrot.lane.b32.xlu0 %v3820, 32
        %v3828 = vpop.permute.xlu0 %3827
        %3833 = vrot.lane.b32.xlu0 %v3753, 64
        %v3834 = vpop.permute.xlu0 %3833
        %3835 = vrot.lane.b32.xlu0 %v3821, 64
        %v3836 = vpop.permute.xlu0 %3835
        %3841 = vrot.lane.b32.xlu0 %v3754, 96
        %v3842 = vpop.permute.xlu0 %3841
        %3843 = vrot.lane.b32.xlu0 %v3822, 96
        %v3844 = vpop.permute.xlu0 %3843
        %v3847 = vsel %vm2716, %v3751, %v3826
        %v3848 = vsel %vm2716, %v3819, %v3828
        %vm3849 = vcmask 523264
        %v3850 = vsel %vm3849, %v3847, %v3834
        %v3851 = vsel %vm3849, %v3848, %v3836
        %vm3852 = vcmask 785408
        %v3853 = vsel %vm3852, %v3850, %v3842
        %v3854 = vsel %vm3852, %v3851, %v3844
        %v3855 = vpack.c.bf16 %v3854, %v3853
        %v3856 = vld [vmem:[%s1300] sm:$0xf]
        %v3857 = vld [vmem:[%s1300 + $0x4] sm:$0xf]
        %v3858 = vld [vmem:[%s1300 + $0x8] sm:$0xf]
        %v3859 = vld [vmem:[%s1300 + $0xc] sm:$0xf]
        %v3860 = vld [vmem:[%s1300 + $0x10] sm:$0xf]
        %v3861 = vld [vmem:[%s1300 + $0x14] sm:$0xf]
        %v3862 = vld [vmem:[%s1300 + $0x18] sm:$0xf]
        %v3863 = vld [vmem:[%s1300 + $0x1c] sm:$0xf]
        %v3864 = vld [vmem:[%s1300 + $0x20] sm:$0xf]
        %v3865 = vld [vmem:[%s1300 + $0x24] sm:$0xf]
        %v3866 = vld [vmem:[%s1300 + $0x28] sm:$0xf]
        %v3867 = vld [vmem:[%s1300 + $0x2c] sm:$0xf]
        %v3868 = vld [vmem:[%s1300 + $0x30] sm:$0xf]
        %v3869 = vld [vmem:[%s1300 + $0x34] sm:$0xf]
        %v3870 = vld [vmem:[%s1300 + $0x38] sm:$0xf]
        %v3871 = vld [vmem:[%s1300 + $0x3c] sm:$0xf]
        %v3872 = vld [vmem:[%s1531] sm:$0x1]
        %v3874 = vlaneseq
        %v3875 = vshrl.u32 %v3874, 7
        %v3876 = vsub.s32 0, %v3875
        %v3877 = vrot.slane %v3872, %v3876
        %v3895 = vunpack.c.l.b16 %v3856
        %v3896 = vunpack.c.l.b16 %v3857
        %v3897 = vunpack.c.l.b16 %v3858
        %v3898 = vunpack.c.l.b16 %v3859
        %v3899 = vunpack.c.l.b16 %v3860
        %v3900 = vunpack.c.l.b16 %v3861
        %v3901 = vunpack.c.l.b16 %v3862
        %v3902 = vunpack.c.l.b16 %v3863
        %v3903 = vunpack.c.l.b16 %v3864
        %v3904 = vunpack.c.l.b16 %v3865
        %v3905 = vunpack.c.l.b16 %v3866
        %v3906 = vunpack.c.l.b16 %v3867
        %v3907 = vunpack.c.l.b16 %v3868
        %v3908 = vunpack.c.l.b16 %v3869
        %v3909 = vunpack.c.l.b16 %v3870
        %v3910 = vunpack.c.l.b16 %v3871
        %v3911 = vpack.c.b16 %v3896, %v3895
        %v3912 = vpack.c.b16 %v3898, %v3897
        %v3913 = vpack.c.b16 %v3900, %v3899
        %v3914 = vpack.c.b16 %v3902, %v3901
        %v3915 = vpack.c.b16 %v3904, %v3903
        %v3916 = vpack.c.b16 %v3906, %v3905
        %v3917 = vpack.c.b16 %v3908, %v3907
        %v3918 = vpack.c.b16 %v3910, %v3909
        %3927 = vmatprep.subr.bf16.mxu0 0
        %3928 = vmatpush1.bf16.msra.mxu0 %v3911
        %3929 = vmatprep.subr.bf16.mxu0 0
        %3930 = vmatpush1.bf16.msra.mxu0 %v3912
        %3931 = vmatprep.subr.bf16.mxu0 0
        %3932 = vmatpush1.bf16.msra.mxu0 %v3913
        %3933 = vmatprep.subr.bf16.mxu0 0
        %3934 = vmatpush1.bf16.msra.mxu0 %v3914
        %3935 = vmatprep.subr.bf16.mxu0 0
        %3936 = vmatpush1.bf16.msra.mxu0 %v3915
        %3937 = vmatprep.subr.bf16.mxu0 0
        %3938 = vmatpush1.bf16.msra.mxu0 %v3916
        %3939 = vmatprep.subr.bf16.mxu0 0
        %3940 = vmatpush1.bf16.msra.mxu0 %v3917
        %3941 = vmatprep.subr.bf16.mxu0 0
        %3942 = vmatpush1.bf16.msra.mxu0 %v3918
        %3943 = vmatprep.subr.bf16.mxu0 0
        %3944 = vmatpush1.bf16.msra.mxu0 0
        %3945 = vmatprep.subr.bf16.mxu0 0
        %3946 = vmatpush1.bf16.msra.mxu0 0
        %3947 = vmatprep.subr.bf16.mxu0 0
        %3948 = vmatpush1.bf16.msra.mxu0 0
        %3949 = vmatprep.subr.bf16.mxu0 0
        %3950 = vmatpush1.bf16.msra.mxu0 0
        %3951 = vmatprep.subr.bf16.mxu0 0
        %3952 = vmatpush1.bf16.msra.mxu0 0
        %3953 = vmatprep.subr.bf16.mxu0 0
        %3954 = vmatpush1.bf16.msra.mxu0 0
        %3955 = vmatprep.subr.bf16.mxu0 0
        %3956 = vmatpush1.bf16.msra.mxu0 0
        %3957 = vmatprep.subr.bf16.mxu0 0
        %3958 = vmatpush1.bf16.msra.mxu0 0
        %3959 = vmatprep.mubr.bf16.mxu0 0
        %3960 = vmatmul.mubr.bf16.gmra.mrb[0].mxu0 %v3855
        %v3961 = vpop.f32.mrb[0].mxu0
        %v3962 = vadd.f32 %v3877, %v3961
        %v3963 = vpop.f32.mrb[0].mxu0
        %v3964 = vpop.f32.mrb[0].mxu0
        %v3965 = vadd.f32 %v3877, %v3964
        %v3966 = vpop.f32.mrb[0].mxu0
        %3967 = vdwg.mxu0
        %v3968 = vadd.f32 %v1579, %v3962
        %v3969 = vadd.f32 %v1580, %v3965
        %3970 = vadd.xlane.f32.xlu0 %v3968
        %v3971 = vpop.xlane.xlu0 %3970
        %3972 = vadd.xlane.f32.xlu0 %v3969
        %v3973 = vpop.xlane.xlu0 %3972
        %v3974 = vrcp.pop 128.0
        %v3975 = vmul.f32 %v3971, %v3974
        %v3976 = vmul.f32 %v3973, %v3974
        %v3977 = vsub.f32 %v3968, %v3975
        %v3978 = vsub.f32 %v3969, %v3976
        %v3979 = vmul.f32 %v3977, %v3977
        %v3980 = vmul.f32 %v3978, %v3978
        %3981 = vadd.xlane.f32.xlu0 %v3979
        %v3982 = vpop.xlane.xlu0 %3981
        %3983 = vadd.xlane.f32.xlu0 %v3980
        %v3984 = vpop.xlane.xlu0 %3983
        %v3985 = vmul.f32 %v3982, %v3974
        %v3986 = vmul.f32 %v3984, %v3974
        %v3987 = vadd.f32 %v3985, 1e-05
        %v3988 = vadd.f32 %v3986, 1e-05
        %v3989 = vrsqrt.pop %v3987
        %v3990 = vrsqrt.pop %v3988
        %v3991 = vmul.f32 %v3977, %v3989
        %v3992 = vmul.f32 %v3978, %v3990
        %v3993 = vld [vmem:[%s1534] sm:$0x1]
        %v3995 = vlaneseq
        %v3996 = vshrl.u32 %v3995, 7
        %v3997 = vsub.s32 0, %v3996
        %v3998 = vrot.slane %v3993, %v3997
        %v4000 = vmul.f32 %v3991, %v3998
        %v4001 = vmul.f32 %v3992, %v3998
        %v4002 = vld [vmem:[%s1537] sm:$0x1]
        %v4004 = vlaneseq
        %v4005 = vshrl.u32 %v4004, 7
        %v4006 = vsub.s32 0, %v4005
        %v4007 = vrot.slane %v4002, %v4006
        %v4009 = vadd.f32 %v4000, %v4007
        %v4010 = vadd.f32 %v4001, %v4007
        %v4011 = vadd.f32 %v4009, %v1581
        %v4012 = vadd.f32 %v4010, %v1582
        %v4013 = vpack.c.bf16 %v4012, %v4011
        %v4014 = vld [vmem:[%s1309] sm:$0xf]
        %v4015 = vld [vmem:[%s1309 + $0x4] sm:$0xf]
        %v4016 = vld [vmem:[%s1309 + $0x8] sm:$0xf]
        %v4017 = vld [vmem:[%s1309 + $0xc] sm:$0xf]
        %v4018 = vld [vmem:[%s1309 + $0x10] sm:$0xf]
        %v4019 = vld [vmem:[%s1309 + $0x14] sm:$0xf]
        %v4020 = vld [vmem:[%s1309 + $0x18] sm:$0xf]
        %v4021 = vld [vmem:[%s1309 + $0x1c] sm:$0xf]
        %v4022 = vld [vmem:[%s1309 + $0x20] sm:$0xf]
        %v4023 = vld [vmem:[%s1309 + $0x24] sm:$0xf]
        %v4024 = vld [vmem:[%s1309 + $0x28] sm:$0xf]
        %v4025 = vld [vmem:[%s1309 + $0x2c] sm:$0xf]
        %v4026 = vld [vmem:[%s1309 + $0x30] sm:$0xf]
        %v4027 = vld [vmem:[%s1309 + $0x34] sm:$0xf]
        %v4028 = vld [vmem:[%s1309 + $0x38] sm:$0xf]
        %v4029 = vld [vmem:[%s1309 + $0x3c] sm:$0xf]
        %v4030 = vld [vmem:[%s1540] sm:$0x1]
        %v4032 = vlaneseq
        %v4033 = vshrl.u32 %v4032, 7
        %v4034 = vsub.s32 0, %v4033
        %v4035 = vrot.slane %v4030, %v4034
        %v4053 = vunpack.c.l.b16 %v4014
        %v4054 = vunpack.c.l.b16 %v4015
        %v4055 = vunpack.c.l.b16 %v4016
        %v4056 = vunpack.c.l.b16 %v4017
        %v4057 = vunpack.c.l.b16 %v4018
        %v4058 = vunpack.c.l.b16 %v4019
        %v4059 = vunpack.c.l.b16 %v4020
        %v4060 = vunpack.c.l.b16 %v4021
        %v4061 = vunpack.c.l.b16 %v4022
        %v4062 = vunpack.c.l.b16 %v4023
        %v4063 = vunpack.c.l.b16 %v4024
        %v4064 = vunpack.c.l.b16 %v4025
        %v4065 = vunpack.c.l.b16 %v4026
        %v4066 = vunpack.c.l.b16 %v4027
        %v4067 = vunpack.c.l.b16 %v4028
        %v4068 = vunpack.c.l.b16 %v4029
        %v4069 = vpack.c.b16 %v4054, %v4053
        %v4070 = vpack.c.b16 %v4056, %v4055
        %v4071 = vpack.c.b16 %v4058, %v4057
        %v4072 = vpack.c.b16 %v4060, %v4059
        %v4073 = vpack.c.b16 %v4062, %v4061
        %v4074 = vpack.c.b16 %v4064, %v4063
        %v4075 = vpack.c.b16 %v4066, %v4065
        %v4076 = vpack.c.b16 %v4068, %v4067
        %4085 = vmatprep.subr.bf16.mxu0 0
        %4086 = vmatpush1.bf16.msra.mxu0 %v4069
        %4087 = vmatprep.subr.bf16.mxu0 0
        %4088 = vmatpush1.bf16.msra.mxu0 %v4070
        %4089 = vmatprep.subr.bf16.mxu0 0
        %4090 = vmatpush1.bf16.msra.mxu0 %v4071
        %4091 = vmatprep.subr.bf16.mxu0 0
        %4092 = vmatpush1.bf16.msra.mxu0 %v4072
        %4093 = vmatprep.subr.bf16.mxu0 0
        %4094 = vmatpush1.bf16.msra.mxu0 %v4073
        %4095 = vmatprep.subr.bf16.mxu0 0
        %4096 = vmatpush1.bf16.msra.mxu0 %v4074
        %4097 = vmatprep.subr.bf16.mxu0 0
        %4098 = vmatpush1.bf16.msra.mxu0 %v4075
        %4099 = vmatprep.subr.bf16.mxu0 0
        %4100 = vmatpush1.bf16.msra.mxu0 %v4076
        %4101 = vmatprep.subr.bf16.mxu0 0
        %4102 = vmatpush1.bf16.msra.mxu0 0
        %4103 = vmatprep.subr.bf16.mxu0 0
        %4104 = vmatpush1.bf16.msra.mxu0 0
        %4105 = vmatprep.subr.bf16.mxu0 0
        %4106 = vmatpush1.bf16.msra.mxu0 0
        %4107 = vmatprep.subr.bf16.mxu0 0
        %4108 = vmatpush1.bf16.msra.mxu0 0
        %4109 = vmatprep.subr.bf16.mxu0 0
        %4110 = vmatpush1.bf16.msra.mxu0 0
        %4111 = vmatprep.subr.bf16.mxu0 0
        %4112 = vmatpush1.bf16.msra.mxu0 0
        %4113 = vmatprep.subr.bf16.mxu0 0
        %4114 = vmatpush1.bf16.msra.mxu0 0
        %4115 = vmatprep.subr.bf16.mxu0 0
        %4116 = vmatpush1.bf16.msra.mxu0 0
        %4117 = vmatprep.mubr.bf16.mxu0 0
        %4118 = vmatmul.mubr.bf16.gmra.mrb[0].mxu0 %v4013
        %v4119 = vpop.f32.mrb[0].mxu0
        %v4120 = vadd.f32 %v4035, %v4119
        %v4121 = vpop.f32.mrb[0].mxu0
        %v4122 = vpop.f32.mrb[0].mxu0
        %v4123 = vadd.f32 %v4035, %v4122
        %v4124 = vpop.f32.mrb[0].mxu0
        %4125 = vdwg.mxu0
        %v4126 = vpack.c.bf16 %v4123, %v4120
        %4128 = vrot.lane.b32.xlu0 %v4126, 96
        %v4129 = vpop.permute.xlu0 %4128
        %4130 = vrot.lane.b32.xlu0 %v4126, 64
        %v4131 = vpop.permute.xlu0 %4130
        %4132 = vrot.lane.b32.xlu0 %v4126, 32
        %v4133 = vpop.permute.xlu0 %4132
        %v4136 = vpack.i.b16 %v4129, %v4126
        %v4138 = vshrl.u32 %v4126, 16
        %v4139 = vshrl.u32 %v4129, 16
        %v4140 = vpack.i.b16 %v4139, %v4138
        %v4144 = vpack.i.b16 %v4133, %v4131
        %v4146 = vshrl.u32 %v4131, 16
        %v4147 = vshrl.u32 %v4133, 16
        %v4148 = vpack.i.b16 %v4147, %v4146
        %v4150 = vcombine.high %v4136, %v1770
        %v4152 = vunpack.c.l.s4 1983009808
        %v4153 = vunpack.c.0.s8 %v4152
        %v4154 = vlaneseq
        %v4155 = vshrl.u32 %v4154, 7
        %v4156 = vsub.s32 %v4153, %v4155
        %v4157 = vrot.slane %v4136, %v4156
        %v4159 = vunpack.c.l.s4 1983009808
        %v4160 = vunpack.c.0.s8 %v4159
        %v4161 = vlaneseq
        %v4162 = vshrl.u32 %v4161, 7
        %v4163 = vsub.s32 %v4160, %v4162
        %v4164 = vrot.slane %v4150, %v4163
        %v4165 = vcombine.high %v4144, %v1770
        %v4167 = vunpack.c.l.s4 1983009808
        %v4168 = vunpack.c.0.s8 %v4167
        %v4169 = vlaneseq
        %v4170 = vshrl.u32 %v4169, 7
        %v4171 = vsub.s32 %v4168, %v4170
        %v4172 = vrot.slane %v4144, %v4171
        %v4174 = vunpack.c.l.s4 1983009808
        %v4175 = vunpack.c.0.s8 %v4174
        %v4176 = vlaneseq
        %v4177 = vshrl.u32 %v4176, 7
        %v4178 = vsub.s32 %v4175, %v4177
        %v4179 = vrot.slane %v4165, %v4178
        %v4180 = vcombine.low %v4157, %v4172
        %v4181 = vcombine.high %v4157, %v4172
        %v4183 = vunpack.c.l.s4 1934713408
        %v4184 = vunpack.c.0.s8 %v4183
        %v4185 = vlaneseq
        %v4186 = vshrl.u32 %v4185, 7
        %v4187 = vsub.s32 %v4184, %v4186
        %v4188 = vrot.slane %v4180, %v4187
        %v4190 = vunpack.c.l.s4 1934713408
        %v4191 = vunpack.c.0.s8 %v4190
        %v4192 = vlaneseq
        %v4193 = vshrl.u32 %v4192, 7
        %v4194 = vsub.s32 %v4191, %v4193
        %v4195 = vrot.slane %v4181, %v4194
        %v4196 = vcombine.low %v4164, %v4179
        %v4197 = vcombine.high %v4164, %v4179
        %v4199 = vunpack.c.l.s4 1934713408
        %v4200 = vunpack.c.0.s8 %v4199
        %v4201 = vlaneseq
        %v4202 = vshrl.u32 %v4201, 7
        %v4203 = vsub.s32 %v4200, %v4202
        %v4204 = vrot.slane %v4196, %v4203
        %v4206 = vunpack.c.l.s4 1934713408
        %v4207 = vunpack.c.0.s8 %v4206
        %v4208 = vlaneseq
        %v4209 = vshrl.u32 %v4208, 7
        %v4210 = vsub.s32 %v4207, %v4209
        %v4211 = vrot.slane %v4197, %v4210
        %v4212 = vcombine.high %v4188, 0
        %v4213 = vcombine.high %v4195, 0
        %v4214 = vcombine.high %v4204, 0
        %v4215 = vcombine.high %v4211, 0
        %v4216 = vcombine.high %v4140, %v1773
        %v4218 = vunpack.c.l.s4 1983009808
        %v4219 = vunpack.c.0.s8 %v4218
        %v4220 = vlaneseq
        %v4221 = vshrl.u32 %v4220, 7
        %v4222 = vsub.s32 %v4219, %v4221
        %v4223 = vrot.slane %v4140, %v4222
        %v4225 = vunpack.c.l.s4 1983009808
        %v4226 = vunpack.c.0.s8 %v4225
        %v4227 = vlaneseq
        %v4228 = vshrl.u32 %v4227, 7
        %v4229 = vsub.s32 %v4226, %v4228
        %v4230 = vrot.slane %v4216, %v4229
        %v4231 = vcombine.high %v4148, %v1773
        %v4233 = vunpack.c.l.s4 1983009808
        %v4234 = vunpack.c.0.s8 %v4233
        %v4235 = vlaneseq
        %v4236 = vshrl.u32 %v4235, 7
        %v4237 = vsub.s32 %v4234, %v4236
        %v4238 = vrot.slane %v4148, %v4237
        %v4240 = vunpack.c.l.s4 1983009808
        %v4241 = vunpack.c.0.s8 %v4240
        %v4242 = vlaneseq
        %v4243 = vshrl.u32 %v4242, 7
        %v4244 = vsub.s32 %v4241, %v4243
        %v4245 = vrot.slane %v4231, %v4244
        %v4246 = vcombine.low %v4223, %v4238
        %v4247 = vcombine.high %v4223, %v4238
        %v4249 = vunpack.c.l.s4 1934713408
        %v4250 = vunpack.c.0.s8 %v4249
        %v4251 = vlaneseq
        %v4252 = vshrl.u32 %v4251, 7
        %v4253 = vsub.s32 %v4250, %v4252
        %v4254 = vrot.slane %v4246, %v4253
        %v4256 = vunpack.c.l.s4 1934713408
        %v4257 = vunpack.c.0.s8 %v4256
        %v4258 = vlaneseq
        %v4259 = vshrl.u32 %v4258, 7
        %v4260 = vsub.s32 %v4257, %v4259
        %v4261 = vrot.slane %v4247, %v4260
        %v4262 = vcombine.low %v4230, %v4245
        %v4263 = vcombine.high %v4230, %v4245
        %v4265 = vunpack.c.l.s4 1934713408
        %v4266 = vunpack.c.0.s8 %v4265
        %v4267 = vlaneseq
        %v4268 = vshrl.u32 %v4267, 7
        %v4269 = vsub.s32 %v4266, %v4268
        %v4270 = vrot.slane %v4262, %v4269
        %v4272 = vunpack.c.l.s4 1934713408
        %v4273 = vunpack.c.0.s8 %v4272
        %v4274 = vlaneseq
        %v4275 = vshrl.u32 %v4274, 7
        %v4276 = vsub.s32 %v4273, %v4275
        %v4277 = vrot.slane %v4263, %v4276
        %v4278 = vcombine.high %v4254, 0
        %v4279 = vcombine.high %v4261, 0
        %v4280 = vcombine.high %v4270, 0
        %v4281 = vcombine.high %v4277, 0
        %v4282 = vcombine.low %v4188, %v4195
        %v4284 = vunpack.c.l.s4 1983009808
        %v4285 = vunpack.c.0.s8 %v4284
        %v4286 = vlaneseq
        %v4287 = vshrl.u32 %v4286, 7
        %v4288 = vsub.s32 %v4285, %v4287
        %v4289 = vrot.slane %v4282, %v4288
        %v4290 = vcombine.low %v4212, %v4213
        %v4292 = vunpack.c.l.s4 1983009808
        %v4293 = vunpack.c.0.s8 %v4292
        %v4294 = vlaneseq
        %v4295 = vshrl.u32 %v4294, 7
        %v4296 = vsub.s32 %v4293, %v4295
        %v4297 = vrot.slane %v4290, %v4296
        %v4298 = vcombine.low %v4204, %v4211
        %v4300 = vunpack.c.l.s4 1983009808
        %v4301 = vunpack.c.0.s8 %v4300
        %v4302 = vlaneseq
        %v4303 = vshrl.u32 %v4302, 7
        %v4304 = vsub.s32 %v4301, %v4303
        %v4305 = vrot.slane %v4298, %v4304
        %v4306 = vcombine.low %v4214, %v4215
        %v4308 = vunpack.c.l.s4 1983009808
        %v4309 = vunpack.c.0.s8 %v4308
        %v4310 = vlaneseq
        %v4311 = vshrl.u32 %v4310, 7
        %v4312 = vsub.s32 %v4309, %v4311
        %v4313 = vrot.slane %v4306, %v4312
        %v4314 = vcombine.low %v4289, %v4297
        %v4316 = vunpack.c.l.s4 1934713408
        %v4317 = vunpack.c.0.s8 %v4316
        %v4318 = vlaneseq
        %v4319 = vshrl.u32 %v4318, 7
        %v4320 = vsub.s32 %v4317, %v4319
        %v4321 = vrot.slane %v4314, %v4320
        %v4322 = vcombine.low %v4305, %v4313
        %v4324 = vunpack.c.l.s4 1934713408
        %v4325 = vunpack.c.0.s8 %v4324
        %v4326 = vlaneseq
        %v4327 = vshrl.u32 %v4326, 7
        %v4328 = vsub.s32 %v4325, %v4327
        %v4329 = vrot.slane %v4322, %v4328
        %v4330 = vcombine.low %v4321, %v4329
        %v4331 = vcombine.high %v4321, %v4329
        %v4332 = vcombine.low %v4254, %v4261
        %v4334 = vunpack.c.l.s4 1983009808
        %v4335 = vunpack.c.0.s8 %v4334
        %v4336 = vlaneseq
        %v4337 = vshrl.u32 %v4336, 7
        %v4338 = vsub.s32 %v4335, %v4337
        %v4339 = vrot.slane %v4332, %v4338
        %v4340 = vcombine.low %v4278, %v4279
        %v4342 = vunpack.c.l.s4 1983009808
        %v4343 = vunpack.c.0.s8 %v4342
        %v4344 = vlaneseq
        %v4345 = vshrl.u32 %v4344, 7
        %v4346 = vsub.s32 %v4343, %v4345
        %v4347 = vrot.slane %v4340, %v4346
        %v4348 = vcombine.low %v4270, %v4277
        %v4350 = vunpack.c.l.s4 1983009808
        %v4351 = vunpack.c.0.s8 %v4350
        %v4352 = vlaneseq
        %v4353 = vshrl.u32 %v4352, 7
        %v4354 = vsub.s32 %v4351, %v4353
        %v4355 = vrot.slane %v4348, %v4354
        %v4356 = vcombine.low %v4280, %v4281
        %v4358 = vunpack.c.l.s4 1983009808
        %v4359 = vunpack.c.0.s8 %v4358
        %v4360 = vlaneseq
        %v4361 = vshrl.u32 %v4360, 7
        %v4362 = vsub.s32 %v4359, %v4361
        %v4363 = vrot.slane %v4356, %v4362
        %v4364 = vcombine.low %v4339, %v4347
        %v4366 = vunpack.c.l.s4 1934713408
        %v4367 = vunpack.c.0.s8 %v4366
        %v4368 = vlaneseq
        %v4369 = vshrl.u32 %v4368, 7
        %v4370 = vsub.s32 %v4367, %v4369
        %v4371 = vrot.slane %v4364, %v4370
        %v4372 = vcombine.low %v4355, %v4363
        %v4374 = vunpack.c.l.s4 1934713408
        %v4375 = vunpack.c.0.s8 %v4374
        %v4376 = vlaneseq
        %v4377 = vshrl.u32 %v4376, 7
        %v4378 = vsub.s32 %v4375, %v4377
        %v4379 = vrot.slane %v4372, %v4378
        %v4380 = vcombine.low %v4371, %v4379
        %v4381 = vcombine.high %v4371, %v4379
        %v4384 = vpack.i.b16 %v4380, %v4330
        %v4385 = vshrl.u32 %v4330, 16
        %v4386 = vshrl.u32 %v4380, 16
        %v4387 = vpack.i.b16 %v4386, %v4385
        %v4390 = vpack.i.b16 %v4381, %v4331
        %v4391 = vshrl.u32 %v4331, 16
        %v4392 = vshrl.u32 %v4381, 16
        %v4393 = vpack.i.b16 %v4392, %v4391
        %v4394 = vunpack.c.l.b16 %v4384
        %v4395 = vunpack.c.h.b16 %v4384
        %v4396 = vunpack.c.l.b16 %v4387
        %v4397 = vunpack.c.h.b16 %v4387
        %v4398 = vunpack.c.l.b16 %v4390
        %v4399 = vunpack.c.h.b16 %v4390
        %v4400 = vunpack.c.l.b16 %v4393
        %v4401 = vunpack.c.h.b16 %v4393
        %v4402 = vpack.c.b16 %v4394, %v4394
        %v4403 = vpack.c.b16 %v4395, %v4395
        %v4404 = vpack.c.b16 %v4396, %v4396
        %v4405 = vpack.c.b16 %v4397, %v4397
        %v4406 = vpack.c.b16 %v4398, %v4398
        %v4407 = vpack.c.b16 %v4399, %v4399
        %v4408 = vpack.c.b16 %v4400, %v4400
        %v4409 = vpack.c.b16 %v4401, %v4401
        %v4410 = vld [vmem:[%s1318] sm:$0xf]
        %v4411 = vld [vmem:[%s1318 + $0x4] sm:$0xf]
        %v4412 = vld [vmem:[%s1318 + $0x8] sm:$0xf]
        %v4413 = vld [vmem:[%s1318 + $0xc] sm:$0xf]
        %v4414 = vld [vmem:[%s1318 + $0x10] sm:$0xf]
        %v4415 = vld [vmem:[%s1318 + $0x14] sm:$0xf]
        %v4416 = vld [vmem:[%s1318 + $0x18] sm:$0xf]
        %v4417 = vld [vmem:[%s1318 + $0x1c] sm:$0xf]
        %v4418 = vld [vmem:[%s1318 + $0x20] sm:$0xf]
        %v4419 = vld [vmem:[%s1318 + $0x24] sm:$0xf]
        %v4420 = vld [vmem:[%s1318 + $0x28] sm:$0xf]
        %v4421 = vld [vmem:[%s1318 + $0x2c] sm:$0xf]
        %v4422 = vld [vmem:[%s1318 + $0x30] sm:$0xf]
        %v4423 = vld [vmem:[%s1318 + $0x34] sm:$0xf]
        %v4424 = vld [vmem:[%s1318 + $0x38] sm:$0xf]
        %v4425 = vld [vmem:[%s1318 + $0x3c] sm:$0xf]
        %v4426 = vld [vmem:[%s1543] sm:$0x1]
        %v4428 = vlaneseq
        %v4429 = vshrl.u32 %v4428, 7
        %v4430 = vsub.s32 0, %v4429
        %v4431 = vrot.slane %v4426, %v4430
        %v4437 = vunpack.c.l.b16 %v1583
        %v4438 = vunpack.c.l.b16 %v1584
        %v4439 = vunpack.c.l.b16 %v1585
        %v4440 = vunpack.c.l.b16 %v1586
        %v4441 = vpack.c.b16 %v4438, %v4437
        %v4442 = vpack.c.b16 %v4440, %v4439
        %v4461 = vunpack.c.l.b16 %v4410
        %v4462 = vunpack.c.l.b16 %v4411
        %v4463 = vunpack.c.l.b16 %v4412
        %v4464 = vunpack.c.l.b16 %v4413
        %v4465 = vunpack.c.l.b16 %v4414
        %v4466 = vunpack.c.l.b16 %v4415
        %v4467 = vunpack.c.l.b16 %v4416
        %v4468 = vunpack.c.l.b16 %v4417
        %v4469 = vunpack.c.l.b16 %v4418
        %v4470 = vunpack.c.l.b16 %v4419
        %v4471 = vunpack.c.l.b16 %v4420
        %v4472 = vunpack.c.l.b16 %v4421
        %v4473 = vunpack.c.l.b16 %v4422
        %v4474 = vunpack.c.l.b16 %v4423
        %v4475 = vunpack.c.l.b16 %v4424
        %v4476 = vunpack.c.l.b16 %v4425
        %v4477 = vpack.c.b16 %v4462, %v4461
        %v4478 = vpack.c.b16 %v4464, %v4463
        %v4479 = vpack.c.b16 %v4466, %v4465
        %v4480 = vpack.c.b16 %v4468, %v4467
        %v4481 = vpack.c.b16 %v4470, %v4469
        %v4482 = vpack.c.b16 %v4472, %v4471
        %v4483 = vpack.c.b16 %v4474, %v4473
        %v4484 = vpack.c.b16 %v4476, %v4475
        %4493 = vmatprep.subr.bf16.mxu0 0
        %4494 = vmatpush1.bf16.msra.mxu0 %v4477
        %4495 = vmatprep.subr.bf16.mxu0 0
        %4496 = vmatpush1.bf16.msra.mxu0 %v4478
        %4497 = vmatprep.subr.bf16.mxu0 0
        %4498 = vmatpush1.bf16.msra.mxu0 %v4479
        %4499 = vmatprep.subr.bf16.mxu0 0
        %4500 = vmatpush1.bf16.msra.mxu0 %v4480
        %4501 = vmatprep.subr.bf16.mxu0 0
        %4502 = vmatpush1.bf16.msra.mxu0 %v4481
        %4503 = vmatprep.subr.bf16.mxu0 0
        %4504 = vmatpush1.bf16.msra.mxu0 %v4482
        %4505 = vmatprep.subr.bf16.mxu0 0
        %4506 = vmatpush1.bf16.msra.mxu0 %v4483
        %4507 = vmatprep.subr.bf16.mxu0 0
        %4508 = vmatpush1.bf16.msra.mxu0 %v4484
        %4509 = vmatprep.subr.bf16.mxu0 0
        %4510 = vmatpush1.bf16.msra.mxu0 0
        %4511 = vmatprep.subr.bf16.mxu0 0
        %4512 = vmatpush1.bf16.msra.mxu0 0
        %4513 = vmatprep.subr.bf16.mxu0 0
        %4514 = vmatpush1.bf16.msra.mxu0 0
        %4515 = vmatprep.subr.bf16.mxu0 0
        %4516 = vmatpush1.bf16.msra.mxu0 0
        %4517 = vmatprep.subr.bf16.mxu0 0
        %4518 = vmatpush1.bf16.msra.mxu0 0
        %4519 = vmatprep.subr.bf16.mxu0 0
        %4520 = vmatpush1.bf16.msra.mxu0 0
        %4521 = vmatprep.subr.bf16.mxu0 0
        %4522 = vmatpush1.bf16.msra.mxu0 0
        %4523 = vmatprep.subr.bf16.mxu0 0
        %4524 = vmatpush1.bf16.msra.mxu0 0
        %4525 = vmatprep.mubr.bf16.mxu0 0
        %4526 = vmatmul.mubr.bf16.gmra.mrb[0].mxu0 %v4441
        %v4527 = vpop.f32.mrb[0].mxu0
        %v4528 = vadd.f32 %v4431, %v4527
        %v4529 = vpop.f32.mrb[0].mxu0
        %v4530 = vpop.f32.mrb[0].mxu0
        %v4531 = vadd.f32 %v4431, %v4530
        %v4532 = vpop.f32.mrb[0].mxu0
        %4533 = vmatprep.mubr.bf16.mxu0 0
        %4534 = vmatmul.mubr.bf16.gmra.mrb[0].mxu0 %v4442
        %v4535 = vpop.f32.mrb[0].mxu0
        %v4536 = vadd.f32 %v4431, %v4535
        %v4537 = vpop.f32.mrb[0].mxu0
        %v4538 = vpop.f32.mrb[0].mxu0
        %v4539 = vadd.f32 %v4431, %v4538
        %v4540 = vpop.f32.mrb[0].mxu0
        %4541 = vdwg.mxu0
        %v4542 = vpack.c.bf16 %v4531, %v4528
        %v4543 = vpack.c.bf16 %v4539, %v4536
        %4546 = vrot.lane.b32.xlu0 %v4542, 96
        %v4547 = vpop.permute.xlu0 %4546
        %4548 = vrot.lane.b32.xlu0 %v4543, 96
        %v4549 = vpop.permute.xlu0 %4548
        %4550 = vrot.lane.b32.xlu0 %v4542, 64
        %v4551 = vpop.permute.xlu0 %4550
        %4552 = vrot.lane.b32.xlu0 %v4543, 64
        %v4553 = vpop.permute.xlu0 %4552
        %4554 = vrot.lane.b32.xlu0 %v4542, 32
        %v4555 = vpop.permute.xlu0 %4554
        %4556 = vrot.lane.b32.xlu0 %v4543, 32
        %v4557 = vpop.permute.xlu0 %4556
        %v4560 = vpack.i.b16 %v4547, %v4542
        %v4562 = vshrl.u32 %v4542, 16
        %v4563 = vshrl.u32 %v4547, 16
        %v4564 = vpack.i.b16 %v4563, %v4562
        %v4568 = vpack.i.b16 %v4555, %v4551
        %v4570 = vshrl.u32 %v4551, 16
        %v4571 = vshrl.u32 %v4555, 16
        %v4572 = vpack.i.b16 %v4571, %v4570
        %v4576 = vpack.i.b16 %v4549, %v4543
        %v4578 = vshrl.u32 %v4543, 16
        %v4579 = vshrl.u32 %v4549, 16
        %v4580 = vpack.i.b16 %v4579, %v4578
        %v4584 = vpack.i.b16 %v4557, %v4553
        %v4586 = vshrl.u32 %v4553, 16
        %v4587 = vshrl.u32 %v4557, 16
        %v4588 = vpack.i.b16 %v4587, %v4586
        %v4590 = vcombine.high %v4560, %v1770
        %v4592 = vunpack.c.l.s4 1983009808
        %v4593 = vunpack.c.0.s8 %v4592
        %v4594 = vlaneseq
        %v4595 = vshrl.u32 %v4594, 7
        %v4596 = vsub.s32 %v4593, %v4595
        %v4597 = vrot.slane %v4560, %v4596
        %v4599 = vunpack.c.l.s4 1983009808
        %v4600 = vunpack.c.0.s8 %v4599
        %v4601 = vlaneseq
        %v4602 = vshrl.u32 %v4601, 7
        %v4603 = vsub.s32 %v4600, %v4602
        %v4604 = vrot.slane %v4590, %v4603
        %v4605 = vcombine.high %v4568, %v1770
        %v4607 = vunpack.c.l.s4 1983009808
        %v4608 = vunpack.c.0.s8 %v4607
        %v4609 = vlaneseq
        %v4610 = vshrl.u32 %v4609, 7
        %v4611 = vsub.s32 %v4608, %v4610
        %v4612 = vrot.slane %v4568, %v4611
        %v4614 = vunpack.c.l.s4 1983009808
        %v4615 = vunpack.c.0.s8 %v4614
        %v4616 = vlaneseq
        %v4617 = vshrl.u32 %v4616, 7
        %v4618 = vsub.s32 %v4615, %v4617
        %v4619 = vrot.slane %v4605, %v4618
        %v4620 = vcombine.low %v4597, %v4612
        %v4621 = vcombine.high %v4597, %v4612
        %v4623 = vunpack.c.l.s4 1934713408
        %v4624 = vunpack.c.0.s8 %v4623
        %v4625 = vlaneseq
        %v4626 = vshrl.u32 %v4625, 7
        %v4627 = vsub.s32 %v4624, %v4626
        %v4628 = vrot.slane %v4620, %v4627
        %v4630 = vunpack.c.l.s4 1934713408
        %v4631 = vunpack.c.0.s8 %v4630
        %v4632 = vlaneseq
        %v4633 = vshrl.u32 %v4632, 7
        %v4634 = vsub.s32 %v4631, %v4633
        %v4635 = vrot.slane %v4621, %v4634
        %v4636 = vcombine.low %v4604, %v4619
        %v4637 = vcombine.high %v4604, %v4619
        %v4639 = vunpack.c.l.s4 1934713408
        %v4640 = vunpack.c.0.s8 %v4639
        %v4641 = vlaneseq
        %v4642 = vshrl.u32 %v4641, 7
        %v4643 = vsub.s32 %v4640, %v4642
        %v4644 = vrot.slane %v4636, %v4643
        %v4646 = vunpack.c.l.s4 1934713408
        %v4647 = vunpack.c.0.s8 %v4646
        %v4648 = vlaneseq
        %v4649 = vshrl.u32 %v4648, 7
        %v4650 = vsub.s32 %v4647, %v4649
        %v4651 = vrot.slane %v4637, %v4650
        %v4652 = vcombine.high %v4628, 0
        %v4653 = vcombine.high %v4635, 0
        %v4654 = vcombine.high %v4644, 0
        %v4655 = vcombine.high %v4651, 0
        %v4656 = vcombine.high %v4564, %v1773
        %v4658 = vunpack.c.l.s4 1983009808
        %v4659 = vunpack.c.0.s8 %v4658
        %v4660 = vlaneseq
        %v4661 = vshrl.u32 %v4660, 7
        %v4662 = vsub.s32 %v4659, %v4661
        %v4663 = vrot.slane %v4564, %v4662
        %v4665 = vunpack.c.l.s4 1983009808
        %v4666 = vunpack.c.0.s8 %v4665
        %v4667 = vlaneseq
        %v4668 = vshrl.u32 %v4667, 7
        %v4669 = vsub.s32 %v4666, %v4668
        %v4670 = vrot.slane %v4656, %v4669
        %v4671 = vcombine.high %v4572, %v1773
        %v4673 = vunpack.c.l.s4 1983009808
        %v4674 = vunpack.c.0.s8 %v4673
        %v4675 = vlaneseq
        %v4676 = vshrl.u32 %v4675, 7
        %v4677 = vsub.s32 %v4674, %v4676
        %v4678 = vrot.slane %v4572, %v4677
        %v4680 = vunpack.c.l.s4 1983009808
        %v4681 = vunpack.c.0.s8 %v4680
        %v4682 = vlaneseq
        %v4683 = vshrl.u32 %v4682, 7
        %v4684 = vsub.s32 %v4681, %v4683
        %v4685 = vrot.slane %v4671, %v4684
        %v4686 = vcombine.low %v4663, %v4678
        %v4687 = vcombine.high %v4663, %v4678
        %v4689 = vunpack.c.l.s4 1934713408
        %v4690 = vunpack.c.0.s8 %v4689
        %v4691 = vlaneseq
        %v4692 = vshrl.u32 %v4691, 7
        %v4693 = vsub.s32 %v4690, %v4692
        %v4694 = vrot.slane %v4686, %v4693
        %v4696 = vunpack.c.l.s4 1934713408
        %v4697 = vunpack.c.0.s8 %v4696
        %v4698 = vlaneseq
        %v4699 = vshrl.u32 %v4698, 7
        %v4700 = vsub.s32 %v4697, %v4699
        %v4701 = vrot.slane %v4687, %v4700
        %v4702 = vcombine.low %v4670, %v4685
        %v4703 = vcombine.high %v4670, %v4685
        %v4705 = vunpack.c.l.s4 1934713408
        %v4706 = vunpack.c.0.s8 %v4705
        %v4707 = vlaneseq
        %v4708 = vshrl.u32 %v4707, 7
        %v4709 = vsub.s32 %v4706, %v4708
        %v4710 = vrot.slane %v4702, %v4709
        %v4712 = vunpack.c.l.s4 1934713408
        %v4713 = vunpack.c.0.s8 %v4712
        %v4714 = vlaneseq
        %v4715 = vshrl.u32 %v4714, 7
        %v4716 = vsub.s32 %v4713, %v4715
        %v4717 = vrot.slane %v4703, %v4716
        %v4718 = vcombine.high %v4694, 0
        %v4719 = vcombine.high %v4701, 0
        %v4720 = vcombine.high %v4710, 0
        %v4721 = vcombine.high %v4717, 0
        %v4722 = vcombine.high %v4576, %v1770
        %v4724 = vunpack.c.l.s4 1983009808
        %v4725 = vunpack.c.0.s8 %v4724
        %v4726 = vlaneseq
        %v4727 = vshrl.u32 %v4726, 7
        %v4728 = vsub.s32 %v4725, %v4727
        %v4729 = vrot.slane %v4576, %v4728
        %v4731 = vunpack.c.l.s4 1983009808
        %v4732 = vunpack.c.0.s8 %v4731
        %v4733 = vlaneseq
        %v4734 = vshrl.u32 %v4733, 7
        %v4735 = vsub.s32 %v4732, %v4734
        %v4736 = vrot.slane %v4722, %v4735
        %v4737 = vcombine.high %v4584, %v1770
        %v4739 = vunpack.c.l.s4 1983009808
        %v4740 = vunpack.c.0.s8 %v4739
        %v4741 = vlaneseq
        %v4742 = vshrl.u32 %v4741, 7
        %v4743 = vsub.s32 %v4740, %v4742
        %v4744 = vrot.slane %v4584, %v4743
        %v4746 = vunpack.c.l.s4 1983009808
        %v4747 = vunpack.c.0.s8 %v4746
        %v4748 = vlaneseq
        %v4749 = vshrl.u32 %v4748, 7
        %v4750 = vsub.s32 %v4747, %v4749
        %v4751 = vrot.slane %v4737, %v4750
        %v4752 = vcombine.low %v4729, %v4744
        %v4753 = vcombine.high %v4729, %v4744
        %v4755 = vunpack.c.l.s4 1934713408
        %v4756 = vunpack.c.0.s8 %v4755
        %v4757 = vlaneseq
        %v4758 = vshrl.u32 %v4757, 7
        %v4759 = vsub.s32 %v4756, %v4758
        %v4760 = vrot.slane %v4752, %v4759
        %v4762 = vunpack.c.l.s4 1934713408
        %v4763 = vunpack.c.0.s8 %v4762
        %v4764 = vlaneseq
        %v4765 = vshrl.u32 %v4764, 7
        %v4766 = vsub.s32 %v4763, %v4765
        %v4767 = vrot.slane %v4753, %v4766
        %v4768 = vcombine.low %v4736, %v4751
        %v4769 = vcombine.high %v4736, %v4751
        %v4771 = vunpack.c.l.s4 1934713408
        %v4772 = vunpack.c.0.s8 %v4771
        %v4773 = vlaneseq
        %v4774 = vshrl.u32 %v4773, 7
        %v4775 = vsub.s32 %v4772, %v4774
        %v4776 = vrot.slane %v4768, %v4775
        %v4778 = vunpack.c.l.s4 1934713408
        %v4779 = vunpack.c.0.s8 %v4778
        %v4780 = vlaneseq
        %v4781 = vshrl.u32 %v4780, 7
        %v4782 = vsub.s32 %v4779, %v4781
        %v4783 = vrot.slane %v4769, %v4782
        %v4784 = vcombine.high %v4760, 0
        %v4785 = vcombine.high %v4767, 0
        %v4786 = vcombine.high %v4776, 0
        %v4787 = vcombine.high %v4783, 0
        %v4788 = vcombine.high %v4580, %v1773
        %v4790 = vunpack.c.l.s4 1983009808
        %v4791 = vunpack.c.0.s8 %v4790
        %v4792 = vlaneseq
        %v4793 = vshrl.u32 %v4792, 7
        %v4794 = vsub.s32 %v4791, %v4793
        %v4795 = vrot.slane %v4580, %v4794
        %v4797 = vunpack.c.l.s4 1983009808
        %v4798 = vunpack.c.0.s8 %v4797
        %v4799 = vlaneseq
        %v4800 = vshrl.u32 %v4799, 7
        %v4801 = vsub.s32 %v4798, %v4800
        %v4802 = vrot.slane %v4788, %v4801
        %v4803 = vcombine.high %v4588, %v1773
        %v4805 = vunpack.c.l.s4 1983009808
        %v4806 = vunpack.c.0.s8 %v4805
        %v4807 = vlaneseq
        %v4808 = vshrl.u32 %v4807, 7
        %v4809 = vsub.s32 %v4806, %v4808
        %v4810 = vrot.slane %v4588, %v4809
        %v4812 = vunpack.c.l.s4 1983009808
        %v4813 = vunpack.c.0.s8 %v4812
        %v4814 = vlaneseq
        %v4815 = vshrl.u32 %v4814, 7
        %v4816 = vsub.s32 %v4813, %v4815
        %v4817 = vrot.slane %v4803, %v4816
        %v4818 = vcombine.low %v4795, %v4810
        %v4819 = vcombine.high %v4795, %v4810
        %v4821 = vunpack.c.l.s4 1934713408
        %v4822 = vunpack.c.0.s8 %v4821
        %v4823 = vlaneseq
        %v4824 = vshrl.u32 %v4823, 7
        %v4825 = vsub.s32 %v4822, %v4824
        %v4826 = vrot.slane %v4818, %v4825
        %v4828 = vunpack.c.l.s4 1934713408
        %v4829 = vunpack.c.0.s8 %v4828
        %v4830 = vlaneseq
        %v4831 = vshrl.u32 %v4830, 7
        %v4832 = vsub.s32 %v4829, %v4831
        %v4833 = vrot.slane %v4819, %v4832
        %v4834 = vcombine.low %v4802, %v4817
        %v4835 = vcombine.high %v4802, %v4817
        %v4837 = vunpack.c.l.s4 1934713408
        %v4838 = vunpack.c.0.s8 %v4837
        %v4839 = vlaneseq
        %v4840 = vshrl.u32 %v4839, 7
        %v4841 = vsub.s32 %v4838, %v4840
        %v4842 = vrot.slane %v4834, %v4841
        %v4844 = vunpack.c.l.s4 1934713408
        %v4845 = vunpack.c.0.s8 %v4844
        %v4846 = vlaneseq
        %v4847 = vshrl.u32 %v4846, 7
        %v4848 = vsub.s32 %v4845, %v4847
        %v4849 = vrot.slane %v4835, %v4848
        %v4850 = vcombine.high %v4826, 0
        %v4851 = vcombine.high %v4833, 0
        %v4852 = vcombine.high %v4842, 0
        %v4853 = vcombine.high %v4849, 0
        %v4854 = vcombine.low %v4628, %v4635
        %v4856 = vunpack.c.l.s4 1983009808
        %v4857 = vunpack.c.0.s8 %v4856
        %v4858 = vlaneseq
        %v4859 = vshrl.u32 %v4858, 7
        %v4860 = vsub.s32 %v4857, %v4859
        %v4861 = vrot.slane %v4854, %v4860
        %v4862 = vcombine.low %v4652, %v4653
        %v4864 = vunpack.c.l.s4 1983009808
        %v4865 = vunpack.c.0.s8 %v4864
        %v4866 = vlaneseq
        %v4867 = vshrl.u32 %v4866, 7
        %v4868 = vsub.s32 %v4865, %v4867
        %v4869 = vrot.slane %v4862, %v4868
        %v4870 = vcombine.low %v4644, %v4651
        %v4872 = vunpack.c.l.s4 1983009808
        %v4873 = vunpack.c.0.s8 %v4872
        %v4874 = vlaneseq
        %v4875 = vshrl.u32 %v4874, 7
        %v4876 = vsub.s32 %v4873, %v4875
        %v4877 = vrot.slane %v4870, %v4876
        %v4878 = vcombine.low %v4654, %v4655
        %v4880 = vunpack.c.l.s4 1983009808
        %v4881 = vunpack.c.0.s8 %v4880
        %v4882 = vlaneseq
        %v4883 = vshrl.u32 %v4882, 7
        %v4884 = vsub.s32 %v4881, %v4883
        %v4885 = vrot.slane %v4878, %v4884
        %v4886 = vcombine.low %v4861, %v4869
        %v4888 = vunpack.c.l.s4 1934713408
        %v4889 = vunpack.c.0.s8 %v4888
        %v4890 = vlaneseq
        %v4891 = vshrl.u32 %v4890, 7
        %v4892 = vsub.s32 %v4889, %v4891
        %v4893 = vrot.slane %v4886, %v4892
        %v4894 = vcombine.low %v4877, %v4885
        %v4896 = vunpack.c.l.s4 1934713408
        %v4897 = vunpack.c.0.s8 %v4896
        %v4898 = vlaneseq
        %v4899 = vshrl.u32 %v4898, 7
        %v4900 = vsub.s32 %v4897, %v4899
        %v4901 = vrot.slane %v4894, %v4900
        %v4902 = vcombine.low %v4893, %v4901
        %v4903 = vcombine.high %v4893, %v4901
        %v4904 = vcombine.low %v4694, %v4701
        %v4906 = vunpack.c.l.s4 1983009808
        %v4907 = vunpack.c.0.s8 %v4906
        %v4908 = vlaneseq
        %v4909 = vshrl.u32 %v4908, 7
        %v4910 = vsub.s32 %v4907, %v4909
        %v4911 = vrot.slane %v4904, %v4910
        %v4912 = vcombine.low %v4718, %v4719
        %v4914 = vunpack.c.l.s4 1983009808
        %v4915 = vunpack.c.0.s8 %v4914
        %v4916 = vlaneseq
        %v4917 = vshrl.u32 %v4916, 7
        %v4918 = vsub.s32 %v4915, %v4917
        %v4919 = vrot.slane %v4912, %v4918
        %v4920 = vcombine.low %v4710, %v4717
        %v4922 = vunpack.c.l.s4 1983009808
        %v4923 = vunpack.c.0.s8 %v4922
        %v4924 = vlaneseq
        %v4925 = vshrl.u32 %v4924, 7
        %v4926 = vsub.s32 %v4923, %v4925
        %v4927 = vrot.slane %v4920, %v4926
        %v4928 = vcombine.low %v4720, %v4721
        %v4930 = vunpack.c.l.s4 1983009808
        %v4931 = vunpack.c.0.s8 %v4930
        %v4932 = vlaneseq
        %v4933 = vshrl.u32 %v4932, 7
        %v4934 = vsub.s32 %v4931, %v4933
        %v4935 = vrot.slane %v4928, %v4934
        %v4936 = vcombine.low %v4911, %v4919
        %v4938 = vunpack.c.l.s4 1934713408
        %v4939 = vunpack.c.0.s8 %v4938
        %v4940 = vlaneseq
        %v4941 = vshrl.u32 %v4940, 7
        %v4942 = vsub.s32 %v4939, %v4941
        %v4943 = vrot.slane %v4936, %v4942
        %v4944 = vcombine.low %v4927, %v4935
        %v4946 = vunpack.c.l.s4 1934713408
        %v4947 = vunpack.c.0.s8 %v4946
        %v4948 = vlaneseq
        %v4949 = vshrl.u32 %v4948, 7
        %v4950 = vsub.s32 %v4947, %v4949
        %v4951 = vrot.slane %v4944, %v4950
        %v4952 = vcombine.low %v4943, %v4951
        %v4953 = vcombine.high %v4943, %v4951
        %v4954 = vcombine.low %v4760, %v4767
        %v4956 = vunpack.c.l.s4 1983009808
        %v4957 = vunpack.c.0.s8 %v4956
        %v4958 = vlaneseq
        %v4959 = vshrl.u32 %v4958, 7
        %v4960 = vsub.s32 %v4957, %v4959
        %v4961 = vrot.slane %v4954, %v4960
        %v4962 = vcombine.low %v4784, %v4785
        %v4964 = vunpack.c.l.s4 1983009808
        %v4965 = vunpack.c.0.s8 %v4964
        %v4966 = vlaneseq
        %v4967 = vshrl.u32 %v4966, 7
        %v4968 = vsub.s32 %v4965, %v4967
        %v4969 = vrot.slane %v4962, %v4968
        %v4970 = vcombine.low %v4776, %v4783
        %v4972 = vunpack.c.l.s4 1983009808
        %v4973 = vunpack.c.0.s8 %v4972
        %v4974 = vlaneseq
        %v4975 = vshrl.u32 %v4974, 7
        %v4976 = vsub.s32 %v4973, %v4975
        %v4977 = vrot.slane %v4970, %v4976
        %v4978 = vcombine.low %v4786, %v4787
        %v4980 = vunpack.c.l.s4 1983009808
        %v4981 = vunpack.c.0.s8 %v4980
        %v4982 = vlaneseq
        %v4983 = vshrl.u32 %v4982, 7
        %v4984 = vsub.s32 %v4981, %v4983
        %v4985 = vrot.slane %v4978, %v4984
        %v4986 = vcombine.low %v4961, %v4969
        %v4988 = vunpack.c.l.s4 1934713408
        %v4989 = vunpack.c.0.s8 %v4988
        %v4990 = vlaneseq
        %v4991 = vshrl.u32 %v4990, 7
        %v4992 = vsub.s32 %v4989, %v4991
        %v4993 = vrot.slane %v4986, %v4992
        %v4994 = vcombine.low %v4977, %v4985
        %v4996 = vunpack.c.l.s4 1934713408
        %v4997 = vunpack.c.0.s8 %v4996
        %v4998 = vlaneseq
        %v4999 = vshrl.u32 %v4998, 7
        %v5000 = vsub.s32 %v4997, %v4999
        %v5001 = vrot.slane %v4994, %v5000
        %v5002 = vcombine.low %v4993, %v5001
        %v5003 = vcombine.high %v4993, %v5001
        %v5004 = vcombine.low %v4826, %v4833
        %v5006 = vunpack.c.l.s4 1983009808
        %v5007 = vunpack.c.0.s8 %v5006
        %v5008 = vlaneseq
        %v5009 = vshrl.u32 %v5008, 7
        %v5010 = vsub.s32 %v5007, %v5009
        %v5011 = vrot.slane %v5004, %v5010
        %v5012 = vcombine.low %v4850, %v4851
        %v5014 = vunpack.c.l.s4 1983009808
        %v5015 = vunpack.c.0.s8 %v5014
        %v5016 = vlaneseq
        %v5017 = vshrl.u32 %v5016, 7
        %v5018 = vsub.s32 %v5015, %v5017
        %v5019 = vrot.slane %v5012, %v5018
        %v5020 = vcombine.low %v4842, %v4849
        %v5022 = vunpack.c.l.s4 1983009808
        %v5023 = vunpack.c.0.s8 %v5022
        %v5024 = vlaneseq
        %v5025 = vshrl.u32 %v5024, 7
        %v5026 = vsub.s32 %v5023, %v5025
        %v5027 = vrot.slane %v5020, %v5026
        %v5028 = vcombine.low %v4852, %v4853
        %v5030 = vunpack.c.l.s4 1983009808
        %v5031 = vunpack.c.0.s8 %v5030
        %v5032 = vlaneseq
        %v5033 = vshrl.u32 %v5032, 7
        %v5034 = vsub.s32 %v5031, %v5033
        %v5035 = vrot.slane %v5028, %v5034
        %v5036 = vcombine.low %v5011, %v5019
        %v5038 = vunpack.c.l.s4 1934713408
        %v5039 = vunpack.c.0.s8 %v5038
        %v5040 = vlaneseq
        %v5041 = vshrl.u32 %v5040, 7
        %v5042 = vsub.s32 %v5039, %v5041
        %v5043 = vrot.slane %v5036, %v5042
        %v5044 = vcombine.low %v5027, %v5035
        %v5046 = vunpack.c.l.s4 1934713408
        %v5047 = vunpack.c.0.s8 %v5046
        %v5048 = vlaneseq
        %v5049 = vshrl.u32 %v5048, 7
        %v5050 = vsub.s32 %v5047, %v5049
        %v5051 = vrot.slane %v5044, %v5050
        %v5052 = vcombine.low %v5043, %v5051
        %v5053 = vcombine.high %v5043, %v5051
        %v5056 = vpack.i.b16 %v4952, %v4902
        %v5057 = vshrl.u32 %v4902, 16
        %v5058 = vshrl.u32 %v4952, 16
        %v5059 = vpack.i.b16 %v5058, %v5057
        %v5062 = vpack.i.b16 %v4953, %v4903
        %v5063 = vshrl.u32 %v4903, 16
        %v5064 = vshrl.u32 %v4953, 16
        %v5065 = vpack.i.b16 %v5064, %v5063
        %v5068 = vpack.i.b16 %v5052, %v5002
        %v5069 = vshrl.u32 %v5002, 16
        %v5070 = vshrl.u32 %v5052, 16
        %v5071 = vpack.i.b16 %v5070, %v5069
        %v5074 = vpack.i.b16 %v5053, %v5003
        %v5075 = vshrl.u32 %v5003, 16
        %v5076 = vshrl.u32 %v5053, 16
        %v5077 = vpack.i.b16 %v5076, %v5075
        %v5078 = vld [vmem:[%s1327] sm:$0xf]
        %v5079 = vld [vmem:[%s1327 + $0x4] sm:$0xf]
        %v5080 = vld [vmem:[%s1327 + $0x8] sm:$0xf]
        %v5081 = vld [vmem:[%s1327 + $0xc] sm:$0xf]
        %v5082 = vld [vmem:[%s1327 + $0x10] sm:$0xf]
        %v5083 = vld [vmem:[%s1327 + $0x14] sm:$0xf]
        %v5084 = vld [vmem:[%s1327 + $0x18] sm:$0xf]
        %v5085 = vld [vmem:[%s1327 + $0x1c] sm:$0xf]
        %v5086 = vld [vmem:[%s1327 + $0x20] sm:$0xf]
        %v5087 = vld [vmem:[%s1327 + $0x24] sm:$0xf]
        %v5088 = vld [vmem:[%s1327 + $0x28] sm:$0xf]
        %v5089 = vld [vmem:[%s1327 + $0x2c] sm:$0xf]
        %v5090 = vld [vmem:[%s1327 + $0x30] sm:$0xf]
        %v5091 = vld [vmem:[%s1327 + $0x34] sm:$0xf]
        %v5092 = vld [vmem:[%s1327 + $0x38] sm:$0xf]
        %v5093 = vld [vmem:[%s1327 + $0x3c] sm:$0xf]
        %v5094 = vld [vmem:[%s1546] sm:$0x1]
        %v5096 = vlaneseq
        %v5097 = vshrl.u32 %v5096, 7
        %v5098 = vsub.s32 0, %v5097
        %v5099 = vrot.slane %v5094, %v5098
        %v5105 = vunpack.c.l.b16 %v1587
        %v5106 = vunpack.c.l.b16 %v1588
        %v5107 = vunpack.c.l.b16 %v1589
        %v5108 = vunpack.c.l.b16 %v1590
        %v5109 = vpack.c.b16 %v5106, %v5105
        %v5110 = vpack.c.b16 %v5108, %v5107
        %v5129 = vunpack.c.l.b16 %v5078
        %v5130 = vunpack.c.l.b16 %v5079
        %v5131 = vunpack.c.l.b16 %v5080
        %v5132 = vunpack.c.l.b16 %v5081
        %v5133 = vunpack.c.l.b16 %v5082
        %v5134 = vunpack.c.l.b16 %v5083
        %v5135 = vunpack.c.l.b16 %v5084
        %v5136 = vunpack.c.l.b16 %v5085
        %v5137 = vunpack.c.l.b16 %v5086
        %v5138 = vunpack.c.l.b16 %v5087
        %v5139 = vunpack.c.l.b16 %v5088
        %v5140 = vunpack.c.l.b16 %v5089
        %v5141 = vunpack.c.l.b16 %v5090
        %v5142 = vunpack.c.l.b16 %v5091
        %v5143 = vunpack.c.l.b16 %v5092
        %v5144 = vunpack.c.l.b16 %v5093
        %v5145 = vpack.c.b16 %v5130, %v5129
        %v5146 = vpack.c.b16 %v5132, %v5131
        %v5147 = vpack.c.b16 %v5134, %v5133
        %v5148 = vpack.c.b16 %v5136, %v5135
        %v5149 = vpack.c.b16 %v5138, %v5137
        %v5150 = vpack.c.b16 %v5140, %v5139
        %v5151 = vpack.c.b16 %v5142, %v5141
        %v5152 = vpack.c.b16 %v5144, %v5143
        %5161 = vmatprep.subr.bf16.mxu0 0
        %5162 = vmatpush1.bf16.msra.mxu0 %v5145
        %5163 = vmatprep.subr.bf16.mxu0 0
        %5164 = vmatpush1.bf16.msra.mxu0 %v5146
        %5165 = vmatprep.subr.bf16.mxu0 0
        %5166 = vmatpush1.bf16.msra.mxu0 %v5147
        %5167 = vmatprep.subr.bf16.mxu0 0
        %5168 = vmatpush1.bf16.msra.mxu0 %v5148
        %5169 = vmatprep.subr.bf16.mxu0 0
        %5170 = vmatpush1.bf16.msra.mxu0 %v5149
        %5171 = vmatprep.subr.bf16.mxu0 0
        %5172 = vmatpush1.bf16.msra.mxu0 %v5150
        %5173 = vmatprep.subr.bf16.mxu0 0
        %5174 = vmatpush1.bf16.msra.mxu0 %v5151
        %5175 = vmatprep.subr.bf16.mxu0 0
        %5176 = vmatpush1.bf16.msra.mxu0 %v5152
        %5177 = vmatprep.subr.bf16.mxu0 0
        %5178 = vmatpush1.bf16.msra.mxu0 0
        %5179 = vmatprep.subr.bf16.mxu0 0
        %5180 = vmatpush1.bf16.msra.mxu0 0
        %5181 = vmatprep.subr.bf16.mxu0 0
        %5182 = vmatpush1.bf16.msra.mxu0 0
        %5183 = vmatprep.subr.bf16.mxu0 0
        %5184 = vmatpush1.bf16.msra.mxu0 0
        %5185 = vmatprep.subr.bf16.mxu0 0
        %5186 = vmatpush1.bf16.msra.mxu0 0
        %5187 = vmatprep.subr.bf16.mxu0 0
        %5188 = vmatpush1.bf16.msra.mxu0 0
        %5189 = vmatprep.subr.bf16.mxu0 0
        %5190 = vmatpush1.bf16.msra.mxu0 0
        %5191 = vmatprep.subr.bf16.mxu0 0
        %5192 = vmatpush1.bf16.msra.mxu0 0
        %5193 = vmatprep.mubr.bf16.mxu0 0
        %5194 = vmatmul.mubr.bf16.gmra.mrb[0].mxu0 %v5109
        %v5195 = vpop.f32.mrb[0].mxu0
        %v5196 = vadd.f32 %v5099, %v5195
        %v5197 = vpop.f32.mrb[0].mxu0
        %v5198 = vpop.f32.mrb[0].mxu0
        %v5199 = vadd.f32 %v5099, %v5198
        %v5200 = vpop.f32.mrb[0].mxu0
        %5201 = vmatprep.mubr.bf16.mxu0 0
        %5202 = vmatmul.mubr.bf16.gmra.mrb[0].mxu0 %v5110
        %v5203 = vpop.f32.mrb[0].mxu0
        %v5204 = vadd.f32 %v5099, %v5203
        %v5205 = vpop.f32.mrb[0].mxu0
        %v5206 = vpop.f32.mrb[0].mxu0
        %v5207 = vadd.f32 %v5099, %v5206
        %v5208 = vpop.f32.mrb[0].mxu0
        %5209 = vdwg.mxu0
        %v5210 = vpack.c.bf16 %v5199, %v5196
        %v5211 = vpack.c.bf16 %v5207, %v5204
        %5214 = vrot.lane.b32.xlu0 %v5210, 96
        %v5215 = vpop.permute.xlu0 %5214
        %5216 = vrot.lane.b32.xlu0 %v5211, 96
        %v5217 = vpop.permute.xlu0 %5216
        %5218 = vrot.lane.b32.xlu0 %v5210, 64
        %v5219 = vpop.permute.xlu0 %5218
        %5220 = vrot.lane.b32.xlu0 %v5211, 64
        %v5221 = vpop.permute.xlu0 %5220
        %5222 = vrot.lane.b32.xlu0 %v5210, 32
        %v5223 = vpop.permute.xlu0 %5222
        %5224 = vrot.lane.b32.xlu0 %v5211, 32
        %v5225 = vpop.permute.xlu0 %5224
        %v5228 = vpack.i.b16 %v5215, %v5210
        %v5230 = vshrl.u32 %v5210, 16
        %v5231 = vshrl.u32 %v5215, 16
        %v5232 = vpack.i.b16 %v5231, %v5230
        %v5236 = vpack.i.b16 %v5223, %v5219
        %v5238 = vshrl.u32 %v5219, 16
        %v5239 = vshrl.u32 %v5223, 16
        %v5240 = vpack.i.b16 %v5239, %v5238
        %v5244 = vpack.i.b16 %v5217, %v5211
        %v5246 = vshrl.u32 %v5211, 16
        %v5247 = vshrl.u32 %v5217, 16
        %v5248 = vpack.i.b16 %v5247, %v5246
        %v5252 = vpack.i.b16 %v5225, %v5221
        %v5254 = vshrl.u32 %v5221, 16
        %v5255 = vshrl.u32 %v5225, 16
        %v5256 = vpack.i.b16 %v5255, %v5254
        %v5258 = vcombine.high %v5228, %v1770
        %v5260 = vunpack.c.l.s4 1983009808
        %v5261 = vunpack.c.0.s8 %v5260
        %v5262 = vlaneseq
        %v5263 = vshrl.u32 %v5262, 7
        %v5264 = vsub.s32 %v5261, %v5263
        %v5265 = vrot.slane %v5228, %v5264
        %v5267 = vunpack.c.l.s4 1983009808
        %v5268 = vunpack.c.0.s8 %v5267
        %v5269 = vlaneseq
        %v5270 = vshrl.u32 %v5269, 7
        %v5271 = vsub.s32 %v5268, %v5270
        %v5272 = vrot.slane %v5258, %v5271
        %v5273 = vcombine.high %v5236, %v1770
        %v5275 = vunpack.c.l.s4 1983009808
        %v5276 = vunpack.c.0.s8 %v5275
        %v5277 = vlaneseq
        %v5278 = vshrl.u32 %v5277, 7
        %v5279 = vsub.s32 %v5276, %v5278
        %v5280 = vrot.slane %v5236, %v5279
        %v5282 = vunpack.c.l.s4 1983009808
        %v5283 = vunpack.c.0.s8 %v5282
        %v5284 = vlaneseq
        %v5285 = vshrl.u32 %v5284, 7
        %v5286 = vsub.s32 %v5283, %v5285
        %v5287 = vrot.slane %v5273, %v5286
        %v5288 = vcombine.low %v5265, %v5280
        %v5289 = vcombine.high %v5265, %v5280
        %v5291 = vunpack.c.l.s4 1934713408
        %v5292 = vunpack.c.0.s8 %v5291
        %v5293 = vlaneseq
        %v5294 = vshrl.u32 %v5293, 7
        %v5295 = vsub.s32 %v5292, %v5294
        %v5296 = vrot.slane %v5288, %v5295
        %v5298 = vunpack.c.l.s4 1934713408
        %v5299 = vunpack.c.0.s8 %v5298
        %v5300 = vlaneseq
        %v5301 = vshrl.u32 %v5300, 7
        %v5302 = vsub.s32 %v5299, %v5301
        %v5303 = vrot.slane %v5289, %v5302
        %v5304 = vcombine.low %v5272, %v5287
        %v5305 = vcombine.high %v5272, %v5287
        %v5307 = vunpack.c.l.s4 1934713408
        %v5308 = vunpack.c.0.s8 %v5307
        %v5309 = vlaneseq
        %v5310 = vshrl.u32 %v5309, 7
        %v5311 = vsub.s32 %v5308, %v5310
        %v5312 = vrot.slane %v5304, %v5311
        %v5314 = vunpack.c.l.s4 1934713408
        %v5315 = vunpack.c.0.s8 %v5314
        %v5316 = vlaneseq
        %v5317 = vshrl.u32 %v5316, 7
        %v5318 = vsub.s32 %v5315, %v5317
        %v5319 = vrot.slane %v5305, %v5318
        %v5320 = vcombine.high %v5296, 0
        %v5321 = vcombine.high %v5303, 0
        %v5322 = vcombine.high %v5312, 0
        %v5323 = vcombine.high %v5319, 0
        %v5324 = vcombine.high %v5232, %v1773
        %v5326 = vunpack.c.l.s4 1983009808
        %v5327 = vunpack.c.0.s8 %v5326
        %v5328 = vlaneseq
        %v5329 = vshrl.u32 %v5328, 7
        %v5330 = vsub.s32 %v5327, %v5329
        %v5331 = vrot.slane %v5232, %v5330
        %v5333 = vunpack.c.l.s4 1983009808
        %v5334 = vunpack.c.0.s8 %v5333
        %v5335 = vlaneseq
        %v5336 = vshrl.u32 %v5335, 7
        %v5337 = vsub.s32 %v5334, %v5336
        %v5338 = vrot.slane %v5324, %v5337
        %v5339 = vcombine.high %v5240, %v1773
        %v5341 = vunpack.c.l.s4 1983009808
        %v5342 = vunpack.c.0.s8 %v5341
        %v5343 = vlaneseq
        %v5344 = vshrl.u32 %v5343, 7
        %v5345 = vsub.s32 %v5342, %v5344
        %v5346 = vrot.slane %v5240, %v5345
        %v5348 = vunpack.c.l.s4 1983009808
        %v5349 = vunpack.c.0.s8 %v5348
        %v5350 = vlaneseq
        %v5351 = vshrl.u32 %v5350, 7
        %v5352 = vsub.s32 %v5349, %v5351
        %v5353 = vrot.slane %v5339, %v5352
        %v5354 = vcombine.low %v5331, %v5346
        %v5355 = vcombine.high %v5331, %v5346
        %v5357 = vunpack.c.l.s4 1934713408
        %v5358 = vunpack.c.0.s8 %v5357
        %v5359 = vlaneseq
        %v5360 = vshrl.u32 %v5359, 7
        %v5361 = vsub.s32 %v5358, %v5360
        %v5362 = vrot.slane %v5354, %v5361
        %v5364 = vunpack.c.l.s4 1934713408
        %v5365 = vunpack.c.0.s8 %v5364
        %v5366 = vlaneseq
        %v5367 = vshrl.u32 %v5366, 7
        %v5368 = vsub.s32 %v5365, %v5367
        %v5369 = vrot.slane %v5355, %v5368
        %v5370 = vcombine.low %v5338, %v5353
        %v5371 = vcombine.high %v5338, %v5353
        %v5373 = vunpack.c.l.s4 1934713408
        %v5374 = vunpack.c.0.s8 %v5373
        %v5375 = vlaneseq
        %v5376 = vshrl.u32 %v5375, 7
        %v5377 = vsub.s32 %v5374, %v5376
        %v5378 = vrot.slane %v5370, %v5377
        %v5380 = vunpack.c.l.s4 1934713408
        %v5381 = vunpack.c.0.s8 %v5380
        %v5382 = vlaneseq
        %v5383 = vshrl.u32 %v5382, 7
        %v5384 = vsub.s32 %v5381, %v5383
        %v5385 = vrot.slane %v5371, %v5384
        %v5386 = vcombine.high %v5362, 0
        %v5387 = vcombine.high %v5369, 0
        %v5388 = vcombine.high %v5378, 0
        %v5389 = vcombine.high %v5385, 0
        %v5390 = vcombine.high %v5244, %v1770
        %v5392 = vunpack.c.l.s4 1983009808
        %v5393 = vunpack.c.0.s8 %v5392
        %v5394 = vlaneseq
        %v5395 = vshrl.u32 %v5394, 7
        %v5396 = vsub.s32 %v5393, %v5395
        %v5397 = vrot.slane %v5244, %v5396
        %v5399 = vunpack.c.l.s4 1983009808
        %v5400 = vunpack.c.0.s8 %v5399
        %v5401 = vlaneseq
        %v5402 = vshrl.u32 %v5401, 7
        %v5403 = vsub.s32 %v5400, %v5402
        %v5404 = vrot.slane %v5390, %v5403
        %v5405 = vcombine.high %v5252, %v1770
        %v5407 = vunpack.c.l.s4 1983009808
        %v5408 = vunpack.c.0.s8 %v5407
        %v5409 = vlaneseq
        %v5410 = vshrl.u32 %v5409, 7
        %v5411 = vsub.s32 %v5408, %v5410
        %v5412 = vrot.slane %v5252, %v5411
        %v5414 = vunpack.c.l.s4 1983009808
        %v5415 = vunpack.c.0.s8 %v5414
        %v5416 = vlaneseq
        %v5417 = vshrl.u32 %v5416, 7
        %v5418 = vsub.s32 %v5415, %v5417
        %v5419 = vrot.slane %v5405, %v5418
        %v5420 = vcombine.low %v5397, %v5412
        %v5421 = vcombine.high %v5397, %v5412
        %v5423 = vunpack.c.l.s4 1934713408
        %v5424 = vunpack.c.0.s8 %v5423
        %v5425 = vlaneseq
        %v5426 = vshrl.u32 %v5425, 7
        %v5427 = vsub.s32 %v5424, %v5426
        %v5428 = vrot.slane %v5420, %v5427
        %v5430 = vunpack.c.l.s4 1934713408
        %v5431 = vunpack.c.0.s8 %v5430
        %v5432 = vlaneseq
        %v5433 = vshrl.u32 %v5432, 7
        %v5434 = vsub.s32 %v5431, %v5433
        %v5435 = vrot.slane %v5421, %v5434
        %v5436 = vcombine.low %v5404, %v5419
        %v5437 = vcombine.high %v5404, %v5419
        %v5439 = vunpack.c.l.s4 1934713408
        %v5440 = vunpack.c.0.s8 %v5439
        %v5441 = vlaneseq
        %v5442 = vshrl.u32 %v5441, 7
        %v5443 = vsub.s32 %v5440, %v5442
        %v5444 = vrot.slane %v5436, %v5443
        %v5446 = vunpack.c.l.s4 1934713408
        %v5447 = vunpack.c.0.s8 %v5446
        %v5448 = vlaneseq
        %v5449 = vshrl.u32 %v5448, 7
        %v5450 = vsub.s32 %v5447, %v5449
        %v5451 = vrot.slane %v5437, %v5450
        %v5452 = vcombine.high %v5428, 0
        %v5453 = vcombine.high %v5435, 0
        %v5454 = vcombine.high %v5444, 0
        %v5455 = vcombine.high %v5451, 0
        %v5456 = vcombine.high %v5248, %v1773
        %v5458 = vunpack.c.l.s4 1983009808
        %v5459 = vunpack.c.0.s8 %v5458
        %v5460 = vlaneseq
        %v5461 = vshrl.u32 %v5460, 7
        %v5462 = vsub.s32 %v5459, %v5461
        %v5463 = vrot.slane %v5248, %v5462
        %v5465 = vunpack.c.l.s4 1983009808
        %v5466 = vunpack.c.0.s8 %v5465
        %v5467 = vlaneseq
        %v5468 = vshrl.u32 %v5467, 7
        %v5469 = vsub.s32 %v5466, %v5468
        %v5470 = vrot.slane %v5456, %v5469
        %v5471 = vcombine.high %v5256, %v1773
        %v5473 = vunpack.c.l.s4 1983009808
        %v5474 = vunpack.c.0.s8 %v5473
        %v5475 = vlaneseq
        %v5476 = vshrl.u32 %v5475, 7
        %v5477 = vsub.s32 %v5474, %v5476
        %v5478 = vrot.slane %v5256, %v5477
        %v5480 = vunpack.c.l.s4 1983009808
        %v5481 = vunpack.c.0.s8 %v5480
        %v5482 = vlaneseq
        %v5483 = vshrl.u32 %v5482, 7
        %v5484 = vsub.s32 %v5481, %v5483
        %v5485 = vrot.slane %v5471, %v5484
        %v5486 = vcombine.low %v5463, %v5478
        %v5487 = vcombine.high %v5463, %v5478
        %v5489 = vunpack.c.l.s4 1934713408
        %v5490 = vunpack.c.0.s8 %v5489
        %v5491 = vlaneseq
        %v5492 = vshrl.u32 %v5491, 7
        %v5493 = vsub.s32 %v5490, %v5492
        %v5494 = vrot.slane %v5486, %v5493
        %v5496 = vunpack.c.l.s4 1934713408
        %v5497 = vunpack.c.0.s8 %v5496
        %v5498 = vlaneseq
        %v5499 = vshrl.u32 %v5498, 7
        %v5500 = vsub.s32 %v5497, %v5499
        %v5501 = vrot.slane %v5487, %v5500
        %v5502 = vcombine.low %v5470, %v5485
        %v5503 = vcombine.high %v5470, %v5485
        %v5505 = vunpack.c.l.s4 1934713408
        %v5506 = vunpack.c.0.s8 %v5505
        %v5507 = vlaneseq
        %v5508 = vshrl.u32 %v5507, 7
        %v5509 = vsub.s32 %v5506, %v5508
        %v5510 = vrot.slane %v5502, %v5509
        %v5512 = vunpack.c.l.s4 1934713408
        %v5513 = vunpack.c.0.s8 %v5512
        %v5514 = vlaneseq
        %v5515 = vshrl.u32 %v5514, 7
        %v5516 = vsub.s32 %v5513, %v5515
        %v5517 = vrot.slane %v5503, %v5516
        %v5518 = vcombine.high %v5494, 0
        %v5519 = vcombine.high %v5501, 0
        %v5520 = vcombine.high %v5510, 0
        %v5521 = vcombine.high %v5517, 0
        %v5522 = vcombine.low %v5296, %v5303
        %v5524 = vunpack.c.l.s4 1983009808
        %v5525 = vunpack.c.0.s8 %v5524
        %v5526 = vlaneseq
        %v5527 = vshrl.u32 %v5526, 7
        %v5528 = vsub.s32 %v5525, %v5527
        %v5529 = vrot.slane %v5522, %v5528
        %v5530 = vcombine.low %v5320, %v5321
        %v5532 = vunpack.c.l.s4 1983009808
        %v5533 = vunpack.c.0.s8 %v5532
        %v5534 = vlaneseq
        %v5535 = vshrl.u32 %v5534, 7
        %v5536 = vsub.s32 %v5533, %v5535
        %v5537 = vrot.slane %v5530, %v5536
        %v5538 = vcombine.low %v5312, %v5319
        %v5540 = vunpack.c.l.s4 1983009808
        %v5541 = vunpack.c.0.s8 %v5540
        %v5542 = vlaneseq
        %v5543 = vshrl.u32 %v5542, 7
        %v5544 = vsub.s32 %v5541, %v5543
        %v5545 = vrot.slane %v5538, %v5544
        %v5546 = vcombine.low %v5322, %v5323
        %v5548 = vunpack.c.l.s4 1983009808
        %v5549 = vunpack.c.0.s8 %v5548
        %v5550 = vlaneseq
        %v5551 = vshrl.u32 %v5550, 7
        %v5552 = vsub.s32 %v5549, %v5551
        %v5553 = vrot.slane %v5546, %v5552
        %v5554 = vcombine.low %v5529, %v5537
        %v5556 = vunpack.c.l.s4 1934713408
        %v5557 = vunpack.c.0.s8 %v5556
        %v5558 = vlaneseq
        %v5559 = vshrl.u32 %v5558, 7
        %v5560 = vsub.s32 %v5557, %v5559
        %v5561 = vrot.slane %v5554, %v5560
        %v5562 = vcombine.low %v5545, %v5553
        %v5564 = vunpack.c.l.s4 1934713408
        %v5565 = vunpack.c.0.s8 %v5564
        %v5566 = vlaneseq
        %v5567 = vshrl.u32 %v5566, 7
        %v5568 = vsub.s32 %v5565, %v5567
        %v5569 = vrot.slane %v5562, %v5568
        %v5570 = vcombine.low %v5561, %v5569
        %v5571 = vcombine.high %v5561, %v5569
        %v5572 = vcombine.low %v5362, %v5369
        %v5574 = vunpack.c.l.s4 1983009808
        %v5575 = vunpack.c.0.s8 %v5574
        %v5576 = vlaneseq
        %v5577 = vshrl.u32 %v5576, 7
        %v5578 = vsub.s32 %v5575, %v5577
        %v5579 = vrot.slane %v5572, %v5578
        %v5580 = vcombine.low %v5386, %v5387
        %v5582 = vunpack.c.l.s4 1983009808
        %v5583 = vunpack.c.0.s8 %v5582
        %v5584 = vlaneseq
        %v5585 = vshrl.u32 %v5584, 7
        %v5586 = vsub.s32 %v5583, %v5585
        %v5587 = vrot.slane %v5580, %v5586
        %v5588 = vcombine.low %v5378, %v5385
        %v5590 = vunpack.c.l.s4 1983009808
        %v5591 = vunpack.c.0.s8 %v5590
        %v5592 = vlaneseq
        %v5593 = vshrl.u32 %v5592, 7
        %v5594 = vsub.s32 %v5591, %v5593
        %v5595 = vrot.slane %v5588, %v5594
        %v5596 = vcombine.low %v5388, %v5389
        %v5598 = vunpack.c.l.s4 1983009808
        %v5599 = vunpack.c.0.s8 %v5598
        %v5600 = vlaneseq
        %v5601 = vshrl.u32 %v5600, 7
        %v5602 = vsub.s32 %v5599, %v5601
        %v5603 = vrot.slane %v5596, %v5602
        %v5604 = vcombine.low %v5579, %v5587
        %v5606 = vunpack.c.l.s4 1934713408
        %v5607 = vunpack.c.0.s8 %v5606
        %v5608 = vlaneseq
        %v5609 = vshrl.u32 %v5608, 7
        %v5610 = vsub.s32 %v5607, %v5609
        %v5611 = vrot.slane %v5604, %v5610
        %v5612 = vcombine.low %v5595, %v5603
        %v5614 = vunpack.c.l.s4 1934713408
        %v5615 = vunpack.c.0.s8 %v5614
        %v5616 = vlaneseq
        %v5617 = vshrl.u32 %v5616, 7
        %v5618 = vsub.s32 %v5615, %v5617
        %v5619 = vrot.slane %v5612, %v5618
        %v5620 = vcombine.low %v5611, %v5619
        %v5621 = vcombine.high %v5611, %v5619
        %v5622 = vcombine.low %v5428, %v5435
        %v5624 = vunpack.c.l.s4 1983009808
        %v5625 = vunpack.c.0.s8 %v5624
        %v5626 = vlaneseq
        %v5627 = vshrl.u32 %v5626, 7
        %v5628 = vsub.s32 %v5625, %v5627
        %v5629 = vrot.slane %v5622, %v5628
        %v5630 = vcombine.low %v5452, %v5453
        %v5632 = vunpack.c.l.s4 1983009808
        %v5633 = vunpack.c.0.s8 %v5632
        %v5634 = vlaneseq
        %v5635 = vshrl.u32 %v5634, 7
        %v5636 = vsub.s32 %v5633, %v5635
        %v5637 = vrot.slane %v5630, %v5636
        %v5638 = vcombine.low %v5444, %v5451
        %v5640 = vunpack.c.l.s4 1983009808
        %v5641 = vunpack.c.0.s8 %v5640
        %v5642 = vlaneseq
        %v5643 = vshrl.u32 %v5642, 7
        %v5644 = vsub.s32 %v5641, %v5643
        %v5645 = vrot.slane %v5638, %v5644
        %v5646 = vcombine.low %v5454, %v5455
        %v5648 = vunpack.c.l.s4 1983009808
        %v5649 = vunpack.c.0.s8 %v5648
        %v5650 = vlaneseq
        %v5651 = vshrl.u32 %v5650, 7
        %v5652 = vsub.s32 %v5649, %v5651
        %v5653 = vrot.slane %v5646, %v5652
        %v5654 = vcombine.low %v5629, %v5637
        %v5656 = vunpack.c.l.s4 1934713408
        %v5657 = vunpack.c.0.s8 %v5656
        %v5658 = vlaneseq
        %v5659 = vshrl.u32 %v5658, 7
        %v5660 = vsub.s32 %v5657, %v5659
        %v5661 = vrot.slane %v5654, %v5660
        %v5662 = vcombine.low %v5645, %v5653
        %v5664 = vunpack.c.l.s4 1934713408
        %v5665 = vunpack.c.0.s8 %v5664
        %v5666 = vlaneseq
        %v5667 = vshrl.u32 %v5666, 7
        %v5668 = vsub.s32 %v5665, %v5667
        %v5669 = vrot.slane %v5662, %v5668
        %v5670 = vcombine.low %v5661, %v5669
        %v5671 = vcombine.high %v5661, %v5669
        %v5672 = vcombine.low %v5494, %v5501
        %v5674 = vunpack.c.l.s4 1983009808
        %v5675 = vunpack.c.0.s8 %v5674
        %v5676 = vlaneseq
        %v5677 = vshrl.u32 %v5676, 7
        %v5678 = vsub.s32 %v5675, %v5677
        %v5679 = vrot.slane %v5672, %v5678
        %v5680 = vcombine.low %v5518, %v5519
        %v5682 = vunpack.c.l.s4 1983009808
        %v5683 = vunpack.c.0.s8 %v5682
        %v5684 = vlaneseq
        %v5685 = vshrl.u32 %v5684, 7
        %v5686 = vsub.s32 %v5683, %v5685
        %v5687 = vrot.slane %v5680, %v5686
        %v5688 = vcombine.low %v5510, %v5517
        %v5690 = vunpack.c.l.s4 1983009808
        %v5691 = vunpack.c.0.s8 %v5690
        %v5692 = vlaneseq
        %v5693 = vshrl.u32 %v5692, 7
        %v5694 = vsub.s32 %v5691, %v5693
        %v5695 = vrot.slane %v5688, %v5694
        %v5696 = vcombine.low %v5520, %v5521
        %v5698 = vunpack.c.l.s4 1983009808
        %v5699 = vunpack.c.0.s8 %v5698
        %v5700 = vlaneseq
        %v5701 = vshrl.u32 %v5700, 7
        %v5702 = vsub.s32 %v5699, %v5701
        %v5703 = vrot.slane %v5696, %v5702
        %v5704 = vcombine.low %v5679, %v5687
        %v5706 = vunpack.c.l.s4 1934713408
        %v5707 = vunpack.c.0.s8 %v5706
        %v5708 = vlaneseq
        %v5709 = vshrl.u32 %v5708, 7
        %v5710 = vsub.s32 %v5707, %v5709
        %v5711 = vrot.slane %v5704, %v5710
        %v5712 = vcombine.low %v5695, %v5703
        %v5714 = vunpack.c.l.s4 1934713408
        %v5715 = vunpack.c.0.s8 %v5714
        %v5716 = vlaneseq
        %v5717 = vshrl.u32 %v5716, 7
        %v5718 = vsub.s32 %v5715, %v5717
        %v5719 = vrot.slane %v5712, %v5718
        %v5720 = vcombine.low %v5711, %v5719
        %v5721 = vcombine.high %v5711, %v5719
        %v5724 = vpack.i.b16 %v5620, %v5570
        %v5726 = vshrl.u32 %v5570, 16
        %v5727 = vshrl.u32 %v5620, 16
        %v5728 = vpack.i.b16 %v5727, %v5726
        %v5732 = vpack.i.b16 %v5621, %v5571
        %v5734 = vshrl.u32 %v5571, 16
        %v5735 = vshrl.u32 %v5621, 16
        %v5736 = vpack.i.b16 %v5735, %v5734
        %v5740 = vpack.i.b16 %v5720, %v5670
        %v5742 = vshrl.u32 %v5670, 16
        %v5743 = vshrl.u32 %v5720, 16
        %v5744 = vpack.i.b16 %v5743, %v5742
        %v5748 = vpack.i.b16 %v5721, %v5671
        %v5750 = vshrl.u32 %v5671, 16
        %v5751 = vshrl.u32 %v5721, 16
        %v5752 = vpack.i.b16 %v5751, %v5750
        %v5755 = vsel %vm2716, %v4402, 0
        %v5758 = vsel %vm2716, %v5056, 0
        %5760 = vmatprep.subr.bf16.mxu0 0
        %5761 = vmatpush1.bf16.xpose.msra.mxu0 %v5758
        %5762 = vmatprep.subr.bf16.mxu0 0
        %5763 = vmatpush1.bf16.xpose.msra.mxu0 0
        %5764 = vmatprep.subr.bf16.mxu0 0
        %5765 = vmatpush1.bf16.xpose.msra.mxu0 0
        %5766 = vmatprep.subr.bf16.mxu0 0
        %5767 = vmatpush1.bf16.xpose.msra.mxu0 0
        %5768 = vmatprep.subr.bf16.mxu0 0
        %5769 = vmatpush1.bf16.xpose.msra.mxu0 0
        %5770 = vmatprep.subr.bf16.mxu0 0
        %5771 = vmatpush1.bf16.xpose.msra.mxu0 0
        %5772 = vmatprep.subr.bf16.mxu0 0
        %5773 = vmatpush1.bf16.xpose.msra.mxu0 0
        %5774 = vmatprep.subr.bf16.mxu0 0
        %5775 = vmatpush1.bf16.xpose.msra.mxu0 0
        %5776 = vmatprep.subr.bf16.mxu0 0
        %5777 = vmatpush1.bf16.xpose.msra.mxu0 0
        %5778 = vmatprep.subr.bf16.mxu0 0
        %5779 = vmatpush1.bf16.xpose.msra.mxu0 0
        %5780 = vmatprep.subr.bf16.mxu0 0
        %5781 = vmatpush1.bf16.xpose.msra.mxu0 0
        %5782 = vmatprep.subr.bf16.mxu0 0
        %5783 = vmatpush1.bf16.xpose.msra.mxu0 0
        %5784 = vmatprep.subr.bf16.mxu0 0
        %5785 = vmatpush1.bf16.xpose.msra.mxu0 0
        %5786 = vmatprep.subr.bf16.mxu0 0
        %5787 = vmatpush1.bf16.xpose.msra.mxu0 0
        %5788 = vmatprep.subr.bf16.mxu0 0
        %5789 = vmatpush1.bf16.xpose.msra.mxu0 0
        %5790 = vmatprep.subr.bf16.mxu0 0
        %5791 = vmatpush1.bf16.xpose.msra.mxu0 0
        %5792 = vmatprep.mubr.bf16.mxu0 0
        %5793 = vmatmul.mubr.bf16.gmra.mrb[0].mxu0 %v5755
        %v5794 = vpop.f32.mrb[0].mxu0
        %v5795 = vadd.f32 0.0, %v5794
        %v5796 = vpop.f32.mrb[0].mxu0
        %v5797 = vpop.f32.mrb[0].mxu0
        %v5798 = vpop.f32.mrb[0].mxu0
        %5799 = vdwg.mxu0
        %v5801 = vsel %vm2716, %v4403, 0
        %v5804 = vsel %vm2716, %v5068, 0
        %5806 = vmatprep.subr.bf16.mxu0 0
        %5807 = vmatpush1.bf16.xpose.msra.mxu0 %v5804
        %5808 = vmatprep.subr.bf16.mxu0 0
        %5809 = vmatpush1.bf16.xpose.msra.mxu0 0
        %5810 = vmatprep.subr.bf16.mxu0 0
        %5811 = vmatpush1.bf16.xpose.msra.mxu0 0
        %5812 = vmatprep.subr.bf16.mxu0 0
        %5813 = vmatpush1.bf16.xpose.msra.mxu0 0
        %5814 = vmatprep.subr.bf16.mxu0 0
        %5815 = vmatpush1.bf16.xpose.msra.mxu0 0
        %5816 = vmatprep.subr.bf16.mxu0 0
        %5817 = vmatpush1.bf16.xpose.msra.mxu0 0
        %5818 = vmatprep.subr.bf16.mxu0 0
        %5819 = vmatpush1.bf16.xpose.msra.mxu0 0
        %5820 = vmatprep.subr.bf16.mxu0 0
        %5821 = vmatpush1.bf16.xpose.msra.mxu0 0
        %5822 = vmatprep.subr.bf16.mxu0 0
        %5823 = vmatpush1.bf16.xpose.msra.mxu0 0
        %5824 = vmatprep.subr.bf16.mxu0 0
        %5825 = vmatpush1.bf16.xpose.msra.mxu0 0
        %5826 = vmatprep.subr.bf16.mxu0 0
        %5827 = vmatpush1.bf16.xpose.msra.mxu0 0
        %5828 = vmatprep.subr.bf16.mxu0 0
        %5829 = vmatpush1.bf16.xpose.msra.mxu0 0
        %5830 = vmatprep.subr.bf16.mxu0 0
        %5831 = vmatpush1.bf16.xpose.msra.mxu0 0
        %5832 = vmatprep.subr.bf16.mxu0 0
        %5833 = vmatpush1.bf16.xpose.msra.mxu0 0
        %5834 = vmatprep.subr.bf16.mxu0 0
        %5835 = vmatpush1.bf16.xpose.msra.mxu0 0
        %5836 = vmatprep.subr.bf16.mxu0 0
        %5837 = vmatpush1.bf16.xpose.msra.mxu0 0
        %5838 = vmatprep.mubr.bf16.mxu0 0
        %5839 = vmatmul.mubr.bf16.gmra.mrb[0].mxu0 %v5801
        %v5840 = vpop.f32.mrb[0].mxu0
        %v5841 = vadd.f32 0.0, %v5840
        %v5842 = vpop.f32.mrb[0].mxu0
        %v5843 = vpop.f32.mrb[0].mxu0
        %v5844 = vpop.f32.mrb[0].mxu0
        %5845 = vdwg.mxu0
        %v5847 = vsel %vm2716, %v4404, 0
        %v5850 = vsel %vm2716, %v5059, 0
        %5852 = vmatprep.subr.bf16.mxu0 0
        %5853 = vmatpush1.bf16.xpose.msra.mxu0 %v5850
        %5854 = vmatprep.subr.bf16.mxu0 0
        %5855 = vmatpush1.bf16.xpose.msra.mxu0 0
        %5856 = vmatprep.subr.bf16.mxu0 0
        %5857 = vmatpush1.bf16.xpose.msra.mxu0 0
        %5858 = vmatprep.subr.bf16.mxu0 0
        %5859 = vmatpush1.bf16.xpose.msra.mxu0 0
        %5860 = vmatprep.subr.bf16.mxu0 0
        %5861 = vmatpush1.bf16.xpose.msra.mxu0 0
        %5862 = vmatprep.subr.bf16.mxu0 0
        %5863 = vmatpush1.bf16.xpose.msra.mxu0 0
        %5864 = vmatprep.subr.bf16.mxu0 0
        %5865 = vmatpush1.bf16.xpose.msra.mxu0 0
        %5866 = vmatprep.subr.bf16.mxu0 0
        %5867 = vmatpush1.bf16.xpose.msra.mxu0 0
        %5868 = vmatprep.subr.bf16.mxu0 0
        %5869 = vmatpush1.bf16.xpose.msra.mxu0 0
        %5870 = vmatprep.subr.bf16.mxu0 0
        %5871 = vmatpush1.bf16.xpose.msra.mxu0 0
        %5872 = vmatprep.subr.bf16.mxu0 0
        %5873 = vmatpush1.bf16.xpose.msra.mxu0 0
        %5874 = vmatprep.subr.bf16.mxu0 0
        %5875 = vmatpush1.bf16.xpose.msra.mxu0 0
        %5876 = vmatprep.subr.bf16.mxu0 0
        %5877 = vmatpush1.bf16.xpose.msra.mxu0 0
        %5878 = vmatprep.subr.bf16.mxu0 0
        %5879 = vmatpush1.bf16.xpose.msra.mxu0 0
        %5880 = vmatprep.subr.bf16.mxu0 0
        %5881 = vmatpush1.bf16.xpose.msra.mxu0 0
        %5882 = vmatprep.subr.bf16.mxu0 0
        %5883 = vmatpush1.bf16.xpose.msra.mxu0 0
        %5884 = vmatprep.mubr.bf16.mxu0 0
        %5885 = vmatmul.mubr.bf16.gmra.mrb[0].mxu0 %v5847
        %v5886 = vpop.f32.mrb[0].mxu0
        %v5887 = vadd.f32 0.0, %v5886
        %v5888 = vpop.f32.mrb[0].mxu0
        %v5889 = vpop.f32.mrb[0].mxu0
        %v5890 = vpop.f32.mrb[0].mxu0
        %5891 = vdwg.mxu0
        %v5893 = vsel %vm2716, %v4405, 0
        %v5896 = vsel %vm2716, %v5071, 0
        %5898 = vmatprep.subr.bf16.mxu0 0
        %5899 = vmatpush1.bf16.xpose.msra.mxu0 %v5896
        %5900 = vmatprep.subr.bf16.mxu0 0
        %5901 = vmatpush1.bf16.xpose.msra.mxu0 0
        %5902 = vmatprep.subr.bf16.mxu0 0
        %5903 = vmatpush1.bf16.xpose.msra.mxu0 0
        %5904 = vmatprep.subr.bf16.mxu0 0
        %5905 = vmatpush1.bf16.xpose.msra.mxu0 0
        %5906 = vmatprep.subr.bf16.mxu0 0
        %5907 = vmatpush1.bf16.xpose.msra.mxu0 0
        %5908 = vmatprep.subr.bf16.mxu0 0
        %5909 = vmatpush1.bf16.xpose.msra.mxu0 0
        %5910 = vmatprep.subr.bf16.mxu0 0
        %5911 = vmatpush1.bf16.xpose.msra.mxu0 0
        %5912 = vmatprep.subr.bf16.mxu0 0
        %5913 = vmatpush1.bf16.xpose.msra.mxu0 0
        %5914 = vmatprep.subr.bf16.mxu0 0
        %5915 = vmatpush1.bf16.xpose.msra.mxu0 0
        %5916 = vmatprep.subr.bf16.mxu0 0
        %5917 = vmatpush1.bf16.xpose.msra.mxu0 0
        %5918 = vmatprep.subr.bf16.mxu0 0
        %5919 = vmatpush1.bf16.xpose.msra.mxu0 0
        %5920 = vmatprep.subr.bf16.mxu0 0
        %5921 = vmatpush1.bf16.xpose.msra.mxu0 0
        %5922 = vmatprep.subr.bf16.mxu0 0
        %5923 = vmatpush1.bf16.xpose.msra.mxu0 0
        %5924 = vmatprep.subr.bf16.mxu0 0
        %5925 = vmatpush1.bf16.xpose.msra.mxu0 0
        %5926 = vmatprep.subr.bf16.mxu0 0
        %5927 = vmatpush1.bf16.xpose.msra.mxu0 0
        %5928 = vmatprep.subr.bf16.mxu0 0
        %5929 = vmatpush1.bf16.xpose.msra.mxu0 0
        %5930 = vmatprep.mubr.bf16.mxu0 0
        %5931 = vmatmul.mubr.bf16.gmra.mrb[0].mxu0 %v5893
        %v5932 = vpop.f32.mrb[0].mxu0
        %v5933 = vadd.f32 0.0, %v5932
        %v5934 = vpop.f32.mrb[0].mxu0
        %v5935 = vpop.f32.mrb[0].mxu0
        %v5936 = vpop.f32.mrb[0].mxu0
        %5937 = vdwg.mxu0
        %v5939 = vsel %vm2716, %v4406, 0
        %v5942 = vsel %vm2716, %v5062, 0
        %5944 = vmatprep.subr.bf16.mxu0 0
        %5945 = vmatpush1.bf16.xpose.msra.mxu0 %v5942
        %5946 = vmatprep.subr.bf16.mxu0 0
        %5947 = vmatpush1.bf16.xpose.msra.mxu0 0
        %5948 = vmatprep.subr.bf16.mxu0 0
        %5949 = vmatpush1.bf16.xpose.msra.mxu0 0
        %5950 = vmatprep.subr.bf16.mxu0 0
        %5951 = vmatpush1.bf16.xpose.msra.mxu0 0
        %5952 = vmatprep.subr.bf16.mxu0 0
        %5953 = vmatpush1.bf16.xpose.msra.mxu0 0
        %5954 = vmatprep.subr.bf16.mxu0 0
        %5955 = vmatpush1.bf16.xpose.msra.mxu0 0
        %5956 = vmatprep.subr.bf16.mxu0 0
        %5957 = vmatpush1.bf16.xpose.msra.mxu0 0
        %5958 = vmatprep.subr.bf16.mxu0 0
        %5959 = vmatpush1.bf16.xpose.msra.mxu0 0
        %5960 = vmatprep.subr.bf16.mxu0 0
        %5961 = vmatpush1.bf16.xpose.msra.mxu0 0
        %5962 = vmatprep.subr.bf16.mxu0 0
        %5963 = vmatpush1.bf16.xpose.msra.mxu0 0
        %5964 = vmatprep.subr.bf16.mxu0 0
        %5965 = vmatpush1.bf16.xpose.msra.mxu0 0
        %5966 = vmatprep.subr.bf16.mxu0 0
        %5967 = vmatpush1.bf16.xpose.msra.mxu0 0
        %5968 = vmatprep.subr.bf16.mxu0 0
        %5969 = vmatpush1.bf16.xpose.msra.mxu0 0
        %5970 = vmatprep.subr.bf16.mxu0 0
        %5971 = vmatpush1.bf16.xpose.msra.mxu0 0
        %5972 = vmatprep.subr.bf16.mxu0 0
        %5973 = vmatpush1.bf16.xpose.msra.mxu0 0
        %5974 = vmatprep.subr.bf16.mxu0 0
        %5975 = vmatpush1.bf16.xpose.msra.mxu0 0
        %5976 = vmatprep.mubr.bf16.mxu0 0
        %5977 = vmatmul.mubr.bf16.gmra.mrb[0].mxu0 %v5939
        %v5978 = vpop.f32.mrb[0].mxu0
        %v5979 = vadd.f32 0.0, %v5978
        %v5980 = vpop.f32.mrb[0].mxu0
        %v5981 = vpop.f32.mrb[0].mxu0
        %v5982 = vpop.f32.mrb[0].mxu0
        %5983 = vdwg.mxu0
        %v5985 = vsel %vm2716, %v4407, 0
        %v5988 = vsel %vm2716, %v5074, 0
        %5990 = vmatprep.subr.bf16.mxu0 0
        %5991 = vmatpush1.bf16.xpose.msra.mxu0 %v5988
        %5992 = vmatprep.subr.bf16.mxu0 0
        %5993 = vmatpush1.bf16.xpose.msra.mxu0 0
        %5994 = vmatprep.subr.bf16.mxu0 0
        %5995 = vmatpush1.bf16.xpose.msra.mxu0 0
        %5996 = vmatprep.subr.bf16.mxu0 0
        %5997 = vmatpush1.bf16.xpose.msra.mxu0 0
        %5998 = vmatprep.subr.bf16.mxu0 0
        %5999 = vmatpush1.bf16.xpose.msra.mxu0 0
        %6000 = vmatprep.subr.bf16.mxu0 0
        %6001 = vmatpush1.bf16.xpose.msra.mxu0 0
        %6002 = vmatprep.subr.bf16.mxu0 0
        %6003 = vmatpush1.bf16.xpose.msra.mxu0 0
        %6004 = vmatprep.subr.bf16.mxu0 0
        %6005 = vmatpush1.bf16.xpose.msra.mxu0 0
        %6006 = vmatprep.subr.bf16.mxu0 0
        %6007 = vmatpush1.bf16.xpose.msra.mxu0 0
        %6008 = vmatprep.subr.bf16.mxu0 0
        %6009 = vmatpush1.bf16.xpose.msra.mxu0 0
        %6010 = vmatprep.subr.bf16.mxu0 0
        %6011 = vmatpush1.bf16.xpose.msra.mxu0 0
        %6012 = vmatprep.subr.bf16.mxu0 0
        %6013 = vmatpush1.bf16.xpose.msra.mxu0 0
        %6014 = vmatprep.subr.bf16.mxu0 0
        %6015 = vmatpush1.bf16.xpose.msra.mxu0 0
        %6016 = vmatprep.subr.bf16.mxu0 0
        %6017 = vmatpush1.bf16.xpose.msra.mxu0 0
        %6018 = vmatprep.subr.bf16.mxu0 0
        %6019 = vmatpush1.bf16.xpose.msra.mxu0 0
        %6020 = vmatprep.subr.bf16.mxu0 0
        %6021 = vmatpush1.bf16.xpose.msra.mxu0 0
        %6022 = vmatprep.mubr.bf16.mxu0 0
        %6023 = vmatmul.mubr.bf16.gmra.mrb[0].mxu0 %v5985
        %v6024 = vpop.f32.mrb[0].mxu0
        %v6025 = vadd.f32 0.0, %v6024
        %v6026 = vpop.f32.mrb[0].mxu0
        %v6027 = vpop.f32.mrb[0].mxu0
        %v6028 = vpop.f32.mrb[0].mxu0
        %6029 = vdwg.mxu0
        %v6031 = vsel %vm2716, %v4408, 0
        %v6034 = vsel %vm2716, %v5065, 0
        %6036 = vmatprep.subr.bf16.mxu0 0
        %6037 = vmatpush1.bf16.xpose.msra.mxu0 %v6034
        %6038 = vmatprep.subr.bf16.mxu0 0
        %6039 = vmatpush1.bf16.xpose.msra.mxu0 0
        %6040 = vmatprep.subr.bf16.mxu0 0
        %6041 = vmatpush1.bf16.xpose.msra.mxu0 0
        %6042 = vmatprep.subr.bf16.mxu0 0
        %6043 = vmatpush1.bf16.xpose.msra.mxu0 0
        %6044 = vmatprep.subr.bf16.mxu0 0
        %6045 = vmatpush1.bf16.xpose.msra.mxu0 0
        %6046 = vmatprep.subr.bf16.mxu0 0
        %6047 = vmatpush1.bf16.xpose.msra.mxu0 0
        %6048 = vmatprep.subr.bf16.mxu0 0
        %6049 = vmatpush1.bf16.xpose.msra.mxu0 0
        %6050 = vmatprep.subr.bf16.mxu0 0
        %6051 = vmatpush1.bf16.xpose.msra.mxu0 0
        %6052 = vmatprep.subr.bf16.mxu0 0
        %6053 = vmatpush1.bf16.xpose.msra.mxu0 0
        %6054 = vmatprep.subr.bf16.mxu0 0
        %6055 = vmatpush1.bf16.xpose.msra.mxu0 0
        %6056 = vmatprep.subr.bf16.mxu0 0
        %6057 = vmatpush1.bf16.xpose.msra.mxu0 0
        %6058 = vmatprep.subr.bf16.mxu0 0
        %6059 = vmatpush1.bf16.xpose.msra.mxu0 0
        %6060 = vmatprep.subr.bf16.mxu0 0
        %6061 = vmatpush1.bf16.xpose.msra.mxu0 0
        %6062 = vmatprep.subr.bf16.mxu0 0
        %6063 = vmatpush1.bf16.xpose.msra.mxu0 0
        %6064 = vmatprep.subr.bf16.mxu0 0
        %6065 = vmatpush1.bf16.xpose.msra.mxu0 0
        %6066 = vmatprep.subr.bf16.mxu0 0
        %6067 = vmatpush1.bf16.xpose.msra.mxu0 0
        %6068 = vmatprep.mubr.bf16.mxu0 0
        %6069 = vmatmul.mubr.bf16.gmra.mrb[0].mxu0 %v6031
        %v6070 = vpop.f32.mrb[0].mxu0
        %v6071 = vadd.f32 0.0, %v6070
        %v6072 = vpop.f32.mrb[0].mxu0
        %v6073 = vpop.f32.mrb[0].mxu0
        %v6074 = vpop.f32.mrb[0].mxu0
        %6075 = vdwg.mxu0
        %v6077 = vsel %vm2716, %v4409, 0
        %v6080 = vsel %vm2716, %v5077, 0
        %6082 = vmatprep.subr.bf16.mxu0 0
        %6083 = vmatpush1.bf16.xpose.msra.mxu0 %v6080
        %6084 = vmatprep.subr.bf16.mxu0 0
        %6085 = vmatpush1.bf16.xpose.msra.mxu0 0
        %6086 = vmatprep.subr.bf16.mxu0 0
        %6087 = vmatpush1.bf16.xpose.msra.mxu0 0
        %6088 = vmatprep.subr.bf16.mxu0 0
        %6089 = vmatpush1.bf16.xpose.msra.mxu0 0
        %6090 = vmatprep.subr.bf16.mxu0 0
        %6091 = vmatpush1.bf16.xpose.msra.mxu0 0
        %6092 = vmatprep.subr.bf16.mxu0 0
        %6093 = vmatpush1.bf16.xpose.msra.mxu0 0
        %6094 = vmatprep.subr.bf16.mxu0 0
        %6095 = vmatpush1.bf16.xpose.msra.mxu0 0
        %6096 = vmatprep.subr.bf16.mxu0 0
        %6097 = vmatpush1.bf16.xpose.msra.mxu0 0
        %6098 = vmatprep.subr.bf16.mxu0 0
        %6099 = vmatpush1.bf16.xpose.msra.mxu0 0
        %6100 = vmatprep.subr.bf16.mxu0 0
        %6101 = vmatpush1.bf16.xpose.msra.mxu0 0
        %6102 = vmatprep.subr.bf16.mxu0 0
        %6103 = vmatpush1.bf16.xpose.msra.mxu0 0
        %6104 = vmatprep.subr.bf16.mxu0 0
        %6105 = vmatpush1.bf16.xpose.msra.mxu0 0
        %6106 = vmatprep.subr.bf16.mxu0 0
        %6107 = vmatpush1.bf16.xpose.msra.mxu0 0
        %6108 = vmatprep.subr.bf16.mxu0 0
        %6109 = vmatpush1.bf16.xpose.msra.mxu0 0
        %6110 = vmatprep.subr.bf16.mxu0 0
        %6111 = vmatpush1.bf16.xpose.msra.mxu0 0
        %6112 = vmatprep.subr.bf16.mxu0 0
        %6113 = vmatpush1.bf16.xpose.msra.mxu0 0
        %6114 = vmatprep.mubr.bf16.mxu0 0
        %6115 = vmatmul.mubr.bf16.gmra.mrb[0].mxu0 %v6077
        %v6116 = vpop.f32.mrb[0].mxu0
        %v6117 = vadd.f32 0.0, %v6116
        %v6118 = vpop.f32.mrb[0].mxu0
        %v6119 = vpop.f32.mrb[0].mxu0
        %v6120 = vpop.f32.mrb[0].mxu0
        %6121 = vdwg.mxu0
        %vm6122 = vcmask 130048
        %v6123 = vsel %vm6122, %v5795, -inf
        %6124 = vmax.xlane.f32.xlu0 %v6123
        %v6125 = vpop.xlane.xlu0 %6124
        %v6126 = vsel %vm6122, %v5841, -inf
        %6127 = vmax.xlane.f32.xlu0 %v6126
        %v6128 = vpop.xlane.xlu0 %6127
        %v6129 = vsel %vm6122, %v5887, -inf
        %6130 = vmax.xlane.f32.xlu0 %v6129
        %v6131 = vpop.xlane.xlu0 %6130
        %v6132 = vsel %vm6122, %v5933, -inf
        %6133 = vmax.xlane.f32.xlu0 %v6132
        %v6134 = vpop.xlane.xlu0 %6133
        %v6135 = vsel %vm6122, %v5979, -inf
        %6136 = vmax.xlane.f32.xlu0 %v6135
        %v6137 = vpop.xlane.xlu0 %6136
        %v6138 = vsel %vm6122, %v6025, -inf
        %6139 = vmax.xlane.f32.xlu0 %v6138
        %v6140 = vpop.xlane.xlu0 %6139
        %v6141 = vsel %vm6122, %v6071, -inf
        %6142 = vmax.xlane.f32.xlu0 %v6141
        %v6143 = vpop.xlane.xlu0 %6142
        %v6144 = vsel %vm6122, %v6117, -inf
        %6145 = vmax.xlane.f32.xlu0 %v6144
        %v6146 = vpop.xlane.xlu0 %6145
        %v6147 = vsub.f32 %v5795, %v6125
        %v6148 = vsub.f32 %v5841, %v6128
        %v6149 = vsub.f32 %v5887, %v6131
        %v6150 = vsub.f32 %v5933, %v6134
        %v6151 = vsub.f32 %v5979, %v6137
        %v6152 = vsub.f32 %v6025, %v6140
        %v6153 = vsub.f32 %v6071, %v6143
        %v6154 = vsub.f32 %v6117, %v6146
        %v6155 = vmul.f32 %v6147, 1.442695
        %v6156 = vpow.pop %v6155
        %v6157 = vmul.f32 %v6148, 1.442695
        %v6158 = vpow.pop %v6157
        %v6159 = vmul.f32 %v6149, 1.442695
        %v6160 = vpow.pop %v6159
        %v6161 = vmul.f32 %v6150, 1.442695
        %v6162 = vpow.pop %v6161
        %v6163 = vmul.f32 %v6151, 1.442695
        %v6164 = vpow.pop %v6163
        %v6165 = vmul.f32 %v6152, 1.442695
        %v6166 = vpow.pop %v6165
        %v6167 = vmul.f32 %v6153, 1.442695
        %v6168 = vpow.pop %v6167
        %v6169 = vmul.f32 %v6154, 1.442695
        %v6170 = vpow.pop %v6169
        %v6171 = vsel %vm6122, %v6156, 0.0
        %6172 = vadd.xlane.f32.xlu0 %v6171
        %v6173 = vpop.xlane.xlu0 %6172
        %v6174 = vsel %vm6122, %v6158, 0.0
        %6175 = vadd.xlane.f32.xlu0 %v6174
        %v6176 = vpop.xlane.xlu0 %6175
        %v6177 = vsel %vm6122, %v6160, 0.0
        %6178 = vadd.xlane.f32.xlu0 %v6177
        %v6179 = vpop.xlane.xlu0 %6178
        %v6180 = vsel %vm6122, %v6162, 0.0
        %6181 = vadd.xlane.f32.xlu0 %v6180
        %v6182 = vpop.xlane.xlu0 %6181
        %v6183 = vsel %vm6122, %v6164, 0.0
        %6184 = vadd.xlane.f32.xlu0 %v6183
        %v6185 = vpop.xlane.xlu0 %6184
        %v6186 = vsel %vm6122, %v6166, 0.0
        %6187 = vadd.xlane.f32.xlu0 %v6186
        %v6188 = vpop.xlane.xlu0 %6187
        %v6189 = vsel %vm6122, %v6168, 0.0
        %6190 = vadd.xlane.f32.xlu0 %v6189
        %v6191 = vpop.xlane.xlu0 %6190
        %v6192 = vsel %vm6122, %v6170, 0.0
        %6193 = vadd.xlane.f32.xlu0 %v6192
        %v6194 = vpop.xlane.xlu0 %6193
        %v6195 = vrcp.pop %v6173
        %v6196 = vrcp.pop %v6176
        %v6197 = vrcp.pop %v6179
        %v6198 = vrcp.pop %v6182
        %v6199 = vrcp.pop %v6185
        %v6200 = vrcp.pop %v6188
        %v6201 = vrcp.pop %v6191
        %v6202 = vrcp.pop %v6194
        %v6203 = vmul.f32 %v6156, %v6195
        %v6204 = vmul.f32 %v6158, %v6196
        %v6205 = vmul.f32 %v6160, %v6197
        %v6206 = vmul.f32 %v6162, %v6198
        %v6207 = vmul.f32 %v6164, %v6199
        %v6208 = vmul.f32 %v6166, %v6200
        %v6209 = vmul.f32 %v6168, %v6201
        %v6210 = vmul.f32 %v6170, %v6202
        %v6211 = vpack.c.bf16 %v6203, %v6203
        %v6212 = vpack.c.bf16 %v6204, %v6204
        %v6213 = vpack.c.bf16 %v6205, %v6205
        %v6214 = vpack.c.bf16 %v6206, %v6206
        %v6215 = vpack.c.bf16 %v6207, %v6207
        %v6216 = vpack.c.bf16 %v6208, %v6208
        %v6217 = vpack.c.bf16 %v6209, %v6209
        %v6218 = vpack.c.bf16 %v6210, %v6210
        %v6220 = vsel %vm6122, %v6211, 0
        %6222 = vmatprep.subr.bf16.mxu0 0
        %6223 = vmatpush1.bf16.msra.mxu0 %v5724
        %6224 = vmatprep.subr.bf16.mxu0 0
        %6225 = vmatpush1.bf16.msra.mxu0 0
        %6226 = vmatprep.subr.bf16.mxu0 0
        %6227 = vmatpush1.bf16.msra.mxu0 0
        %6228 = vmatprep.subr.bf16.mxu0 0
        %6229 = vmatpush1.bf16.msra.mxu0 0
        %6230 = vmatprep.subr.bf16.mxu0 0
        %6231 = vmatpush1.bf16.msra.mxu0 0
        %6232 = vmatprep.subr.bf16.mxu0 0
        %6233 = vmatpush1.bf16.msra.mxu0 0
        %6234 = vmatprep.subr.bf16.mxu0 0
        %6235 = vmatpush1.bf16.msra.mxu0 0
        %6236 = vmatprep.subr.bf16.mxu0 0
        %6237 = vmatpush1.bf16.msra.mxu0 0
        %6238 = vmatprep.subr.bf16.mxu0 0
        %6239 = vmatpush1.bf16.msra.mxu0 0
        %6240 = vmatprep.subr.bf16.mxu0 0
        %6241 = vmatpush1.bf16.msra.mxu0 0
        %6242 = vmatprep.subr.bf16.mxu0 0
        %6243 = vmatpush1.bf16.msra.mxu0 0
        %6244 = vmatprep.subr.bf16.mxu0 0
        %6245 = vmatpush1.bf16.msra.mxu0 0
        %6246 = vmatprep.subr.bf16.mxu0 0
        %6247 = vmatpush1.bf16.msra.mxu0 0
        %6248 = vmatprep.subr.bf16.mxu0 0
        %6249 = vmatpush1.bf16.msra.mxu0 0
        %6250 = vmatprep.subr.bf16.mxu0 0
        %6251 = vmatpush1.bf16.msra.mxu0 0
        %6252 = vmatprep.subr.bf16.mxu0 0
        %6253 = vmatpush1.bf16.msra.mxu0 0
        %6254 = vmatprep.mubr.bf16.mxu0 0
        %6255 = vmatmul.mubr.bf16.gmra.mrb[0].mxu0 %v6220
        %v6256 = vpop.f32.mrb[0].mxu0
        %v6257 = vadd.f32 0.0, %v6256
        %v6258 = vpop.f32.mrb[0].mxu0
        %v6259 = vpop.f32.mrb[0].mxu0
        %v6260 = vpop.f32.mrb[0].mxu0
        %6261 = vdwg.mxu0
        %v6263 = vsel %vm6122, %v6212, 0
        %6265 = vmatprep.subr.bf16.mxu0 0
        %6266 = vmatpush1.bf16.msra.mxu0 %v5740
        %6267 = vmatprep.subr.bf16.mxu0 0
        %6268 = vmatpush1.bf16.msra.mxu0 0
        %6269 = vmatprep.subr.bf16.mxu0 0
        %6270 = vmatpush1.bf16.msra.mxu0 0
        %6271 = vmatprep.subr.bf16.mxu0 0
        %6272 = vmatpush1.bf16.msra.mxu0 0
        %6273 = vmatprep.subr.bf16.mxu0 0
        %6274 = vmatpush1.bf16.msra.mxu0 0
        %6275 = vmatprep.subr.bf16.mxu0 0
        %6276 = vmatpush1.bf16.msra.mxu0 0
        %6277 = vmatprep.subr.bf16.mxu0 0
        %6278 = vmatpush1.bf16.msra.mxu0 0
        %6279 = vmatprep.subr.bf16.mxu0 0
        %6280 = vmatpush1.bf16.msra.mxu0 0
        %6281 = vmatprep.subr.bf16.mxu0 0
        %6282 = vmatpush1.bf16.msra.mxu0 0
        %6283 = vmatprep.subr.bf16.mxu0 0
        %6284 = vmatpush1.bf16.msra.mxu0 0
        %6285 = vmatprep.subr.bf16.mxu0 0
        %6286 = vmatpush1.bf16.msra.mxu0 0
        %6287 = vmatprep.subr.bf16.mxu0 0
        %6288 = vmatpush1.bf16.msra.mxu0 0
        %6289 = vmatprep.subr.bf16.mxu0 0
        %6290 = vmatpush1.bf16.msra.mxu0 0
        %6291 = vmatprep.subr.bf16.mxu0 0
        %6292 = vmatpush1.bf16.msra.mxu0 0
        %6293 = vmatprep.subr.bf16.mxu0 0
        %6294 = vmatpush1.bf16.msra.mxu0 0
        %6295 = vmatprep.subr.bf16.mxu0 0
        %6296 = vmatpush1.bf16.msra.mxu0 0
        %6297 = vmatprep.mubr.bf16.mxu0 0
        %6298 = vmatmul.mubr.bf16.gmra.mrb[0].mxu0 %v6263
        %v6299 = vpop.f32.mrb[0].mxu0
        %v6300 = vadd.f32 0.0, %v6299
        %v6301 = vpop.f32.mrb[0].mxu0
        %v6302 = vpop.f32.mrb[0].mxu0
        %v6303 = vpop.f32.mrb[0].mxu0
        %6304 = vdwg.mxu0
        %v6306 = vsel %vm6122, %v6213, 0
        %6308 = vmatprep.subr.bf16.mxu0 0
        %6309 = vmatpush1.bf16.msra.mxu0 %v5728
        %6310 = vmatprep.subr.bf16.mxu0 0
        %6311 = vmatpush1.bf16.msra.mxu0 0
        %6312 = vmatprep.subr.bf16.mxu0 0
        %6313 = vmatpush1.bf16.msra.mxu0 0
        %6314 = vmatprep.subr.bf16.mxu0 0
        %6315 = vmatpush1.bf16.msra.mxu0 0
        %6316 = vmatprep.subr.bf16.mxu0 0
        %6317 = vmatpush1.bf16.msra.mxu0 0
        %6318 = vmatprep.subr.bf16.mxu0 0
        %6319 = vmatpush1.bf16.msra.mxu0 0
        %6320 = vmatprep.subr.bf16.mxu0 0
        %6321 = vmatpush1.bf16.msra.mxu0 0
        %6322 = vmatprep.subr.bf16.mxu0 0
        %6323 = vmatpush1.bf16.msra.mxu0 0
        %6324 = vmatprep.subr.bf16.mxu0 0
        %6325 = vmatpush1.bf16.msra.mxu0 0
        %6326 = vmatprep.subr.bf16.mxu0 0
        %6327 = vmatpush1.bf16.msra.mxu0 0
        %6328 = vmatprep.subr.bf16.mxu0 0
        %6329 = vmatpush1.bf16.msra.mxu0 0
        %6330 = vmatprep.subr.bf16.mxu0 0
        %6331 = vmatpush1.bf16.msra.mxu0 0
        %6332 = vmatprep.subr.bf16.mxu0 0
        %6333 = vmatpush1.bf16.msra.mxu0 0
        %6334 = vmatprep.subr.bf16.mxu0 0
        %6335 = vmatpush1.bf16.msra.mxu0 0
        %6336 = vmatprep.subr.bf16.mxu0 0
        %6337 = vmatpush1.bf16.msra.mxu0 0
        %6338 = vmatprep.subr.bf16.mxu0 0
        %6339 = vmatpush1.bf16.msra.mxu0 0
        %6340 = vmatprep.mubr.bf16.mxu0 0
        %6341 = vmatmul.mubr.bf16.gmra.mrb[0].mxu0 %v6306
        %v6342 = vpop.f32.mrb[0].mxu0
        %v6343 = vadd.f32 0.0, %v6342
        %v6344 = vpop.f32.mrb[0].mxu0
        %v6345 = vpop.f32.mrb[0].mxu0
        %v6346 = vpop.f32.mrb[0].mxu0
        %6347 = vdwg.mxu0
        %v6349 = vsel %vm6122, %v6214, 0
        %6351 = vmatprep.subr.bf16.mxu0 0
        %6352 = vmatpush1.bf16.msra.mxu0 %v5744
        %6353 = vmatprep.subr.bf16.mxu0 0
        %6354 = vmatpush1.bf16.msra.mxu0 0
        %6355 = vmatprep.subr.bf16.mxu0 0
        %6356 = vmatpush1.bf16.msra.mxu0 0
        %6357 = vmatprep.subr.bf16.mxu0 0
        %6358 = vmatpush1.bf16.msra.mxu0 0
        %6359 = vmatprep.subr.bf16.mxu0 0
        %6360 = vmatpush1.bf16.msra.mxu0 0
        %6361 = vmatprep.subr.bf16.mxu0 0
        %6362 = vmatpush1.bf16.msra.mxu0 0
        %6363 = vmatprep.subr.bf16.mxu0 0
        %6364 = vmatpush1.bf16.msra.mxu0 0
        %6365 = vmatprep.subr.bf16.mxu0 0
        %6366 = vmatpush1.bf16.msra.mxu0 0
        %6367 = vmatprep.subr.bf16.mxu0 0
        %6368 = vmatpush1.bf16.msra.mxu0 0
        %6369 = vmatprep.subr.bf16.mxu0 0
        %6370 = vmatpush1.bf16.msra.mxu0 0
        %6371 = vmatprep.subr.bf16.mxu0 0
        %6372 = vmatpush1.bf16.msra.mxu0 0
        %6373 = vmatprep.subr.bf16.mxu0 0
        %6374 = vmatpush1.bf16.msra.mxu0 0
        %6375 = vmatprep.subr.bf16.mxu0 0
        %6376 = vmatpush1.bf16.msra.mxu0 0
        %6377 = vmatprep.subr.bf16.mxu0 0
        %6378 = vmatpush1.bf16.msra.mxu0 0
        %6379 = vmatprep.subr.bf16.mxu0 0
        %6380 = vmatpush1.bf16.msra.mxu0 0
        %6381 = vmatprep.subr.bf16.mxu0 0
        %6382 = vmatpush1.bf16.msra.mxu0 0
        %6383 = vmatprep.mubr.bf16.mxu0 0
        %6384 = vmatmul.mubr.bf16.gmra.mrb[0].mxu0 %v6349
        %v6385 = vpop.f32.mrb[0].mxu0
        %v6386 = vadd.f32 0.0, %v6385
        %v6387 = vpop.f32.mrb[0].mxu0
        %v6388 = vpop.f32.mrb[0].mxu0
        %v6389 = vpop.f32.mrb[0].mxu0
        %6390 = vdwg.mxu0
        %v6392 = vsel %vm6122, %v6215, 0
        %6394 = vmatprep.subr.bf16.mxu0 0
        %6395 = vmatpush1.bf16.msra.mxu0 %v5732
        %6396 = vmatprep.subr.bf16.mxu0 0
        %6397 = vmatpush1.bf16.msra.mxu0 0
        %6398 = vmatprep.subr.bf16.mxu0 0
        %6399 = vmatpush1.bf16.msra.mxu0 0
        %6400 = vmatprep.subr.bf16.mxu0 0
        %6401 = vmatpush1.bf16.msra.mxu0 0
        %6402 = vmatprep.subr.bf16.mxu0 0
        %6403 = vmatpush1.bf16.msra.mxu0 0
        %6404 = vmatprep.subr.bf16.mxu0 0
        %6405 = vmatpush1.bf16.msra.mxu0 0
        %6406 = vmatprep.subr.bf16.mxu0 0
        %6407 = vmatpush1.bf16.msra.mxu0 0
        %6408 = vmatprep.subr.bf16.mxu0 0
        %6409 = vmatpush1.bf16.msra.mxu0 0
        %6410 = vmatprep.subr.bf16.mxu0 0
        %6411 = vmatpush1.bf16.msra.mxu0 0
        %6412 = vmatprep.subr.bf16.mxu0 0
        %6413 = vmatpush1.bf16.msra.mxu0 0
        %6414 = vmatprep.subr.bf16.mxu0 0
        %6415 = vmatpush1.bf16.msra.mxu0 0
        %6416 = vmatprep.subr.bf16.mxu0 0
        %6417 = vmatpush1.bf16.msra.mxu0 0
        %6418 = vmatprep.subr.bf16.mxu0 0
        %6419 = vmatpush1.bf16.msra.mxu0 0
        %6420 = vmatprep.subr.bf16.mxu0 0
        %6421 = vmatpush1.bf16.msra.mxu0 0
        %6422 = vmatprep.subr.bf16.mxu0 0
        %6423 = vmatpush1.bf16.msra.mxu0 0
        %6424 = vmatprep.subr.bf16.mxu0 0
        %6425 = vmatpush1.bf16.msra.mxu0 0
        %6426 = vmatprep.mubr.bf16.mxu0 0
        %6427 = vmatmul.mubr.bf16.gmra.mrb[0].mxu0 %v6392
        %v6428 = vpop.f32.mrb[0].mxu0
        %v6429 = vadd.f32 0.0, %v6428
        %v6430 = vpop.f32.mrb[0].mxu0
        %v6431 = vpop.f32.mrb[0].mxu0
        %v6432 = vpop.f32.mrb[0].mxu0
        %6433 = vdwg.mxu0
        %v6435 = vsel %vm6122, %v6216, 0
        %6437 = vmatprep.subr.bf16.mxu0 0
        %6438 = vmatpush1.bf16.msra.mxu0 %v5748
        %6439 = vmatprep.subr.bf16.mxu0 0
        %6440 = vmatpush1.bf16.msra.mxu0 0
        %6441 = vmatprep.subr.bf16.mxu0 0
        %6442 = vmatpush1.bf16.msra.mxu0 0
        %6443 = vmatprep.subr.bf16.mxu0 0
        %6444 = vmatpush1.bf16.msra.mxu0 0
        %6445 = vmatprep.subr.bf16.mxu0 0
        %6446 = vmatpush1.bf16.msra.mxu0 0
        %6447 = vmatprep.subr.bf16.mxu0 0
        %6448 = vmatpush1.bf16.msra.mxu0 0
        %6449 = vmatprep.subr.bf16.mxu0 0
        %6450 = vmatpush1.bf16.msra.mxu0 0
        %6451 = vmatprep.subr.bf16.mxu0 0
        %6452 = vmatpush1.bf16.msra.mxu0 0
        %6453 = vmatprep.subr.bf16.mxu0 0
        %6454 = vmatpush1.bf16.msra.mxu0 0
        %6455 = vmatprep.subr.bf16.mxu0 0
        %6456 = vmatpush1.bf16.msra.mxu0 0
        %6457 = vmatprep.subr.bf16.mxu0 0
        %6458 = vmatpush1.bf16.msra.mxu0 0
        %6459 = vmatprep.subr.bf16.mxu0 0
        %6460 = vmatpush1.bf16.msra.mxu0 0
        %6461 = vmatprep.subr.bf16.mxu0 0
        %6462 = vmatpush1.bf16.msra.mxu0 0
        %6463 = vmatprep.subr.bf16.mxu0 0
        %6464 = vmatpush1.bf16.msra.mxu0 0
        %6465 = vmatprep.subr.bf16.mxu0 0
        %6466 = vmatpush1.bf16.msra.mxu0 0
        %6467 = vmatprep.subr.bf16.mxu0 0
        %6468 = vmatpush1.bf16.msra.mxu0 0
        %6469 = vmatprep.mubr.bf16.mxu0 0
        %6470 = vmatmul.mubr.bf16.gmra.mrb[0].mxu0 %v6435
        %v6471 = vpop.f32.mrb[0].mxu0
        %v6472 = vadd.f32 0.0, %v6471
        %v6473 = vpop.f32.mrb[0].mxu0
        %v6474 = vpop.f32.mrb[0].mxu0
        %v6475 = vpop.f32.mrb[0].mxu0
        %6476 = vdwg.mxu0
        %v6478 = vsel %vm6122, %v6217, 0
        %6480 = vmatprep.subr.bf16.mxu0 0
        %6481 = vmatpush1.bf16.msra.mxu0 %v5736
        %6482 = vmatprep.subr.bf16.mxu0 0
        %6483 = vmatpush1.bf16.msra.mxu0 0
        %6484 = vmatprep.subr.bf16.mxu0 0
        %6485 = vmatpush1.bf16.msra.mxu0 0
        %6486 = vmatprep.subr.bf16.mxu0 0
        %6487 = vmatpush1.bf16.msra.mxu0 0
        %6488 = vmatprep.subr.bf16.mxu0 0
        %6489 = vmatpush1.bf16.msra.mxu0 0
        %6490 = vmatprep.subr.bf16.mxu0 0
        %6491 = vmatpush1.bf16.msra.mxu0 0
        %6492 = vmatprep.subr.bf16.mxu0 0
        %6493 = vmatpush1.bf16.msra.mxu0 0
        %6494 = vmatprep.subr.bf16.mxu0 0
        %6495 = vmatpush1.bf16.msra.mxu0 0
        %6496 = vmatprep.subr.bf16.mxu0 0
        %6497 = vmatpush1.bf16.msra.mxu0 0
        %6498 = vmatprep.subr.bf16.mxu0 0
        %6499 = vmatpush1.bf16.msra.mxu0 0
        %6500 = vmatprep.subr.bf16.mxu0 0
        %6501 = vmatpush1.bf16.msra.mxu0 0
        %6502 = vmatprep.subr.bf16.mxu0 0
        %6503 = vmatpush1.bf16.msra.mxu0 0
        %6504 = vmatprep.subr.bf16.mxu0 0
        %6505 = vmatpush1.bf16.msra.mxu0 0
        %6506 = vmatprep.subr.bf16.mxu0 0
        %6507 = vmatpush1.bf16.msra.mxu0 0
        %6508 = vmatprep.subr.bf16.mxu0 0
        %6509 = vmatpush1.bf16.msra.mxu0 0
        %6510 = vmatprep.subr.bf16.mxu0 0
        %6511 = vmatpush1.bf16.msra.mxu0 0
        %6512 = vmatprep.mubr.bf16.mxu0 0
        %6513 = vmatmul.mubr.bf16.gmra.mrb[0].mxu0 %v6478
        %v6514 = vpop.f32.mrb[0].mxu0
        %v6515 = vadd.f32 0.0, %v6514
        %v6516 = vpop.f32.mrb[0].mxu0
        %v6517 = vpop.f32.mrb[0].mxu0
        %v6518 = vpop.f32.mrb[0].mxu0
        %6519 = vdwg.mxu0
        %v6521 = vsel %vm6122, %v6218, 0
        %6523 = vmatprep.subr.bf16.mxu0 0
        %6524 = vmatpush1.bf16.msra.mxu0 %v5752
        %6525 = vmatprep.subr.bf16.mxu0 0
        %6526 = vmatpush1.bf16.msra.mxu0 0
        %6527 = vmatprep.subr.bf16.mxu0 0
        %6528 = vmatpush1.bf16.msra.mxu0 0
        %6529 = vmatprep.subr.bf16.mxu0 0
        %6530 = vmatpush1.bf16.msra.mxu0 0
        %6531 = vmatprep.subr.bf16.mxu0 0
        %6532 = vmatpush1.bf16.msra.mxu0 0
        %6533 = vmatprep.subr.bf16.mxu0 0
        %6534 = vmatpush1.bf16.msra.mxu0 0
        %6535 = vmatprep.subr.bf16.mxu0 0
        %6536 = vmatpush1.bf16.msra.mxu0 0
        %6537 = vmatprep.subr.bf16.mxu0 0
        %6538 = vmatpush1.bf16.msra.mxu0 0
        %6539 = vmatprep.subr.bf16.mxu0 0
        %6540 = vmatpush1.bf16.msra.mxu0 0
        %6541 = vmatprep.subr.bf16.mxu0 0
        %6542 = vmatpush1.bf16.msra.mxu0 0
        %6543 = vmatprep.subr.bf16.mxu0 0
        %6544 = vmatpush1.bf16.msra.mxu0 0
        %6545 = vmatprep.subr.bf16.mxu0 0
        %6546 = vmatpush1.bf16.msra.mxu0 0
        %6547 = vmatprep.subr.bf16.mxu0 0
        %6548 = vmatpush1.bf16.msra.mxu0 0
        %6549 = vmatprep.subr.bf16.mxu0 0
        %6550 = vmatpush1.bf16.msra.mxu0 0
        %6551 = vmatprep.subr.bf16.mxu0 0
        %6552 = vmatpush1.bf16.msra.mxu0 0
        %6553 = vmatprep.subr.bf16.mxu0 0
        %6554 = vmatpush1.bf16.msra.mxu0 0
        %6555 = vmatprep.mubr.bf16.mxu0 0
        %6556 = vmatmul.mubr.bf16.gmra.mrb[0].mxu0 %v6521
        %v6557 = vpop.f32.mrb[0].mxu0
        %v6558 = vadd.f32 0.0, %v6557
        %v6559 = vpop.f32.mrb[0].mxu0
        %v6560 = vpop.f32.mrb[0].mxu0
        %v6561 = vpop.f32.mrb[0].mxu0
        %6562 = vdwg.mxu0
        %v6563 = vcombine.low %v6257, %v6429
        %v6564 = vcombine.high %v6257, %v6429
        %v6566 = vunpack.c.l.s4 1983009808
        %v6567 = vunpack.c.0.s8 %v6566
        %v6568 = vlaneseq
        %v6569 = vshrl.u32 %v6568, 7
        %v6570 = vsub.s32 %v6567, %v6569
        %v6571 = vrot.slane %v6563, %v6570
        %v6573 = vunpack.c.l.s4 1983009808
        %v6574 = vunpack.c.0.s8 %v6573
        %v6575 = vlaneseq
        %v6576 = vshrl.u32 %v6575, 7
        %v6577 = vsub.s32 %v6574, %v6576
        %v6578 = vrot.slane %v6564, %v6577
        %v6579 = vcombine.low %v6343, %v6515
        %v6580 = vcombine.high %v6343, %v6515
        %v6582 = vunpack.c.l.s4 1983009808
        %v6583 = vunpack.c.0.s8 %v6582
        %v6584 = vlaneseq
        %v6585 = vshrl.u32 %v6584, 7
        %v6586 = vsub.s32 %v6583, %v6585
        %v6587 = vrot.slane %v6579, %v6586
        %v6589 = vunpack.c.l.s4 1983009808
        %v6590 = vunpack.c.0.s8 %v6589
        %v6591 = vlaneseq
        %v6592 = vshrl.u32 %v6591, 7
        %v6593 = vsub.s32 %v6590, %v6592
        %v6594 = vrot.slane %v6580, %v6593
        %v6595 = vcombine.low %v6571, %v6587
        %v6596 = vcombine.high %v6571, %v6587
        %v6598 = vunpack.c.l.s4 1934713408
        %v6599 = vunpack.c.0.s8 %v6598
        %v6600 = vlaneseq
        %v6601 = vshrl.u32 %v6600, 7
        %v6602 = vsub.s32 %v6599, %v6601
        %v6603 = vrot.slane %v6595, %v6602
        %v6605 = vunpack.c.l.s4 1934713408
        %v6606 = vunpack.c.0.s8 %v6605
        %v6607 = vlaneseq
        %v6608 = vshrl.u32 %v6607, 7
        %v6609 = vsub.s32 %v6606, %v6608
        %v6610 = vrot.slane %v6596, %v6609
        %v6611 = vcombine.low %v6578, %v6594
        %v6612 = vcombine.high %v6578, %v6594
        %v6614 = vunpack.c.l.s4 1934713408
        %v6615 = vunpack.c.0.s8 %v6614
        %v6616 = vlaneseq
        %v6617 = vshrl.u32 %v6616, 7
        %v6618 = vsub.s32 %v6615, %v6617
        %v6619 = vrot.slane %v6611, %v6618
        %v6621 = vunpack.c.l.s4 1934713408
        %v6622 = vunpack.c.0.s8 %v6621
        %v6623 = vlaneseq
        %v6624 = vshrl.u32 %v6623, 7
        %v6625 = vsub.s32 %v6622, %v6624
        %v6626 = vrot.slane %v6612, %v6625
        %v6627 = vcombine.high %v6603, 0.0
        %v6628 = vcombine.high %v6610, 0.0
        %v6629 = vcombine.high %v6619, 0.0
        %v6630 = vcombine.high %v6626, 0.0
        %v6631 = vcombine.low %v6300, %v6472
        %v6632 = vcombine.high %v6300, %v6472
        %v6634 = vunpack.c.l.s4 1983009808
        %v6635 = vunpack.c.0.s8 %v6634
        %v6636 = vlaneseq
        %v6637 = vshrl.u32 %v6636, 7
        %v6638 = vsub.s32 %v6635, %v6637
        %v6639 = vrot.slane %v6631, %v6638
        %v6641 = vunpack.c.l.s4 1983009808
        %v6642 = vunpack.c.0.s8 %v6641
        %v6643 = vlaneseq
        %v6644 = vshrl.u32 %v6643, 7
        %v6645 = vsub.s32 %v6642, %v6644
        %v6646 = vrot.slane %v6632, %v6645
        %v6647 = vcombine.low %v6386, %v6558
        %v6648 = vcombine.high %v6386, %v6558
        %v6650 = vunpack.c.l.s4 1983009808
        %v6651 = vunpack.c.0.s8 %v6650
        %v6652 = vlaneseq
        %v6653 = vshrl.u32 %v6652, 7
        %v6654 = vsub.s32 %v6651, %v6653
        %v6655 = vrot.slane %v6647, %v6654
        %v6657 = vunpack.c.l.s4 1983009808
        %v6658 = vunpack.c.0.s8 %v6657
        %v6659 = vlaneseq
        %v6660 = vshrl.u32 %v6659, 7
        %v6661 = vsub.s32 %v6658, %v6660
        %v6662 = vrot.slane %v6648, %v6661
        %v6663 = vcombine.low %v6639, %v6655
        %v6664 = vcombine.high %v6639, %v6655
        %v6666 = vunpack.c.l.s4 1934713408
        %v6667 = vunpack.c.0.s8 %v6666
        %v6668 = vlaneseq
        %v6669 = vshrl.u32 %v6668, 7
        %v6670 = vsub.s32 %v6667, %v6669
        %v6671 = vrot.slane %v6663, %v6670
        %v6673 = vunpack.c.l.s4 1934713408
        %v6674 = vunpack.c.0.s8 %v6673
        %v6675 = vlaneseq
        %v6676 = vshrl.u32 %v6675, 7
        %v6677 = vsub.s32 %v6674, %v6676
        %v6678 = vrot.slane %v6664, %v6677
        %v6679 = vcombine.low %v6646, %v6662
        %v6680 = vcombine.high %v6646, %v6662
        %v6682 = vunpack.c.l.s4 1934713408
        %v6683 = vunpack.c.0.s8 %v6682
        %v6684 = vlaneseq
        %v6685 = vshrl.u32 %v6684, 7
        %v6686 = vsub.s32 %v6683, %v6685
        %v6687 = vrot.slane %v6679, %v6686
        %v6689 = vunpack.c.l.s4 1934713408
        %v6690 = vunpack.c.0.s8 %v6689
        %v6691 = vlaneseq
        %v6692 = vshrl.u32 %v6691, 7
        %v6693 = vsub.s32 %v6690, %v6692
        %v6694 = vrot.slane %v6680, %v6693
        %v6695 = vcombine.high %v6671, 0.0
        %v6696 = vcombine.high %v6678, 0.0
        %v6697 = vcombine.high %v6687, 0.0
        %v6698 = vcombine.high %v6694, 0.0
        %v6699 = vcombine.low %v6603, %v6610
        %v6701 = vunpack.c.l.s4 1983009808
        %v6702 = vunpack.c.0.s8 %v6701
        %v6703 = vlaneseq
        %v6704 = vshrl.u32 %v6703, 7
        %v6705 = vsub.s32 %v6702, %v6704
        %v6706 = vrot.slane %v6699, %v6705
        %v6707 = vcombine.low %v6627, %v6628
        %v6709 = vunpack.c.l.s4 1983009808
        %v6710 = vunpack.c.0.s8 %v6709
        %v6711 = vlaneseq
        %v6712 = vshrl.u32 %v6711, 7
        %v6713 = vsub.s32 %v6710, %v6712
        %v6714 = vrot.slane %v6707, %v6713
        %v6715 = vcombine.low %v6619, %v6626
        %v6717 = vunpack.c.l.s4 1983009808
        %v6718 = vunpack.c.0.s8 %v6717
        %v6719 = vlaneseq
        %v6720 = vshrl.u32 %v6719, 7
        %v6721 = vsub.s32 %v6718, %v6720
        %v6722 = vrot.slane %v6715, %v6721
        %v6723 = vcombine.low %v6629, %v6630
        %v6725 = vunpack.c.l.s4 1983009808
        %v6726 = vunpack.c.0.s8 %v6725
        %v6727 = vlaneseq
        %v6728 = vshrl.u32 %v6727, 7
        %v6729 = vsub.s32 %v6726, %v6728
        %v6730 = vrot.slane %v6723, %v6729
        %v6731 = vcombine.low %v6706, %v6714
        %v6732 = vcombine.high %v6706, %v6714
        %v6734 = vunpack.c.l.s4 1934713408
        %v6735 = vunpack.c.0.s8 %v6734
        %v6736 = vlaneseq
        %v6737 = vshrl.u32 %v6736, 7
        %v6738 = vsub.s32 %v6735, %v6737
        %v6739 = vrot.slane %v6731, %v6738
        %v6741 = vunpack.c.l.s4 1934713408
        %v6742 = vunpack.c.0.s8 %v6741
        %v6743 = vlaneseq
        %v6744 = vshrl.u32 %v6743, 7
        %v6745 = vsub.s32 %v6742, %v6744
        %v6746 = vrot.slane %v6732, %v6745
        %v6747 = vcombine.low %v6722, %v6730
        %v6748 = vcombine.high %v6722, %v6730
        %v6750 = vunpack.c.l.s4 1934713408
        %v6751 = vunpack.c.0.s8 %v6750
        %v6752 = vlaneseq
        %v6753 = vshrl.u32 %v6752, 7
        %v6754 = vsub.s32 %v6751, %v6753
        %v6755 = vrot.slane %v6747, %v6754
        %v6757 = vunpack.c.l.s4 1934713408
        %v6758 = vunpack.c.0.s8 %v6757
        %v6759 = vlaneseq
        %v6760 = vshrl.u32 %v6759, 7
        %v6761 = vsub.s32 %v6758, %v6760
        %v6762 = vrot.slane %v6748, %v6761
        %v6763 = vcombine.low %v6739, %v6755
        %v6764 = vcombine.high %v6739, %v6755
        %v6765 = vcombine.low %v6746, %v6762
        %v6766 = vcombine.high %v6746, %v6762
        %v6767 = vcombine.low %v6671, %v6678
        %v6769 = vunpack.c.l.s4 1983009808
        %v6770 = vunpack.c.0.s8 %v6769
        %v6771 = vlaneseq
        %v6772 = vshrl.u32 %v6771, 7
        %v6773 = vsub.s32 %v6770, %v6772
        %v6774 = vrot.slane %v6767, %v6773
        %v6775 = vcombine.low %v6695, %v6696
        %v6777 = vunpack.c.l.s4 1983009808
        %v6778 = vunpack.c.0.s8 %v6777
        %v6779 = vlaneseq
        %v6780 = vshrl.u32 %v6779, 7
        %v6781 = vsub.s32 %v6778, %v6780
        %v6782 = vrot.slane %v6775, %v6781
        %v6783 = vcombine.low %v6687, %v6694
        %v6785 = vunpack.c.l.s4 1983009808
        %v6786 = vunpack.c.0.s8 %v6785
        %v6787 = vlaneseq
        %v6788 = vshrl.u32 %v6787, 7
        %v6789 = vsub.s32 %v6786, %v6788
        %v6790 = vrot.slane %v6783, %v6789
        %v6791 = vcombine.low %v6697, %v6698
        %v6793 = vunpack.c.l.s4 1983009808
        %v6794 = vunpack.c.0.s8 %v6793
        %v6795 = vlaneseq
        %v6796 = vshrl.u32 %v6795, 7
        %v6797 = vsub.s32 %v6794, %v6796
        %v6798 = vrot.slane %v6791, %v6797
        %v6799 = vcombine.low %v6774, %v6782
        %v6800 = vcombine.high %v6774, %v6782
        %v6802 = vunpack.c.l.s4 1934713408
        %v6803 = vunpack.c.0.s8 %v6802
        %v6804 = vlaneseq
        %v6805 = vshrl.u32 %v6804, 7
        %v6806 = vsub.s32 %v6803, %v6805
        %v6807 = vrot.slane %v6799, %v6806
        %v6809 = vunpack.c.l.s4 1934713408
        %v6810 = vunpack.c.0.s8 %v6809
        %v6811 = vlaneseq
        %v6812 = vshrl.u32 %v6811, 7
        %v6813 = vsub.s32 %v6810, %v6812
        %v6814 = vrot.slane %v6800, %v6813
        %v6815 = vcombine.low %v6790, %v6798
        %v6816 = vcombine.high %v6790, %v6798
        %v6818 = vunpack.c.l.s4 1934713408
        %v6819 = vunpack.c.0.s8 %v6818
        %v6820 = vlaneseq
        %v6821 = vshrl.u32 %v6820, 7
        %v6822 = vsub.s32 %v6819, %v6821
        %v6823 = vrot.slane %v6815, %v6822
        %v6825 = vunpack.c.l.s4 1934713408
        %v6826 = vunpack.c.0.s8 %v6825
        %v6827 = vlaneseq
        %v6828 = vshrl.u32 %v6827, 7
        %v6829 = vsub.s32 %v6826, %v6828
        %v6830 = vrot.slane %v6816, %v6829
        %v6831 = vcombine.low %v6807, %v6823
        %v6832 = vcombine.high %v6807, %v6823
        %v6833 = vcombine.low %v6814, %v6830
        %v6834 = vcombine.high %v6814, %v6830
        %6837 = vrot.lane.b32.xlu0 %v6764, 32
        %v6838 = vpop.permute.xlu0 %6837
        %6839 = vrot.lane.b32.xlu0 %v6832, 32
        %v6840 = vpop.permute.xlu0 %6839
        %6845 = vrot.lane.b32.xlu0 %v6765, 64
        %v6846 = vpop.permute.xlu0 %6845
        %6847 = vrot.lane.b32.xlu0 %v6833, 64
        %v6848 = vpop.permute.xlu0 %6847
        %6853 = vrot.lane.b32.xlu0 %v6766, 96
        %v6854 = vpop.permute.xlu0 %6853
        %6855 = vrot.lane.b32.xlu0 %v6834, 96
        %v6856 = vpop.permute.xlu0 %6855
        %v6859 = vsel %vm2716, %v6763, %v6838
        %v6860 = vsel %vm2716, %v6831, %v6840
        %v6861 = vsel %vm3849, %v6859, %v6846
        %v6862 = vsel %vm3849, %v6860, %v6848
        %v6863 = vsel %vm3852, %v6861, %v6854
        %v6864 = vsel %vm3852, %v6862, %v6856
        %v6865 = vpack.c.bf16 %v6864, %v6863
        %v6866 = vld [vmem:[%s1336] sm:$0xf]
        %v6867 = vld [vmem:[%s1336 + $0x4] sm:$0xf]
        %v6868 = vld [vmem:[%s1336 + $0x8] sm:$0xf]
        %v6869 = vld [vmem:[%s1336 + $0xc] sm:$0xf]
        %v6870 = vld [vmem:[%s1336 + $0x10] sm:$0xf]
        %v6871 = vld [vmem:[%s1336 + $0x14] sm:$0xf]
        %v6872 = vld [vmem:[%s1336 + $0x18] sm:$0xf]
        %v6873 = vld [vmem:[%s1336 + $0x1c] sm:$0xf]
        %v6874 = vld [vmem:[%s1336 + $0x20] sm:$0xf]
        %v6875 = vld [vmem:[%s1336 + $0x24] sm:$0xf]
        %v6876 = vld [vmem:[%s1336 + $0x28] sm:$0xf]
        %v6877 = vld [vmem:[%s1336 + $0x2c] sm:$0xf]
        %v6878 = vld [vmem:[%s1336 + $0x30] sm:$0xf]
        %v6879 = vld [vmem:[%s1336 + $0x34] sm:$0xf]
        %v6880 = vld [vmem:[%s1336 + $0x38] sm:$0xf]
        %v6881 = vld [vmem:[%s1336 + $0x3c] sm:$0xf]
        %v6882 = vld [vmem:[%s1549] sm:$0x1]
        %v6884 = vlaneseq
        %v6885 = vshrl.u32 %v6884, 7
        %v6886 = vsub.s32 0, %v6885
        %v6887 = vrot.slane %v6882, %v6886
        %v6905 = vunpack.c.l.b16 %v6866
        %v6906 = vunpack.c.l.b16 %v6867
        %v6907 = vunpack.c.l.b16 %v6868
        %v6908 = vunpack.c.l.b16 %v6869
        %v6909 = vunpack.c.l.b16 %v6870
        %v6910 = vunpack.c.l.b16 %v6871
        %v6911 = vunpack.c.l.b16 %v6872
        %v6912 = vunpack.c.l.b16 %v6873
        %v6913 = vunpack.c.l.b16 %v6874
        %v6914 = vunpack.c.l.b16 %v6875
        %v6915 = vunpack.c.l.b16 %v6876
        %v6916 = vunpack.c.l.b16 %v6877
        %v6917 = vunpack.c.l.b16 %v6878
        %v6918 = vunpack.c.l.b16 %v6879
        %v6919 = vunpack.c.l.b16 %v6880
        %v6920 = vunpack.c.l.b16 %v6881
        %v6921 = vpack.c.b16 %v6906, %v6905
        %v6922 = vpack.c.b16 %v6908, %v6907
        %v6923 = vpack.c.b16 %v6910, %v6909
        %v6924 = vpack.c.b16 %v6912, %v6911
        %v6925 = vpack.c.b16 %v6914, %v6913
        %v6926 = vpack.c.b16 %v6916, %v6915
        %v6927 = vpack.c.b16 %v6918, %v6917
        %v6928 = vpack.c.b16 %v6920, %v6919
        %6937 = vmatprep.subr.bf16.mxu0 0
        %6938 = vmatpush1.bf16.msra.mxu0 %v6921
        %6939 = vmatprep.subr.bf16.mxu0 0
        %6940 = vmatpush1.bf16.msra.mxu0 %v6922
        %6941 = vmatprep.subr.bf16.mxu0 0
        %6942 = vmatpush1.bf16.msra.mxu0 %v6923
        %6943 = vmatprep.subr.bf16.mxu0 0
        %6944 = vmatpush1.bf16.msra.mxu0 %v6924
        %6945 = vmatprep.subr.bf16.mxu0 0
        %6946 = vmatpush1.bf16.msra.mxu0 %v6925
        %6947 = vmatprep.subr.bf16.mxu0 0
        %6948 = vmatpush1.bf16.msra.mxu0 %v6926
        %6949 = vmatprep.subr.bf16.mxu0 0
        %6950 = vmatpush1.bf16.msra.mxu0 %v6927
        %6951 = vmatprep.subr.bf16.mxu0 0
        %6952 = vmatpush1.bf16.msra.mxu0 %v6928
        %6953 = vmatprep.subr.bf16.mxu0 0
        %6954 = vmatpush1.bf16.msra.mxu0 0
        %6955 = vmatprep.subr.bf16.mxu0 0
        %6956 = vmatpush1.bf16.msra.mxu0 0
        %6957 = vmatprep.subr.bf16.mxu0 0
        %6958 = vmatpush1.bf16.msra.mxu0 0
        %6959 = vmatprep.subr.bf16.mxu0 0
        %6960 = vmatpush1.bf16.msra.mxu0 0
        %6961 = vmatprep.subr.bf16.mxu0 0
        %6962 = vmatpush1.bf16.msra.mxu0 0
        %6963 = vmatprep.subr.bf16.mxu0 0
        %6964 = vmatpush1.bf16.msra.mxu0 0
        %6965 = vmatprep.subr.bf16.mxu0 0
        %6966 = vmatpush1.bf16.msra.mxu0 0
        %6967 = vmatprep.subr.bf16.mxu0 0
        %6968 = vmatpush1.bf16.msra.mxu0 0
        %6969 = vmatprep.mubr.bf16.mxu0 0
        %6970 = vmatmul.mubr.bf16.gmra.mrb[0].mxu0 %v6865
        %v6971 = vpop.f32.mrb[0].mxu0
        %v6972 = vadd.f32 %v6887, %v6971
        %v6973 = vpop.f32.mrb[0].mxu0
        %v6974 = vpop.f32.mrb[0].mxu0
        %v6975 = vadd.f32 %v6887, %v6974
        %v6976 = vpop.f32.mrb[0].mxu0
        %6977 = vdwg.mxu0
        %v6978 = vadd.f32 %v4009, %v6972
        %v6979 = vadd.f32 %v4010, %v6975
        %6980 = vadd.xlane.f32.xlu0 %v6978
        %v6981 = vpop.xlane.xlu0 %6980
        %6982 = vadd.xlane.f32.xlu0 %v6979
        %v6983 = vpop.xlane.xlu0 %6982
        %v6984 = vmul.f32 %v6981, %v3974
        %v6985 = vmul.f32 %v6983, %v3974
        %v6986 = vsub.f32 %v6978, %v6984
        %v6987 = vsub.f32 %v6979, %v6985
        %v6988 = vmul.f32 %v6986, %v6986
        %v6989 = vmul.f32 %v6987, %v6987
        %6990 = vadd.xlane.f32.xlu0 %v6988
        %v6991 = vpop.xlane.xlu0 %6990
        %6992 = vadd.xlane.f32.xlu0 %v6989
        %v6993 = vpop.xlane.xlu0 %6992
        %v6994 = vmul.f32 %v6991, %v3974
        %v6995 = vmul.f32 %v6993, %v3974
        %v6996 = vadd.f32 %v6994, 1e-05
        %v6997 = vadd.f32 %v6995, 1e-05
        %v6998 = vrsqrt.pop %v6996
        %v6999 = vrsqrt.pop %v6997
        %v7000 = vmul.f32 %v6986, %v6998
        %v7001 = vmul.f32 %v6987, %v6999
        %v7002 = vld [vmem:[%s1552] sm:$0x1]
        %v7004 = vlaneseq
        %v7005 = vshrl.u32 %v7004, 7
        %v7006 = vsub.s32 0, %v7005
        %v7007 = vrot.slane %v7002, %v7006
        %v7009 = vmul.f32 %v7000, %v7007
        %v7010 = vmul.f32 %v7001, %v7007
        %v7011 = vld [vmem:[%s1555] sm:$0x1]
        %v7013 = vlaneseq
        %v7014 = vshrl.u32 %v7013, 7
        %v7015 = vsub.s32 0, %v7014
        %v7016 = vrot.slane %v7011, %v7015
        %v7018 = vadd.f32 %v7009, %v7016
        %v7019 = vadd.f32 %v7010, %v7016
        %v7020 = vpack.c.bf16 %v7019, %v7018
        %v7021 = vld [vmem:[%s1345] sm:$0xff]
        %v7022 = vld [vmem:[%s1345 + $0x8] sm:$0xff]
        %v7023 = vld [vmem:[%s1345 + $0x10] sm:$0xff]
        %v7024 = vld [vmem:[%s1345 + $0x18] sm:$0xff]
        %v7025 = vld [vmem:[%s1345 + $0x20] sm:$0xff]
        %v7026 = vld [vmem:[%s1345 + $0x28] sm:$0xff]
        %v7027 = vld [vmem:[%s1345 + $0x30] sm:$0xff]
        %v7028 = vld [vmem:[%s1345 + $0x38] sm:$0xff]
        %v7029 = vld [vmem:[%s1345 + $0x40] sm:$0xff]
        %v7030 = vld [vmem:[%s1345 + $0x48] sm:$0xff]
        %v7031 = vld [vmem:[%s1345 + $0x50] sm:$0xff]
        %v7032 = vld [vmem:[%s1345 + $0x58] sm:$0xff]
        %v7033 = vld [vmem:[%s1345 + $0x60] sm:$0xff]
        %v7034 = vld [vmem:[%s1345 + $0x68] sm:$0xff]
        %v7035 = vld [vmem:[%s1345 + $0x70] sm:$0xff]
        %v7036 = vld [vmem:[%s1345 + $0x78] sm:$0xff]
        %v7037 = vld [vmem:[%s1559] sm:$0x3]
        %v7039 = vlaneseq
        %v7040 = vshrl.u32 %v7039, 7
        %v7041 = vsub.s32 0, %v7040
        %v7042 = vrot.slane %v7037, %v7041
        %v7043 = vlaneseq
        %v7044 = vshrl.u32 %v7043, 7
        %v7045 = vsub.s32 1, %v7044
        %v7046 = vrot.slane %v7037, %v7045
        %v7065 = vunpack.c.l.b16 %v7021
        %v7066 = vunpack.c.h.b16 %v7021
        %v7067 = vunpack.c.l.b16 %v7022
        %v7068 = vunpack.c.h.b16 %v7022
        %v7069 = vunpack.c.l.b16 %v7023
        %v7070 = vunpack.c.h.b16 %v7023
        %v7071 = vunpack.c.l.b16 %v7024
        %v7072 = vunpack.c.h.b16 %v7024
        %v7073 = vunpack.c.l.b16 %v7025
        %v7074 = vunpack.c.h.b16 %v7025
        %v7075 = vunpack.c.l.b16 %v7026
        %v7076 = vunpack.c.h.b16 %v7026
        %v7077 = vunpack.c.l.b16 %v7027
        %v7078 = vunpack.c.h.b16 %v7027
        %v7079 = vunpack.c.l.b16 %v7028
        %v7080 = vunpack.c.h.b16 %v7028
        %v7081 = vunpack.c.l.b16 %v7029
        %v7082 = vunpack.c.h.b16 %v7029
        %v7083 = vunpack.c.l.b16 %v7030
        %v7084 = vunpack.c.h.b16 %v7030
        %v7085 = vunpack.c.l.b16 %v7031
        %v7086 = vunpack.c.h.b16 %v7031
        %v7087 = vunpack.c.l.b16 %v7032
        %v7088 = vunpack.c.h.b16 %v7032
        %v7089 = vunpack.c.l.b16 %v7033
        %v7090 = vunpack.c.h.b16 %v7033
        %v7091 = vunpack.c.l.b16 %v7034
        %v7092 = vunpack.c.h.b16 %v7034
        %v7093 = vunpack.c.l.b16 %v7035
        %v7094 = vunpack.c.h.b16 %v7035
        %v7095 = vunpack.c.l.b16 %v7036
        %v7096 = vunpack.c.h.b16 %v7036
        %v7097 = vpack.c.b16 %v7067, %v7065
        %v7098 = vpack.c.b16 %v7068, %v7066
        %v7099 = vpack.c.b16 %v7071, %v7069
        %v7100 = vpack.c.b16 %v7072, %v7070
        %v7101 = vpack.c.b16 %v7075, %v7073
        %v7102 = vpack.c.b16 %v7076, %v7074
        %v7103 = vpack.c.b16 %v7079, %v7077
        %v7104 = vpack.c.b16 %v7080, %v7078
        %v7105 = vpack.c.b16 %v7083, %v7081
        %v7106 = vpack.c.b16 %v7084, %v7082
        %v7107 = vpack.c.b16 %v7087, %v7085
        %v7108 = vpack.c.b16 %v7088, %v7086
        %v7109 = vpack.c.b16 %v7091, %v7089
        %v7110 = vpack.c.b16 %v7092, %v7090
        %v7111 = vpack.c.b16 %v7095, %v7093
        %v7112 = vpack.c.b16 %v7096, %v7094
        %7129 = vmatprep.subr.bf16.mxu0 %v7098
        %7130 = vmatpush1.bf16.msra.mxu0 %v7097
        %7131 = vmatprep.subr.bf16.mxu0 %v7100
        %7132 = vmatpush1.bf16.msra.mxu0 %v7099
        %7133 = vmatprep.subr.bf16.mxu0 %v7102
        %7134 = vmatpush1.bf16.msra.mxu0 %v7101
        %7135 = vmatprep.subr.bf16.mxu0 %v7104
        %7136 = vmatpush1.bf16.msra.mxu0 %v7103
        %7137 = vmatprep.subr.bf16.mxu0 %v7106
        %7138 = vmatpush1.bf16.msra.mxu0 %v7105
        %7139 = vmatprep.subr.bf16.mxu0 %v7108
        %7140 = vmatpush1.bf16.msra.mxu0 %v7107
        %7141 = vmatprep.subr.bf16.mxu0 %v7110
        %7142 = vmatpush1.bf16.msra.mxu0 %v7109
        %7143 = vmatprep.subr.bf16.mxu0 %v7112
        %7144 = vmatpush1.bf16.msra.mxu0 %v7111
        %7145 = vmatprep.subr.bf16.mxu0 0
        %7146 = vmatpush1.bf16.msra.mxu0 0
        %7147 = vmatprep.subr.bf16.mxu0 0
        %7148 = vmatpush1.bf16.msra.mxu0 0
        %7149 = vmatprep.subr.bf16.mxu0 0
        %7150 = vmatpush1.bf16.msra.mxu0 0
        %7151 = vmatprep.subr.bf16.mxu0 0
        %7152 = vmatpush1.bf16.msra.mxu0 0
        %7153 = vmatprep.subr.bf16.mxu0 0
        %7154 = vmatpush1.bf16.msra.mxu0 0
        %7155 = vmatprep.subr.bf16.mxu0 0
        %7156 = vmatpush1.bf16.msra.mxu0 0
        %7157 = vmatprep.subr.bf16.mxu0 0
        %7158 = vmatpush1.bf16.msra.mxu0 0
        %7159 = vmatprep.subr.bf16.mxu0 0
        %7160 = vmatpush1.bf16.msra.mxu0 0
        %7161 = vmatprep.mubr.bf16.mxu0 0
        %7162 = vmatmul.mubr.bf16.gmra.mrb[0].mxu0 %v7020
        %v7163 = vpop.f32.mrb[0].mxu0
        %v7164 = vadd.f32 %v7042, %v7163
        %v7165 = vpop.f32.mrb[0].mxu0
        %v7166 = vadd.f32 %v7046, %v7165
        %v7167 = vpop.f32.mrb[0].mxu0
        %v7168 = vadd.f32 %v7042, %v7167
        %v7169 = vpop.f32.mrb[0].mxu0
        %v7170 = vadd.f32 %v7046, %v7169
        %7171 = vdwg.mxu0
        %v7172 = vmax.f32 %v7164, 0.0
        %v7173 = vmax.f32 %v7166, 0.0
        %v7174 = vmax.f32 %v7168, 0.0
        %v7175 = vmax.f32 %v7170, 0.0
        %v7176 = vpack.c.bf16 %v7174, %v7172
        %v7177 = vpack.c.bf16 %v7175, %v7173
        %v7178 = vld [vmem:[%s1354] sm:$0xf]
        %v7179 = vld [vmem:[%s1354 + $0x4] sm:$0xf]
        %v7180 = vld [vmem:[%s1354 + $0x8] sm:$0xf]
        %v7181 = vld [vmem:[%s1354 + $0xc] sm:$0xf]
        %v7182 = vld [vmem:[%s1354 + $0x10] sm:$0xf]
        %v7183 = vld [vmem:[%s1354 + $0x14] sm:$0xf]
        %v7184 = vld [vmem:[%s1354 + $0x18] sm:$0xf]
        %v7185 = vld [vmem:[%s1354 + $0x1c] sm:$0xf]
        %v7186 = vld [vmem:[%s1354 + $0x20] sm:$0xf]
        %v7187 = vld [vmem:[%s1354 + $0x24] sm:$0xf]
        %v7188 = vld [vmem:[%s1354 + $0x28] sm:$0xf]
        %v7189 = vld [vmem:[%s1354 + $0x2c] sm:$0xf]
        %v7190 = vld [vmem:[%s1354 + $0x30] sm:$0xf]
        %v7191 = vld [vmem:[%s1354 + $0x34] sm:$0xf]
        %v7192 = vld [vmem:[%s1354 + $0x38] sm:$0xf]
        %v7193 = vld [vmem:[%s1354 + $0x3c] sm:$0xf]
        %v7194 = vld [vmem:[%s1354 + $0x40] sm:$0xf]
        %v7195 = vld [vmem:[%s1354 + $0x44] sm:$0xf]
        %v7196 = vld [vmem:[%s1354 + $0x48] sm:$0xf]
        %v7197 = vld [vmem:[%s1354 + $0x4c] sm:$0xf]
        %v7198 = vld [vmem:[%s1354 + $0x50] sm:$0xf]
        %v7199 = vld [vmem:[%s1354 + $0x54] sm:$0xf]
        %v7200 = vld [vmem:[%s1354 + $0x58] sm:$0xf]
        %v7201 = vld [vmem:[%s1354 + $0x5c] sm:$0xf]
        %v7202 = vld [vmem:[%s1354 + $0x60] sm:$0xf]
        %v7203 = vld [vmem:[%s1354 + $0x64] sm:$0xf]
        %v7204 = vld [vmem:[%s1354 + $0x68] sm:$0xf]
        %v7205 = vld [vmem:[%s1354 + $0x6c] sm:$0xf]
        %v7206 = vld [vmem:[%s1354 + $0x70] sm:$0xf]
        %v7207 = vld [vmem:[%s1354 + $0x74] sm:$0xf]
        %v7208 = vld [vmem:[%s1354 + $0x78] sm:$0xf]
        %v7209 = vld [vmem:[%s1354 + $0x7c] sm:$0xf]
        %v7210 = vld [vmem:[%s1562] sm:$0x1]
        %v7212 = vlaneseq
        %v7213 = vshrl.u32 %v7212, 7
        %v7214 = vsub.s32 0, %v7213
        %v7215 = vrot.slane %v7210, %v7214
        %v7249 = vunpack.c.l.b16 %v7178
        %v7250 = vunpack.c.l.b16 %v7179
        %v7251 = vunpack.c.l.b16 %v7180
        %v7252 = vunpack.c.l.b16 %v7181
        %v7253 = vunpack.c.l.b16 %v7182
        %v7254 = vunpack.c.l.b16 %v7183
        %v7255 = vunpack.c.l.b16 %v7184
        %v7256 = vunpack.c.l.b16 %v7185
        %v7257 = vunpack.c.l.b16 %v7186
        %v7258 = vunpack.c.l.b16 %v7187
        %v7259 = vunpack.c.l.b16 %v7188
        %v7260 = vunpack.c.l.b16 %v7189
        %v7261 = vunpack.c.l.b16 %v7190
        %v7262 = vunpack.c.l.b16 %v7191
        %v7263 = vunpack.c.l.b16 %v7192
        %v7264 = vunpack.c.l.b16 %v7193
        %v7265 = vunpack.c.l.b16 %v7194
        %v7266 = vunpack.c.l.b16 %v7195
        %v7267 = vunpack.c.l.b16 %v7196
        %v7268 = vunpack.c.l.b16 %v7197
        %v7269 = vunpack.c.l.b16 %v7198
        %v7270 = vunpack.c.l.b16 %v7199
        %v7271 = vunpack.c.l.b16 %v7200
        %v7272 = vunpack.c.l.b16 %v7201
        %v7273 = vunpack.c.l.b16 %v7202
        %v7274 = vunpack.c.l.b16 %v7203
        %v7275 = vunpack.c.l.b16 %v7204
        %v7276 = vunpack.c.l.b16 %v7205
        %v7277 = vunpack.c.l.b16 %v7206
        %v7278 = vunpack.c.l.b16 %v7207
        %v7279 = vunpack.c.l.b16 %v7208
        %v7280 = vunpack.c.l.b16 %v7209
        %v7281 = vpack.c.b16 %v7250, %v7249
        %v7282 = vpack.c.b16 %v7252, %v7251
        %v7283 = vpack.c.b16 %v7254, %v7253
        %v7284 = vpack.c.b16 %v7256, %v7255
        %v7285 = vpack.c.b16 %v7258, %v7257
        %v7286 = vpack.c.b16 %v7260, %v7259
        %v7287 = vpack.c.b16 %v7262, %v7261
        %v7288 = vpack.c.b16 %v7264, %v7263
        %v7289 = vpack.c.b16 %v7266, %v7265
        %v7290 = vpack.c.b16 %v7268, %v7267
        %v7291 = vpack.c.b16 %v7270, %v7269
        %v7292 = vpack.c.b16 %v7272, %v7271
        %v7293 = vpack.c.b16 %v7274, %v7273
        %v7294 = vpack.c.b16 %v7276, %v7275
        %v7295 = vpack.c.b16 %v7278, %v7277
        %v7296 = vpack.c.b16 %v7280, %v7279
        %7313 = vmatprep.subr.bf16.mxu0 0
        %7314 = vmatpush1.bf16.msra.mxu0 %v7281
        %7315 = vmatprep.subr.bf16.mxu0 0
        %7316 = vmatpush1.bf16.msra.mxu0 %v7282
        %7317 = vmatprep.subr.bf16.mxu0 0
        %7318 = vmatpush1.bf16.msra.mxu0 %v7283
        %7319 = vmatprep.subr.bf16.mxu0 0
        %7320 = vmatpush1.bf16.msra.mxu0 %v7284
        %7321 = vmatprep.subr.bf16.mxu0 0
        %7322 = vmatpush1.bf16.msra.mxu0 %v7285
        %7323 = vmatprep.subr.bf16.mxu0 0
        %7324 = vmatpush1.bf16.msra.mxu0 %v7286
        %7325 = vmatprep.subr.bf16.mxu0 0
        %7326 = vmatpush1.bf16.msra.mxu0 %v7287
        %7327 = vmatprep.subr.bf16.mxu0 0
        %7328 = vmatpush1.bf16.msra.mxu0 %v7288
        %7329 = vmatprep.subr.bf16.mxu0 0
        %7330 = vmatpush1.bf16.msra.mxu0 %v7289
        %7331 = vmatprep.subr.bf16.mxu0 0
        %7332 = vmatpush1.bf16.msra.mxu0 %v7290
        %7333 = vmatprep.subr.bf16.mxu0 0
        %7334 = vmatpush1.bf16.msra.mxu0 %v7291
        %7335 = vmatprep.subr.bf16.mxu0 0
        %7336 = vmatpush1.bf16.msra.mxu0 %v7292
        %7337 = vmatprep.subr.bf16.mxu0 0
        %7338 = vmatpush1.bf16.msra.mxu0 %v7293
        %7339 = vmatprep.subr.bf16.mxu0 0
        %7340 = vmatpush1.bf16.msra.mxu0 %v7294
        %7341 = vmatprep.subr.bf16.mxu0 0
        %7342 = vmatpush1.bf16.msra.mxu0 %v7295
        %7343 = vmatprep.subr.bf16.mxu0 0
        %7344 = vmatpush1.bf16.msra.mxu0 %v7296
        %7345 = vmatprep.mubr.bf16.mxu0 %v7177
        %7346 = vmatmul.mubr.bf16.gmra.mrb[0].mxu0 %v7176
        %v7347 = vpop.f32.mrb[0].mxu0
        %v7348 = vadd.f32 %v7215, %v7347
        %v7349 = vpop.f32.mrb[0].mxu0
        %v7350 = vpop.f32.mrb[0].mxu0
        %v7351 = vadd.f32 %v7215, %v7350
        %v7352 = vpop.f32.mrb[0].mxu0
        %7353 = vdwg.mxu0
        %v7354 = vadd.f32 %v7018, %v7348
        %v7355 = vadd.f32 %v7019, %v7351
        %7356 = vadd.xlane.f32.xlu0 %v7354
        %v7357 = vpop.xlane.xlu0 %7356
        %7358 = vadd.xlane.f32.xlu0 %v7355
        %v7359 = vpop.xlane.xlu0 %7358
        %v7360 = vmul.f32 %v7357, %v3974
        %v7361 = vmul.f32 %v7359, %v3974
        %v7362 = vsub.f32 %v7354, %v7360
        %v7363 = vsub.f32 %v7355, %v7361
        %v7364 = vmul.f32 %v7362, %v7362
        %v7365 = vmul.f32 %v7363, %v7363
        %7366 = vadd.xlane.f32.xlu0 %v7364
        %v7367 = vpop.xlane.xlu0 %7366
        %7368 = vadd.xlane.f32.xlu0 %v7365
        %v7369 = vpop.xlane.xlu0 %7368
        %v7370 = vmul.f32 %v7367, %v3974
        %v7371 = vmul.f32 %v7369, %v3974
        %v7372 = vadd.f32 %v7370, 1e-05
        %v7373 = vadd.f32 %v7371, 1e-05
        %v7374 = vrsqrt.pop %v7372
        %v7375 = vrsqrt.pop %v7373
        %v7376 = vmul.f32 %v7362, %v7374
        %v7377 = vmul.f32 %v7363, %v7375
        %v7378 = vld [vmem:[%s1565] sm:$0x1]
        %v7380 = vlaneseq
        %v7381 = vshrl.u32 %v7380, 7
        %v7382 = vsub.s32 0, %v7381
        %v7383 = vrot.slane %v7378, %v7382
        %v7385 = vmul.f32 %v7376, %v7383
        %v7386 = vmul.f32 %v7377, %v7383
        %v7387 = vld [vmem:[%s1568] sm:$0x1]
        %v7389 = vlaneseq
        %v7390 = vshrl.u32 %v7389, 7
        %v7391 = vsub.s32 0, %v7390
        %v7392 = vrot.slane %v7387, %v7391
        %v7394 = vadd.f32 %v7385, %v7392
        %v7395 = vadd.f32 %v7386, %v7392
        %7396 = vst [vmem:[#allocation2] sm:$0xff] %v7394
        %7397 = vst [vmem:[#allocation2 + $0x8] sm:$0xff] %v7395
        %7398 = vadd.xlane.f32.xlu0 %v7394
        %v7399 = vpop.xlane.xlu0 %7398
        %7400 = vadd.xlane.f32.xlu0 %v7395
        %v7401 = vpop.xlane.xlu0 %7400
        %v7402 = vmul.f32 %v7399, %v3974
        %v7403 = vmul.f32 %v7401, %v3974
        %v7404 = vsub.f32 %v7394, %v7402
        %v7405 = vsub.f32 %v7395, %v7403
        %v7406 = vmul.f32 %v7404, %v7404
        %v7407 = vmul.f32 %v7405, %v7405
        %7408 = vadd.xlane.f32.xlu0 %v7406
        %v7409 = vpop.xlane.xlu0 %7408
        %7410 = vadd.xlane.f32.xlu0 %v7407
        %v7411 = vpop.xlane.xlu0 %7410
        %v7412 = vmul.f32 %v7409, %v3974
        %v7413 = vmul.f32 %v7411, %v3974
        %v7414 = vadd.f32 %v7412, 1e-05
        %v7415 = vadd.f32 %v7413, 1e-05
        %v7416 = vrsqrt.pop %v7414
        %v7417 = vrsqrt.pop %v7415
        %v7418 = vmul.f32 %v7404, %v7416
        %v7419 = vmul.f32 %v7405, %v7417
        %v7420 = vld [vmem:[%s57] sm:$0x1]
        %v7422 = vlaneseq
        %v7423 = vshrl.u32 %v7422, 7
        %v7424 = vsub.s32 0, %v7423
        %v7425 = vrot.slane %v7420, %v7424
        %v7427 = vmul.f32 %v7418, %v7425
        %v7428 = vmul.f32 %v7419, %v7425
        %v7429 = vld [vmem:[%s59] sm:$0x1]
        %v7431 = vlaneseq
        %v7432 = vshrl.u32 %v7431, 7
        %v7433 = vsub.s32 0, %v7432
        %v7434 = vrot.slane %v7429, %v7433
        %v7436 = vadd.f32 %v7427, %v7434
        %v7437 = vadd.f32 %v7428, %v7434
        %7438 = vst [vmem:[%s1517] sm:$0xff] %v7436
        %7439 = vst [vmem:[%s1517 + $0x8] sm:$0xff] %v7437
        %s7440 = sand.u32 %s870, 1
        %s7441 = scalar_lea.sflag [#allocation5], %s7440
        %s7442 = sand.u32 %s870, 1
        %s7443 = smul.addr %s7442, 16
        %s7444 = scalar_lea.vmem [#allocation20], %s7443
        // Predicated region
        $region197: #{tpu_custom_call.1} parent=139 // pred_check
          %p7445 = pneg %p880
        $region198: #{tpu_custom_call.1} parent=139 // pred_check_branch
          %7447 = sbr.rel (%p7445) target = $region200
        $region199: #{tpu_custom_call.1} parent=139 // pred_region
          %s7448 = smul.u32 2, %s82
          %s7450 = ssub.s32 256, 256
          %7451 = vsyncadd %s7441, %s7450
          %s7452 = smul.addr %s83, 2
          %s7453 = sadd.s32 %s7448, %s7452
          %s7454 = smul.addr %s7453, 128
          %s7455 = scalar_lea.hbm %s61, %s7454
          %s7456 = sshll.u32 %s7444, 4
          %s7457 = int_to_ptr.vmem [resolvable:$true] %s7456
          %7462 = dma.vmem_to_hbm [thread:$0]  %s7457, 256, %s7455, %s7441, 128, 128, 8
        $region200: #{tpu_custom_call.1} parent=139 // pred_fallthru
          _
      $region140: #{tpu_custom_call.1} parent=5 // pred_fallthru
        _
      %p7463 = scmp.le.s32.totalorder 2, %s73
      // Predicated region
      $region201: #{tpu_custom_call.1} parent=5 // pred_check
        %p7464 = pneg %p7463
      $region202: #{tpu_custom_call.1} parent=5 // pred_check_branch
        %7466 = sbr.rel (%p7464) target = $region204
      $region203: #{tpu_custom_call.1} parent=5 // pred_region
        %s7467 = ssub.s32 %s73, 2
        // Predicated region
        $region205: #{tpu_custom_call.1} parent=203 // pred_check
          %p7468 = pneg %p886
        $region206: #{tpu_custom_call.1} parent=203 // pred_check_branch
          %7470 = sbr.rel (%p7468) target = $region208
        $region207: #{tpu_custom_call.1} parent=203 // pred_region
          %s7471 = sand.u32 %s871, 1
          %s7472 = scalar_lea.sflag [#allocation5], %s7471
          %s7473 = sand.u32 %s871, 1
          %s7474 = smul.addr %s7473, 16
          %s7475 = scalar_lea.vmem [#allocation20], %s7474
          %7476 = dma.done %s7472, 256
        $region208: #{tpu_custom_call.1} parent=203 // pred_fallthru
          _
      $region204: #{tpu_custom_call.1} parent=5 // pred_fallthru
        _
    $region6: #{tpu_custom_call.1} parent=1 // loop_footer
      %s77 = sadd.s32 1, %s73
    $region7: #{tpu_custom_call.1} parent=1 // loop_footer_branch
      %72 = sbr.rel target = $region3
    $region8: #{tpu_custom_call.1} parent=1 // loop_exit
      _
    %7477 = vsyncpa [#allocation4], 1
    %s7478 = scalar_lea.sflag [#allocation4], 1
    %7479 = vsyncpa %s7478, 1
    %7480 = vsyncpa [#allocation7], 1
    %7481 = vsyncpa [#allocation10], 1
    %7482 = vsyncpa [#allocation5], 1
    %s7483 = scalar_lea.sflag [#allocation5], 1
    %7484 = vsyncpa %s7483, 1

</llo_original>
